<compile_context>
chip_gen: v5e
topology: v5e:2x2
jax: 0.10.0
libtpu: 0.0.40
codegen_flags: <defaults>
</compile_context>

<pallas_src>
import functools
import math

import jax
import jax.numpy as jnp
from jax import lax
from jax.experimental import pallas as pl
from jax.experimental.pallas import tpu as pltpu

_BN_EPS = 1e-5
_VMEM_LIMIT = 32 * 1024 * 1024     # safe on v5e/v6e (128 MiB) and v7x (64 MiB)
_BF16_MIN_K = 16                   # keep tiny-K (e.g. 3-wide) matmuls in f32


def _row_tile(n, cap=1024, multiple=8):
    """Largest tile <= cap dividing n that is a multiple of `multiple`.
    Falls back to n itself (full-extent block) when no such divisor exists."""
    cap = min(cap, n)
    for cand in range(cap, 0, -1):
        if n % cand == 0 and cand % multiple == 0:
            return cand
    return n


def _maybe_bf16(w):
    """bf16 weights for MXU-friendly matmuls; tiny-K weights stay f32."""
    return w.astype(jnp.bfloat16) if w.shape[0] >= _BF16_MIN_K else w


def _dot_bias(a, w_ref, b_ref):
    """a @ w + b with f32 accumulation; operands cast to the weight dtype."""
    a = a.astype(w_ref.dtype)
    return jnp.dot(a, w_ref[...], preferred_element_type=jnp.float32) + b_ref[...]


# ----------------------------------------------------------------------------
# Fused: [per-batch transform fold] -> 3x(conv1x1+BN+ReLU) -> reduce(N)
#        -> FC head (TNet fc1..fc3+eye  OR  classifier fc1..fc3+log_softmax)
# ----------------------------------------------------------------------------
def _mlp3_reduce_head_kernel(*refs, has_transform, reduce_op, head,
                             acc_rows, tile_n):
    i = 0
    x_ref = refs[i]; i += 1
    t_ref = None
    if has_transform:
        t_ref = refs[i]; i += 1
    w1, b1, w2, b2, w3, b3 = refs[i:i + 6]; i += 6
    fw1, fb1, fw2, fb2, fw3, fb3 = refs[i:i + 6]; i += 6
    eye_ref = None
    if head == "tnet":
        eye_ref = refs[i]; i += 1
    o_ref = refs[i]; i += 1
    acc_ref = refs[i]; i += 1
    tw_ref = refs[i] if has_transform else None

    n = pl.program_id(1)

    @pl.when(n == 0)
    def _init():
        if reduce_op == "max":
            acc_ref[...] = jnp.full_like(acc_ref, -jnp.inf)
        else:
            acc_ref[...] = jnp.zeros_like(acc_ref)
        if has_transform:
            # Fold the per-batch feature transform into conv1's weight:
            #   relu(bn1(conv1(x @ t))) == relu(x @ (t @ w1') + b1')
            tw = jnp.dot(t_ref[0].astype(jnp.float32), w1[...].astype(jnp.float32),
                         preferred_element_type=jnp.float32)
            tw_ref[...] = tw.astype(tw_ref.dtype)

    x = x_ref[0]                                            # (tile_n, Cin)
    if has_transform:
        h = jnp.maximum(
            jnp.dot(x.astype(tw_ref.dtype), tw_ref[...],
                    preferred_element_type=jnp.float32) + b1[...], 0.0)
    else:
        h = jnp.maximum(_dot_bias(x, w1, b1), 0.0)
    h = jnp.maximum(_dot_bias(h, w2, b2), 0.0)
    h = jnp.maximum(_dot_bias(h, w3, b3), 0.0)              # (tile_n, C3) f32

    # Per-tile partial reduction: group rows and combine on the VPU so the XLU
    # slots stay free for MXU pushes; the single cross-sublane reduce happens
    # once per batch in the finalize below.
    if acc_rows == 1:
        if reduce_op == "max":
            part = jnp.max(h, axis=0, keepdims=True)
        else:
            part = jnp.sum(h, axis=0, keepdims=True)
    else:
        part = h[0:acc_rows, :]
        for g in range(1, tile_n // acc_rows):
            blk = h[g * acc_rows:(g + 1) * acc_rows, :]
            part = jnp.maximum(part, blk) if reduce_op == "max" else part + blk
    if reduce_op == "max":
        acc_ref[...] = jnp.maximum(acc_ref[...], part)
    else:
        acc_ref[...] = acc_ref[...] + part

    @pl.when(n == pl.num_programs(1) - 1)
    def _finalize():
        if reduce_op == "max":
            g = jnp.max(acc_ref[...], axis=0, keepdims=True)
        else:
            g = jnp.sum(acc_ref[...], axis=0, keepdims=True)   # (1, C3)
        hh = jnp.maximum(_dot_bias(g, fw1, fb1), 0.0)
        hh = jnp.maximum(_dot_bias(hh, fw2, fb2), 0.0)
        # Dropout(p=0.3) on the classifier path: eval-mode identity.
        o = _dot_bias(hh, fw3, fb3)
        if head == "tnet":
            o = o + eye_ref[...]
        else:
            m = jnp.max(o, axis=-1, keepdims=True)
            s = o - m
            o = s - jnp.log(jnp.sum(jnp.exp(s), axis=-1, keepdims=True))
        o_ref[0] = o.astype(o_ref.dtype)


def mlp3_reduce_head(x, conv_layers, fc_layers, *, reduce_op, head,
                     transform=None):
    """x:(B,N,Cin) -> (B, out_dim). Fully fused per-point MLP + reduce + head."""
    B, N, Cin = x.shape
    (w1, b1), (w2, b2), (w3, b3) = conv_layers
    (fw1, fb1), (fw2, fb2), (fw3, fb3) = fc_layers
    C1, C2, C3 = w1.shape[1], w2.shape[1], w3.shape[1]
    F1, F2 = fw1.shape[1], fw2.shape[1]
    out_dim = fw3.shape[1]
    TN = _row_tile(N, cap=1024, multiple=8)
    acc_rows = 8 if TN % 8 == 0 else 1
    grid = (B, N // TN)

    args = [x]
    in_specs = [pl.BlockSpec((1, TN, Cin), lambda b, n: (b, n, 0))]
    if transform is not None:
        args.append(transform)
        in_specs.append(pl.BlockSpec((1, Cin, Cin), lambda b, n: (b, 0, 0)))
    for w, bias in ((w1, b1), (w2, b2), (w3, b3),
                    (fw1, fb1), (fw2, fb2), (fw3, fb3)):
        wk = _maybe_bf16(w)
        args += [wk, bias.reshape(1, -1)]
        in_specs += [pl.BlockSpec(wk.shape, lambda b, n: (0, 0)),       # resident
                     pl.BlockSpec((1, wk.shape[1]), lambda b, n: (0, 0))]
    if head == "tnet":
        d = math.isqrt(out_dim)
        args.append(jnp.eye(d, dtype=jnp.float32).reshape(1, out_dim))
        in_specs.append(pl.BlockSpec((1, out_dim), lambda b, n: (0, 0)))

    scratch = [pltpu.VMEM((acc_rows, C3), jnp.float32)]
    if transform is not None:
        tw_dtype = jnp.bfloat16 if Cin >= _BF16_MIN_K else jnp.float32
        scratch.append(pltpu.VMEM((Cin, C1), tw_dtype))

    flops = 2 * B * N * (Cin * C1 + C1 * C2 + C2 * C3)
    flops += 2 * B * (C3 * F1 + F1 * F2 + F2 * out_dim)
    if transform is not None:
        flops += 2 * B * Cin * Cin * C1
    bytes_accessed = (x.size * x.dtype.itemsize + B * out_dim * 4
                      + sum(a.size * a.dtype.itemsize for a in args[1:]))
    transcendentals = B * out_dim if head == "class" else 0

    kern = functools.partial(_mlp3_reduce_head_kernel,
                             has_transform=transform is not None,
                             reduce_op=reduce_op, head=head,
                             acc_rows=acc_rows, tile_n=TN)
    out = pl.pallas_call(
        kern,
        out_shape=jax.ShapeDtypeStruct((B, 1, out_dim), jnp.float32),
        grid_spec=pltpu.PrefetchScalarGridSpec(
            num_scalar_prefetch=0,
            grid=grid,
            in_specs=in_specs,
            out_specs=pl.BlockSpec((1, 1, out_dim), lambda b, n: (b, 0, 0)),
            scratch_shapes=scratch),
        compiler_params=pltpu.CompilerParams(
            dimension_semantics=("parallel", "arbitrary"),
            vmem_limit_bytes=_VMEM_LIMIT),
        cost_estimate=pl.CostEstimate(flops=flops,
                                      transcendentals=transcendentals,
                                      bytes_accessed=bytes_accessed),
    )(*args)
    return out.reshape(B, out_dim)


# ----------------------------------------------------------------------------
# Fused input-transform bmm + conv1 + conv2.
# Outputs: tnet_out written directly as (B, D, N) (lane-dense) and h as bf16.
# ----------------------------------------------------------------------------
def _xform_conv12_kernel(x_ref, t_ref, tt_ref, w1_ref, b1_ref, w2_ref, b2_ref,
                         xt_ref, h_ref):
    x = x_ref[0]                                              # (TN, D) f32
    # tnet_out block, already transposed: (x @ t).T == einsum('ik,jk->ij', t.T, x)
    xt_t = lax.dot_general(tt_ref[0], x, (((1,), (1,)), ((), ())),
                           preferred_element_type=jnp.float32)   # (D, TN)
    xt_ref[0] = xt_t.astype(xt_ref.dtype)
    # Fold the input transform into conv1: relu(bn1(conv1(x @ t))) ==
    # relu(x @ (t @ w1') + b1').  (D x D)(D x C1) is negligible per tile.
    tw1 = jnp.dot(t_ref[0], w1_ref[...].astype(jnp.float32),
                  preferred_element_type=jnp.float32)            # (D, C1)
    h = jnp.maximum(
        jnp.dot(x, tw1, preferred_element_type=jnp.float32) + b1_ref[...], 0.0)
    h = jnp.maximum(_dot_bias(h, w2_ref, b2_ref), 0.0)
    h_ref[0] = h.astype(h_ref.dtype)


def xform_conv12(x, t, layer1, layer2):
    """x:(B,N,D), t:(B,D,D) -> (tnet_out (B,D,N) f32, features (B,N,C2) bf16)."""
    B, N, D = x.shape
    (w1, b1), (w2, b2) = layer1, layer2
    C1, C2 = w1.shape[1], w2.shape[1]
    # Lane-dense tnet_out stores need the point tile to be a multiple of 128
    # (or the full extent).
    TN = _row_tile(N, cap=1024, multiple=128)
    grid = (B, N // TN)
    tt = jnp.swapaxes(t, 1, 2)
    w1k, w2k = _maybe_bf16(w1), _maybe_bf16(w2)

    in_specs = [
        pl.BlockSpec((1, TN, D), lambda b, n: (b, n, 0)),
        pl.BlockSpec((1, D, D), lambda b, n: (b, 0, 0)),
        pl.BlockSpec((1, D, D), lambda b, n: (b, 0, 0)),
        pl.BlockSpec(w1k.shape, lambda b, n: (0, 0)),
        pl.BlockSpec((1, C1), lambda b, n: (0, 0)),
        pl.BlockSpec(w2k.shape, lambda b, n: (0, 0)),
        pl.BlockSpec((1, C2), lambda b, n: (0, 0)),
    ]
    out_shape = (jax.ShapeDtypeStruct((B, D, N), jnp.float32),      # tnet_out
                 jax.ShapeDtypeStruct((B, N, C2), jnp.bfloat16))    # features
    out_specs = (pl.BlockSpec((1, D, TN), lambda b, n: (b, 0, n)),
                 pl.BlockSpec((1, TN, C2), lambda b, n: (b, n, 0)))

    flops = 2 * B * N * (D * D + D * C1 + C1 * C2)
    bytes_accessed = (x.size * 4 + 2 * t.size * 4
                      + (w1.size + w2.size) * 2 + (C1 + C2) * 4
                      + B * D * N * 4 + B * N * C2 * 2)

    xt_t, h = pl.pallas_call(
        _xform_conv12_kernel,
        out_shape=out_shape,
        grid_spec=pltpu.PrefetchScalarGridSpec(
            num_scalar_prefetch=0, grid=grid,
            in_specs=in_specs, out_specs=out_specs),
        compiler_params=pltpu.CompilerParams(
            dimension_semantics=("parallel", "parallel"),
            vmem_limit_bytes=_VMEM_LIMIT),
        cost_estimate=pl.CostEstimate(flops=flops, transcendentals=0,
                                      bytes_accessed=bytes_accessed),
    )(x, t, tt, w1k, b1.reshape(1, -1), w2k, b2.reshape(1, -1))
    return xt_t, h


# ----------------------------------------------------------------------------
# Deterministic parameter construction (synthetic weights; BN folded into W/b)
# ----------------------------------------------------------------------------
def _layer_with_bn(key, cin, cout):
    kw, kb, kg, kbe, km, kv = jax.random.split(key, 6)
    w = 0.05 * jax.random.normal(kw, (cin, cout), jnp.float32)
    b = 0.05 * jax.random.normal(kb, (cout,), jnp.float32)
    gamma = 1.0 + 0.1 * jax.random.normal(kg, (cout,), jnp.float32)
    beta = 0.1 * jax.random.normal(kbe, (cout,), jnp.float32)
    mean = 0.1 * jax.random.normal(km, (cout,), jnp.float32)
    var = 1.0 + 0.1 * jnp.abs(jax.random.normal(kv, (cout,), jnp.float32))
    scale = gamma / jnp.sqrt(var + _BN_EPS)
    shift = (b - mean) * scale + beta
    return (w * scale[None, :], shift)          # BN folded into weight + bias


def _layer_plain(key, cin, cout):
    kw, kb = jax.random.split(key, 2)
    w = 0.05 * jax.random.normal(kw, (cin, cout), jnp.float32)
    b = 0.05 * jax.random.normal(kb, (cout,), jnp.float32)
    return (w, b)


def _transformation_net_params(key, input_dim, output_dim):
    ks = jax.random.split(key, 6)
    return {
        "conv1": _layer_with_bn(ks[0], input_dim, 64),
        "conv2": _layer_with_bn(ks[1], 64, 128),
        "conv3": _layer_with_bn(ks[2], 128, 256),
        "fc1": _layer_with_bn(ks[3], 256, 256),
        "fc2": _layer_with_bn(ks[4], 256, 128),
        "fc3": _layer_plain(ks[5], 128, output_dim * output_dim),
    }


def init_params(key, num_classes=8, point_dimension=3):
    ks = jax.random.split(key, 10)
    base = {
        "input_transform": _transformation_net_params(ks[0], point_dimension,
                                                      point_dimension),
        "feature_transform": _transformation_net_params(ks[1], 64, 64),
        "conv1": _layer_with_bn(ks[2], point_dimension, 64),
        "conv2": _layer_with_bn(ks[3], 64, 64),
        "conv3": _layer_with_bn(ks[4], 64, 64),
        "conv4": _layer_with_bn(ks[5], 64, 128),
        "conv5": _layer_with_bn(ks[6], 128, 256),
    }
    head = {
        "fc1": _layer_with_bn(ks[7], 256, 128),
        "fc2": _layer_with_bn(ks[8], 128, 64),
        "fc3": _layer_plain(ks[9], 64, num_classes),
    }
    return {"base": base, "head": head}


# ----------------------------------------------------------------------------
# Forward pass (4 fused pallas_calls total)
# ----------------------------------------------------------------------------
def transformation_net(x, p):
    """x: (B, N, Cin) -> (B, D, D).  D derived statically from fc3's shape."""
    d = math.isqrt(p["fc3"][0].shape[1])
    t = mlp3_reduce_head(
        x, (p["conv1"], p["conv2"], p["conv3"]),
        (p["fc1"], p["fc2"], p["fc3"]),
        reduce_op="max", head="tnet")
    return t.reshape(x.shape[0], d, d)


def classification_pointnet(x, params):
    base, head = params["base"], params["head"]
    # A) input TNet
    t_in = transformation_net(x, base["input_transform"])          # (B, D, D)
    # B) bmm(x, t_in) folded into conv1, conv2; tnet_out written transposed.
    tnet_out, h = xform_conv12(x, t_in, base["conv1"], base["conv2"])
    # C) feature TNet on h
    t_feat = transformation_net(h, base["feature_transform"])      # (B, 64, 64)
    # D) bmm(h, t_feat) folded into conv3; conv4, conv5; SUM over points
    #    (torch.sum(x, dim=2) per the reference); classifier head fused.
    logp = mlp3_reduce_head(
        h, (base["conv3"], base["conv4"], base["conv5"]),
        (head["fc1"], head["fc2"], head["fc3"]),
        reduce_op="sum", head="class", transform=t_feat)
    return logp, t_feat, tnet_out


# ----------------------------------------------------------------------------
if __name__ == "__main__":
    B, N, POINT_DIM, NUM_CLASSES = 2, 64, 3, 8

    key = jax.random.PRNGKey(0)
    k_params, k_x = jax.random.split(key)
    params = init_params(k_params, num_classes=NUM_CLASSES,
                         point_dimension=POINT_DIM)
    x = jax.random.normal(k_x, (B, N, POINT_DIM), jnp.float32)

    fwd = jax.jit(classification_pointnet)
    logp, feature_transform, tnet_out = fwd(x, params)
    jax.block_until_ready((logp, feature_transform, tnet_out))

    assert logp.shape == (B, NUM_CLASSES)
    assert feature_transform.shape == (B, 64, 64)
    assert tnet_out.shape == (B, POINT_DIM, N)
    # log-softmax rows should sum to ~1 in prob space
    assert bool(jnp.all(jnp.abs(jnp.sum(jnp.exp(logp), axis=1) - 1.0) < 1e-3))

    print("KERNEL_OK")
</pallas_src>

<mosaic_0001>
module attributes {stable_mosaic.version = 11 : i64} {
  func.func @_mlp3_reduce_head_kernel(%arg0: i32, %arg1: i32, %arg2: memref<1x64x3xf32, #tpu.memory_space<vmem>>, %arg3: memref<3x64xf32, #tpu.memory_space<vmem>>, %arg4: memref<1x64xf32, #tpu.memory_space<vmem>>, %arg5: memref<64x128xbf16, #tpu.memory_space<vmem>>, %arg6: memref<1x128xf32, #tpu.memory_space<vmem>>, %arg7: memref<128x256xbf16, #tpu.memory_space<vmem>>, %arg8: memref<1x256xf32, #tpu.memory_space<vmem>>, %arg9: memref<256x256xbf16, #tpu.memory_space<vmem>>, %arg10: memref<1x256xf32, #tpu.memory_space<vmem>>, %arg11: memref<256x128xbf16, #tpu.memory_space<vmem>>, %arg12: memref<1x128xf32, #tpu.memory_space<vmem>>, %arg13: memref<128x9xbf16, #tpu.memory_space<vmem>>, %arg14: memref<1x9xf32, #tpu.memory_space<vmem>>, %arg15: memref<1x9xf32, #tpu.memory_space<vmem>>, %arg16: memref<1x1x9xf32, #tpu.memory_space<vmem>>, %arg17: memref<8x256xf32, #tpu.memory_space<vmem>>) attributes {dimension_semantics = [#tpu.dimension_semantics<parallel>, #tpu.dimension_semantics<arbitrary>], iteration_bounds = array<i64: 2, 1>, scalar_prefetch = 0 : i64, scratch_operands = 1 : i64, tpu.core_type = #tpu.core_type<tc>, window_params = [{transform_indices = @transform_0, window_bounds = array<i64: 1, 64, 3>}, {pipeline_mode = #tpu.pipeline_mode<synchronous>, transform_indices = @transform_1, window_bounds = array<i64: 3, 64>}, {pipeline_mode = #tpu.pipeline_mode<synchronous>, transform_indices = @transform_2, window_bounds = array<i64: 1, 64>}, {pipeline_mode = #tpu.pipeline_mode<synchronous>, transform_indices = @transform_3, window_bounds = array<i64: 64, 128>}, {pipeline_mode = #tpu.pipeline_mode<synchronous>, transform_indices = @transform_4, window_bounds = array<i64: 1, 128>}, {pipeline_mode = #tpu.pipeline_mode<synchronous>, transform_indices = @transform_5, window_bounds = array<i64: 128, 256>}, {pipeline_mode = #tpu.pipeline_mode<synchronous>, transform_indices = @transform_6, window_bounds = array<i64: 1, 256>}, {pipeline_mode = #tpu.pipeline_mode<synchronous>, transform_indices = @transform_7, window_bounds = array<i64: 256, 256>}, {pipeline_mode = #tpu.pipeline_mode<synchronous>, transform_indices = @transform_8, window_bounds = array<i64: 1, 256>}, {pipeline_mode = #tpu.pipeline_mode<synchronous>, transform_indices = @transform_9, window_bounds = array<i64: 256, 128>}, {pipeline_mode = #tpu.pipeline_mode<synchronous>, transform_indices = @transform_10, window_bounds = array<i64: 1, 128>}, {pipeline_mode = #tpu.pipeline_mode<synchronous>, transform_indices = @transform_11, window_bounds = array<i64: 128, 9>}, {pipeline_mode = #tpu.pipeline_mode<synchronous>, transform_indices = @transform_12, window_bounds = array<i64: 1, 9>}, {pipeline_mode = #tpu.pipeline_mode<synchronous>, transform_indices = @transform_13, window_bounds = array<i64: 1, 9>}, {transform_indices = @transform_14, window_bounds = array<i64: 1, 1, 9>}]} {
    %c0_i32 = arith.constant 0 : i32
    %0 = arith.cmpi eq, %arg1, %c0_i32 : i32
    %1 = arith.extui %0 : i1 to i32
    %c0_i32_0 = arith.constant 0 : i32
    %2 = arith.cmpi ne, %1, %c0_i32_0 : i32
    scf.if %2 {
      %cst_26 = arith.constant 0xFF800000 : f32
      %49 = vector.broadcast %cst_26 : f32 to vector<8x256xf32>
      %c0_27 = arith.constant 0 : index
      %c0_28 = arith.constant 0 : index
      %50 = vector.load %arg17[%c0_27, %c0_28] : memref<8x256xf32, #tpu.memory_space<vmem>>, vector<8x256xf32>
      tpu.vector_store %arg17[%c0_27, %c0_28], %49 {strides = array<i32>} : memref<8x256xf32, #tpu.memory_space<vmem>>, vector<8x256xf32>,
    } else {
    }
    %c0 = arith.constant 0 : index
    %c0_1 = arith.constant 0 : index
    %c0_2 = arith.constant 0 : index
    %3 = vector.load %arg2[%c0, %c0_1, %c0_2] : memref<1x64x3xf32, #tpu.memory_space<vmem>>, vector<1x64x3xf32>
    %4 = vector.shape_cast %3 : vector<1x64x3xf32> to vector<64x3xf32>
    %c0_3 = arith.constant 0 : index
    %c0_4 = arith.constant 0 : index
    %5 = vector.load %arg3[%c0_3, %c0_4] : memref<3x64xf32, #tpu.memory_space<vmem>>, vector<3x64xf32>
    %cst = arith.constant dense<0.000000e+00> : vector<64x64xf32>
    %6 = tpu.matmul %4, %5, %cst {dimension_numbers = #tpu.dot_dimension_numbers<[1], [0], [0], [1], [0, 0, 1, 1], [], []>} : vector<64x3xf32>, vector<3x64xf32>, vector<64x64xf32> -> vector<64x64xf32>
    %c0_5 = arith.constant 0 : index
    %c0_6 = arith.constant 0 : index
    %7 = vector.load %arg4[%c0_5, %c0_6] : memref<1x64xf32, #tpu.memory_space<vmem>>, vector<1x64xf32>
    %8 = vector.broadcast %7 : vector<1x64xf32> to vector<64x64xf32>
    %9 = arith.addf %6, %8 : vector<64x64xf32>
    %cst_7 = arith.constant 0.000000e+00 : f32
    %10 = vector.broadcast %cst_7 : f32 to vector<64x64xf32>
    %11 = arith.maximumf %9, %10 : vector<64x64xf32>
    %12 = arith.truncf %11 : vector<64x64xf32> to vector<64x64xbf16>
    %c0_8 = arith.constant 0 : index
    %c0_9 = arith.constant 0 : index
    %13 = vector.load %arg5[%c0_8, %c0_9] : memref<64x128xbf16, #tpu.memory_space<vmem>>, vector<64x128xbf16>
    %cst_10 = arith.constant dense<0.000000e+00> : vector<64x128xf32>
    %14 = tpu.matmul %12, %13, %cst_10 {dimension_numbers = #tpu.dot_dimension_numbers<[1], [0], [0], [1], [0, 0, 1, 1], [], []>} : vector<64x64xbf16>, vector<64x128xbf16>, vector<64x128xf32> -> vector<64x128xf32>
    %c0_11 = arith.constant 0 : index
    %c0_12 = arith.constant 0 : index
    %15 = vector.load %arg6[%c0_11, %c0_12] : memref<1x128xf32, #tpu.memory_space<vmem>>, vector<1x128xf32>
    %16 = vector.broadcast %15 : vector<1x128xf32> to vector<64x128xf32>
    %17 = arith.addf %14, %16 : vector<64x128xf32>
    %cst_13 = arith.constant 0.000000e+00 : f32
    %18 = vector.broadcast %cst_13 : f32 to vector<64x128xf32>
    %19 = arith.maximumf %17, %18 : vector<64x128xf32>
    %20 = arith.truncf %19 : vector<64x128xf32> to vector<64x128xbf16>
    %c0_14 = arith.constant 0 : index
    %c0_15 = arith.constant 0 : index
    %21 = vector.load %arg7[%c0_14, %c0_15] : memref<128x256xbf16, #tpu.memory_space<vmem>>, vector<128x256xbf16>
    %cst_16 = arith.constant dense<0.000000e+00> : vector<64x256xf32>
    %22 = tpu.matmul %20, %21, %cst_16 {dimension_numbers = #tpu.dot_dimension_numbers<[1], [0], [0], [1], [0, 0, 1, 1], [], []>} : vector<64x128xbf16>, vector<128x256xbf16>, vector<64x256xf32> -> vector<64x256xf32>
    %c0_17 = arith.constant 0 : index
    %c0_18 = arith.constant 0 : index
    %23 = vector.load %arg8[%c0_17, %c0_18] : memref<1x256xf32, #tpu.memory_space<vmem>>, vector<1x256xf32>
    %24 = vector.broadcast %23 : vector<1x256xf32> to vector<64x256xf32>
    %25 = arith.addf %22, %24 : vector<64x256xf32>
    %cst_19 = arith.constant 0.000000e+00 : f32
    %26 = vector.broadcast %cst_19 : f32 to vector<64x256xf32>
    %27 = arith.maximumf %25, %26 : vector<64x256xf32>
    %28 = vector.extract_strided_slice %27 {offsets = [0, 0], sizes = [8, 256], strides = [1, 1]} : vector<64x256xf32> to vector<8x256xf32>
    %29 = vector.extract_strided_slice %27 {offsets = [8, 0], sizes = [8, 256], strides = [1, 1]} : vector<64x256xf32> to vector<8x256xf32>
    %30 = arith.maximumf %28, %29 : vector<8x256xf32>
    %31 = vector.extract_strided_slice %27 {offsets = [16, 0], sizes = [8, 256], strides = [1, 1]} : vector<64x256xf32> to vector<8x256xf32>
    %32 = arith.maximumf %30, %31 : vector<8x256xf32>
    %33 = vector.extract_strided_slice %27 {offsets = [24, 0], sizes = [8, 256], strides = [1, 1]} : vector<64x256xf32> to vector<8x256xf32>
    %34 = arith.maximumf %32, %33 : vector<8x256xf32>
    %35 = vector.extract_strided_slice %27 {offsets = [32, 0], sizes = [8, 256], strides = [1, 1]} : vector<64x256xf32> to vector<8x256xf32>
    %36 = arith.maximumf %34, %35 : vector<8x256xf32>
    %37 = vector.extract_strided_slice %27 {offsets = [40, 0], sizes = [8, 256], strides = [1, 1]} : vector<64x256xf32> to vector<8x256xf32>
    %38 = arith.maximumf %36, %37 : vector<8x256xf32>
    %39 = vector.extract_strided_slice %27 {offsets = [48, 0], sizes = [8, 256], strides = [1, 1]} : vector<64x256xf32> to vector<8x256xf32>
    %40 = arith.maximumf %38, %39 : vector<8x256xf32>
    %41 = vector.extract_strided_slice %27 {offsets = [56, 0], sizes = [8, 256], strides = [1, 1]} : vector<64x256xf32> to vector<8x256xf32>
    %42 = arith.maximumf %40, %41 : vector<8x256xf32>
    %c0_20 = arith.constant 0 : index
    %c0_21 = arith.constant 0 : index
    %43 = vector.load %arg17[%c0_20, %c0_21] : memref<8x256xf32, #tpu.memory_space<vmem>>, vector<8x256xf32>
    %44 = arith.maximumf %43, %42 : vector<8x256xf32>
    %c0_22 = arith.constant 0 : index
    %c0_23 = arith.constant 0 : index
    %45 = vector.load %arg17[%c0_22, %c0_23] : memref<8x256xf32, #tpu.memory_space<vmem>>, vector<8x256xf32>
    tpu.vector_store %arg17[%c0_22, %c0_23], %44 {strides = array<i32>} : memref<8x256xf32, #tpu.memory_space<vmem>>, vector<8x256xf32>,
    %c0_i32_24 = arith.constant 0 : i32
    %46 = arith.cmpi eq, %arg1, %c0_i32_24 : i32
    %47 = arith.extui %46 : i1 to i32
    %c0_i32_25 = arith.constant 0 : i32
    %48 = arith.cmpi ne, %47, %c0_i32_25 : i32
    scf.if %48 {
      %c0_26 = arith.constant 0 : index
      %c0_27 = arith.constant 0 : index
      %49 = vector.load %arg17[%c0_26, %c0_27] : memref<8x256xf32, #tpu.memory_space<vmem>>, vector<8x256xf32>
      %cst_28 = arith.constant dense<0xFF800000> : vector<256xf32>
      %50 = vector.multi_reduction <maximumf>, %49, %cst_28 [0] : vector<8x256xf32> to vector<256xf32>
      %51 = vector.shape_cast %50 : vector<256xf32> to vector<1x256xf32>
      %52 = arith.truncf %51 : vector<1x256xf32> to vector<1x256xbf16>
      %c0_29 = arith.constant 0 : index
      %c0_30 = arith.constant 0 : index
      %53 = vector.load %arg9[%c0_29, %c0_30] : memref<256x256xbf16, #tpu.memory_space<vmem>>, vector<256x256xbf16>
      %cst_31 = arith.constant dense<0.000000e+00> : vector<1x256xf32>
      %54 = tpu.matmul %52, %53, %cst_31 {dimension_numbers = #tpu.dot_dimension_numbers<[1], [0], [0], [1], [0, 0, 1, 1], [], []>} : vector<1x256xbf16>, vector<256x256xbf16>, vector<1x256xf32> -> vector<1x256xf32>
      %c0_32 = arith.constant 0 : index
      %c0_33 = arith.constant 0 : index
      %55 = vector.load %arg10[%c0_32, %c0_33] : memref<1x256xf32, #tpu.memory_space<vmem>>, vector<1x256xf32>
      %56 = arith.addf %54, %55 : vector<1x256xf32>
      %cst_34 = arith.constant 0.000000e+00 : f32
      %57 = vector.broadcast %cst_34 : f32 to vector<1x256xf32>
      %58 = arith.maximumf %56, %57 : vector<1x256xf32>
      %59 = arith.truncf %58 : vector<1x256xf32> to vector<1x256xbf16>
      %c0_35 = arith.constant 0 : index
      %c0_36 = arith.constant 0 : index
      %60 = vector.load %arg11[%c0_35, %c0_36] : memref<256x128xbf16, #tpu.memory_space<vmem>>, vector<256x128xbf16>
      %cst_37 = arith.constant dense<0.000000e+00> : vector<1x128xf32>
      %61 = tpu.matmul %59, %60, %cst_37 {dimension_numbers = #tpu.dot_dimension_numbers<[1], [0], [0], [1], [0, 0, 1, 1], [], []>} : vector<1x256xbf16>, vector<256x128xbf16>, vector<1x128xf32> -> vector<1x128xf32>
      %c0_38 = arith.constant 0 : index
      %c0_39 = arith.constant 0 : index
      %62 = vector.load %arg12[%c0_38, %c0_39] : memref<1x128xf32, #tpu.memory_space<vmem>>, vector<1x128xf32>
      %63 = arith.addf %61, %62 : vector<1x128xf32>
      %cst_40 = arith.constant 0.000000e+00 : f32
      %64 = vector.broadcast %cst_40 : f32 to vector<1x128xf32>
      %65 = arith.maximumf %63, %64 : vector<1x128xf32>
      %66 = arith.truncf %65 : vector<1x128xf32> to vector<1x128xbf16>
      %c0_41 = arith.constant 0 : index
      %c0_42 = arith.constant 0 : index
      %67 = vector.load %arg13[%c0_41, %c0_42] : memref<128x9xbf16, #tpu.memory_space<vmem>>, vector<128x9xbf16>
      %cst_43 = arith.constant dense<0.000000e+00> : vector<1x9xf32>
      %68 = tpu.matmul %66, %67, %cst_43 {dimension_numbers = #tpu.dot_dimension_numbers<[1], [0], [0], [1], [0, 0, 1, 1], [], []>} : vector<1x128xbf16>, vector<128x9xbf16>, vector<1x9xf32> -> vector<1x9xf32>
      %c0_44 = arith.constant 0 : index
      %c0_45 = arith.constant 0 : index
      %69 = vector.load %arg14[%c0_44, %c0_45] : memref<1x9xf32, #tpu.memory_space<vmem>>, vector<1x9xf32>
      %70 = arith.addf %68, %69 : vector<1x9xf32>
      %c0_46 = arith.constant 0 : index
      %c0_47 = arith.constant 0 : index
      %71 = vector.load %arg15[%c0_46, %c0_47] : memref<1x9xf32, #tpu.memory_space<vmem>>, vector<1x9xf32>
      %72 = arith.addf %70, %71 : vector<1x9xf32>
      %c0_48 = arith.constant 0 : index
      %c0_49 = arith.constant 0 : index
      %c0_50 = arith.constant 0 : index
      %73 = vector.load %arg16[%c0_48, %c0_49, %c0_50] : memref<1x1x9xf32, #tpu.memory_space<vmem>>, vector<1x1x9xf32>
      %74 = vector.shape_cast %73 : vector<1x1x9xf32> to vector<1x9xf32>
      %75 = vector.shape_cast %72 : vector<1x9xf32> to vector<1x1x9xf32>
      tpu.vector_store %arg16[%c0_48, %c0_49, %c0_50], %75 {strides = array<i32>} : memref<1x1x9xf32, #tpu.memory_space<vmem>>, vector<1x1x9xf32>,
    } else {
    }
    return
  }
  func.func @transform_0(%arg0: i32, %arg1: i32) -> (i32, i32, i32) {
    %c0_i32 = arith.constant 0 : i32
    %c0_i32_0 = arith.constant 0 : i32
    return %arg0, %arg1, %c0_i32 : i32, i32, i32
  }
  func.func @transform_1(%arg0: i32, %arg1: i32) -> (i32, i32) {
    %c0_i32 = arith.constant 0 : i32
    %c0_i32_0 = arith.constant 0 : i32
    %c0_i32_1 = arith.constant 0 : i32
    return %c0_i32, %c0_i32_0 : i32, i32
  }
  func.func @transform_2(%arg0: i32, %arg1: i32) -> (i32, i32) {
    %c0_i32 = arith.constant 0 : i32
    %c0_i32_0 = arith.constant 0 : i32
    %c0_i32_1 = arith.constant 0 : i32
    return %c0_i32, %c0_i32_0 : i32, i32
  }
  func.func @transform_3(%arg0: i32, %arg1: i32) -> (i32, i32) {
    %c0_i32 = arith.constant 0 : i32
    %c0_i32_0 = arith.constant 0 : i32
    %c0_i32_1 = arith.constant 0 : i32
    return %c0_i32, %c0_i32_0 : i32, i32
  }
  func.func @transform_4(%arg0: i32, %arg1: i32) -> (i32, i32) {
    %c0_i32 = arith.constant 0 : i32
    %c0_i32_0 = arith.constant 0 : i32
    %c0_i32_1 = arith.constant 0 : i32
    return %c0_i32, %c0_i32_0 : i32, i32
  }
  func.func @transform_5(%arg0: i32, %arg1: i32) -> (i32, i32) {
    %c0_i32 = arith.constant 0 : i32
    %c0_i32_0 = arith.constant 0 : i32
    %c0_i32_1 = arith.constant 0 : i32
    return %c0_i32, %c0_i32_0 : i32, i32
  }
  func.func @transform_6(%arg0: i32, %arg1: i32) -> (i32, i32) {
    %c0_i32 = arith.constant 0 : i32
    %c0_i32_0 = arith.constant 0 : i32
    %c0_i32_1 = arith.constant 0 : i32
    return %c0_i32, %c0_i32_0 : i32, i32
  }
  func.func @transform_7(%arg0: i32, %arg1: i32) -> (i32, i32) {
    %c0_i32 = arith.constant 0 : i32
    %c0_i32_0 = arith.constant 0 : i32
    %c0_i32_1 = arith.constant 0 : i32
    return %c0_i32, %c0_i32_0 : i32, i32
  }
  func.func @transform_8(%arg0: i32, %arg1: i32) -> (i32, i32) {
    %c0_i32 = arith.constant 0 : i32
    %c0_i32_0 = arith.constant 0 : i32
    %c0_i32_1 = arith.constant 0 : i32
    return %c0_i32, %c0_i32_0 : i32, i32
  }
  func.func @transform_9(%arg0: i32, %arg1: i32) -> (i32, i32) {
    %c0_i32 = arith.constant 0 : i32
    %c0_i32_0 = arith.constant 0 : i32
    %c0_i32_1 = arith.constant 0 : i32
    return %c0_i32, %c0_i32_0 : i32, i32
  }
  func.func @transform_10(%arg0: i32, %arg1: i32) -> (i32, i32) {
    %c0_i32 = arith.constant 0 : i32
    %c0_i32_0 = arith.constant 0 : i32
    %c0_i32_1 = arith.constant 0 : i32
    return %c0_i32, %c0_i32_0 : i32, i32
  }
  func.func @transform_11(%arg0: i32, %arg1: i32) -> (i32, i32) {
    %c0_i32 = arith.constant 0 : i32
    %c0_i32_0 = arith.constant 0 : i32
    %c0_i32_1 = arith.constant 0 : i32
    return %c0_i32, %c0_i32_0 : i32, i32
  }
  func.func @transform_12(%arg0: i32, %arg1: i32) -> (i32, i32) {
    %c0_i32 = arith.constant 0 : i32
    %c0_i32_0 = arith.constant 0 : i32
    %c0_i32_1 = arith.constant 0 : i32
    return %c0_i32, %c0_i32_0 : i32, i32
  }
  func.func @transform_13(%arg0: i32, %arg1: i32) -> (i32, i32) {
    %c0_i32 = arith.constant 0 : i32
    %c0_i32_0 = arith.constant 0 : i32
    %c0_i32_1 = arith.constant 0 : i32
    return %c0_i32, %c0_i32_0 : i32, i32
  }
  func.func @transform_14(%arg0: i32, %arg1: i32) -> (i32, i32, i32) {
    %c0_i32 = arith.constant 0 : i32
    %c0_i32_0 = arith.constant 0 : i32
    %c0_i32_1 = arith.constant 0 : i32
    return %arg0, %c0_i32, %c0_i32_0 : i32, i32, i32
  }
}

module attributes {stable_mosaic.version = 11 : i64} {
  func.func @_xform_conv12_kernel(%arg0: i32, %arg1: i32, %arg2: memref<1x64x3xf32, #tpu.memory_space<vmem>>, %arg3: memref<1x3x3xf32, #tpu.memory_space<vmem>>, %arg4: memref<1x3x3xf32, #tpu.memory_space<vmem>>, %arg5: memref<3x64xf32, #tpu.memory_space<vmem>>, %arg6: memref<1x64xf32, #tpu.memory_space<vmem>>, %arg7: memref<64x64xbf16, #tpu.memory_space<vmem>>, %arg8: memref<1x64xf32, #tpu.memory_space<vmem>>, %arg9: memref<1x3x64xf32, #tpu.memory_space<vmem>>, %arg10: memref<1x64x64xbf16, #tpu.memory_space<vmem>>) attributes {dimension_semantics = [#tpu.dimension_semantics<parallel>, #tpu.dimension_semantics<parallel>], iteration_bounds = array<i64: 2, 1>, scalar_prefetch = 0 : i64, scratch_operands = 0 : i64, tpu.core_type = #tpu.core_type<tc>, window_params = [{transform_indices = @transform_0, window_bounds = array<i64: 1, 64, 3>}, {transform_indices = @transform_1, window_bounds = array<i64: 1, 3, 3>}, {transform_indices = @transform_2, window_bounds = array<i64: 1, 3, 3>}, {pipeline_mode = #tpu.pipeline_mode<synchronous>, transform_indices = @transform_3, window_bounds = array<i64: 3, 64>}, {pipeline_mode = #tpu.pipeline_mode<synchronous>, transform_indices = @transform_4, window_bounds = array<i64: 1, 64>}, {pipeline_mode = #tpu.pipeline_mode<synchronous>, transform_indices = @transform_5, window_bounds = array<i64: 64, 64>}, {pipeline_mode = #tpu.pipeline_mode<synchronous>, transform_indices = @transform_6, window_bounds = array<i64: 1, 64>}, {transform_indices = @transform_7, window_bounds = array<i64: 1, 3, 64>}, {transform_indices = @transform_8, window_bounds = array<i64: 1, 64, 64>}]} {
    %c0 = arith.constant 0 : index
    %c0_0 = arith.constant 0 : index
    %c0_1 = arith.constant 0 : index
    %0 = vector.load %arg2[%c0, %c0_0, %c0_1] : memref<1x64x3xf32, #tpu.memory_space<vmem>>, vector<1x64x3xf32>
    %1 = vector.shape_cast %0 : vector<1x64x3xf32> to vector<64x3xf32>
    %c0_2 = arith.constant 0 : index
    %c0_3 = arith.constant 0 : index
    %c0_4 = arith.constant 0 : index
    %2 = vector.load %arg4[%c0_2, %c0_3, %c0_4] : memref<1x3x3xf32, #tpu.memory_space<vmem>>, vector<1x3x3xf32>
    %3 = vector.shape_cast %2 : vector<1x3x3xf32> to vector<3x3xf32>
    %cst = arith.constant dense<0.000000e+00> : vector<3x64xf32>
    %4 = tpu.matmul %3, %1, %cst {dimension_numbers = #tpu.dot_dimension_numbers<[1], [1], [0], [0], [0, 0, 1, 0], [], []>} : vector<3x3xf32>, vector<64x3xf32>, vector<3x64xf32> -> vector<3x64xf32>
    %c0_5 = arith.constant 0 : index
    %c0_6 = arith.constant 0 : index
    %c0_7 = arith.constant 0 : index
    %5 = vector.load %arg9[%c0_5, %c0_6, %c0_7] : memref<1x3x64xf32, #tpu.memory_space<vmem>>, vector<1x3x64xf32>
    %6 = vector.shape_cast %5 : vector<1x3x64xf32> to vector<3x64xf32>
    %7 = vector.shape_cast %4 : vector<3x64xf32> to vector<1x3x64xf32>
    tpu.vector_store %arg9[%c0_5, %c0_6, %c0_7], %7 {strides = array<i32>} : memref<1x3x64xf32, #tpu.memory_space<vmem>>, vector<1x3x64xf32>,
    %c0_8 = arith.constant 0 : index
    %c0_9 = arith.constant 0 : index
    %c0_10 = arith.constant 0 : index
    %8 = vector.load %arg3[%c0_8, %c0_9, %c0_10] : memref<1x3x3xf32, #tpu.memory_space<vmem>>, vector<1x3x3xf32>
    %9 = vector.shape_cast %8 : vector<1x3x3xf32> to vector<3x3xf32>
    %c0_11 = arith.constant 0 : index
    %c0_12 = arith.constant 0 : index
    %10 = vector.load %arg5[%c0_11, %c0_12] : memref<3x64xf32, #tpu.memory_space<vmem>>, vector<3x64xf32>
    %cst_13 = arith.constant dense<0.000000e+00> : vector<3x64xf32>
    %11 = tpu.matmul %9, %10, %cst_13 {dimension_numbers = #tpu.dot_dimension_numbers<[1], [0], [0], [1], [0, 0, 1, 1], [], []>} : vector<3x3xf32>, vector<3x64xf32>, vector<3x64xf32> -> vector<3x64xf32>
    %cst_14 = arith.constant dense<0.000000e+00> : vector<64x64xf32>
    %12 = tpu.matmul %1, %11, %cst_14 {dimension_numbers = #tpu.dot_dimension_numbers<[1], [0], [0], [1], [0, 0, 1, 1], [], []>} : vector<64x3xf32>, vector<3x64xf32>, vector<64x64xf32> -> vector<64x64xf32>
    %c0_15 = arith.constant 0 : index
    %c0_16 = arith.constant 0 : index
    %13 = vector.load %arg6[%c0_15, %c0_16] : memref<1x64xf32, #tpu.memory_space<vmem>>, vector<1x64xf32>
    %14 = vector.broadcast %13 : vector<1x64xf32> to vector<64x64xf32>
    %15 = arith.addf %12, %14 : vector<64x64xf32>
    %cst_17 = arith.constant 0.000000e+00 : f32
    %16 = vector.broadcast %cst_17 : f32 to vector<64x64xf32>
    %17 = arith.maximumf %15, %16 : vector<64x64xf32>
    %18 = arith.truncf %17 : vector<64x64xf32> to vector<64x64xbf16>
    %c0_18 = arith.constant 0 : index
    %c0_19 = arith.constant 0 : index
    %19 = vector.load %arg7[%c0_18, %c0_19] : memref<64x64xbf16, #tpu.memory_space<vmem>>, vector<64x64xbf16>
    %cst_20 = arith.constant dense<0.000000e+00> : vector<64x64xf32>
    %20 = tpu.matmul %18, %19, %cst_20 {dimension_numbers = #tpu.dot_dimension_numbers<[1], [0], [0], [1], [0, 0, 1, 1], [], []>} : vector<64x64xbf16>, vector<64x64xbf16>, vector<64x64xf32> -> vector<64x64xf32>
    %c0_21 = arith.constant 0 : index
    %c0_22 = arith.constant 0 : index
    %21 = vector.load %arg8[%c0_21, %c0_22] : memref<1x64xf32, #tpu.memory_space<vmem>>, vector<1x64xf32>
    %22 = vector.broadcast %21 : vector<1x64xf32> to vector<64x64xf32>
    %23 = arith.addf %20, %22 : vector<64x64xf32>
    %cst_23 = arith.constant 0.000000e+00 : f32
    %24 = vector.broadcast %cst_23 : f32 to vector<64x64xf32>
    %25 = arith.maximumf %23, %24 : vector<64x64xf32>
    %26 = arith.truncf %25 : vector<64x64xf32> to vector<64x64xbf16>
    %c0_24 = arith.constant 0 : index
    %c0_25 = arith.constant 0 : index
    %c0_26 = arith.constant 0 : index
    %27 = vector.load %arg10[%c0_24, %c0_25, %c0_26] : memref<1x64x64xbf16, #tpu.memory_space<vmem>>, vector<1x64x64xbf16>
    %28 = vector.shape_cast %27 : vector<1x64x64xbf16> to vector<64x64xbf16>
    %29 = vector.shape_cast %26 : vector<64x64xbf16> to vector<1x64x64xbf16>
    tpu.vector_store %arg10[%c0_24, %c0_25, %c0_26], %29 {strides = array<i32>} : memref<1x64x64xbf16, #tpu.memory_space<vmem>>, vector<1x64x64xbf16>,
    return
  }
  func.func @transform_0(%arg0: i32, %arg1: i32) -> (i32, i32, i32) {
    %c0_i32 = arith.constant 0 : i32
    %c0_i32_0 = arith.constant 0 : i32
    return %arg0, %arg1, %c0_i32 : i32, i32, i32
  }
  func.func @transform_1(%arg0: i32, %arg1: i32) -> (i32, i32, i32) {
    %c0_i32 = arith.constant 0 : i32
    %c0_i32_0 = arith.constant 0 : i32
    %c0_i32_1 = arith.constant 0 : i32
    return %arg0, %c0_i32, %c0_i32_0 : i32, i32, i32
  }
  func.func @transform_2(%arg0: i32, %arg1: i32) -> (i32, i32, i32) {
    %c0_i32 = arith.constant 0 : i32
    %c0_i32_0 = arith.constant 0 : i32
    %c0_i32_1 = arith.constant 0 : i32
    return %arg0, %c0_i32, %c0_i32_0 : i32, i32, i32
  }
  func.func @transform_3(%arg0: i32, %arg1: i32) -> (i32, i32) {
    %c0_i32 = arith.constant 0 : i32
    %c0_i32_0 = arith.constant 0 : i32
    %c0_i32_1 = arith.constant 0 : i32
    return %c0_i32, %c0_i32_0 : i32, i32
  }
  func.func @transform_4(%arg0: i32, %arg1: i32) -> (i32, i32) {
    %c0_i32 = arith.constant 0 : i32
    %c0_i32_0 = arith.constant 0 : i32
    %c0_i32_1 = arith.constant 0 : i32
    return %c0_i32, %c0_i32_0 : i32, i32
  }
  func.func @transform_5(%arg0: i32, %arg1: i32) -> (i32, i32) {
    %c0_i32 = arith.constant 0 : i32
    %c0_i32_0 = arith.constant 0 : i32
    %c0_i32_1 = arith.constant 0 : i32
    return %c0_i32, %c0_i32_0 : i32, i32
  }
  func.func @transform_6(%arg0: i32, %arg1: i32) -> (i32, i32) {
    %c0_i32 = arith.constant 0 : i32
    %c0_i32_0 = arith.constant 0 : i32
    %c0_i32_1 = arith.constant 0 : i32
    return %c0_i32, %c0_i32_0 : i32, i32
  }
  func.func @transform_7(%arg0: i32, %arg1: i32) -> (i32, i32, i32) {
    %c0_i32 = arith.constant 0 : i32
    %c0_i32_0 = arith.constant 0 : i32
    return %arg0, %c0_i32, %arg1 : i32, i32, i32
  }
  func.func @transform_8(%arg0: i32, %arg1: i32) -> (i32, i32, i32) {
    %c0_i32 = arith.constant 0 : i32
    %c0_i32_0 = arith.constant 0 : i32
    return %arg0, %arg1, %c0_i32 : i32, i32, i32
  }
}

module attributes {stable_mosaic.version = 11 : i64} {
  func.func @_mlp3_reduce_head_kernel(%arg0: i32, %arg1: i32, %arg2: memref<1x64x64xbf16, #tpu.memory_space<vmem>>, %arg3: memref<64x64xbf16, #tpu.memory_space<vmem>>, %arg4: memref<1x64xf32, #tpu.memory_space<vmem>>, %arg5: memref<64x128xbf16, #tpu.memory_space<vmem>>, %arg6: memref<1x128xf32, #tpu.memory_space<vmem>>, %arg7: memref<128x256xbf16, #tpu.memory_space<vmem>>, %arg8: memref<1x256xf32, #tpu.memory_space<vmem>>, %arg9: memref<256x256xbf16, #tpu.memory_space<vmem>>, %arg10: memref<1x256xf32, #tpu.memory_space<vmem>>, %arg11: memref<256x128xbf16, #tpu.memory_space<vmem>>, %arg12: memref<1x128xf32, #tpu.memory_space<vmem>>, %arg13: memref<128x4096xbf16, #tpu.memory_space<vmem>>, %arg14: memref<1x4096xf32, #tpu.memory_space<vmem>>, %arg15: memref<1x4096xf32, #tpu.memory_space<vmem>>, %arg16: memref<1x1x4096xf32, #tpu.memory_space<vmem>>, %arg17: memref<8x256xf32, #tpu.memory_space<vmem>>) attributes {dimension_semantics = [#tpu.dimension_semantics<parallel>, #tpu.dimension_semantics<arbitrary>], iteration_bounds = array<i64: 2, 1>, scalar_prefetch = 0 : i64, scratch_operands = 1 : i64, tpu.core_type = #tpu.core_type<tc>, window_params = [{transform_indices = @transform_0, window_bounds = array<i64: 1, 64, 64>}, {pipeline_mode = #tpu.pipeline_mode<synchronous>, transform_indices = @transform_1, window_bounds = array<i64: 64, 64>}, {pipeline_mode = #tpu.pipeline_mode<synchronous>, transform_indices = @transform_2, window_bounds = array<i64: 1, 64>}, {pipeline_mode = #tpu.pipeline_mode<synchronous>, transform_indices = @transform_3, window_bounds = array<i64: 64, 128>}, {pipeline_mode = #tpu.pipeline_mode<synchronous>, transform_indices = @transform_4, window_bounds = array<i64: 1, 128>}, {pipeline_mode = #tpu.pipeline_mode<synchronous>, transform_indices = @transform_5, window_bounds = array<i64: 128, 256>}, {pipeline_mode = #tpu.pipeline_mode<synchronous>, transform_indices = @transform_6, window_bounds = array<i64: 1, 256>}, {pipeline_mode = #tpu.pipeline_mode<synchronous>, transform_indices = @transform_7, window_bounds = array<i64: 256, 256>}, {pipeline_mode = #tpu.pipeline_mode<synchronous>, transform_indices = @transform_8, window_bounds = array<i64: 1, 256>}, {pipeline_mode = #tpu.pipeline_mode<synchronous>, transform_indices = @transform_9, window_bounds = array<i64: 256, 128>}, {pipeline_mode = #tpu.pipeline_mode<synchronous>, transform_indices = @transform_10, window_bounds = array<i64: 1, 128>}, {pipeline_mode = #tpu.pipeline_mode<synchronous>, transform_indices = @transform_11, window_bounds = array<i64: 128, 4096>}, {pipeline_mode = #tpu.pipeline_mode<synchronous>, transform_indices = @transform_12, window_bounds = array<i64: 1, 4096>}, {pipeline_mode = #tpu.pipeline_mode<synchronous>, transform_indices = @transform_13, window_bounds = array<i64: 1, 4096>}, {transform_indices = @transform_14, window_bounds = array<i64: 1, 1, 4096>}]} {
    %c0_i32 = arith.constant 0 : i32
    %0 = arith.cmpi eq, %arg1, %c0_i32 : i32
    %1 = arith.extui %0 : i1 to i32
    %c0_i32_0 = arith.constant 0 : i32
    %2 = arith.cmpi ne, %1, %c0_i32_0 : i32
    scf.if %2 {
      %cst_26 = arith.constant 0xFF800000 : f32
      %49 = vector.broadcast %cst_26 : f32 to vector<8x256xf32>
      %c0_27 = arith.constant 0 : index
      %c0_28 = arith.constant 0 : index
      %50 = vector.load %arg17[%c0_27, %c0_28] : memref<8x256xf32, #tpu.memory_space<vmem>>, vector<8x256xf32>
      tpu.vector_store %arg17[%c0_27, %c0_28], %49 {strides = array<i32>} : memref<8x256xf32, #tpu.memory_space<vmem>>, vector<8x256xf32>,
    } else {
    }
    %c0 = arith.constant 0 : index
    %c0_1 = arith.constant 0 : index
    %c0_2 = arith.constant 0 : index
    %3 = vector.load %arg2[%c0, %c0_1, %c0_2] : memref<1x64x64xbf16, #tpu.memory_space<vmem>>, vector<1x64x64xbf16>
    %4 = vector.shape_cast %3 : vector<1x64x64xbf16> to vector<64x64xbf16>
    %c0_3 = arith.constant 0 : index
    %c0_4 = arith.constant 0 : index
    %5 = vector.load %arg3[%c0_3, %c0_4] : memref<64x64xbf16, #tpu.memory_space<vmem>>, vector<64x64xbf16>
    %cst = arith.constant dense<0.000000e+00> : vector<64x64xf32>
    %6 = tpu.matmul %4, %5, %cst {dimension_numbers = #tpu.dot_dimension_numbers<[1], [0], [0], [1], [0, 0, 1, 1], [], []>} : vector<64x64xbf16>, vector<64x64xbf16>, vector<64x64xf32> -> vector<64x64xf32>
    %c0_5 = arith.constant 0 : index
    %c0_6 = arith.constant 0 : index
    %7 = vector.load %arg4[%c0_5, %c0_6] : memref<1x64xf32, #tpu.memory_space<vmem>>, vector<1x64xf32>
    %8 = vector.broadcast %7 : vector<1x64xf32> to vector<64x64xf32>
    %9 = arith.addf %6, %8 : vector<64x64xf32>
    %cst_7 = arith.constant 0.000000e+00 : f32
    %10 = vector.broadcast %cst_7 : f32 to vector<64x64xf32>
    %11 = arith.maximumf %9, %10 : vector<64x64xf32>
    %12 = arith.truncf %11 : vector<64x64xf32> to vector<64x64xbf16>
    %c0_8 = arith.constant 0 : index
    %c0_9 = arith.constant 0 : index
    %13 = vector.load %arg5[%c0_8, %c0_9] : memref<64x128xbf16, #tpu.memory_space<vmem>>, vector<64x128xbf16>
    %cst_10 = arith.constant dense<0.000000e+00> : vector<64x128xf32>
    %14 = tpu.matmul %12, %13, %cst_10 {dimension_numbers = #tpu.dot_dimension_numbers<[1], [0], [0], [1], [0, 0, 1, 1], [], []>} : vector<64x64xbf16>, vector<64x128xbf16>, vector<64x128xf32> -> vector<64x128xf32>
    %c0_11 = arith.constant 0 : index
    %c0_12 = arith.constant 0 : index
    %15 = vector.load %arg6[%c0_11, %c0_12] : memref<1x128xf32, #tpu.memory_space<vmem>>, vector<1x128xf32>
    %16 = vector.broadcast %15 : vector<1x128xf32> to vector<64x128xf32>
    %17 = arith.addf %14, %16 : vector<64x128xf32>
    %cst_13 = arith.constant 0.000000e+00 : f32
    %18 = vector.broadcast %cst_13 : f32 to vector<64x128xf32>
    %19 = arith.maximumf %17, %18 : vector<64x128xf32>
    %20 = arith.truncf %19 : vector<64x128xf32> to vector<64x128xbf16>
    %c0_14 = arith.constant 0 : index
    %c0_15 = arith.constant 0 : index
    %21 = vector.load %arg7[%c0_14, %c0_15] : memref<128x256xbf16, #tpu.memory_space<vmem>>, vector<128x256xbf16>
    %cst_16 = arith.constant dense<0.000000e+00> : vector<64x256xf32>
    %22 = tpu.matmul %20, %21, %cst_16 {dimension_numbers = #tpu.dot_dimension_numbers<[1], [0], [0], [1], [0, 0, 1, 1], [], []>} : vector<64x128xbf16>, vector<128x256xbf16>, vector<64x256xf32> -> vector<64x256xf32>
    %c0_17 = arith.constant 0 : index
    %c0_18 = arith.constant 0 : index
    %23 = vector.load %arg8[%c0_17, %c0_18] : memref<1x256xf32, #tpu.memory_space<vmem>>, vector<1x256xf32>
    %24 = vector.broadcast %23 : vector<1x256xf32> to vector<64x256xf32>
    %25 = arith.addf %22, %24 : vector<64x256xf32>
    %cst_19 = arith.constant 0.000000e+00 : f32
    %26 = vector.broadcast %cst_19 : f32 to vector<64x256xf32>
    %27 = arith.maximumf %25, %26 : vector<64x256xf32>
    %28 = vector.extract_strided_slice %27 {offsets = [0, 0], sizes = [8, 256], strides = [1, 1]} : vector<64x256xf32> to vector<8x256xf32>
    %29 = vector.extract_strided_slice %27 {offsets = [8, 0], sizes = [8, 256], strides = [1, 1]} : vector<64x256xf32> to vector<8x256xf32>
    %30 = arith.maximumf %28, %29 : vector<8x256xf32>
    %31 = vector.extract_strided_slice %27 {offsets = [16, 0], sizes = [8, 256], strides = [1, 1]} : vector<64x256xf32> to vector<8x256xf32>
    %32 = arith.maximumf %30, %31 : vector<8x256xf32>
    %33 = vector.extract_strided_slice %27 {offsets = [24, 0], sizes = [8, 256], strides = [1, 1]} : vector<64x256xf32> to vector<8x256xf32>
    %34 = arith.maximumf %32, %33 : vector<8x256xf32>
    %35 = vector.extract_strided_slice %27 {offsets = [32, 0], sizes = [8, 256], strides = [1, 1]} : vector<64x256xf32> to vector<8x256xf32>
    %36 = arith.maximumf %34, %35 : vector<8x256xf32>
    %37 = vector.extract_strided_slice %27 {offsets = [40, 0], sizes = [8, 256], strides = [1, 1]} : vector<64x256xf32> to vector<8x256xf32>
    %38 = arith.maximumf %36, %37 : vector<8x256xf32>
    %39 = vector.extract_strided_slice %27 {offsets = [48, 0], sizes = [8, 256], strides = [1, 1]} : vector<64x256xf32> to vector<8x256xf32>
    %40 = arith.maximumf %38, %39 : vector<8x256xf32>
    %41 = vector.extract_strided_slice %27 {offsets = [56, 0], sizes = [8, 256], strides = [1, 1]} : vector<64x256xf32> to vector<8x256xf32>
    %42 = arith.maximumf %40, %41 : vector<8x256xf32>
    %c0_20 = arith.constant 0 : index
    %c0_21 = arith.constant 0 : index
    %43 = vector.load %arg17[%c0_20, %c0_21] : memref<8x256xf32, #tpu.memory_space<vmem>>, vector<8x256xf32>
    %44 = arith.maximumf %43, %42 : vector<8x256xf32>
    %c0_22 = arith.constant 0 : index
    %c0_23 = arith.constant 0 : index
    %45 = vector.load %arg17[%c0_22, %c0_23] : memref<8x256xf32, #tpu.memory_space<vmem>>, vector<8x256xf32>
    tpu.vector_store %arg17[%c0_22, %c0_23], %44 {strides = array<i32>} : memref<8x256xf32, #tpu.memory_space<vmem>>, vector<8x256xf32>,
    %c0_i32_24 = arith.constant 0 : i32
    %46 = arith.cmpi eq, %arg1, %c0_i32_24 : i32
    %47 = arith.extui %46 : i1 to i32
    %c0_i32_25 = arith.constant 0 : i32
    %48 = arith.cmpi ne, %47, %c0_i32_25 : i32
    scf.if %48 {
      %c0_26 = arith.constant 0 : index
      %c0_27 = arith.constant 0 : index
      %49 = vector.load %arg17[%c0_26, %c0_27] : memref<8x256xf32, #tpu.memory_space<vmem>>, vector<8x256xf32>
      %cst_28 = arith.constant dense<0xFF800000> : vector<256xf32>
      %50 = vector.multi_reduction <maximumf>, %49, %cst_28 [0] : vector<8x256xf32> to vector<256xf32>
      %51 = vector.shape_cast %50 : vector<256xf32> to vector<1x256xf32>
      %52 = arith.truncf %51 : vector<1x256xf32> to vector<1x256xbf16>
      %c0_29 = arith.constant 0 : index
      %c0_30 = arith.constant 0 : index
      %53 = vector.load %arg9[%c0_29, %c0_30] : memref<256x256xbf16, #tpu.memory_space<vmem>>, vector<256x256xbf16>
      %cst_31 = arith.constant dense<0.000000e+00> : vector<1x256xf32>
      %54 = tpu.matmul %52, %53, %cst_31 {dimension_numbers = #tpu.dot_dimension_numbers<[1], [0], [0], [1], [0, 0, 1, 1], [], []>} : vector<1x256xbf16>, vector<256x256xbf16>, vector<1x256xf32> -> vector<1x256xf32>
      %c0_32 = arith.constant 0 : index
      %c0_33 = arith.constant 0 : index
      %55 = vector.load %arg10[%c0_32, %c0_33] : memref<1x256xf32, #tpu.memory_space<vmem>>, vector<1x256xf32>
      %56 = arith.addf %54, %55 : vector<1x256xf32>
      %cst_34 = arith.constant 0.000000e+00 : f32
      %57 = vector.broadcast %cst_34 : f32 to vector<1x256xf32>
      %58 = arith.maximumf %56, %57 : vector<1x256xf32>
      %59 = arith.truncf %58 : vector<1x256xf32> to vector<1x256xbf16>
      %c0_35 = arith.constant 0 : index
      %c0_36 = arith.constant 0 : index
      %60 = vector.load %arg11[%c0_35, %c0_36] : memref<256x128xbf16, #tpu.memory_space<vmem>>, vector<256x128xbf16>
      %cst_37 = arith.constant dense<0.000000e+00> : vector<1x128xf32>
      %61 = tpu.matmul %59, %60, %cst_37 {dimension_numbers = #tpu.dot_dimension_numbers<[1], [0], [0], [1], [0, 0, 1, 1], [], []>} : vector<1x256xbf16>, vector<256x128xbf16>, vector<1x128xf32> -> vector<1x128xf32>
      %c0_38 = arith.constant 0 : index
      %c0_39 = arith.constant 0 : index
      %62 = vector.load %arg12[%c0_38, %c0_39] : memref<1x128xf32, #tpu.memory_space<vmem>>, vector<1x128xf32>
      %63 = arith.addf %61, %62 : vector<1x128xf32>
      %cst_40 = arith.constant 0.000000e+00 : f32
      %64 = vector.broadcast %cst_40 : f32 to vector<1x128xf32>
      %65 = arith.maximumf %63, %64 : vector<1x128xf32>
      %66 = arith.truncf %65 : vector<1x128xf32> to vector<1x128xbf16>
      %c0_41 = arith.constant 0 : index
      %c0_42 = arith.constant 0 : index
      %67 = vector.load %arg13[%c0_41, %c0_42] : memref<128x4096xbf16, #tpu.memory_space<vmem>>, vector<128x4096xbf16>
      %cst_43 = arith.constant dense<0.000000e+00> : vector<1x4096xf32>
      %68 = tpu.matmul %66, %67, %cst_43 {dimension_numbers = #tpu.dot_dimension_numbers<[1], [0], [0], [1], [0, 0, 1, 1], [], []>} : vector<1x128xbf16>, vector<128x4096xbf16>, vector<1x4096xf32> -> vector<1x4096xf32>
      %c0_44 = arith.constant 0 : index
      %c0_45 = arith.constant 0 : index
      %69 = vector.load %arg14[%c0_44, %c0_45] : memref<1x4096xf32, #tpu.memory_space<vmem>>, vector<1x4096xf32>
      %70 = arith.addf %68, %69 : vector<1x4096xf32>
      %c0_46 = arith.constant 0 : index
      %c0_47 = arith.constant 0 : index
      %71 = vector.load %arg15[%c0_46, %c0_47] : memref<1x4096xf32, #tpu.memory_space<vmem>>, vector<1x4096xf32>
      %72 = arith.addf %70, %71 : vector<1x4096xf32>
      %c0_48 = arith.constant 0 : index
      %c0_49 = arith.constant 0 : index
      %c0_50 = arith.constant 0 : index
      %73 = vector.load %arg16[%c0_48, %c0_49, %c0_50] : memref<1x1x4096xf32, #tpu.memory_space<vmem>>, vector<1x1x4096xf32>
      %74 = vector.shape_cast %73 : vector<1x1x4096xf32> to vector<1x4096xf32>
      %75 = vector.shape_cast %72 : vector<1x4096xf32> to vector<1x1x4096xf32>
      tpu.vector_store %arg16[%c0_48, %c0_49, %c0_50], %75 {strides = array<i32>} : memref<1x1x4096xf32, #tpu.memory_space<vmem>>, vector<1x1x4096xf32>,
    } else {
    }
    return
  }
  func.func @transform_0(%arg0: i32, %arg1: i32) -> (i32, i32, i32) {
    %c0_i32 = arith.constant 0 : i32
    %c0_i32_0 = arith.constant 0 : i32
    return %arg0, %arg1, %c0_i32 : i32, i32, i32
  }
  func.func @transform_1(%arg0: i32, %arg1: i32) -> (i32, i32) {
    %c0_i32 = arith.constant 0 : i32
    %c0_i32_0 = arith.constant 0 : i32
    %c0_i32_1 = arith.constant 0 : i32
    return %c0_i32, %c0_i32_0 : i32, i32
  }
  func.func @transform_2(%arg0: i32, %arg1: i32) -> (i32, i32) {
    %c0_i32 = arith.constant 0 : i32
    %c0_i32_0 = arith.constant 0 : i32
    %c0_i32_1 = arith.constant 0 : i32
    return %c0_i32, %c0_i32_0 : i32, i32
  }
  func.func @transform_3(%arg0: i32, %arg1: i32) -> (i32, i32) {
    %c0_i32 = arith.constant 0 : i32
    %c0_i32_0 = arith.constant 0 : i32
    %c0_i32_1 = arith.constant 0 : i32
    return %c0_i32, %c0_i32_0 : i32, i32
  }
  func.func @transform_4(%arg0: i32, %arg1: i32) -> (i32, i32) {
    %c0_i32 = arith.constant 0 : i32
    %c0_i32_0 = arith.constant 0 : i32
    %c0_i32_1 = arith.constant 0 : i32
    return %c0_i32, %c0_i32_0 : i32, i32
  }
  func.func @transform_5(%arg0: i32, %arg1: i32) -> (i32, i32) {
    %c0_i32 = arith.constant 0 : i32
    %c0_i32_0 = arith.constant 0 : i32
    %c0_i32_1 = arith.constant 0 : i32
    return %c0_i32, %c0_i32_0 : i32, i32
  }
  func.func @transform_6(%arg0: i32, %arg1: i32) -> (i32, i32) {
    %c0_i32 = arith.constant 0 : i32
    %c0_i32_0 = arith.constant 0 : i32
    %c0_i32_1 = arith.constant 0 : i32
    return %c0_i32, %c0_i32_0 : i32, i32
  }
  func.func @transform_7(%arg0: i32, %arg1: i32) -> (i32, i32) {
    %c0_i32 = arith.constant 0 : i32
    %c0_i32_0 = arith.constant 0 : i32
    %c0_i32_1 = arith.constant 0 : i32
    return %c0_i32, %c0_i32_0 : i32, i32
  }
  func.func @transform_8(%arg0: i32, %arg1: i32) -> (i32, i32) {
    %c0_i32 = arith.constant 0 : i32
    %c0_i32_0 = arith.constant 0 : i32
    %c0_i32_1 = arith.constant 0 : i32
    return %c0_i32, %c0_i32_0 : i32, i32
  }
  func.func @transform_9(%arg0: i32, %arg1: i32) -> (i32, i32) {
    %c0_i32 = arith.constant 0 : i32
    %c0_i32_0 = arith.constant 0 : i32
    %c0_i32_1 = arith.constant 0 : i32
    return %c0_i32, %c0_i32_0 : i32, i32
  }
  func.func @transform_10(%arg0: i32, %arg1: i32) -> (i32, i32) {
    %c0_i32 = arith.constant 0 : i32
    %c0_i32_0 = arith.constant 0 : i32
    %c0_i32_1 = arith.constant 0 : i32
    return %c0_i32, %c0_i32_0 : i32, i32
  }
  func.func @transform_11(%arg0: i32, %arg1: i32) -> (i32, i32) {
    %c0_i32 = arith.constant 0 : i32
    %c0_i32_0 = arith.constant 0 : i32
    %c0_i32_1 = arith.constant 0 : i32
    return %c0_i32, %c0_i32_0 : i32, i32
  }
  func.func @transform_12(%arg0: i32, %arg1: i32) -> (i32, i32) {
    %c0_i32 = arith.constant 0 : i32
    %c0_i32_0 = arith.constant 0 : i32
    %c0_i32_1 = arith.constant 0 : i32
    return %c0_i32, %c0_i32_0 : i32, i32
  }
  func.func @transform_13(%arg0: i32, %arg1: i32) -> (i32, i32) {
    %c0_i32 = arith.constant 0 : i32
    %c0_i32_0 = arith.constant 0 : i32
    %c0_i32_1 = arith.constant 0 : i32
    return %c0_i32, %c0_i32_0 : i32, i32
  }
  func.func @transform_14(%arg0: i32, %arg1: i32) -> (i32, i32, i32) {
    %c0_i32 = arith.constant 0 : i32
    %c0_i32_0 = arith.constant 0 : i32
    %c0_i32_1 = arith.constant 0 : i32
    return %arg0, %c0_i32, %c0_i32_0 : i32, i32, i32
  }
}

module attributes {stable_mosaic.version = 11 : i64} {
  func.func @_mlp3_reduce_head_kernel(%arg0: i32, %arg1: i32, %arg2: memref<1x64x64xbf16, #tpu.memory_space<vmem>>, %arg3: memref<1x64x64xf32, #tpu.memory_space<vmem>>, %arg4: memref<64x64xbf16, #tpu.memory_space<vmem>>, %arg5: memref<1x64xf32, #tpu.memory_space<vmem>>, %arg6: memref<64x128xbf16, #tpu.memory_space<vmem>>, %arg7: memref<1x128xf32, #tpu.memory_space<vmem>>, %arg8: memref<128x256xbf16, #tpu.memory_space<vmem>>, %arg9: memref<1x256xf32, #tpu.memory_space<vmem>>, %arg10: memref<256x128xbf16, #tpu.memory_space<vmem>>, %arg11: memref<1x128xf32, #tpu.memory_space<vmem>>, %arg12: memref<128x64xbf16, #tpu.memory_space<vmem>>, %arg13: memref<1x64xf32, #tpu.memory_space<vmem>>, %arg14: memref<64x8xbf16, #tpu.memory_space<vmem>>, %arg15: memref<1x8xf32, #tpu.memory_space<vmem>>, %arg16: memref<1x1x8xf32, #tpu.memory_space<vmem>>, %arg17: memref<8x256xf32, #tpu.memory_space<vmem>>, %arg18: memref<64x64xbf16, #tpu.memory_space<vmem>>) attributes {dimension_semantics = [#tpu.dimension_semantics<parallel>, #tpu.dimension_semantics<arbitrary>], iteration_bounds = array<i64: 2, 1>, scalar_prefetch = 0 : i64, scratch_operands = 2 : i64, tpu.core_type = #tpu.core_type<tc>, window_params = [{transform_indices = @transform_0, window_bounds = array<i64: 1, 64, 64>}, {transform_indices = @transform_1, window_bounds = array<i64: 1, 64, 64>}, {pipeline_mode = #tpu.pipeline_mode<synchronous>, transform_indices = @transform_2, window_bounds = array<i64: 64, 64>}, {pipeline_mode = #tpu.pipeline_mode<synchronous>, transform_indices = @transform_3, window_bounds = array<i64: 1, 64>}, {pipeline_mode = #tpu.pipeline_mode<synchronous>, transform_indices = @transform_4, window_bounds = array<i64: 64, 128>}, {pipeline_mode = #tpu.pipeline_mode<synchronous>, transform_indices = @transform_5, window_bounds = array<i64: 1, 128>}, {pipeline_mode = #tpu.pipeline_mode<synchronous>, transform_indices = @transform_6, window_bounds = array<i64: 128, 256>}, {pipeline_mode = #tpu.pipeline_mode<synchronous>, transform_indices = @transform_7, window_bounds = array<i64: 1, 256>}, {pipeline_mode = #tpu.pipeline_mode<synchronous>, transform_indices = @transform_8, window_bounds = array<i64: 256, 128>}, {pipeline_mode = #tpu.pipeline_mode<synchronous>, transform_indices = @transform_9, window_bounds = array<i64: 1, 128>}, {pipeline_mode = #tpu.pipeline_mode<synchronous>, transform_indices = @transform_10, window_bounds = array<i64: 128, 64>}, {pipeline_mode = #tpu.pipeline_mode<synchronous>, transform_indices = @transform_11, window_bounds = array<i64: 1, 64>}, {pipeline_mode = #tpu.pipeline_mode<synchronous>, transform_indices = @transform_12, window_bounds = array<i64: 64, 8>}, {pipeline_mode = #tpu.pipeline_mode<synchronous>, transform_indices = @transform_13, window_bounds = array<i64: 1, 8>}, {transform_indices = @transform_14, window_bounds = array<i64: 1, 1, 8>}]} {
    %c0_i32 = arith.constant 0 : i32
    %0 = arith.cmpi eq, %arg1, %c0_i32 : i32
    %1 = arith.extui %0 : i1 to i32
    %c0_i32_0 = arith.constant 0 : i32
    %2 = arith.cmpi ne, %1, %c0_i32_0 : i32
    scf.if %2 {
      %cst_26 = arith.constant 0.000000e+00 : f32
      %49 = vector.broadcast %cst_26 : f32 to vector<8x256xf32>
      %c0_27 = arith.constant 0 : index
      %c0_28 = arith.constant 0 : index
      %50 = vector.load %arg17[%c0_27, %c0_28] : memref<8x256xf32, #tpu.memory_space<vmem>>, vector<8x256xf32>
      tpu.vector_store %arg17[%c0_27, %c0_28], %49 {strides = array<i32>} : memref<8x256xf32, #tpu.memory_space<vmem>>, vector<8x256xf32>,
      %c0_29 = arith.constant 0 : index
      %c0_30 = arith.constant 0 : index
      %c0_31 = arith.constant 0 : index
      %51 = vector.load %arg3[%c0_29, %c0_30, %c0_31] : memref<1x64x64xf32, #tpu.memory_space<vmem>>, vector<1x64x64xf32>
      %52 = vector.shape_cast %51 : vector<1x64x64xf32> to vector<64x64xf32>
      %c0_32 = arith.constant 0 : index
      %c0_33 = arith.constant 0 : index
      %53 = vector.load %arg4[%c0_32, %c0_33] : memref<64x64xbf16, #tpu.memory_space<vmem>>, vector<64x64xbf16>
      %54 = arith.extf %53 : vector<64x64xbf16> to vector<64x64xf32>
      %cst_34 = arith.constant dense<0.000000e+00> : vector<64x64xf32>
      %55 = tpu.matmul %52, %54, %cst_34 {dimension_numbers = #tpu.dot_dimension_numbers<[1], [0], [0], [1], [0, 0, 1, 1], [], []>} : vector<64x64xf32>, vector<64x64xf32>, vector<64x64xf32> -> vector<64x64xf32>
      %56 = arith.truncf %55 : vector<64x64xf32> to vector<64x64xbf16>
      %c0_35 = arith.constant 0 : index
      %c0_36 = arith.constant 0 : index
      %57 = vector.load %arg18[%c0_35, %c0_36] : memref<64x64xbf16, #tpu.memory_space<vmem>>, vector<64x64xbf16>
      tpu.vector_store %arg18[%c0_35, %c0_36], %56 {strides = array<i32>} : memref<64x64xbf16, #tpu.memory_space<vmem>>, vector<64x64xbf16>,
    } else {
    }
    %c0 = arith.constant 0 : index
    %c0_1 = arith.constant 0 : index
    %c0_2 = arith.constant 0 : index
    %3 = vector.load %arg2[%c0, %c0_1, %c0_2] : memref<1x64x64xbf16, #tpu.memory_space<vmem>>, vector<1x64x64xbf16>
    %4 = vector.shape_cast %3 : vector<1x64x64xbf16> to vector<64x64xbf16>
    %c0_3 = arith.constant 0 : index
    %c0_4 = arith.constant 0 : index
    %5 = vector.load %arg18[%c0_3, %c0_4] : memref<64x64xbf16, #tpu.memory_space<vmem>>, vector<64x64xbf16>
    %cst = arith.constant dense<0.000000e+00> : vector<64x64xf32>
    %6 = tpu.matmul %4, %5, %cst {dimension_numbers = #tpu.dot_dimension_numbers<[1], [0], [0], [1], [0, 0, 1, 1], [], []>} : vector<64x64xbf16>, vector<64x64xbf16>, vector<64x64xf32> -> vector<64x64xf32>
    %c0_5 = arith.constant 0 : index
    %c0_6 = arith.constant 0 : index
    %7 = vector.load %arg5[%c0_5, %c0_6] : memref<1x64xf32, #tpu.memory_space<vmem>>, vector<1x64xf32>
    %8 = vector.broadcast %7 : vector<1x64xf32> to vector<64x64xf32>
    %9 = arith.addf %6, %8 : vector<64x64xf32>
    %cst_7 = arith.constant 0.000000e+00 : f32
    %10 = vector.broadcast %cst_7 : f32 to vector<64x64xf32>
    %11 = arith.maximumf %9, %10 : vector<64x64xf32>
    %12 = arith.truncf %11 : vector<64x64xf32> to vector<64x64xbf16>
    %c0_8 = arith.constant 0 : index
    %c0_9 = arith.constant 0 : index
    %13 = vector.load %arg6[%c0_8, %c0_9] : memref<64x128xbf16, #tpu.memory_space<vmem>>, vector<64x128xbf16>
    %cst_10 = arith.constant dense<0.000000e+00> : vector<64x128xf32>
    %14 = tpu.matmul %12, %13, %cst_10 {dimension_numbers = #tpu.dot_dimension_numbers<[1], [0], [0], [1], [0, 0, 1, 1], [], []>} : vector<64x64xbf16>, vector<64x128xbf16>, vector<64x128xf32> -> vector<64x128xf32>
    %c0_11 = arith.constant 0 : index
    %c0_12 = arith.constant 0 : index
    %15 = vector.load %arg7[%c0_11, %c0_12] : memref<1x128xf32, #tpu.memory_space<vmem>>, vector<1x128xf32>
    %16 = vector.broadcast %15 : vector<1x128xf32> to vector<64x128xf32>
    %17 = arith.addf %14, %16 : vector<64x128xf32>
    %cst_13 = arith.constant 0.000000e+00 : f32
    %18 = vector.broadcast %cst_13 : f32 to vector<64x128xf32>
    %19 = arith.maximumf %17, %18 : vector<64x128xf32>
    %20 = arith.truncf %19 : vector<64x128xf32> to vector<64x128xbf16>
    %c0_14 = arith.constant 0 : index
    %c0_15 = arith.constant 0 : index
    %21 = vector.load %arg8[%c0_14, %c0_15] : memref<128x256xbf16, #tpu.memory_space<vmem>>, vector<128x256xbf16>
    %cst_16 = arith.constant dense<0.000000e+00> : vector<64x256xf32>
    %22 = tpu.matmul %20, %21, %cst_16 {dimension_numbers = #tpu.dot_dimension_numbers<[1], [0], [0], [1], [0, 0, 1, 1], [], []>} : vector<64x128xbf16>, vector<128x256xbf16>, vector<64x256xf32> -> vector<64x256xf32>
    %c0_17 = arith.constant 0 : index
    %c0_18 = arith.constant 0 : index
    %23 = vector.load %arg9[%c0_17, %c0_18] : memref<1x256xf32, #tpu.memory_space<vmem>>, vector<1x256xf32>
    %24 = vector.broadcast %23 : vector<1x256xf32> to vector<64x256xf32>
    %25 = arith.addf %22, %24 : vector<64x256xf32>
    %cst_19 = arith.constant 0.000000e+00 : f32
    %26 = vector.broadcast %cst_19 : f32 to vector<64x256xf32>
    %27 = arith.maximumf %25, %26 : vector<64x256xf32>
    %28 = vector.extract_strided_slice %27 {offsets = [0, 0], sizes = [8, 256], strides = [1, 1]} : vector<64x256xf32> to vector<8x256xf32>
    %29 = vector.extract_strided_slice %27 {offsets = [8, 0], sizes = [8, 256], strides = [1, 1]} : vector<64x256xf32> to vector<8x256xf32>
    %30 = arith.addf %28, %29 : vector<8x256xf32>
    %31 = vector.extract_strided_slice %27 {offsets = [16, 0], sizes = [8, 256], strides = [1, 1]} : vector<64x256xf32> to vector<8x256xf32>
    %32 = arith.addf %30, %31 : vector<8x256xf32>
    %33 = vector.extract_strided_slice %27 {offsets = [24, 0], sizes = [8, 256], strides = [1, 1]} : vector<64x256xf32> to vector<8x256xf32>
    %34 = arith.addf %32, %33 : vector<8x256xf32>
    %35 = vector.extract_strided_slice %27 {offsets = [32, 0], sizes = [8, 256], strides = [1, 1]} : vector<64x256xf32> to vector<8x256xf32>
    %36 = arith.addf %34, %35 : vector<8x256xf32>
    %37 = vector.extract_strided_slice %27 {offsets = [40, 0], sizes = [8, 256], strides = [1, 1]} : vector<64x256xf32> to vector<8x256xf32>
    %38 = arith.addf %36, %37 : vector<8x256xf32>
    %39 = vector.extract_strided_slice %27 {offsets = [48, 0], sizes = [8, 256], strides = [1, 1]} : vector<64x256xf32> to vector<8x256xf32>
    %40 = arith.addf %38, %39 : vector<8x256xf32>
    %41 = vector.extract_strided_slice %27 {offsets = [56, 0], sizes = [8, 256], strides = [1, 1]} : vector<64x256xf32> to vector<8x256xf32>
    %42 = arith.addf %40, %41 : vector<8x256xf32>
    %c0_20 = arith.constant 0 : index
    %c0_21 = arith.constant 0 : index
    %43 = vector.load %arg17[%c0_20, %c0_21] : memref<8x256xf32, #tpu.memory_space<vmem>>, vector<8x256xf32>
    %44 = arith.addf %43, %42 : vector<8x256xf32>
    %c0_22 = arith.constant 0 : index
    %c0_23 = arith.constant 0 : index
    %45 = vector.load %arg17[%c0_22, %c0_23] : memref<8x256xf32, #tpu.memory_space<vmem>>, vector<8x256xf32>
    tpu.vector_store %arg17[%c0_22, %c0_23], %44 {strides = array<i32>} : memref<8x256xf32, #tpu.memory_space<vmem>>, vector<8x256xf32>,
    %c0_i32_24 = arith.constant 0 : i32
    %46 = arith.cmpi eq, %arg1, %c0_i32_24 : i32
    %47 = arith.extui %46 : i1 to i32
    %c0_i32_25 = arith.constant 0 : i32
    %48 = arith.cmpi ne, %47, %c0_i32_25 : i32
    scf.if %48 {
      %c0_26 = arith.constant 0 : index
      %c0_27 = arith.constant 0 : index
      %49 = vector.load %arg17[%c0_26, %c0_27] : memref<8x256xf32, #tpu.memory_space<vmem>>, vector<8x256xf32>
      %cst_28 = arith.constant dense<0.000000e+00> : vector<256xf32>
      %50 = vector.multi_reduction <add>, %49, %cst_28 [0] : vector<8x256xf32> to vector<256xf32>
      %51 = vector.shape_cast %50 : vector<256xf32> to vector<1x256xf32>
      %52 = arith.truncf %51 : vector<1x256xf32> to vector<1x256xbf16>
      %c0_29 = arith.constant 0 : index
      %c0_30 = arith.constant 0 : index
      %53 = vector.load %arg10[%c0_29, %c0_30] : memref<256x128xbf16, #tpu.memory_space<vmem>>, vector<256x128xbf16>
      %cst_31 = arith.constant dense<0.000000e+00> : vector<1x128xf32>
      %54 = tpu.matmul %52, %53, %cst_31 {dimension_numbers = #tpu.dot_dimension_numbers<[1], [0], [0], [1], [0, 0, 1, 1], [], []>} : vector<1x256xbf16>, vector<256x128xbf16>, vector<1x128xf32> -> vector<1x128xf32>
      %c0_32 = arith.constant 0 : index
      %c0_33 = arith.constant 0 : index
      %55 = vector.load %arg11[%c0_32, %c0_33] : memref<1x128xf32, #tpu.memory_space<vmem>>, vector<1x128xf32>
      %56 = arith.addf %54, %55 : vector<1x128xf32>
      %cst_34 = arith.constant 0.000000e+00 : f32
      %57 = vector.broadcast %cst_34 : f32 to vector<1x128xf32>
      %58 = arith.maximumf %56, %57 : vector<1x128xf32>
      %59 = arith.truncf %58 : vector<1x128xf32> to vector<1x128xbf16>
      %c0_35 = arith.constant 0 : index
      %c0_36 = arith.constant 0 : index
      %60 = vector.load %arg12[%c0_35, %c0_36] : memref<128x64xbf16, #tpu.memory_space<vmem>>, vector<128x64xbf16>
      %cst_37 = arith.constant dense<0.000000e+00> : vector<1x64xf32>
      %61 = tpu.matmul %59, %60, %cst_37 {dimension_numbers = #tpu.dot_dimension_numbers<[1], [0], [0], [1], [0, 0, 1, 1], [], []>} : vector<1x128xbf16>, vector<128x64xbf16>, vector<1x64xf32> -> vector<1x64xf32>
      %c0_38 = arith.constant 0 : index
      %c0_39 = arith.constant 0 : index
      %62 = vector.load %arg13[%c0_38, %c0_39] : memref<1x64xf32, #tpu.memory_space<vmem>>, vector<1x64xf32>
      %63 = arith.addf %61, %62 : vector<1x64xf32>
      %cst_40 = arith.constant 0.000000e+00 : f32
      %64 = vector.broadcast %cst_40 : f32 to vector<1x64xf32>
      %65 = arith.maximumf %63, %64 : vector<1x64xf32>
      %66 = arith.truncf %65 : vector<1x64xf32> to vector<1x64xbf16>
      %c0_41 = arith.constant 0 : index
      %c0_42 = arith.constant 0 : index
      %67 = vector.load %arg14[%c0_41, %c0_42] : memref<64x8xbf16, #tpu.memory_space<vmem>>, vector<64x8xbf16>
      %cst_43 = arith.constant dense<0.000000e+00> : vector<1x8xf32>
      %68 = tpu.matmul %66, %67, %cst_43 {dimension_numbers = #tpu.dot_dimension_numbers<[1], [0], [0], [1], [0, 0, 1, 1], [], []>} : vector<1x64xbf16>, vector<64x8xbf16>, vector<1x8xf32> -> vector<1x8xf32>
      %c0_44 = arith.constant 0 : index
      %c0_45 = arith.constant 0 : index
      %69 = vector.load %arg15[%c0_44, %c0_45] : memref<1x8xf32, #tpu.memory_space<vmem>>, vector<1x8xf32>
      %70 = arith.addf %68, %69 : vector<1x8xf32>
      %cst_46 = arith.constant dense<0xFF800000> : vector<1xf32>
      %71 = vector.multi_reduction <maximumf>, %70, %cst_46 [1] : vector<1x8xf32> to vector<1xf32>
      %72 = vector.shape_cast %71 : vector<1xf32> to vector<1x1xf32>
      %73 = vector.broadcast %72 : vector<1x1xf32> to vector<1x8xf32>
      %74 = arith.subf %70, %73 : vector<1x8xf32>
      %75 = math.exp %74 : vector<1x8xf32>
      %cst_47 = arith.constant dense<0.000000e+00> : vector<1xf32>
      %76 = vector.multi_reduction <add>, %75, %cst_47 [1] : vector<1x8xf32> to vector<1xf32>
      %77 = vector.shape_cast %76 : vector<1xf32> to vector<1x1xf32>
      %78 = math.log %77 : vector<1x1xf32>
      %79 = vector.broadcast %78 : vector<1x1xf32> to vector<1x8xf32>
      %80 = arith.subf %74, %79 : vector<1x8xf32>
      %c0_48 = arith.constant 0 : index
      %c0_49 = arith.constant 0 : index
      %c0_50 = arith.constant 0 : index
      %81 = vector.load %arg16[%c0_48, %c0_49, %c0_50] : memref<1x1x8xf32, #tpu.memory_space<vmem>>, vector<1x1x8xf32>
      %82 = vector.shape_cast %81 : vector<1x1x8xf32> to vector<1x8xf32>
      %83 = vector.shape_cast %80 : vector<1x8xf32> to vector<1x1x8xf32>
      tpu.vector_store %arg16[%c0_48, %c0_49, %c0_50], %83 {strides = array<i32>} : memref<1x1x8xf32, #tpu.memory_space<vmem>>, vector<1x1x8xf32>,
    } else {
    }
    return
  }
  func.func @transform_0(%arg0: i32, %arg1: i32) -> (i32, i32, i32) {
    %c0_i32 = arith.constant 0 : i32
    %c0_i32_0 = arith.constant 0 : i32
    return %arg0, %arg1, %c0_i32 : i32, i32, i32
  }
  func.func @transform_1(%arg0: i32, %arg1: i32) -> (i32, i32, i32) {
    %c0_i32 = arith.constant 0 : i32
    %c0_i32_0 = arith.constant 0 : i32
    %c0_i32_1 = arith.constant 0 : i32
    return %arg0, %c0_i32, %c0_i32_0 : i32, i32, i32
  }
  func.func @transform_2(%arg0: i32, %arg1: i32) -> (i32, i32) {
    %c0_i32 = arith.constant 0 : i32
    %c0_i32_0 = arith.constant 0 : i32
    %c0_i32_1 = arith.constant 0 : i32
    return %c0_i32, %c0_i32_0 : i32, i32
  }
  func.func @transform_3(%arg0: i32, %arg1: i32) -> (i32, i32) {
    %c0_i32 = arith.constant 0 : i32
    %c0_i32_0 = arith.constant 0 : i32
    %c0_i32_1 = arith.constant 0 : i32
    return %c0_i32, %c0_i32_0 : i32, i32
  }
  func.func @transform_4(%arg0: i32, %arg1: i32) -> (i32, i32) {
    %c0_i32 = arith.constant 0 : i32
    %c0_i32_0 = arith.constant 0 : i32
    %c0_i32_1 = arith.constant 0 : i32
    return %c0_i32, %c0_i32_0 : i32, i32
  }
  func.func @transform_5(%arg0: i32, %arg1: i32) -> (i32, i32) {
    %c0_i32 = arith.constant 0 : i32
    %c0_i32_0 = arith.constant 0 : i32
    %c0_i32_1 = arith.constant 0 : i32
    return %c0_i32, %c0_i32_0 : i32, i32
  }
  func.func @transform_6(%arg0: i32, %arg1: i32) -> (i32, i32) {
    %c0_i32 = arith.constant 0 : i32
    %c0_i32_0 = arith.constant 0 : i32
    %c0_i32_1 = arith.constant 0 : i32
    return %c0_i32, %c0_i32_0 : i32, i32
  }
  func.func @transform_7(%arg0: i32, %arg1: i32) -> (i32, i32) {
    %c0_i32 = arith.constant 0 : i32
    %c0_i32_0 = arith.constant 0 : i32
    %c0_i32_1 = arith.constant 0 : i32
    return %c0_i32, %c0_i32_0 : i32, i32
  }
  func.func @transform_8(%arg0: i32, %arg1: i32) -> (i32, i32) {
    %c0_i32 = arith.constant 0 : i32
    %c0_i32_0 = arith.constant 0 : i32
    %c0_i32_1 = arith.constant 0 : i32
    return %c0_i32, %c0_i32_0 : i32, i32
  }
  func.func @transform_9(%arg0: i32, %arg1: i32) -> (i32, i32) {
    %c0_i32 = arith.constant 0 : i32
    %c0_i32_0 = arith.constant 0 : i32
    %c0_i32_1 = arith.constant 0 : i32
    return %c0_i32, %c0_i32_0 : i32, i32
  }
  func.func @transform_10(%arg0: i32, %arg1: i32) -> (i32, i32) {
    %c0_i32 = arith.constant 0 : i32
    %c0_i32_0 = arith.constant 0 : i32
    %c0_i32_1 = arith.constant 0 : i32
    return %c0_i32, %c0_i32_0 : i32, i32
  }
  func.func @transform_11(%arg0: i32, %arg1: i32) -> (i32, i32) {
    %c0_i32 = arith.constant 0 : i32
    %c0_i32_0 = arith.constant 0 : i32
    %c0_i32_1 = arith.constant 0 : i32
    return %c0_i32, %c0_i32_0 : i32, i32
  }
  func.func @transform_12(%arg0: i32, %arg1: i32) -> (i32, i32) {
    %c0_i32 = arith.constant 0 : i32
    %c0_i32_0 = arith.constant 0 : i32
    %c0_i32_1 = arith.constant 0 : i32
    return %c0_i32, %c0_i32_0 : i32, i32
  }
  func.func @transform_13(%arg0: i32, %arg1: i32) -> (i32, i32) {
    %c0_i32 = arith.constant 0 : i32
    %c0_i32_0 = arith.constant 0 : i32
    %c0_i32_1 = arith.constant 0 : i32
    return %c0_i32, %c0_i32_0 : i32, i32
  }
  func.func @transform_14(%arg0: i32, %arg1: i32) -> (i32, i32, i32) {
    %c0_i32 = arith.constant 0 : i32
    %c0_i32_0 = arith.constant 0 : i32
    %c0_i32_1 = arith.constant 0 : i32
    return %arg0, %c0_i32, %c0_i32_0 : i32, i32, i32
  }
}

</mosaic_0001>

<llo_original>
// kernel: classification_pointnet.5
$region0: #{classification_pointnet.5}
  #allocation0 [shape = 'u32[]', space=smem, size = 0x4, offset = 0x4, fixed_abs, tag = 'smem constant byte address 0x4 - core index']
  #allocation1 [shape = 'u32[72,128]{1,0:T(1,128)}', space=vmem, size = 0x9000, scoped, tag = 'internal scratch']
  %s0 = inlined_call_operand.vmem [shape: f32[2,64,3], index: 0, kind: input, shape index: {}]
  %s1 = inlined_call_operand.vmem [shape: f32[2,3,3], index: 1, kind: input, shape index: {}]
  %s2 = inlined_call_operand.vmem [shape: f32[2,3,3], index: 2, kind: input, shape index: {}]
  %s3 = inlined_call_operand.hbm [shape: f32[3,64], index: 3, kind: input, shape index: {}]
  %s4 = inlined_call_operand.hbm [shape: f32[1,64], index: 4, kind: input, shape index: {}]
  %s5 = inlined_call_operand.vmem [shape: bf16[64,64], index: 5, kind: input, shape index: {}]
  %s6 = inlined_call_operand.hbm [shape: f32[1,64], index: 6, kind: input, shape index: {}]
  %s7 = inlined_call_operand.vmem [shape: f32[2,3,64], index: 7, kind: output, shape index: {0}]
  %s8 = inlined_call_operand.vmem [shape: bf16[2,64,64], index: 8, kind: output, shape index: {1}]
  %9 = xla_tuple %s7, %s8
  %s10 = sld [smem:[#allocation0]]
  $region81: #{classification_pointnet.5} parent=0
    _
  %s12 = ssub.s32 1, %s10
  %s13 = scalar_select 0, %s12, %s10
  $region1: #{classification_pointnet.5} parent=0
    #allocation2 [shape = 'u8[2048]{0}', space=vmem, size = 0x800, scoped, tag = 'input window, operand 3, single buffered']
    #allocation3 [shape = 's32[2]{0}', space=sflag, size = 0x8, scoped, tag = 'scoped memory for classification_pointnet.5']
    #allocation4 [shape = 'u8[512]{0}', space=vmem, size = 0x400, scoped, tag = 'input window, operand 4, single buffered']
    #allocation5 [shape = 's32[1]{0}', space=sflag, size = 0x4, scoped, tag = 'scoped memory for classification_pointnet.5']
    #allocation6 [shape = 'u8[512]{0}', space=vmem, size = 0x400, scoped, tag = 'input window, operand 6, single buffered']
    %14 = vsyncpa [#allocation3], 0
    %15 = vsyncpa [#allocation5], 0
    loop: start=0, step=1, limit=4
    $region2: #{classification_pointnet.5} parent=1 // loop_pre_header
      _
    $region3: #{classification_pointnet.5} parent=1 // loop_header
      %s17 = sphi 0, %s21
      %p18 = scmp.ge.s32.totalorder %s17, 4
      %s24 = sphi 0, %s36
      %s25 = sphi 0, %s32
      %s26 = sphi 0, %s24
      %s27 = sphi 0, %s25
      %s28 = sphi 0, %s26
      %s29 = sphi 0, %s27
      %s41 = sphi 0, %s43
      %s44 = sphi 0, %s41
      %s45 = sphi 0, %s44
      %s61 = sphi 0, %s45
      %s67 = sphi 0, %s69
      %s70 = sphi 0, %s67
      %s71 = sphi 0, %s70
      %s87 = sphi 0, %s71
      %s93 = sphi 0, %s95
      %s96 = sphi 0, %s93
      %s97 = sphi 0, %s96
      %s113 = sphi 0, %s97
      %s117 = sphi 0, %s117
      %s119 = sphi 0, %s117
      %s120 = sphi 0, %s119
      %s134 = sphi 0, %s120
      %s138 = sphi 0, %s138
      %s140 = sphi 0, %s138
      %s141 = sphi 0, %s140
      %s155 = sphi 0, %s141
      %s159 = sphi 0, %s159
      %s161 = sphi 0, %s159
      %s162 = sphi 0, %s161
      %s176 = sphi 0, %s162
      %s180 = sphi 0, %s180
      %s182 = sphi 0, %s180
      %s183 = sphi 0, %s182
      %s197 = sphi 0, %s183
      %s205 = sphi 0, %s207
      %s208 = sphi 0, %s205
      %s209 = sphi 0, %s208
      %s225 = sphi 0, %s209
      %s233 = sphi 0, %s235
      %s236 = sphi 0, %s233
      %s237 = sphi 0, %s236
      %s253 = sphi 0, %s237
    $region4: #{classification_pointnet.5} parent=1 // loop_header_branch
      %20 = sbr.rel (%p18) target = $region8
    $region5: #{classification_pointnet.5} parent=1 // loop_body
      %s22 = ssub.s32 %s17, 1
      %s23 = ssub.s32 %s17, 2
      %s30 = sadd.s32 1, %s25
      %p31 = scmp.ge.s32.totalorder %s30, 1
      %s32 = scalar_select %p31, 0, %s30
      %s33 = sadd.s32 1, %s24
      %s34 = scalar_select %p31, %s33, %s24
      %p35 = scmp.ge.s32.totalorder %s34, 2
      %s36 = scalar_select %p35, 0, %s34
      %s37 = ssub.s32 %s24, %s36
      %s38 = ssub.s32 %s25, %s32
      %s39 = sor.u32 %s37, %s38
      %p40 = scmp.eq.s32.totalorder %s39, 0
      %s42 = sadd.s32 %s41, 1
      %s43 = scalar_select %p40, %s41, %s42
      %p46 = pneg %p40
      %p47 = scmp.eq.s32.totalorder %s17, 1
      %p48 = por %p46, %p47
      %p49 = scmp.ne.s32.totalorder %s41, %s44
      %p50 = scmp.eq.s32.totalorder %s17, 0
      %p51 = por %p49, %p50
      %p52 = scmp.ne.s32.totalorder %s41, %s44
      %p53 = scmp.eq.s32.totalorder %s22, 1
      %p54 = por %p52, %p53
      %p55 = scmp.ne.s32.totalorder %s44, %s45
      %p56 = scmp.eq.s32.totalorder %s22, 0
      %p57 = por %p55, %p56
      %p58 = scmp.ne.s32.totalorder %s44, %s45
      %p59 = scmp.eq.s32.totalorder %s23, 1
      %p60 = por %p58, %p59
      %p62 = scmp.ne.s32.totalorder %s45, %s61
      %p63 = scmp.eq.s32.totalorder %s23, 0
      %p64 = por %p62, %p63
      %s65 = ssub.s32 %s24, %s36
      %p66 = scmp.eq.s32.totalorder %s65, 0
      %s68 = sadd.s32 %s67, 1
      %s69 = scalar_select %p66, %s67, %s68
      %p72 = pneg %p66
      %p73 = scmp.eq.s32.totalorder %s17, 1
      %p74 = por %p72, %p73
      %p75 = scmp.ne.s32.totalorder %s67, %s70
      %p76 = scmp.eq.s32.totalorder %s17, 0
      %p77 = por %p75, %p76
      %p78 = scmp.ne.s32.totalorder %s67, %s70
      %p79 = scmp.eq.s32.totalorder %s22, 1
      %p80 = por %p78, %p79
      %p81 = scmp.ne.s32.totalorder %s70, %s71
      %p82 = scmp.eq.s32.totalorder %s22, 0
      %p83 = por %p81, %p82
      %p84 = scmp.ne.s32.totalorder %s70, %s71
      %p85 = scmp.eq.s32.totalorder %s23, 1
      %p86 = por %p84, %p85
      %p88 = scmp.ne.s32.totalorder %s71, %s87
      %p89 = scmp.eq.s32.totalorder %s23, 0
      %p90 = por %p88, %p89
      %s91 = ssub.s32 %s24, %s36
      %p92 = scmp.eq.s32.totalorder %s91, 0
      %s94 = sadd.s32 %s93, 1
      %s95 = scalar_select %p92, %s93, %s94
      %p98 = pneg %p92
      %p99 = scmp.eq.s32.totalorder %s17, 1
      %p100 = por %p98, %p99
      %p101 = scmp.ne.s32.totalorder %s93, %s96
      %p102 = scmp.eq.s32.totalorder %s17, 0
      %p103 = por %p101, %p102
      %p104 = scmp.ne.s32.totalorder %s93, %s96
      %p105 = scmp.eq.s32.totalorder %s22, 1
      %p106 = por %p104, %p105
      %p107 = scmp.ne.s32.totalorder %s96, %s97
      %p108 = scmp.eq.s32.totalorder %s22, 0
      %p109 = por %p107, %p108
      %p110 = scmp.ne.s32.totalorder %s96, %s97
      %p111 = scmp.eq.s32.totalorder %s23, 1
      %p112 = por %p110, %p111
      %p114 = scmp.ne.s32.totalorder %s97, %s113
      %p115 = scmp.eq.s32.totalorder %s23, 0
      %p116 = por %p114, %p115
      %s118 = sadd.s32 %s117, 1
      %p121 = scmp.eq.s32.totalorder %s17, 1
      %p122 = scmp.ne.s32.totalorder %s117, %s119
      %p123 = scmp.eq.s32.totalorder %s17, 0
      %p124 = por %p122, %p123
      %p125 = scmp.ne.s32.totalorder %s117, %s119
      %p126 = scmp.eq.s32.totalorder %s22, 1
      %p127 = por %p125, %p126
      %p128 = scmp.ne.s32.totalorder %s119, %s120
      %p129 = scmp.eq.s32.totalorder %s22, 0
      %p130 = por %p128, %p129
      %p131 = scmp.ne.s32.totalorder %s119, %s120
      %p132 = scmp.eq.s32.totalorder %s23, 1
      %p133 = por %p131, %p132
      %p135 = scmp.ne.s32.totalorder %s120, %s134
      %p136 = scmp.eq.s32.totalorder %s23, 0
      %p137 = por %p135, %p136
      %s139 = sadd.s32 %s138, 1
      %p142 = scmp.eq.s32.totalorder %s17, 1
      %p143 = scmp.ne.s32.totalorder %s138, %s140
      %p144 = scmp.eq.s32.totalorder %s17, 0
      %p145 = por %p143, %p144
      %p146 = scmp.ne.s32.totalorder %s138, %s140
      %p147 = scmp.eq.s32.totalorder %s22, 1
      %p148 = por %p146, %p147
      %p149 = scmp.ne.s32.totalorder %s140, %s141
      %p150 = scmp.eq.s32.totalorder %s22, 0
      %p151 = por %p149, %p150
      %p152 = scmp.ne.s32.totalorder %s140, %s141
      %p153 = scmp.eq.s32.totalorder %s23, 1
      %p154 = por %p152, %p153
      %p156 = scmp.ne.s32.totalorder %s141, %s155
      %p157 = scmp.eq.s32.totalorder %s23, 0
      %p158 = por %p156, %p157
      %s160 = sadd.s32 %s159, 1
      %p163 = scmp.eq.s32.totalorder %s17, 1
      %p164 = scmp.ne.s32.totalorder %s159, %s161
      %p165 = scmp.eq.s32.totalorder %s17, 0
      %p166 = por %p164, %p165
      %p167 = scmp.ne.s32.totalorder %s159, %s161
      %p168 = scmp.eq.s32.totalorder %s22, 1
      %p169 = por %p167, %p168
      %p170 = scmp.ne.s32.totalorder %s161, %s162
      %p171 = scmp.eq.s32.totalorder %s22, 0
      %p172 = por %p170, %p171
      %p173 = scmp.ne.s32.totalorder %s161, %s162
      %p174 = scmp.eq.s32.totalorder %s23, 1
      %p175 = por %p173, %p174
      %p177 = scmp.ne.s32.totalorder %s162, %s176
      %p178 = scmp.eq.s32.totalorder %s23, 0
      %p179 = por %p177, %p178
      %s181 = sadd.s32 %s180, 1
      %p184 = scmp.eq.s32.totalorder %s17, 1
      %p185 = scmp.ne.s32.totalorder %s180, %s182
      %p186 = scmp.eq.s32.totalorder %s17, 0
      %p187 = por %p185, %p186
      %p188 = scmp.ne.s32.totalorder %s180, %s182
      %p189 = scmp.eq.s32.totalorder %s22, 1
      %p190 = por %p188, %p189
      %p191 = scmp.ne.s32.totalorder %s182, %s183
      %p192 = scmp.eq.s32.totalorder %s22, 0
      %p193 = por %p191, %p192
      %p194 = scmp.ne.s32.totalorder %s182, %s183
      %p195 = scmp.eq.s32.totalorder %s23, 1
      %p196 = por %p194, %p195
      %p198 = scmp.ne.s32.totalorder %s183, %s197
      %p199 = scmp.eq.s32.totalorder %s23, 0
      %p200 = por %p198, %p199
      %s201 = ssub.s32 %s24, %s36
      %s202 = ssub.s32 %s25, %s32
      %s203 = sor.u32 %s201, %s202
      %p204 = scmp.eq.s32.totalorder %s203, 0
      %s206 = sadd.s32 %s205, 1
      %s207 = scalar_select %p204, %s205, %s206
      %p210 = pneg %p204
      %p211 = scmp.eq.s32.totalorder %s17, 1
      %p212 = por %p210, %p211
      %p213 = scmp.ne.s32.totalorder %s205, %s208
      %p214 = scmp.eq.s32.totalorder %s17, 0
      %p215 = por %p213, %p214
      %p216 = scmp.ne.s32.totalorder %s205, %s208
      %p217 = scmp.eq.s32.totalorder %s22, 1
      %p218 = por %p216, %p217
      %p219 = scmp.ne.s32.totalorder %s208, %s209
      %p220 = scmp.eq.s32.totalorder %s22, 0
      %p221 = por %p219, %p220
      %p222 = scmp.ne.s32.totalorder %s208, %s209
      %p223 = scmp.eq.s32.totalorder %s23, 1
      %p224 = por %p222, %p223
      %p226 = scmp.ne.s32.totalorder %s209, %s225
      %p227 = scmp.eq.s32.totalorder %s23, 0
      %p228 = por %p226, %p227
      %s229 = ssub.s32 %s24, %s36
      %s230 = ssub.s32 %s25, %s32
      %s231 = sor.u32 %s229, %s230
      %p232 = scmp.eq.s32.totalorder %s231, 0
      %s234 = sadd.s32 %s233, 1
      %s235 = scalar_select %p232, %s233, %s234
      %p238 = pneg %p232
      %p239 = scmp.eq.s32.totalorder %s17, 1
      %p240 = por %p238, %p239
      %p241 = scmp.ne.s32.totalorder %s233, %s236
      %p242 = scmp.eq.s32.totalorder %s17, 0
      %p243 = por %p241, %p242
      %p244 = scmp.ne.s32.totalorder %s233, %s236
      %p245 = scmp.eq.s32.totalorder %s22, 1
      %p246 = por %p244, %p245
      %p247 = scmp.ne.s32.totalorder %s236, %s237
      %p248 = scmp.eq.s32.totalorder %s22, 0
      %p249 = por %p247, %p248
      %p250 = scmp.ne.s32.totalorder %s236, %s237
      %p251 = scmp.eq.s32.totalorder %s23, 1
      %p252 = por %p250, %p251
      %p254 = scmp.ne.s32.totalorder %s237, %s253
      %p255 = scmp.eq.s32.totalorder %s23, 0
      %p256 = por %p254, %p255
      %p257 = scmp.le.s32.totalorder 1, %s17
      %p258 = scmp.lt.s32.totalorder %s17, 3
      %p259 = pnand %p257, %p258
      %p260 = pneg %p259
      // Predicated region
      $region9: #{classification_pointnet.5} parent=5 // pred_check
        _
      $region10: #{classification_pointnet.5} parent=5 // pred_check_branch
        %262 = sbr.rel (%p259) target = $region12
      $region11: #{classification_pointnet.5} parent=5 // pred_region
        %s263 = ssub.s32 %s17, 1
        // Predicated region
        $region13: #{classification_pointnet.5} parent=11 // pred_check
          %p264 = pneg %p130
        $region14: #{classification_pointnet.5} parent=11 // pred_check_branch
          %266 = sbr.rel (%p264) target = $region16
        $region15: #{classification_pointnet.5} parent=11 // pred_region
          %268 = vsyncadd [#allocation3], 0
          %s270 = sshll.u32 %s3, 4
          %s271 = int_to_ptr.hbm [resolvable:$true] %s270
          %s272 = sshll.u32 [#allocation2], 4
          %s273 = int_to_ptr.vmem [resolvable:$true] %s272
          %275 = dma.hbm_to_vmem [thread:$0]  %s271, 64, %s273, [#allocation3]
        $region16: #{classification_pointnet.5} parent=11 // pred_fallthru
          _
        // Predicated region
        $region17: #{classification_pointnet.5} parent=11 // pred_check
          %p276 = pneg %p151
        $region18: #{classification_pointnet.5} parent=11 // pred_check_branch
          %278 = sbr.rel (%p276) target = $region20
        $region19: #{classification_pointnet.5} parent=11 // pred_region
          %280 = vsyncadd [#allocation5], 0
          %s282 = sshll.u32 %s4, 4
          %s283 = int_to_ptr.hbm [resolvable:$true] %s282
          %s284 = sshll.u32 [#allocation4], 4
          %s285 = int_to_ptr.vmem [resolvable:$true] %s284
          %287 = dma.hbm_to_vmem [thread:$0]  %s283, 16, %s285, [#allocation5]
        $region20: #{classification_pointnet.5} parent=11 // pred_fallthru
          _
        // Predicated region
        $region21: #{classification_pointnet.5} parent=11 // pred_check
          %p288 = pneg %p172
        $region22: #{classification_pointnet.5} parent=11 // pred_check_branch
          %290 = sbr.rel (%p288) target = $region24
        $region23: #{classification_pointnet.5} parent=11 // pred_region
          _
        $region24: #{classification_pointnet.5} parent=11 // pred_fallthru
          _
        // Predicated region
        $region25: #{classification_pointnet.5} parent=11 // pred_check
          %p291 = pneg %p193
        $region26: #{classification_pointnet.5} parent=11 // pred_check_branch
          %293 = sbr.rel (%p291) target = $region28
        $region27: #{classification_pointnet.5} parent=11 // pred_region
          %295 = vsyncadd [#allocation5], 0
          %s297 = sshll.u32 %s6, 4
          %s298 = int_to_ptr.hbm [resolvable:$true] %s297
          %s299 = sshll.u32 [#allocation6], 4
          %s300 = int_to_ptr.vmem [resolvable:$true] %s299
          %302 = dma.hbm_to_vmem [thread:$0]  %s298, 16, %s300, [#allocation5]
        $region28: #{classification_pointnet.5} parent=11 // pred_fallthru
          _
      $region12: #{classification_pointnet.5} parent=5 // pred_fallthru
        _
      %p303 = scmp.lt.s32.totalorder %s17, 2
      // Predicated region
      $region29: #{classification_pointnet.5} parent=5 // pred_check
        %p304 = pneg %p303
      $region30: #{classification_pointnet.5} parent=5 // pred_check_branch
        %306 = sbr.rel (%p304) target = $region32
      $region31: #{classification_pointnet.5} parent=5 // pred_region
        // Predicated region
        $region33: #{classification_pointnet.5} parent=31 // pred_check
          %p307 = pneg %p51
        $region34: #{classification_pointnet.5} parent=31 // pred_check_branch
          %309 = sbr.rel (%p307) target = $region36
        $region35: #{classification_pointnet.5} parent=31 // pred_region
          %s310 = smul.u32 8, %s25
          %p311 = scmp.lt.s32.totalorder %s24, 1
          %s312 = scalar_select %p311, %s24, 1
          %p313 = scmp.lt.s32.totalorder %s310, 7
          %s314 = scalar_select %p313, %s310, 7
          %s315 = smul.addr %s312, 8
          %s316 = sadd.s32 %s314, %s315
          %s317 = smul.addr %s316, 8
          %s318 = scalar_lea.vmem %s0, %s317
          %s319 = smul.u32 8, %s25
        $region36: #{classification_pointnet.5} parent=31 // pred_fallthru
          _
        // Predicated region
        $region37: #{classification_pointnet.5} parent=31 // pred_check
          %p320 = pneg %p77
        $region38: #{classification_pointnet.5} parent=31 // pred_check_branch
          %322 = sbr.rel (%p320) target = $region40
        $region39: #{classification_pointnet.5} parent=31 // pred_region
          %p323 = scmp.lt.s32.totalorder %s24, 1
          %s324 = scalar_select %p323, %s24, 1
          %s325 = smul.addr %s324, 4
          %s326 = scalar_lea.vmem %s1, %s325
        $region40: #{classification_pointnet.5} parent=31 // pred_fallthru
          _
        // Predicated region
        $region41: #{classification_pointnet.5} parent=31 // pred_check
          %p327 = pneg %p103
        $region42: #{classification_pointnet.5} parent=31 // pred_check_branch
          %329 = sbr.rel (%p327) target = $region44
        $region43: #{classification_pointnet.5} parent=31 // pred_region
          %p330 = scmp.lt.s32.totalorder %s24, 1
          %s331 = scalar_select %p330, %s24, 1
          %s332 = smul.addr %s331, 4
          %s333 = scalar_lea.vmem %s2, %s332
        $region44: #{classification_pointnet.5} parent=31 // pred_fallthru
          _
      $region32: #{classification_pointnet.5} parent=5 // pred_fallthru
        _
      %p334 = scmp.le.s32.totalorder 1, %s17
      %p335 = scmp.lt.s32.totalorder %s17, 3
      %p336 = pnand %p334, %p335
      %p337 = pneg %p336
      // Predicated region
      $region45: #{classification_pointnet.5} parent=5 // pred_check
        _
      $region46: #{classification_pointnet.5} parent=5 // pred_check_branch
        %339 = sbr.rel (%p336) target = $region48
      $region47: #{classification_pointnet.5} parent=5 // pred_region
        %s340 = ssub.s32 %s17, 1
        // Predicated region
        $region49: #{classification_pointnet.5} parent=47 // pred_check
          %p341 = pneg %p130
        $region50: #{classification_pointnet.5} parent=47 // pred_check_branch
          %343 = sbr.rel (%p341) target = $region52
        $region51: #{classification_pointnet.5} parent=47 // pred_region
          %345 = dma.done [#allocation3], 64
        $region52: #{classification_pointnet.5} parent=47 // pred_fallthru
          _
        // Predicated region
        $region53: #{classification_pointnet.5} parent=47 // pred_check
          %p346 = pneg %p151
        $region54: #{classification_pointnet.5} parent=47 // pred_check_branch
          %348 = sbr.rel (%p346) target = $region56
        $region55: #{classification_pointnet.5} parent=47 // pred_region
          %350 = dma.done [#allocation5], 16
        $region56: #{classification_pointnet.5} parent=47 // pred_fallthru
          _
        // Predicated region
        $region57: #{classification_pointnet.5} parent=47 // pred_check
          %p351 = pneg %p193
        $region58: #{classification_pointnet.5} parent=47 // pred_check_branch
          %353 = sbr.rel (%p351) target = $region60
        $region59: #{classification_pointnet.5} parent=47 // pred_region
          %355 = dma.done [#allocation5], 16
        $region60: #{classification_pointnet.5} parent=47 // pred_fallthru
          _
        %s356 = smul.u32 8, %s27
        %p357 = scmp.lt.s32.totalorder %s26, 1
        %s358 = scalar_select %p357, %s26, 1
        %p359 = scmp.lt.s32.totalorder %s356, 7
        %s360 = scalar_select %p359, %s356, 7
        %s361 = smul.addr %s358, 8
        %s362 = sadd.s32 %s360, %s361
        %s363 = smul.addr %s362, 8
        %s364 = scalar_lea.vmem %s0, %s363
        %p365 = pneg %p57
        %p366 = pneg %p54
        %p367 = scmp.lt.s32.totalorder %s26, 1
        %s368 = scalar_select %p367, %s26, 1
        %s369 = smul.addr %s368, 4
        %s370 = scalar_lea.vmem %s1, %s369
        %p371 = pneg %p83
        %p372 = pneg %p80
        %p373 = scmp.lt.s32.totalorder %s26, 1
        %s374 = scalar_select %p373, %s26, 1
        %s375 = smul.addr %s374, 4
        %s376 = scalar_lea.vmem %s2, %s375
        %p377 = pneg %p109
        %p378 = pneg %p106
        %p379 = pneg %p130
        %p380 = pneg %p127
        %p381 = pneg %p151
        %p382 = pneg %p148
        %p383 = pneg %p172
        %p384 = pneg %p169
        %p385 = pneg %p193
        %p386 = pneg %p190
        %p387 = pneg %p221
        %p388 = pneg %p218
        %p389 = scmp.lt.s32.totalorder %s26, 1
        %s390 = scalar_select %p389, %s26, 1
        %p391 = scmp.lt.s32.totalorder %s27, 0
        %s392 = scalar_select %p391, %s27, 0
        %s393 = sadd.s32 %s392, %s390
        %s394 = smul.addr %s393, 4
        %s395 = scalar_lea.vmem %s7, %s394
        %p396 = pneg %p249
        %p397 = pneg %p246
        %s398 = smul.u32 8, %s27
        %p399 = scmp.lt.s32.totalorder %s26, 1
        %s400 = scalar_select %p399, %s26, 1
        %p401 = scmp.lt.s32.totalorder %s398, 7
        %s402 = scalar_select %p401, %s398, 7
        %s403 = smul.addr %s400, 8
        %s404 = sadd.s32 %s402, %s403
        %s405 = smul.addr %s404, 4
        %s406 = scalar_lea.vmem %s8, %s405
        %s407 = smul.u32 8, %s27
        %p408 = scmp.lt.s32.totalorder %s26, 1
        %s409 = scalar_select %p408, %s26, 1
        %p410 = scmp.lt.s32.totalorder %s407, 7
        %s411 = scalar_select %p410, %s407, 7
        %s412 = smul.addr %s409, 8
        %s413 = sadd.s32 %s411, %s412
        %s414 = smul.addr %s413, 8
        %s415 = scalar_lea.vmem %s0, %s414
        %s416 = smul.u32 8, %s27
        %p417 = scmp.lt.s32.totalorder %s26, 1
        %s418 = scalar_select %p417, %s26, 1
        %s419 = smul.addr %s418, 4
        %s420 = scalar_lea.vmem %s1, %s419
        %p421 = scmp.lt.s32.totalorder %s26, 1
        %s422 = scalar_select %p421, %s26, 1
        %s423 = smul.addr %s422, 4
        %s424 = scalar_lea.vmem %s2, %s423
        %p425 = scmp.lt.s32.totalorder %s26, 1
        %s426 = scalar_select %p425, %s26, 1
        %p427 = scmp.lt.s32.totalorder %s27, 0
        %s428 = scalar_select %p427, %s27, 0
        %s429 = sadd.s32 %s428, %s426
        %s430 = smul.addr %s429, 4
        %s431 = scalar_lea.vmem %s7, %s430
        %s432 = smul.u32 8, %s27
        %p433 = scmp.lt.s32.totalorder %s26, 1
        %s434 = scalar_select %p433, %s26, 1
        %p435 = scmp.lt.s32.totalorder %s432, 7
        %s436 = scalar_select %p435, %s432, 7
        %s437 = smul.addr %s434, 8
        %s438 = sadd.s32 %s436, %s437
        %s439 = smul.addr %s438, 4
        %s440 = scalar_lea.vmem %s8, %s439
        %s441 = smul.u32 8, %s27
        %v443 = vld [vmem:[%s415] sm:$0xff]
        %v444 = vld [vmem:[%s415 + $0x8] sm:$0xff]
        %v445 = vld [vmem:[%s415 + $0x10] sm:$0xff]
        %v446 = vld [vmem:[%s415 + $0x18] sm:$0xff]
        %v447 = vld [vmem:[%s415 + $0x20] sm:$0xff]
        %v448 = vld [vmem:[%s415 + $0x28] sm:$0xff]
        %v449 = vld [vmem:[%s415 + $0x30] sm:$0xff]
        %v450 = vld [vmem:[%s415 + $0x38] sm:$0xff]
        %v451 = vld [vmem:[%s424] sm:$0x7]
        %vm452 = vcmask 23552
        %v454 = vsel %vm452, %v451, 0
        %v457 = vsel %vm452, %v443, 0
        %v460 = vsel %vm452, %v444, 0
        %v463 = vsel %vm452, %v445, 0
        %v466 = vsel %vm452, %v446, 0
        %v469 = vsel %vm452, %v447, 0
        %v472 = vsel %vm452, %v448, 0
        %v475 = vsel %vm452, %v449, 0
        %v478 = vsel %vm452, %v450, 0
        %480 = vmatpush.xpose.msra.mxu0 0.0
        %481 = vmatpush.xpose.msra.mxu0 0.0
        %482 = vmatpush.xpose.msra.mxu0 0.0
        %483 = vmatpush.xpose.msra.mxu0 0.0
        %484 = vmatpush.xpose.msra.mxu0 0.0
        %485 = vmatpush.xpose.msra.mxu0 0.0
        %486 = vmatpush.xpose.msra.mxu0 0.0
        %487 = vmatpush.xpose.msra.mxu0 0.0
        %488 = vmatpush.xpose.msra.mxu0 %v478
        %489 = vmatpush.xpose.msra.mxu0 %v475
        %490 = vmatpush.xpose.msra.mxu0 %v472
        %491 = vmatpush.xpose.msra.mxu0 %v469
        %492 = vmatpush.xpose.msra.mxu0 %v466
        %493 = vmatpush.xpose.msra.mxu0 %v463
        %494 = vmatpush.xpose.msra.mxu0 %v460
        %495 = vmatpush.xpose.msra.mxu0 %v457
        %496 = vmatmul.f32.gmra.mxu0 %v454
        %v497 = vpop.f32.mrf.mxu0
        %v498 = vadd.f32 0.0, %v497
        %499 = vdwg.mxu0
        %vm500 = vcmask 518144
        %501 = vst.msk [vmem:[%s431] sm:$0x7] %vm500, %v498
        %v502 = vld [vmem:[%s420] sm:$0x7]
        %v503 = vld [vmem:[#allocation2] sm:$0x7]
        %v505 = vsel %vm452, %v502, 0
        %vm507 = vcmask 1042432
        %v509 = vsel %vm507, %v503, 0
        %511 = vmatpush.msra.mxu0 0.0
        %512 = vmatpush.msra.mxu0 0.0
        %513 = vmatpush.msra.mxu0 0.0
        %514 = vmatpush.msra.mxu0 0.0
        %515 = vmatpush.msra.mxu0 0.0
        %516 = vmatpush.msra.mxu0 0.0
        %517 = vmatpush.msra.mxu0 0.0
        %518 = vmatpush.msra.mxu0 0.0
        %519 = vmatpush.msra.mxu0 0.0
        %520 = vmatpush.msra.mxu0 0.0
        %521 = vmatpush.msra.mxu0 0.0
        %522 = vmatpush.msra.mxu0 0.0
        %523 = vmatpush.msra.mxu0 0.0
        %524 = vmatpush.msra.mxu0 0.0
        %525 = vmatpush.msra.mxu0 0.0
        %526 = vmatpush.msra.mxu0 %v509
        %527 = vmatmul.f32.gmra.mxu0 %v505
        %v528 = vpop.f32.mrf.mxu0
        %v529 = vadd.f32 0.0, %v528
        %530 = vdwg.mxu0
        %v531 = vld [vmem:[#allocation4] sm:$0x1]
        %v533 = vperm.slane %v531, 0
        %v536 = vsel %vm507, %v529, 0
        %538 = vmatpush.msra.mxu0 0.0
        %539 = vmatpush.msra.mxu0 0.0
        %540 = vmatpush.msra.mxu0 0.0
        %541 = vmatpush.msra.mxu0 0.0
        %542 = vmatpush.msra.mxu0 0.0
        %543 = vmatpush.msra.mxu0 0.0
        %544 = vmatpush.msra.mxu0 0.0
        %545 = vmatpush.msra.mxu0 0.0
        %546 = vmatpush.msra.mxu0 0.0
        %547 = vmatpush.msra.mxu0 0.0
        %548 = vmatpush.msra.mxu0 0.0
        %549 = vmatpush.msra.mxu0 0.0
        %550 = vmatpush.msra.mxu0 0.0
        %551 = vmatpush.msra.mxu0 0.0
        %552 = vmatpush.msra.mxu0 0.0
        %553 = vmatpush.msra.mxu0 %v536
        %554 = vmatmul.f32.gmra.mxu0 %v457
        %v555 = vpop.f32.mrf.mxu0
        %v556 = vadd.f32 %v533, %v555
        %557 = vmatmul.f32.gmra.mxu0 %v460
        %v558 = vpop.f32.mrf.mxu0
        %v559 = vadd.f32 %v533, %v558
        %560 = vmatmul.f32.gmra.mxu0 %v463
        %v561 = vpop.f32.mrf.mxu0
        %v562 = vadd.f32 %v533, %v561
        %563 = vmatmul.f32.gmra.mxu0 %v466
        %v564 = vpop.f32.mrf.mxu0
        %v565 = vadd.f32 %v533, %v564
        %566 = vmatmul.f32.gmra.mxu0 %v469
        %v567 = vpop.f32.mrf.mxu0
        %v568 = vadd.f32 %v533, %v567
        %569 = vmatmul.f32.gmra.mxu0 %v472
        %v570 = vpop.f32.mrf.mxu0
        %v571 = vadd.f32 %v533, %v570
        %572 = vmatmul.f32.gmra.mxu0 %v475
        %v573 = vpop.f32.mrf.mxu0
        %v574 = vadd.f32 %v533, %v573
        %575 = vmatmul.f32.gmra.mxu0 %v478
        %v576 = vpop.f32.mrf.mxu0
        %v577 = vadd.f32 %v533, %v576
        %578 = vdwg.mxu0
        %v579 = vmax.f32 %v556, 0.0
        %v580 = vmax.f32 %v559, 0.0
        %v581 = vmax.f32 %v562, 0.0
        %v582 = vmax.f32 %v565, 0.0
        %v583 = vmax.f32 %v568, 0.0
        %v584 = vmax.f32 %v571, 0.0
        %v585 = vmax.f32 %v574, 0.0
        %v586 = vmax.f32 %v577, 0.0
        %v587 = vpack.c.bf16 %v580, %v579
        %v588 = vpack.c.bf16 %v582, %v581
        %v589 = vpack.c.bf16 %v584, %v583
        %v590 = vpack.c.bf16 %v586, %v585
        %v591 = vld [vmem:[%s5] sm:$0xf]
        %v592 = vld [vmem:[%s5 + $0x4] sm:$0xf]
        %v593 = vld [vmem:[%s5 + $0x8] sm:$0xf]
        %v594 = vld [vmem:[%s5 + $0xc] sm:$0xf]
        %v595 = vld [vmem:[%s5 + $0x10] sm:$0xf]
        %v596 = vld [vmem:[%s5 + $0x14] sm:$0xf]
        %v597 = vld [vmem:[%s5 + $0x18] sm:$0xf]
        %v598 = vld [vmem:[%s5 + $0x1c] sm:$0xf]
        %v599 = vld [vmem:[#allocation6] sm:$0x1]
        %v601 = vperm.slane %v599, 0
        %v611 = vunpack.c.l.b16 %v591
        %v612 = vunpack.c.l.b16 %v592
        %v613 = vunpack.c.l.b16 %v593
        %v614 = vunpack.c.l.b16 %v594
        %v615 = vunpack.c.l.b16 %v595
        %v616 = vunpack.c.l.b16 %v596
        %v617 = vunpack.c.l.b16 %v597
        %v618 = vunpack.c.l.b16 %v598
        %v619 = vpack.c.b16 %v612, %v611
        %v620 = vpack.c.b16 %v614, %v613
        %v621 = vpack.c.b16 %v616, %v615
        %v622 = vpack.c.b16 %v618, %v617
        %vm627 = vcmask 523264
        %v629 = vsel %vm627, %v587, 0
        %v632 = vsel %vm627, %v588, 0
        %v635 = vsel %vm627, %v589, 0
        %v638 = vsel %vm627, %v590, 0
        %640 = vmatpush.bf16.msra.mxu0 0
        %641 = vmatpush.bf16.msra.mxu0 0
        %642 = vmatpush.bf16.msra.mxu0 0
        %643 = vmatpush.bf16.msra.mxu0 0
        %644 = vmatpush.bf16.msra.mxu0 %v622
        %645 = vmatpush.bf16.msra.mxu0 %v621
        %646 = vmatpush.bf16.msra.mxu0 %v620
        %647 = vmatpush.bf16.msra.mxu0 %v619
        %648 = vmatmul.bf16.gmra.mxu0 %v629
        %v649 = vpop.f32.mrf.mxu0
        %v650 = vadd.f32 %v601, %v649
        %v651 = vpop.f32.mrf.mxu0
        %v652 = vadd.f32 %v601, %v651
        %653 = vmatmul.bf16.gmra.mxu0 %v632
        %v654 = vpop.f32.mrf.mxu0
        %v655 = vadd.f32 %v601, %v654
        %v656 = vpop.f32.mrf.mxu0
        %v657 = vadd.f32 %v601, %v656
        %658 = vmatmul.bf16.gmra.mxu0 %v635
        %v659 = vpop.f32.mrf.mxu0
        %v660 = vadd.f32 %v601, %v659
        %v661 = vpop.f32.mrf.mxu0
        %v662 = vadd.f32 %v601, %v661
        %663 = vmatmul.bf16.gmra.mxu0 %v638
        %v664 = vpop.f32.mrf.mxu0
        %v665 = vadd.f32 %v601, %v664
        %v666 = vpop.f32.mrf.mxu0
        %v667 = vadd.f32 %v601, %v666
        %668 = vdwg.mxu0
        %v669 = vmax.f32 %v650, 0.0
        %v670 = vmax.f32 %v652, 0.0
        %v671 = vmax.f32 %v655, 0.0
        %v672 = vmax.f32 %v657, 0.0
        %v673 = vmax.f32 %v660, 0.0
        %v674 = vmax.f32 %v662, 0.0
        %v675 = vmax.f32 %v665, 0.0
        %v676 = vmax.f32 %v667, 0.0
        %v677 = vpack.c.bf16 %v669, %v669
        %v678 = vpack.c.bf16 %v670, %v670
        %v679 = vpack.c.bf16 %v671, %v671
        %v680 = vpack.c.bf16 %v672, %v672
        %v681 = vpack.c.bf16 %v673, %v673
        %v682 = vpack.c.bf16 %v674, %v674
        %v683 = vpack.c.bf16 %v675, %v675
        %v684 = vpack.c.bf16 %v676, %v676
        %vm685 = vcmask 519168
        %686 = vst.msk [vmem:[%s440] sm:$0xf] %vm685, %v677
        %687 = vst.msk [vmem:[%s440 + $0x4] sm:$0xf] %vm685, %v678
        %688 = vst.msk [vmem:[%s440 + $0x8] sm:$0xf] %vm685, %v679
        %689 = vst.msk [vmem:[%s440 + $0xc] sm:$0xf] %vm685, %v680
        %690 = vst.msk [vmem:[%s440 + $0x10] sm:$0xf] %vm685, %v681
        %691 = vst.msk [vmem:[%s440 + $0x14] sm:$0xf] %vm685, %v682
        %692 = vst.msk [vmem:[%s440 + $0x18] sm:$0xf] %vm685, %v683
        %693 = vst.msk [vmem:[%s440 + $0x1c] sm:$0xf] %vm685, %v684
        %p694 = scmp.lt.s32.totalorder %s26, 1
        %s695 = scalar_select %p694, %s26, 1
        %p696 = scmp.lt.s32.totalorder %s27, 0
        %s697 = scalar_select %p696, %s27, 0
        %s698 = sadd.s32 %s697, %s695
        %s699 = smul.addr %s698, 4
        %s700 = scalar_lea.vmem %s7, %s699
        %s701 = smul.u32 8, %s27
        %p702 = scmp.lt.s32.totalorder %s26, 1
        %s703 = scalar_select %p702, %s26, 1
        %p704 = scmp.lt.s32.totalorder %s701, 7
        %s705 = scalar_select %p704, %s701, 7
        %s706 = smul.addr %s703, 8
        %s707 = sadd.s32 %s705, %s706
        %s708 = smul.addr %s707, 4
        %s709 = scalar_lea.vmem %s8, %s708
        // Predicated region
        $region61: #{classification_pointnet.5} parent=47 // pred_check
          %p710 = pneg %p218
        $region62: #{classification_pointnet.5} parent=47 // pred_check_branch
          %712 = sbr.rel (%p710) target = $region64
        $region63: #{classification_pointnet.5} parent=47 // pred_region
          _
        $region64: #{classification_pointnet.5} parent=47 // pred_fallthru
          _
        // Predicated region
        $region65: #{classification_pointnet.5} parent=47 // pred_check
          %p713 = pneg %p246
        $region66: #{classification_pointnet.5} parent=47 // pred_check_branch
          %715 = sbr.rel (%p713) target = $region68
        $region67: #{classification_pointnet.5} parent=47 // pred_region
          %s716 = smul.u32 8, %s27
        $region68: #{classification_pointnet.5} parent=47 // pred_fallthru
          _
      $region48: #{classification_pointnet.5} parent=5 // pred_fallthru
        _
      %p717 = scmp.le.s32.totalorder 2, %s17
      // Predicated region
      $region69: #{classification_pointnet.5} parent=5 // pred_check
        %p718 = pneg %p717
      $region70: #{classification_pointnet.5} parent=5 // pred_check_branch
        %720 = sbr.rel (%p718) target = $region72
      $region71: #{classification_pointnet.5} parent=5 // pred_region
        %s721 = ssub.s32 %s17, 2
        // Predicated region
        $region73: #{classification_pointnet.5} parent=71 // pred_check
          %p722 = pneg %p224
        $region74: #{classification_pointnet.5} parent=71 // pred_check_branch
          %724 = sbr.rel (%p722) target = $region76
        $region75: #{classification_pointnet.5} parent=71 // pred_region
          %p725 = scmp.lt.s32.totalorder %s28, 1
          %s726 = scalar_select %p725, %s28, 1
          %p727 = scmp.lt.s32.totalorder %s29, 0
          %s728 = scalar_select %p727, %s29, 0
          %s729 = sadd.s32 %s728, %s726
          %s730 = smul.addr %s729, 4
          %s731 = scalar_lea.vmem %s7, %s730
        $region76: #{classification_pointnet.5} parent=71 // pred_fallthru
          _
        // Predicated region
        $region77: #{classification_pointnet.5} parent=71 // pred_check
          %p732 = pneg %p252
        $region78: #{classification_pointnet.5} parent=71 // pred_check_branch
          %734 = sbr.rel (%p732) target = $region80
        $region79: #{classification_pointnet.5} parent=71 // pred_region
          %s735 = smul.u32 8, %s29
          %p736 = scmp.lt.s32.totalorder %s28, 1
          %s737 = scalar_select %p736, %s28, 1
          %p738 = scmp.lt.s32.totalorder %s735, 7
          %s739 = scalar_select %p738, %s735, 7
          %s740 = smul.addr %s737, 8
          %s741 = sadd.s32 %s739, %s740
          %s742 = smul.addr %s741, 4
          %s743 = scalar_lea.vmem %s8, %s742
        $region80: #{classification_pointnet.5} parent=71 // pred_fallthru
          _
      $region72: #{classification_pointnet.5} parent=5 // pred_fallthru
        _
    $region6: #{classification_pointnet.5} parent=1 // loop_footer
      %s21 = sadd.s32 1, %s17
    $region7: #{classification_pointnet.5} parent=1 // loop_footer_branch
      %16 = sbr.rel target = $region3
    $region8: #{classification_pointnet.5} parent=1 // loop_exit
      _
    %744 = vsyncpa [#allocation3], 1
    %s745 = scalar_lea.sflag [#allocation3], 1
    %746 = vsyncpa %s745, 1
    %747 = vsyncpa [#allocation5], 1

// kernel: classification_pointnet.4
$region0: #{classification_pointnet.4}
  #allocation0 [shape = 'u32[]', space=smem, size = 0x4, offset = 0x4, fixed_abs, tag = 'smem constant byte address 0x4 - core index']
  #allocation1 [shape = 'u32[72,128]{1,0:T(1,128)}', space=vmem, size = 0x9000, scoped, tag = 'internal scratch']
  #allocation2 [shape = 'f32[8,256]{1,0:T(8,128)}', space=vmem, size = 0x2000, scoped, tag = 'scratch operand']
  %s0 = inlined_call_operand.vmem [shape: f32[2,64,3], index: 0, kind: input, shape index: {}]
  %s1 = inlined_call_operand.hbm [shape: f32[3,64], index: 1, kind: input, shape index: {}]
  %s2 = inlined_call_operand.hbm [shape: f32[1,64], index: 2, kind: input, shape index: {}]
  %s3 = inlined_call_operand.vmem [shape: bf16[64,128], index: 3, kind: input, shape index: {}]
  %s4 = inlined_call_operand.hbm [shape: f32[1,128], index: 4, kind: input, shape index: {}]
  %s5 = inlined_call_operand.vmem [shape: bf16[128,256], index: 5, kind: input, shape index: {}]
  %s6 = inlined_call_operand.hbm [shape: f32[1,256], index: 6, kind: input, shape index: {}]
  %s7 = inlined_call_operand.vmem [shape: bf16[256,256], index: 7, kind: input, shape index: {}]
  %s8 = inlined_call_operand.hbm [shape: f32[1,256], index: 8, kind: input, shape index: {}]
  %s9 = inlined_call_operand.vmem [shape: bf16[256,128], index: 9, kind: input, shape index: {}]
  %s10 = inlined_call_operand.hbm [shape: f32[1,128], index: 10, kind: input, shape index: {}]
  %s11 = inlined_call_operand.vmem [shape: bf16[128,9], index: 11, kind: input, shape index: {}]
  %s12 = inlined_call_operand.hbm [shape: f32[1,9], index: 12, kind: input, shape index: {}]
  %s13 = inlined_call_operand.vmem [shape: f32[1,9], index: 13, kind: input, shape index: {}]
  %s14 = inlined_call_operand.vmem [shape: f32[2,1,9], index: 14, kind: output, shape index: {}]
  %s15 = sld [smem:[#allocation0]]
  $region125: #{classification_pointnet.4} parent=0
    _
  %s17 = ssub.s32 1, %s15
  %s18 = scalar_select 0, %s17, %s15
  $region1: #{classification_pointnet.4} parent=0
    #allocation3 [shape = 'u8[2048]{0}', space=vmem, size = 0x800, scoped, tag = 'input window, operand 1, single buffered']
    #allocation4 [shape = 's32[2]{0}', space=sflag, size = 0x8, scoped, tag = 'scoped memory for classification_pointnet.4']
    #allocation5 [shape = 'u8[512]{0}', space=vmem, size = 0x400, scoped, tag = 'input window, operand 2, single buffered']
    #allocation6 [shape = 's32[1]{0}', space=sflag, size = 0x4, scoped, tag = 'scoped memory for classification_pointnet.4']
    #allocation7 [shape = 'u8[512]{0}', space=vmem, size = 0x400, scoped, tag = 'input window, operand 4, single buffered']
    #allocation8 [shape = 'u8[1024]{0}', space=vmem, size = 0x400, scoped, tag = 'input window, operand 6, single buffered']
    #allocation9 [shape = 's32[1]{0}', space=sflag, size = 0x4, scoped, tag = 'scoped memory for classification_pointnet.4']
    #allocation10 [shape = 'u8[1024]{0}', space=vmem, size = 0x400, scoped, tag = 'input window, operand 8, single buffered']
    #allocation11 [shape = 'u8[512]{0}', space=vmem, size = 0x400, scoped, tag = 'input window, operand 10, single buffered']
    #allocation12 [shape = 's32[1]{0}', space=sflag, size = 0x4, scoped, tag = 'scoped memory for classification_pointnet.4']
    #allocation13 [shape = 'u8[512]{0}', space=vmem, size = 0x400, scoped, tag = 'input window, operand 12, single buffered']
    %19 = vsyncpa [#allocation4], 0
    %20 = vsyncpa [#allocation6], 0
    %21 = vsyncpa [#allocation9], 0
    %22 = vsyncpa [#allocation12], 0
    loop: start=0, step=1, limit=4
    $region2: #{classification_pointnet.4} parent=1 // loop_pre_header
      _
    $region3: #{classification_pointnet.4} parent=1 // loop_header
      %s24 = sphi 0, %s28
      %p25 = scmp.ge.s32.totalorder %s24, 4
      %s31 = sphi 0, %s43
      %s32 = sphi 0, %s39
      %s33 = sphi 0, %s31
      %s34 = sphi 0, %s32
      %s35 = sphi 0, %s33
      %s36 = sphi 0, %s34
      %s48 = sphi 0, %s50
      %s51 = sphi 0, %s48
      %s52 = sphi 0, %s51
      %s68 = sphi 0, %s52
      %s72 = sphi 0, %s72
      %s74 = sphi 0, %s72
      %s75 = sphi 0, %s74
      %s89 = sphi 0, %s75
      %s93 = sphi 0, %s93
      %s95 = sphi 0, %s93
      %s96 = sphi 0, %s95
      %s110 = sphi 0, %s96
      %s114 = sphi 0, %s114
      %s116 = sphi 0, %s114
      %s117 = sphi 0, %s116
      %s131 = sphi 0, %s117
      %s135 = sphi 0, %s135
      %s137 = sphi 0, %s135
      %s138 = sphi 0, %s137
      %s152 = sphi 0, %s138
      %s156 = sphi 0, %s156
      %s158 = sphi 0, %s156
      %s159 = sphi 0, %s158
      %s173 = sphi 0, %s159
      %s177 = sphi 0, %s177
      %s179 = sphi 0, %s177
      %s180 = sphi 0, %s179
      %s194 = sphi 0, %s180
      %s198 = sphi 0, %s198
      %s200 = sphi 0, %s198
      %s201 = sphi 0, %s200
      %s215 = sphi 0, %s201
      %s219 = sphi 0, %s219
      %s221 = sphi 0, %s219
      %s222 = sphi 0, %s221
      %s236 = sphi 0, %s222
      %s240 = sphi 0, %s240
      %s242 = sphi 0, %s240
      %s243 = sphi 0, %s242
      %s257 = sphi 0, %s243
      %s261 = sphi 0, %s261
      %s263 = sphi 0, %s261
      %s264 = sphi 0, %s263
      %s278 = sphi 0, %s264
      %s282 = sphi 0, %s282
      %s284 = sphi 0, %s282
      %s285 = sphi 0, %s284
      %s299 = sphi 0, %s285
      %s303 = sphi 0, %s303
      %s305 = sphi 0, %s303
      %s306 = sphi 0, %s305
      %s320 = sphi 0, %s306
      %s324 = sphi 0, %s324
      %s326 = sphi 0, %s324
      %s327 = sphi 0, %s326
      %s341 = sphi 0, %s327
      %s347 = sphi 0, %s349
      %s350 = sphi 0, %s347
      %s351 = sphi 0, %s350
      %s367 = sphi 0, %s351
    $region4: #{classification_pointnet.4} parent=1 // loop_header_branch
      %27 = sbr.rel (%p25) target = $region8
    $region5: #{classification_pointnet.4} parent=1 // loop_body
      %s29 = ssub.s32 %s24, 1
      %s30 = ssub.s32 %s24, 2
      %s37 = sadd.s32 1, %s32
      %p38 = scmp.ge.s32.totalorder %s37, 1
      %s39 = scalar_select %p38, 0, %s37
      %s40 = sadd.s32 1, %s31
      %s41 = scalar_select %p38, %s40, %s31
      %p42 = scmp.ge.s32.totalorder %s41, 2
      %s43 = scalar_select %p42, 0, %s41
      %s44 = ssub.s32 %s31, %s43
      %s45 = ssub.s32 %s32, %s39
      %s46 = sor.u32 %s44, %s45
      %p47 = scmp.eq.s32.totalorder %s46, 0
      %s49 = sadd.s32 %s48, 1
      %s50 = scalar_select %p47, %s48, %s49
      %p53 = pneg %p47
      %p54 = scmp.eq.s32.totalorder %s24, 1
      %p55 = por %p53, %p54
      %p56 = scmp.ne.s32.totalorder %s48, %s51
      %p57 = scmp.eq.s32.totalorder %s24, 0
      %p58 = por %p56, %p57
      %p59 = scmp.ne.s32.totalorder %s48, %s51
      %p60 = scmp.eq.s32.totalorder %s29, 1
      %p61 = por %p59, %p60
      %p62 = scmp.ne.s32.totalorder %s51, %s52
      %p63 = scmp.eq.s32.totalorder %s29, 0
      %p64 = por %p62, %p63
      %p65 = scmp.ne.s32.totalorder %s51, %s52
      %p66 = scmp.eq.s32.totalorder %s30, 1
      %p67 = por %p65, %p66
      %p69 = scmp.ne.s32.totalorder %s52, %s68
      %p70 = scmp.eq.s32.totalorder %s30, 0
      %p71 = por %p69, %p70
      %s73 = sadd.s32 %s72, 1
      %p76 = scmp.eq.s32.totalorder %s24, 1
      %p77 = scmp.ne.s32.totalorder %s72, %s74
      %p78 = scmp.eq.s32.totalorder %s24, 0
      %p79 = por %p77, %p78
      %p80 = scmp.ne.s32.totalorder %s72, %s74
      %p81 = scmp.eq.s32.totalorder %s29, 1
      %p82 = por %p80, %p81
      %p83 = scmp.ne.s32.totalorder %s74, %s75
      %p84 = scmp.eq.s32.totalorder %s29, 0
      %p85 = por %p83, %p84
      %p86 = scmp.ne.s32.totalorder %s74, %s75
      %p87 = scmp.eq.s32.totalorder %s30, 1
      %p88 = por %p86, %p87
      %p90 = scmp.ne.s32.totalorder %s75, %s89
      %p91 = scmp.eq.s32.totalorder %s30, 0
      %p92 = por %p90, %p91
      %s94 = sadd.s32 %s93, 1
      %p97 = scmp.eq.s32.totalorder %s24, 1
      %p98 = scmp.ne.s32.totalorder %s93, %s95
      %p99 = scmp.eq.s32.totalorder %s24, 0
      %p100 = por %p98, %p99
      %p101 = scmp.ne.s32.totalorder %s93, %s95
      %p102 = scmp.eq.s32.totalorder %s29, 1
      %p103 = por %p101, %p102
      %p104 = scmp.ne.s32.totalorder %s95, %s96
      %p105 = scmp.eq.s32.totalorder %s29, 0
      %p106 = por %p104, %p105
      %p107 = scmp.ne.s32.totalorder %s95, %s96
      %p108 = scmp.eq.s32.totalorder %s30, 1
      %p109 = por %p107, %p108
      %p111 = scmp.ne.s32.totalorder %s96, %s110
      %p112 = scmp.eq.s32.totalorder %s30, 0
      %p113 = por %p111, %p112
      %s115 = sadd.s32 %s114, 1
      %p118 = scmp.eq.s32.totalorder %s24, 1
      %p119 = scmp.ne.s32.totalorder %s114, %s116
      %p120 = scmp.eq.s32.totalorder %s24, 0
      %p121 = por %p119, %p120
      %p122 = scmp.ne.s32.totalorder %s114, %s116
      %p123 = scmp.eq.s32.totalorder %s29, 1
      %p124 = por %p122, %p123
      %p125 = scmp.ne.s32.totalorder %s116, %s117
      %p126 = scmp.eq.s32.totalorder %s29, 0
      %p127 = por %p125, %p126
      %p128 = scmp.ne.s32.totalorder %s116, %s117
      %p129 = scmp.eq.s32.totalorder %s30, 1
      %p130 = por %p128, %p129
      %p132 = scmp.ne.s32.totalorder %s117, %s131
      %p133 = scmp.eq.s32.totalorder %s30, 0
      %p134 = por %p132, %p133
      %s136 = sadd.s32 %s135, 1
      %p139 = scmp.eq.s32.totalorder %s24, 1
      %p140 = scmp.ne.s32.totalorder %s135, %s137
      %p141 = scmp.eq.s32.totalorder %s24, 0
      %p142 = por %p140, %p141
      %p143 = scmp.ne.s32.totalorder %s135, %s137
      %p144 = scmp.eq.s32.totalorder %s29, 1
      %p145 = por %p143, %p144
      %p146 = scmp.ne.s32.totalorder %s137, %s138
      %p147 = scmp.eq.s32.totalorder %s29, 0
      %p148 = por %p146, %p147
      %p149 = scmp.ne.s32.totalorder %s137, %s138
      %p150 = scmp.eq.s32.totalorder %s30, 1
      %p151 = por %p149, %p150
      %p153 = scmp.ne.s32.totalorder %s138, %s152
      %p154 = scmp.eq.s32.totalorder %s30, 0
      %p155 = por %p153, %p154
      %s157 = sadd.s32 %s156, 1
      %p160 = scmp.eq.s32.totalorder %s24, 1
      %p161 = scmp.ne.s32.totalorder %s156, %s158
      %p162 = scmp.eq.s32.totalorder %s24, 0
      %p163 = por %p161, %p162
      %p164 = scmp.ne.s32.totalorder %s156, %s158
      %p165 = scmp.eq.s32.totalorder %s29, 1
      %p166 = por %p164, %p165
      %p167 = scmp.ne.s32.totalorder %s158, %s159
      %p168 = scmp.eq.s32.totalorder %s29, 0
      %p169 = por %p167, %p168
      %p170 = scmp.ne.s32.totalorder %s158, %s159
      %p171 = scmp.eq.s32.totalorder %s30, 1
      %p172 = por %p170, %p171
      %p174 = scmp.ne.s32.totalorder %s159, %s173
      %p175 = scmp.eq.s32.totalorder %s30, 0
      %p176 = por %p174, %p175
      %s178 = sadd.s32 %s177, 1
      %p181 = scmp.eq.s32.totalorder %s24, 1
      %p182 = scmp.ne.s32.totalorder %s177, %s179
      %p183 = scmp.eq.s32.totalorder %s24, 0
      %p184 = por %p182, %p183
      %p185 = scmp.ne.s32.totalorder %s177, %s179
      %p186 = scmp.eq.s32.totalorder %s29, 1
      %p187 = por %p185, %p186
      %p188 = scmp.ne.s32.totalorder %s179, %s180
      %p189 = scmp.eq.s32.totalorder %s29, 0
      %p190 = por %p188, %p189
      %p191 = scmp.ne.s32.totalorder %s179, %s180
      %p192 = scmp.eq.s32.totalorder %s30, 1
      %p193 = por %p191, %p192
      %p195 = scmp.ne.s32.totalorder %s180, %s194
      %p196 = scmp.eq.s32.totalorder %s30, 0
      %p197 = por %p195, %p196
      %s199 = sadd.s32 %s198, 1
      %p202 = scmp.eq.s32.totalorder %s24, 1
      %p203 = scmp.ne.s32.totalorder %s198, %s200
      %p204 = scmp.eq.s32.totalorder %s24, 0
      %p205 = por %p203, %p204
      %p206 = scmp.ne.s32.totalorder %s198, %s200
      %p207 = scmp.eq.s32.totalorder %s29, 1
      %p208 = por %p206, %p207
      %p209 = scmp.ne.s32.totalorder %s200, %s201
      %p210 = scmp.eq.s32.totalorder %s29, 0
      %p211 = por %p209, %p210
      %p212 = scmp.ne.s32.totalorder %s200, %s201
      %p213 = scmp.eq.s32.totalorder %s30, 1
      %p214 = por %p212, %p213
      %p216 = scmp.ne.s32.totalorder %s201, %s215
      %p217 = scmp.eq.s32.totalorder %s30, 0
      %p218 = por %p216, %p217
      %s220 = sadd.s32 %s219, 1
      %p223 = scmp.eq.s32.totalorder %s24, 1
      %p224 = scmp.ne.s32.totalorder %s219, %s221
      %p225 = scmp.eq.s32.totalorder %s24, 0
      %p226 = por %p224, %p225
      %p227 = scmp.ne.s32.totalorder %s219, %s221
      %p228 = scmp.eq.s32.totalorder %s29, 1
      %p229 = por %p227, %p228
      %p230 = scmp.ne.s32.totalorder %s221, %s222
      %p231 = scmp.eq.s32.totalorder %s29, 0
      %p232 = por %p230, %p231
      %p233 = scmp.ne.s32.totalorder %s221, %s222
      %p234 = scmp.eq.s32.totalorder %s30, 1
      %p235 = por %p233, %p234
      %p237 = scmp.ne.s32.totalorder %s222, %s236
      %p238 = scmp.eq.s32.totalorder %s30, 0
      %p239 = por %p237, %p238
      %s241 = sadd.s32 %s240, 1
      %p244 = scmp.eq.s32.totalorder %s24, 1
      %p245 = scmp.ne.s32.totalorder %s240, %s242
      %p246 = scmp.eq.s32.totalorder %s24, 0
      %p247 = por %p245, %p246
      %p248 = scmp.ne.s32.totalorder %s240, %s242
      %p249 = scmp.eq.s32.totalorder %s29, 1
      %p250 = por %p248, %p249
      %p251 = scmp.ne.s32.totalorder %s242, %s243
      %p252 = scmp.eq.s32.totalorder %s29, 0
      %p253 = por %p251, %p252
      %p254 = scmp.ne.s32.totalorder %s242, %s243
      %p255 = scmp.eq.s32.totalorder %s30, 1
      %p256 = por %p254, %p255
      %p258 = scmp.ne.s32.totalorder %s243, %s257
      %p259 = scmp.eq.s32.totalorder %s30, 0
      %p260 = por %p258, %p259
      %s262 = sadd.s32 %s261, 1
      %p265 = scmp.eq.s32.totalorder %s24, 1
      %p266 = scmp.ne.s32.totalorder %s261, %s263
      %p267 = scmp.eq.s32.totalorder %s24, 0
      %p268 = por %p266, %p267
      %p269 = scmp.ne.s32.totalorder %s261, %s263
      %p270 = scmp.eq.s32.totalorder %s29, 1
      %p271 = por %p269, %p270
      %p272 = scmp.ne.s32.totalorder %s263, %s264
      %p273 = scmp.eq.s32.totalorder %s29, 0
      %p274 = por %p272, %p273
      %p275 = scmp.ne.s32.totalorder %s263, %s264
      %p276 = scmp.eq.s32.totalorder %s30, 1
      %p277 = por %p275, %p276
      %p279 = scmp.ne.s32.totalorder %s264, %s278
      %p280 = scmp.eq.s32.totalorder %s30, 0
      %p281 = por %p279, %p280
      %s283 = sadd.s32 %s282, 1
      %p286 = scmp.eq.s32.totalorder %s24, 1
      %p287 = scmp.ne.s32.totalorder %s282, %s284
      %p288 = scmp.eq.s32.totalorder %s24, 0
      %p289 = por %p287, %p288
      %p290 = scmp.ne.s32.totalorder %s282, %s284
      %p291 = scmp.eq.s32.totalorder %s29, 1
      %p292 = por %p290, %p291
      %p293 = scmp.ne.s32.totalorder %s284, %s285
      %p294 = scmp.eq.s32.totalorder %s29, 0
      %p295 = por %p293, %p294
      %p296 = scmp.ne.s32.totalorder %s284, %s285
      %p297 = scmp.eq.s32.totalorder %s30, 1
      %p298 = por %p296, %p297
      %p300 = scmp.ne.s32.totalorder %s285, %s299
      %p301 = scmp.eq.s32.totalorder %s30, 0
      %p302 = por %p300, %p301
      %s304 = sadd.s32 %s303, 1
      %p307 = scmp.eq.s32.totalorder %s24, 1
      %p308 = scmp.ne.s32.totalorder %s303, %s305
      %p309 = scmp.eq.s32.totalorder %s24, 0
      %p310 = por %p308, %p309
      %p311 = scmp.ne.s32.totalorder %s303, %s305
      %p312 = scmp.eq.s32.totalorder %s29, 1
      %p313 = por %p311, %p312
      %p314 = scmp.ne.s32.totalorder %s305, %s306
      %p315 = scmp.eq.s32.totalorder %s29, 0
      %p316 = por %p314, %p315
      %p317 = scmp.ne.s32.totalorder %s305, %s306
      %p318 = scmp.eq.s32.totalorder %s30, 1
      %p319 = por %p317, %p318
      %p321 = scmp.ne.s32.totalorder %s306, %s320
      %p322 = scmp.eq.s32.totalorder %s30, 0
      %p323 = por %p321, %p322
      %s325 = sadd.s32 %s324, 1
      %p328 = scmp.eq.s32.totalorder %s24, 1
      %p329 = scmp.ne.s32.totalorder %s324, %s326
      %p330 = scmp.eq.s32.totalorder %s24, 0
      %p331 = por %p329, %p330
      %p332 = scmp.ne.s32.totalorder %s324, %s326
      %p333 = scmp.eq.s32.totalorder %s29, 1
      %p334 = por %p332, %p333
      %p335 = scmp.ne.s32.totalorder %s326, %s327
      %p336 = scmp.eq.s32.totalorder %s29, 0
      %p337 = por %p335, %p336
      %p338 = scmp.ne.s32.totalorder %s326, %s327
      %p339 = scmp.eq.s32.totalorder %s30, 1
      %p340 = por %p338, %p339
      %p342 = scmp.ne.s32.totalorder %s327, %s341
      %p343 = scmp.eq.s32.totalorder %s30, 0
      %p344 = por %p342, %p343
      %s345 = ssub.s32 %s31, %s43
      %p346 = scmp.eq.s32.totalorder %s345, 0
      %s348 = sadd.s32 %s347, 1
      %s349 = scalar_select %p346, %s347, %s348
      %p352 = pneg %p346
      %p353 = scmp.eq.s32.totalorder %s24, 1
      %p354 = por %p352, %p353
      %p355 = scmp.ne.s32.totalorder %s347, %s350
      %p356 = scmp.eq.s32.totalorder %s24, 0
      %p357 = por %p355, %p356
      %p358 = scmp.ne.s32.totalorder %s347, %s350
      %p359 = scmp.eq.s32.totalorder %s29, 1
      %p360 = por %p358, %p359
      %p361 = scmp.ne.s32.totalorder %s350, %s351
      %p362 = scmp.eq.s32.totalorder %s29, 0
      %p363 = por %p361, %p362
      %p364 = scmp.ne.s32.totalorder %s350, %s351
      %p365 = scmp.eq.s32.totalorder %s30, 1
      %p366 = por %p364, %p365
      %p368 = scmp.ne.s32.totalorder %s351, %s367
      %p369 = scmp.eq.s32.totalorder %s30, 0
      %p370 = por %p368, %p369
      %p371 = scmp.le.s32.totalorder 1, %s24
      %p372 = scmp.lt.s32.totalorder %s24, 3
      %p373 = pnand %p371, %p372
      %p374 = pneg %p373
      // Predicated region
      $region9: #{classification_pointnet.4} parent=5 // pred_check
        _
      $region10: #{classification_pointnet.4} parent=5 // pred_check_branch
        %376 = sbr.rel (%p373) target = $region12
      $region11: #{classification_pointnet.4} parent=5 // pred_region
        %s377 = ssub.s32 %s24, 1
        // Predicated region
        $region13: #{classification_pointnet.4} parent=11 // pred_check
          %p378 = pneg %p85
        $region14: #{classification_pointnet.4} parent=11 // pred_check_branch
          %380 = sbr.rel (%p378) target = $region16
        $region15: #{classification_pointnet.4} parent=11 // pred_region
          %382 = vsyncadd [#allocation4], 0
          %s384 = sshll.u32 %s1, 4
          %s385 = int_to_ptr.hbm [resolvable:$true] %s384
          %s386 = sshll.u32 [#allocation3], 4
          %s387 = int_to_ptr.vmem [resolvable:$true] %s386
          %389 = dma.hbm_to_vmem [thread:$0]  %s385, 64, %s387, [#allocation4]
        $region16: #{classification_pointnet.4} parent=11 // pred_fallthru
          _
        // Predicated region
        $region17: #{classification_pointnet.4} parent=11 // pred_check
          %p390 = pneg %p106
        $region18: #{classification_pointnet.4} parent=11 // pred_check_branch
          %392 = sbr.rel (%p390) target = $region20
        $region19: #{classification_pointnet.4} parent=11 // pred_region
          %394 = vsyncadd [#allocation6], 0
          %s396 = sshll.u32 %s2, 4
          %s397 = int_to_ptr.hbm [resolvable:$true] %s396
          %s398 = sshll.u32 [#allocation5], 4
          %s399 = int_to_ptr.vmem [resolvable:$true] %s398
          %401 = dma.hbm_to_vmem [thread:$0]  %s397, 16, %s399, [#allocation6]
        $region20: #{classification_pointnet.4} parent=11 // pred_fallthru
          _
        // Predicated region
        $region21: #{classification_pointnet.4} parent=11 // pred_check
          %p402 = pneg %p127
        $region22: #{classification_pointnet.4} parent=11 // pred_check_branch
          %404 = sbr.rel (%p402) target = $region24
        $region23: #{classification_pointnet.4} parent=11 // pred_region
          _
        $region24: #{classification_pointnet.4} parent=11 // pred_fallthru
          _
        // Predicated region
        $region25: #{classification_pointnet.4} parent=11 // pred_check
          %p405 = pneg %p148
        $region26: #{classification_pointnet.4} parent=11 // pred_check_branch
          %407 = sbr.rel (%p405) target = $region28
        $region27: #{classification_pointnet.4} parent=11 // pred_region
          %409 = vsyncadd [#allocation6], 0
          %s411 = sshll.u32 %s4, 4
          %s412 = int_to_ptr.hbm [resolvable:$true] %s411
          %s413 = sshll.u32 [#allocation7], 4
          %s414 = int_to_ptr.vmem [resolvable:$true] %s413
          %416 = dma.hbm_to_vmem [thread:$0]  %s412, 16, %s414, [#allocation6]
        $region28: #{classification_pointnet.4} parent=11 // pred_fallthru
          _
        // Predicated region
        $region29: #{classification_pointnet.4} parent=11 // pred_check
          %p417 = pneg %p169
        $region30: #{classification_pointnet.4} parent=11 // pred_check_branch
          %419 = sbr.rel (%p417) target = $region32
        $region31: #{classification_pointnet.4} parent=11 // pred_region
          _
        $region32: #{classification_pointnet.4} parent=11 // pred_fallthru
          _
        // Predicated region
        $region33: #{classification_pointnet.4} parent=11 // pred_check
          %p420 = pneg %p190
        $region34: #{classification_pointnet.4} parent=11 // pred_check_branch
          %422 = sbr.rel (%p420) target = $region36
        $region35: #{classification_pointnet.4} parent=11 // pred_region
          %424 = vsyncadd [#allocation9], 0
          %s426 = sshll.u32 %s6, 4
          %s427 = int_to_ptr.hbm [resolvable:$true] %s426
          %s428 = sshll.u32 [#allocation8], 4
          %s429 = int_to_ptr.vmem [resolvable:$true] %s428
          %431 = dma.hbm_to_vmem [thread:$0]  %s427, 32, %s429, [#allocation9]
        $region36: #{classification_pointnet.4} parent=11 // pred_fallthru
          _
        // Predicated region
        $region37: #{classification_pointnet.4} parent=11 // pred_check
          %p432 = pneg %p211
        $region38: #{classification_pointnet.4} parent=11 // pred_check_branch
          %434 = sbr.rel (%p432) target = $region40
        $region39: #{classification_pointnet.4} parent=11 // pred_region
          _
        $region40: #{classification_pointnet.4} parent=11 // pred_fallthru
          _
        // Predicated region
        $region41: #{classification_pointnet.4} parent=11 // pred_check
          %p435 = pneg %p232
        $region42: #{classification_pointnet.4} parent=11 // pred_check_branch
          %437 = sbr.rel (%p435) target = $region44
        $region43: #{classification_pointnet.4} parent=11 // pred_region
          %439 = vsyncadd [#allocation9], 0
          %s441 = sshll.u32 %s8, 4
          %s442 = int_to_ptr.hbm [resolvable:$true] %s441
          %s443 = sshll.u32 [#allocation10], 4
          %s444 = int_to_ptr.vmem [resolvable:$true] %s443
          %446 = dma.hbm_to_vmem [thread:$0]  %s442, 32, %s444, [#allocation9]
        $region44: #{classification_pointnet.4} parent=11 // pred_fallthru
          _
        // Predicated region
        $region45: #{classification_pointnet.4} parent=11 // pred_check
          %p447 = pneg %p253
        $region46: #{classification_pointnet.4} parent=11 // pred_check_branch
          %449 = sbr.rel (%p447) target = $region48
        $region47: #{classification_pointnet.4} parent=11 // pred_region
          _
        $region48: #{classification_pointnet.4} parent=11 // pred_fallthru
          _
        // Predicated region
        $region49: #{classification_pointnet.4} parent=11 // pred_check
          %p450 = pneg %p274
        $region50: #{classification_pointnet.4} parent=11 // pred_check_branch
          %452 = sbr.rel (%p450) target = $region52
        $region51: #{classification_pointnet.4} parent=11 // pred_region
          %454 = vsyncadd [#allocation12], 0
          %s456 = sshll.u32 %s10, 4
          %s457 = int_to_ptr.hbm [resolvable:$true] %s456
          %s458 = sshll.u32 [#allocation11], 4
          %s459 = int_to_ptr.vmem [resolvable:$true] %s458
          %461 = dma.hbm_to_vmem [thread:$0]  %s457, 16, %s459, [#allocation12]
        $region52: #{classification_pointnet.4} parent=11 // pred_fallthru
          _
        // Predicated region
        $region53: #{classification_pointnet.4} parent=11 // pred_check
          %p462 = pneg %p295
        $region54: #{classification_pointnet.4} parent=11 // pred_check_branch
          %464 = sbr.rel (%p462) target = $region56
        $region55: #{classification_pointnet.4} parent=11 // pred_region
          _
        $region56: #{classification_pointnet.4} parent=11 // pred_fallthru
          _
        // Predicated region
        $region57: #{classification_pointnet.4} parent=11 // pred_check
          %p465 = pneg %p316
        $region58: #{classification_pointnet.4} parent=11 // pred_check_branch
          %467 = sbr.rel (%p465) target = $region60
        $region59: #{classification_pointnet.4} parent=11 // pred_region
          %469 = vsyncadd [#allocation12], 0
          %s471 = sshll.u32 %s12, 4
          %s472 = int_to_ptr.hbm [resolvable:$true] %s471
          %s473 = sshll.u32 [#allocation13], 4
          %s474 = int_to_ptr.vmem [resolvable:$true] %s473
          %476 = dma.hbm_to_vmem [thread:$0]  %s472, 16, %s474, [#allocation12]
        $region60: #{classification_pointnet.4} parent=11 // pred_fallthru
          _
        // Predicated region
        $region61: #{classification_pointnet.4} parent=11 // pred_check
          %p477 = pneg %p337
        $region62: #{classification_pointnet.4} parent=11 // pred_check_branch
          %479 = sbr.rel (%p477) target = $region64
        $region63: #{classification_pointnet.4} parent=11 // pred_region
          _
        $region64: #{classification_pointnet.4} parent=11 // pred_fallthru
          _
      $region12: #{classification_pointnet.4} parent=5 // pred_fallthru
        _
      %p480 = scmp.lt.s32.totalorder %s24, 2
      // Predicated region
      $region65: #{classification_pointnet.4} parent=5 // pred_check
        %p481 = pneg %p480
      $region66: #{classification_pointnet.4} parent=5 // pred_check_branch
        %483 = sbr.rel (%p481) target = $region68
      $region67: #{classification_pointnet.4} parent=5 // pred_region
        // Predicated region
        $region69: #{classification_pointnet.4} parent=67 // pred_check
          %p484 = pneg %p58
        $region70: #{classification_pointnet.4} parent=67 // pred_check_branch
          %486 = sbr.rel (%p484) target = $region72
        $region71: #{classification_pointnet.4} parent=67 // pred_region
          %s487 = smul.u32 8, %s32
          %p488 = scmp.lt.s32.totalorder %s31, 1
          %s489 = scalar_select %p488, %s31, 1
          %p490 = scmp.lt.s32.totalorder %s487, 7
          %s491 = scalar_select %p490, %s487, 7
          %s492 = smul.addr %s489, 8
          %s493 = sadd.s32 %s491, %s492
          %s494 = smul.addr %s493, 8
          %s495 = scalar_lea.vmem %s0, %s494
          %s496 = smul.u32 8, %s32
        $region72: #{classification_pointnet.4} parent=67 // pred_fallthru
          _
      $region68: #{classification_pointnet.4} parent=5 // pred_fallthru
        _
      %p497 = scmp.le.s32.totalorder 1, %s24
      %p498 = scmp.lt.s32.totalorder %s24, 3
      %p499 = pnand %p497, %p498
      %p500 = pneg %p499
      // Predicated region
      $region73: #{classification_pointnet.4} parent=5 // pred_check
        _
      $region74: #{classification_pointnet.4} parent=5 // pred_check_branch
        %502 = sbr.rel (%p499) target = $region76
      $region75: #{classification_pointnet.4} parent=5 // pred_region
        %s503 = ssub.s32 %s24, 1
        // Predicated region
        $region77: #{classification_pointnet.4} parent=75 // pred_check
          %p504 = pneg %p85
        $region78: #{classification_pointnet.4} parent=75 // pred_check_branch
          %506 = sbr.rel (%p504) target = $region80
        $region79: #{classification_pointnet.4} parent=75 // pred_region
          %508 = dma.done [#allocation4], 64
        $region80: #{classification_pointnet.4} parent=75 // pred_fallthru
          _
        // Predicated region
        $region81: #{classification_pointnet.4} parent=75 // pred_check
          %p509 = pneg %p106
        $region82: #{classification_pointnet.4} parent=75 // pred_check_branch
          %511 = sbr.rel (%p509) target = $region84
        $region83: #{classification_pointnet.4} parent=75 // pred_region
          %513 = dma.done [#allocation6], 16
        $region84: #{classification_pointnet.4} parent=75 // pred_fallthru
          _
        // Predicated region
        $region85: #{classification_pointnet.4} parent=75 // pred_check
          %p514 = pneg %p148
        $region86: #{classification_pointnet.4} parent=75 // pred_check_branch
          %516 = sbr.rel (%p514) target = $region88
        $region87: #{classification_pointnet.4} parent=75 // pred_region
          %518 = dma.done [#allocation6], 16
        $region88: #{classification_pointnet.4} parent=75 // pred_fallthru
          _
        // Predicated region
        $region89: #{classification_pointnet.4} parent=75 // pred_check
          %p519 = pneg %p190
        $region90: #{classification_pointnet.4} parent=75 // pred_check_branch
          %521 = sbr.rel (%p519) target = $region92
        $region91: #{classification_pointnet.4} parent=75 // pred_region
          %523 = dma.done [#allocation9], 32
        $region92: #{classification_pointnet.4} parent=75 // pred_fallthru
          _
        // Predicated region
        $region93: #{classification_pointnet.4} parent=75 // pred_check
          %p524 = pneg %p232
        $region94: #{classification_pointnet.4} parent=75 // pred_check_branch
          %526 = sbr.rel (%p524) target = $region96
        $region95: #{classification_pointnet.4} parent=75 // pred_region
          %528 = dma.done [#allocation9], 32
        $region96: #{classification_pointnet.4} parent=75 // pred_fallthru
          _
        // Predicated region
        $region97: #{classification_pointnet.4} parent=75 // pred_check
          %p529 = pneg %p274
        $region98: #{classification_pointnet.4} parent=75 // pred_check_branch
          %531 = sbr.rel (%p529) target = $region100
        $region99: #{classification_pointnet.4} parent=75 // pred_region
          %533 = dma.done [#allocation12], 16
        $region100: #{classification_pointnet.4} parent=75 // pred_fallthru
          _
        // Predicated region
        $region101: #{classification_pointnet.4} parent=75 // pred_check
          %p534 = pneg %p316
        $region102: #{classification_pointnet.4} parent=75 // pred_check_branch
          %536 = sbr.rel (%p534) target = $region104
        $region103: #{classification_pointnet.4} parent=75 // pred_region
          %538 = dma.done [#allocation12], 16
        $region104: #{classification_pointnet.4} parent=75 // pred_fallthru
          _
        %s539 = smul.u32 8, %s34
        %p540 = scmp.lt.s32.totalorder %s33, 1
        %s541 = scalar_select %p540, %s33, 1
        %p542 = scmp.lt.s32.totalorder %s539, 7
        %s543 = scalar_select %p542, %s539, 7
        %s544 = smul.addr %s541, 8
        %s545 = sadd.s32 %s543, %s544
        %s546 = smul.addr %s545, 8
        %s547 = scalar_lea.vmem %s0, %s546
        %p548 = pneg %p64
        %p549 = pneg %p61
        %p550 = pneg %p85
        %p551 = pneg %p82
        %p552 = pneg %p106
        %p553 = pneg %p103
        %p554 = pneg %p127
        %p555 = pneg %p124
        %p556 = pneg %p148
        %p557 = pneg %p145
        %p558 = pneg %p169
        %p559 = pneg %p166
        %p560 = pneg %p190
        %p561 = pneg %p187
        %p562 = pneg %p211
        %p563 = pneg %p208
        %p564 = pneg %p232
        %p565 = pneg %p229
        %p566 = pneg %p253
        %p567 = pneg %p250
        %p568 = pneg %p274
        %p569 = pneg %p271
        %p570 = pneg %p295
        %p571 = pneg %p292
        %p572 = pneg %p316
        %p573 = pneg %p313
        %p574 = pneg %p337
        %p575 = pneg %p334
        %p576 = pneg %p363
        %p577 = pneg %p360
        %p578 = scmp.lt.s32.totalorder %s33, 1
        %s579 = scalar_select %p578, %s33, 1
        %s580 = scalar_lea.vmem %s14, %s579
        %s581 = smul.u32 8, %s34
        %p582 = scmp.lt.s32.totalorder %s33, 1
        %s583 = scalar_select %p582, %s33, 1
        %p584 = scmp.lt.s32.totalorder %s581, 7
        %s585 = scalar_select %p584, %s581, 7
        %s586 = smul.addr %s583, 8
        %s587 = sadd.s32 %s585, %s586
        %s588 = smul.addr %s587, 8
        %s589 = scalar_lea.vmem %s0, %s588
        %s590 = smul.u32 8, %s34
        %p591 = scmp.lt.s32.totalorder %s33, 1
        %s592 = scalar_select %p591, %s33, 1
        %s593 = scalar_lea.vmem %s14, %s592
        %p595 = scmp.eq.s32.totalorder %s34, 0
        // Predicated region
        $region105: #{classification_pointnet.4} parent=75 // pred_check
          %p596 = pneg %p595
        $region106: #{classification_pointnet.4} parent=75 // pred_check_branch
          %598 = sbr.rel (%p596) target = $region108
        $region107: #{classification_pointnet.4} parent=75 // pred_region
          %599 = vst [vmem:[#allocation2] sm:$0xff] -inf
          %600 = vst [vmem:[#allocation2 + $0x8] sm:$0xff] -inf
        $region108: #{classification_pointnet.4} parent=75 // pred_fallthru
          _
        %v601 = vld [vmem:[%s589] sm:$0xff]
        %v602 = vld [vmem:[%s589 + $0x8] sm:$0xff]
        %v603 = vld [vmem:[%s589 + $0x10] sm:$0xff]
        %v604 = vld [vmem:[%s589 + $0x18] sm:$0xff]
        %v605 = vld [vmem:[%s589 + $0x20] sm:$0xff]
        %v606 = vld [vmem:[%s589 + $0x28] sm:$0xff]
        %v607 = vld [vmem:[%s589 + $0x30] sm:$0xff]
        %v608 = vld [vmem:[%s589 + $0x38] sm:$0xff]
        %v609 = vld [vmem:[#allocation3] sm:$0x7]
        %v610 = vld [vmem:[#allocation5] sm:$0x1]
        %v612 = vperm.slane %v610, 0
        %vm614 = vcmask 23552
        %v616 = vsel %vm614, %v601, 0
        %v619 = vsel %vm614, %v602, 0
        %v622 = vsel %vm614, %v603, 0
        %v625 = vsel %vm614, %v604, 0
        %v628 = vsel %vm614, %v605, 0
        %v631 = vsel %vm614, %v606, 0
        %v634 = vsel %vm614, %v607, 0
        %v637 = vsel %vm614, %v608, 0
        %vm639 = vcmask 1042432
        %v641 = vsel %vm639, %v609, 0
        %643 = vmatpush.msra.mxu0 0.0
        %644 = vmatpush.msra.mxu0 0.0
        %645 = vmatpush.msra.mxu0 0.0
        %646 = vmatpush.msra.mxu0 0.0
        %647 = vmatpush.msra.mxu0 0.0
        %648 = vmatpush.msra.mxu0 0.0
        %649 = vmatpush.msra.mxu0 0.0
        %650 = vmatpush.msra.mxu0 0.0
        %651 = vmatpush.msra.mxu0 0.0
        %652 = vmatpush.msra.mxu0 0.0
        %653 = vmatpush.msra.mxu0 0.0
        %654 = vmatpush.msra.mxu0 0.0
        %655 = vmatpush.msra.mxu0 0.0
        %656 = vmatpush.msra.mxu0 0.0
        %657 = vmatpush.msra.mxu0 0.0
        %658 = vmatpush.msra.mxu0 %v641
        %659 = vmatmul.f32.gmra.mxu0 %v616
        %v660 = vpop.f32.mrf.mxu0
        %v661 = vadd.f32 %v612, %v660
        %662 = vmatmul.f32.gmra.mxu0 %v619
        %v663 = vpop.f32.mrf.mxu0
        %v664 = vadd.f32 %v612, %v663
        %665 = vmatmul.f32.gmra.mxu0 %v622
        %v666 = vpop.f32.mrf.mxu0
        %v667 = vadd.f32 %v612, %v666
        %668 = vmatmul.f32.gmra.mxu0 %v625
        %v669 = vpop.f32.mrf.mxu0
        %v670 = vadd.f32 %v612, %v669
        %671 = vmatmul.f32.gmra.mxu0 %v628
        %v672 = vpop.f32.mrf.mxu0
        %v673 = vadd.f32 %v612, %v672
        %674 = vmatmul.f32.gmra.mxu0 %v631
        %v675 = vpop.f32.mrf.mxu0
        %v676 = vadd.f32 %v612, %v675
        %677 = vmatmul.f32.gmra.mxu0 %v634
        %v678 = vpop.f32.mrf.mxu0
        %v679 = vadd.f32 %v612, %v678
        %680 = vmatmul.f32.gmra.mxu0 %v637
        %v681 = vpop.f32.mrf.mxu0
        %v682 = vadd.f32 %v612, %v681
        %683 = vdwg.mxu0
        %v684 = vmax.f32 %v661, 0.0
        %v685 = vmax.f32 %v664, 0.0
        %v686 = vmax.f32 %v667, 0.0
        %v687 = vmax.f32 %v670, 0.0
        %v688 = vmax.f32 %v673, 0.0
        %v689 = vmax.f32 %v676, 0.0
        %v690 = vmax.f32 %v679, 0.0
        %v691 = vmax.f32 %v682, 0.0
        %v692 = vpack.c.bf16 %v685, %v684
        %v693 = vpack.c.bf16 %v687, %v686
        %v694 = vpack.c.bf16 %v689, %v688
        %v695 = vpack.c.bf16 %v691, %v690
        %v696 = vld [vmem:[%s3] sm:$0xf]
        %v697 = vld [vmem:[%s3 + $0x4] sm:$0xf]
        %v698 = vld [vmem:[%s3 + $0x8] sm:$0xf]
        %v699 = vld [vmem:[%s3 + $0xc] sm:$0xf]
        %v700 = vld [vmem:[%s3 + $0x10] sm:$0xf]
        %v701 = vld [vmem:[%s3 + $0x14] sm:$0xf]
        %v702 = vld [vmem:[%s3 + $0x18] sm:$0xf]
        %v703 = vld [vmem:[%s3 + $0x1c] sm:$0xf]
        %v704 = vld [vmem:[#allocation7] sm:$0x1]
        %v706 = vperm.slane %v704, 0
        %v716 = vunpack.c.l.b16 %v696
        %v717 = vunpack.c.l.b16 %v697
        %v718 = vunpack.c.l.b16 %v698
        %v719 = vunpack.c.l.b16 %v699
        %v720 = vunpack.c.l.b16 %v700
        %v721 = vunpack.c.l.b16 %v701
        %v722 = vunpack.c.l.b16 %v702
        %v723 = vunpack.c.l.b16 %v703
        %v724 = vpack.c.b16 %v717, %v716
        %v725 = vpack.c.b16 %v719, %v718
        %v726 = vpack.c.b16 %v721, %v720
        %v727 = vpack.c.b16 %v723, %v722
        %vm732 = vcmask 523264
        %v734 = vsel %vm732, %v692, 0
        %v737 = vsel %vm732, %v693, 0
        %v740 = vsel %vm732, %v694, 0
        %v743 = vsel %vm732, %v695, 0
        %745 = vmatpush.bf16.msra.mxu0 0
        %746 = vmatpush.bf16.msra.mxu0 0
        %747 = vmatpush.bf16.msra.mxu0 0
        %748 = vmatpush.bf16.msra.mxu0 0
        %749 = vmatpush.bf16.msra.mxu0 %v727
        %750 = vmatpush.bf16.msra.mxu0 %v726
        %751 = vmatpush.bf16.msra.mxu0 %v725
        %752 = vmatpush.bf16.msra.mxu0 %v724
        %753 = vmatmul.bf16.gmra.mxu0 %v734
        %v754 = vpop.f32.mrf.mxu0
        %v755 = vadd.f32 %v706, %v754
        %v756 = vpop.f32.mrf.mxu0
        %v757 = vadd.f32 %v706, %v756
        %758 = vmatmul.bf16.gmra.mxu0 %v737
        %v759 = vpop.f32.mrf.mxu0
        %v760 = vadd.f32 %v706, %v759
        %v761 = vpop.f32.mrf.mxu0
        %v762 = vadd.f32 %v706, %v761
        %763 = vmatmul.bf16.gmra.mxu0 %v740
        %v764 = vpop.f32.mrf.mxu0
        %v765 = vadd.f32 %v706, %v764
        %v766 = vpop.f32.mrf.mxu0
        %v767 = vadd.f32 %v706, %v766
        %768 = vmatmul.bf16.gmra.mxu0 %v743
        %v769 = vpop.f32.mrf.mxu0
        %v770 = vadd.f32 %v706, %v769
        %v771 = vpop.f32.mrf.mxu0
        %v772 = vadd.f32 %v706, %v771
        %773 = vdwg.mxu0
        %v774 = vmax.f32 %v755, 0.0
        %v775 = vmax.f32 %v757, 0.0
        %v776 = vmax.f32 %v760, 0.0
        %v777 = vmax.f32 %v762, 0.0
        %v778 = vmax.f32 %v765, 0.0
        %v779 = vmax.f32 %v767, 0.0
        %v780 = vmax.f32 %v770, 0.0
        %v781 = vmax.f32 %v772, 0.0
        %v782 = vpack.c.bf16 %v775, %v774
        %v783 = vpack.c.bf16 %v777, %v776
        %v784 = vpack.c.bf16 %v779, %v778
        %v785 = vpack.c.bf16 %v781, %v780
        %v786 = vld [vmem:[%s5] sm:$0xff]
        %v787 = vld [vmem:[%s5 + $0x8] sm:$0xff]
        %v788 = vld [vmem:[%s5 + $0x10] sm:$0xff]
        %v789 = vld [vmem:[%s5 + $0x18] sm:$0xff]
        %v790 = vld [vmem:[%s5 + $0x20] sm:$0xff]
        %v791 = vld [vmem:[%s5 + $0x28] sm:$0xff]
        %v792 = vld [vmem:[%s5 + $0x30] sm:$0xff]
        %v793 = vld [vmem:[%s5 + $0x38] sm:$0xff]
        %v794 = vld [vmem:[%s5 + $0x40] sm:$0xff]
        %v795 = vld [vmem:[%s5 + $0x48] sm:$0xff]
        %v796 = vld [vmem:[%s5 + $0x50] sm:$0xff]
        %v797 = vld [vmem:[%s5 + $0x58] sm:$0xff]
        %v798 = vld [vmem:[%s5 + $0x60] sm:$0xff]
        %v799 = vld [vmem:[%s5 + $0x68] sm:$0xff]
        %v800 = vld [vmem:[%s5 + $0x70] sm:$0xff]
        %v801 = vld [vmem:[%s5 + $0x78] sm:$0xff]
        %v802 = vld [vmem:[#allocation8] sm:$0x3]
        %v804 = vperm.slane %v802, 0
        %v805 = vperm.slane %v802, 1
        %v824 = vunpack.c.l.b16 %v786
        %v825 = vunpack.c.h.b16 %v786
        %v826 = vunpack.c.l.b16 %v787
        %v827 = vunpack.c.h.b16 %v787
        %v828 = vunpack.c.l.b16 %v788
        %v829 = vunpack.c.h.b16 %v788
        %v830 = vunpack.c.l.b16 %v789
        %v831 = vunpack.c.h.b16 %v789
        %v832 = vunpack.c.l.b16 %v790
        %v833 = vunpack.c.h.b16 %v790
        %v834 = vunpack.c.l.b16 %v791
        %v835 = vunpack.c.h.b16 %v791
        %v836 = vunpack.c.l.b16 %v792
        %v837 = vunpack.c.h.b16 %v792
        %v838 = vunpack.c.l.b16 %v793
        %v839 = vunpack.c.h.b16 %v793
        %v840 = vunpack.c.l.b16 %v794
        %v841 = vunpack.c.h.b16 %v794
        %v842 = vunpack.c.l.b16 %v795
        %v843 = vunpack.c.h.b16 %v795
        %v844 = vunpack.c.l.b16 %v796
        %v845 = vunpack.c.h.b16 %v796
        %v846 = vunpack.c.l.b16 %v797
        %v847 = vunpack.c.h.b16 %v797
        %v848 = vunpack.c.l.b16 %v798
        %v849 = vunpack.c.h.b16 %v798
        %v850 = vunpack.c.l.b16 %v799
        %v851 = vunpack.c.h.b16 %v799
        %v852 = vunpack.c.l.b16 %v800
        %v853 = vunpack.c.h.b16 %v800
        %v854 = vunpack.c.l.b16 %v801
        %v855 = vunpack.c.h.b16 %v801
        %v856 = vpack.c.b16 %v826, %v824
        %v857 = vpack.c.b16 %v827, %v825
        %v858 = vpack.c.b16 %v830, %v828
        %v859 = vpack.c.b16 %v831, %v829
        %v860 = vpack.c.b16 %v834, %v832
        %v861 = vpack.c.b16 %v835, %v833
        %v862 = vpack.c.b16 %v838, %v836
        %v863 = vpack.c.b16 %v839, %v837
        %v864 = vpack.c.b16 %v842, %v840
        %v865 = vpack.c.b16 %v843, %v841
        %v866 = vpack.c.b16 %v846, %v844
        %v867 = vpack.c.b16 %v847, %v845
        %v868 = vpack.c.b16 %v850, %v848
        %v869 = vpack.c.b16 %v851, %v849
        %v870 = vpack.c.b16 %v854, %v852
        %v871 = vpack.c.b16 %v855, %v853
        %888 = vmatpush.bf16.msra.mxu0 %v870
        %889 = vmatpush.bf16.msra.mxu0 %v868
        %890 = vmatpush.bf16.msra.mxu0 %v866
        %891 = vmatpush.bf16.msra.mxu0 %v864
        %892 = vmatpush.bf16.msra.mxu0 %v862
        %893 = vmatpush.bf16.msra.mxu0 %v860
        %894 = vmatpush.bf16.msra.mxu0 %v858
        %895 = vmatpush.bf16.msra.mxu0 %v856
        %896 = vmatmul.bf16.gmra.mxu0 %v782
        %v897 = vpop.f32.mrf.mxu0
        %v898 = vadd.f32 %v804, %v897
        %v899 = vpop.f32.mrf.mxu0
        %v900 = vadd.f32 %v804, %v899
        %901 = vmatmul.bf16.gmra.mxu0 %v783
        %v902 = vpop.f32.mrf.mxu0
        %v903 = vadd.f32 %v804, %v902
        %v904 = vpop.f32.mrf.mxu0
        %v905 = vadd.f32 %v804, %v904
        %906 = vmatmul.bf16.gmra.mxu0 %v784
        %v907 = vpop.f32.mrf.mxu0
        %v908 = vadd.f32 %v804, %v907
        %v909 = vpop.f32.mrf.mxu0
        %v910 = vadd.f32 %v804, %v909
        %911 = vmatmul.bf16.gmra.mxu0 %v785
        %v912 = vpop.f32.mrf.mxu0
        %v913 = vadd.f32 %v804, %v912
        %v914 = vpop.f32.mrf.mxu0
        %v915 = vadd.f32 %v804, %v914
        %916 = vdwg.mxu0
        %917 = vmatpush.bf16.msra.mxu0 %v871
        %918 = vmatpush.bf16.msra.mxu0 %v869
        %919 = vmatpush.bf16.msra.mxu0 %v867
        %920 = vmatpush.bf16.msra.mxu0 %v865
        %921 = vmatpush.bf16.msra.mxu0 %v863
        %922 = vmatpush.bf16.msra.mxu0 %v861
        %923 = vmatpush.bf16.msra.mxu0 %v859
        %924 = vmatpush.bf16.msra.mxu0 %v857
        %925 = vmatmul.bf16.gmra.mxu0 %v782
        %v926 = vpop.f32.mrf.mxu0
        %v927 = vadd.f32 %v805, %v926
        %v928 = vpop.f32.mrf.mxu0
        %v929 = vadd.f32 %v805, %v928
        %930 = vmatmul.bf16.gmra.mxu0 %v783
        %v931 = vpop.f32.mrf.mxu0
        %v932 = vadd.f32 %v805, %v931
        %v933 = vpop.f32.mrf.mxu0
        %v934 = vadd.f32 %v805, %v933
        %935 = vmatmul.bf16.gmra.mxu0 %v784
        %v936 = vpop.f32.mrf.mxu0
        %v937 = vadd.f32 %v805, %v936
        %v938 = vpop.f32.mrf.mxu0
        %v939 = vadd.f32 %v805, %v938
        %940 = vmatmul.bf16.gmra.mxu0 %v785
        %v941 = vpop.f32.mrf.mxu0
        %v942 = vadd.f32 %v805, %v941
        %v943 = vpop.f32.mrf.mxu0
        %v944 = vadd.f32 %v805, %v943
        %945 = vdwg.mxu0
        %v946 = vmax.f32 %v898, 0.0
        %v947 = vmax.f32 %v927, 0.0
        %v948 = vmax.f32 %v900, 0.0
        %v949 = vmax.f32 %v929, 0.0
        %v950 = vmax.f32 %v903, 0.0
        %v951 = vmax.f32 %v932, 0.0
        %v952 = vmax.f32 %v905, 0.0
        %v953 = vmax.f32 %v934, 0.0
        %v954 = vmax.f32 %v908, 0.0
        %v955 = vmax.f32 %v937, 0.0
        %v956 = vmax.f32 %v910, 0.0
        %v957 = vmax.f32 %v939, 0.0
        %v958 = vmax.f32 %v913, 0.0
        %v959 = vmax.f32 %v942, 0.0
        %v960 = vmax.f32 %v915, 0.0
        %v961 = vmax.f32 %v944, 0.0
        %v962 = vmax.f32 %v946, %v948
        %v963 = vmax.f32 %v947, %v949
        %v964 = vmax.f32 %v962, %v950
        %v965 = vmax.f32 %v963, %v951
        %v966 = vmax.f32 %v964, %v952
        %v967 = vmax.f32 %v965, %v953
        %v968 = vmax.f32 %v966, %v954
        %v969 = vmax.f32 %v967, %v955
        %v970 = vmax.f32 %v968, %v956
        %v971 = vmax.f32 %v969, %v957
        %v972 = vmax.f32 %v970, %v958
        %v973 = vmax.f32 %v971, %v959
        %v974 = vmax.f32 %v972, %v960
        %v975 = vmax.f32 %v973, %v961
        %v976 = vld [vmem:[#allocation2] sm:$0xff]
        %v977 = vld [vmem:[#allocation2 + $0x8] sm:$0xff]
        %v978 = vmax.f32 %v976, %v974
        %v979 = vmax.f32 %v977, %v975
        %980 = vst [vmem:[#allocation2] sm:$0xff] %v978
        %981 = vst [vmem:[#allocation2 + $0x8] sm:$0xff] %v979
        // Predicated region
        $region109: #{classification_pointnet.4} parent=75 // pred_check
          %p982 = pneg %p595
        $region110: #{classification_pointnet.4} parent=75 // pred_check_branch
          %984 = sbr.rel (%p982) target = $region112
        $region111: #{classification_pointnet.4} parent=75 // pred_region
          %v985 = vld [vmem:[#allocation2] sm:$0xff]
          %v986 = vld [vmem:[#allocation2 + $0x8] sm:$0xff]
          %v987 = vrot.slane %v985, 4
          %v988 = vmax.f32 %v985, %v987
          %v989 = vrot.slane %v988, 2
          %v990 = vmax.f32 %v988, %v989
          %v991 = vrot.slane %v990, 1
          %v992 = vmax.f32 %v990, %v991
          %v993 = vrot.slane %v986, 4
          %v994 = vmax.f32 %v986, %v993
          %v995 = vrot.slane %v994, 2
          %v996 = vmax.f32 %v994, %v995
          %v997 = vrot.slane %v996, 1
          %v998 = vmax.f32 %v996, %v997
          %v999 = vpack.c.bf16 %v992, %v992
          %v1000 = vpack.c.bf16 %v998, %v998
          %v1001 = vld [vmem:[%s7] sm:$0xff]
          %v1002 = vld [vmem:[%s7 + $0x8] sm:$0xff]
          %v1003 = vld [vmem:[%s7 + $0x10] sm:$0xff]
          %v1004 = vld [vmem:[%s7 + $0x18] sm:$0xff]
          %v1005 = vld [vmem:[%s7 + $0x20] sm:$0xff]
          %v1006 = vld [vmem:[%s7 + $0x28] sm:$0xff]
          %v1007 = vld [vmem:[%s7 + $0x30] sm:$0xff]
          %v1008 = vld [vmem:[%s7 + $0x38] sm:$0xff]
          %v1009 = vld [vmem:[%s7 + $0x40] sm:$0xff]
          %v1010 = vld [vmem:[%s7 + $0x48] sm:$0xff]
          %v1011 = vld [vmem:[%s7 + $0x50] sm:$0xff]
          %v1012 = vld [vmem:[%s7 + $0x58] sm:$0xff]
          %v1013 = vld [vmem:[%s7 + $0x60] sm:$0xff]
          %v1014 = vld [vmem:[%s7 + $0x68] sm:$0xff]
          %v1015 = vld [vmem:[%s7 + $0x70] sm:$0xff]
          %v1016 = vld [vmem:[%s7 + $0x78] sm:$0xff]
          %v1017 = vld [vmem:[%s7 + $0x80] sm:$0xff]
          %v1018 = vld [vmem:[%s7 + $0x88] sm:$0xff]
          %v1019 = vld [vmem:[%s7 + $0x90] sm:$0xff]
          %v1020 = vld [vmem:[%s7 + $0x98] sm:$0xff]
          %v1021 = vld [vmem:[%s7 + $0xa0] sm:$0xff]
          %v1022 = vld [vmem:[%s7 + $0xa8] sm:$0xff]
          %v1023 = vld [vmem:[%s7 + $0xb0] sm:$0xff]
          %v1024 = vld [vmem:[%s7 + $0xb8] sm:$0xff]
          %v1025 = vld [vmem:[%s7 + $0xc0] sm:$0xff]
          %v1026 = vld [vmem:[%s7 + $0xc8] sm:$0xff]
          %v1027 = vld [vmem:[%s7 + $0xd0] sm:$0xff]
          %v1028 = vld [vmem:[%s7 + $0xd8] sm:$0xff]
          %v1029 = vld [vmem:[%s7 + $0xe0] sm:$0xff]
          %v1030 = vld [vmem:[%s7 + $0xe8] sm:$0xff]
          %v1031 = vld [vmem:[%s7 + $0xf0] sm:$0xff]
          %v1032 = vld [vmem:[%s7 + $0xf8] sm:$0xff]
          %v1033 = vld [vmem:[#allocation10] sm:$0x3]
          %v1066 = vunpack.c.l.b16 %v1001
          %v1067 = vunpack.c.h.b16 %v1001
          %v1068 = vunpack.c.l.b16 %v1002
          %v1069 = vunpack.c.h.b16 %v1002
          %v1070 = vunpack.c.l.b16 %v1003
          %v1071 = vunpack.c.h.b16 %v1003
          %v1072 = vunpack.c.l.b16 %v1004
          %v1073 = vunpack.c.h.b16 %v1004
          %v1074 = vunpack.c.l.b16 %v1005
          %v1075 = vunpack.c.h.b16 %v1005
          %v1076 = vunpack.c.l.b16 %v1006
          %v1077 = vunpack.c.h.b16 %v1006
          %v1078 = vunpack.c.l.b16 %v1007
          %v1079 = vunpack.c.h.b16 %v1007
          %v1080 = vunpack.c.l.b16 %v1008
          %v1081 = vunpack.c.h.b16 %v1008
          %v1082 = vunpack.c.l.b16 %v1009
          %v1083 = vunpack.c.h.b16 %v1009
          %v1084 = vunpack.c.l.b16 %v1010
          %v1085 = vunpack.c.h.b16 %v1010
          %v1086 = vunpack.c.l.b16 %v1011
          %v1087 = vunpack.c.h.b16 %v1011
          %v1088 = vunpack.c.l.b16 %v1012
          %v1089 = vunpack.c.h.b16 %v1012
          %v1090 = vunpack.c.l.b16 %v1013
          %v1091 = vunpack.c.h.b16 %v1013
          %v1092 = vunpack.c.l.b16 %v1014
          %v1093 = vunpack.c.h.b16 %v1014
          %v1094 = vunpack.c.l.b16 %v1015
          %v1095 = vunpack.c.h.b16 %v1015
          %v1096 = vunpack.c.l.b16 %v1016
          %v1097 = vunpack.c.h.b16 %v1016
          %v1098 = vunpack.c.l.b16 %v1017
          %v1099 = vunpack.c.h.b16 %v1017
          %v1100 = vunpack.c.l.b16 %v1018
          %v1101 = vunpack.c.h.b16 %v1018
          %v1102 = vunpack.c.l.b16 %v1019
          %v1103 = vunpack.c.h.b16 %v1019
          %v1104 = vunpack.c.l.b16 %v1020
          %v1105 = vunpack.c.h.b16 %v1020
          %v1106 = vunpack.c.l.b16 %v1021
          %v1107 = vunpack.c.h.b16 %v1021
          %v1108 = vunpack.c.l.b16 %v1022
          %v1109 = vunpack.c.h.b16 %v1022
          %v1110 = vunpack.c.l.b16 %v1023
          %v1111 = vunpack.c.h.b16 %v1023
          %v1112 = vunpack.c.l.b16 %v1024
          %v1113 = vunpack.c.h.b16 %v1024
          %v1114 = vunpack.c.l.b16 %v1025
          %v1115 = vunpack.c.h.b16 %v1025
          %v1116 = vunpack.c.l.b16 %v1026
          %v1117 = vunpack.c.h.b16 %v1026
          %v1118 = vunpack.c.l.b16 %v1027
          %v1119 = vunpack.c.h.b16 %v1027
          %v1120 = vunpack.c.l.b16 %v1028
          %v1121 = vunpack.c.h.b16 %v1028
          %v1122 = vunpack.c.l.b16 %v1029
          %v1123 = vunpack.c.h.b16 %v1029
          %v1124 = vunpack.c.l.b16 %v1030
          %v1125 = vunpack.c.h.b16 %v1030
          %v1126 = vunpack.c.l.b16 %v1031
          %v1127 = vunpack.c.h.b16 %v1031
          %v1128 = vunpack.c.l.b16 %v1032
          %v1129 = vunpack.c.h.b16 %v1032
          %v1130 = vpack.c.b16 %v1068, %v1066
          %v1131 = vpack.c.b16 %v1069, %v1067
          %v1132 = vpack.c.b16 %v1072, %v1070
          %v1133 = vpack.c.b16 %v1073, %v1071
          %v1134 = vpack.c.b16 %v1076, %v1074
          %v1135 = vpack.c.b16 %v1077, %v1075
          %v1136 = vpack.c.b16 %v1080, %v1078
          %v1137 = vpack.c.b16 %v1081, %v1079
          %v1138 = vpack.c.b16 %v1084, %v1082
          %v1139 = vpack.c.b16 %v1085, %v1083
          %v1140 = vpack.c.b16 %v1088, %v1086
          %v1141 = vpack.c.b16 %v1089, %v1087
          %v1142 = vpack.c.b16 %v1092, %v1090
          %v1143 = vpack.c.b16 %v1093, %v1091
          %v1144 = vpack.c.b16 %v1096, %v1094
          %v1145 = vpack.c.b16 %v1097, %v1095
          %v1146 = vpack.c.b16 %v1100, %v1098
          %v1147 = vpack.c.b16 %v1101, %v1099
          %v1148 = vpack.c.b16 %v1104, %v1102
          %v1149 = vpack.c.b16 %v1105, %v1103
          %v1150 = vpack.c.b16 %v1108, %v1106
          %v1151 = vpack.c.b16 %v1109, %v1107
          %v1152 = vpack.c.b16 %v1112, %v1110
          %v1153 = vpack.c.b16 %v1113, %v1111
          %v1154 = vpack.c.b16 %v1116, %v1114
          %v1155 = vpack.c.b16 %v1117, %v1115
          %v1156 = vpack.c.b16 %v1120, %v1118
          %v1157 = vpack.c.b16 %v1121, %v1119
          %v1158 = vpack.c.b16 %v1124, %v1122
          %v1159 = vpack.c.b16 %v1125, %v1123
          %v1160 = vpack.c.b16 %v1128, %v1126
          %v1161 = vpack.c.b16 %v1129, %v1127
          %v1195 = vperm.slane %v1033, 0
          %v1196 = vperm.slane %v1033, 1
          %1199 = vmatpush.bf16.msra.mxu0 %v1144
          %1200 = vmatpush.bf16.msra.mxu0 %v1142
          %1201 = vmatpush.bf16.msra.mxu0 %v1140
          %1202 = vmatpush.bf16.msra.mxu0 %v1138
          %1203 = vmatpush.bf16.msra.mxu0 %v1136
          %1204 = vmatpush.bf16.msra.mxu0 %v1134
          %1205 = vmatpush.bf16.msra.mxu0 %v1132
          %1206 = vmatpush.bf16.msra.mxu0 %v1130
          %1207 = vmatmul.bf16.gmra.mxu0 %v999
          %v1208 = vpop.f32.mrf.mxu0
          %v1209 = vadd.f32 %v1195, %v1208
          %v1210 = vpop.f32.mrf.mxu0
          %1211 = vdwg.mxu0
          %1212 = vmatpush.bf16.msra.mxu0 %v1160
          %1213 = vmatpush.bf16.msra.mxu0 %v1158
          %1214 = vmatpush.bf16.msra.mxu0 %v1156
          %1215 = vmatpush.bf16.msra.mxu0 %v1154
          %1216 = vmatpush.bf16.msra.mxu0 %v1152
          %1217 = vmatpush.bf16.msra.mxu0 %v1150
          %1218 = vmatpush.bf16.msra.mxu0 %v1148
          %1219 = vmatpush.bf16.msra.mxu0 %v1146
          %1220 = vmatmul.bf16.gmra.mxu0 %v1000
          %v1221 = vpop.f32.mrf.mxu0
          %v1222 = vadd.f32 %v1209, %v1221
          %v1223 = vpop.f32.mrf.mxu0
          %1224 = vdwg.mxu0
          %1225 = vmatpush.bf16.msra.mxu0 %v1145
          %1226 = vmatpush.bf16.msra.mxu0 %v1143
          %1227 = vmatpush.bf16.msra.mxu0 %v1141
          %1228 = vmatpush.bf16.msra.mxu0 %v1139
          %1229 = vmatpush.bf16.msra.mxu0 %v1137
          %1230 = vmatpush.bf16.msra.mxu0 %v1135
          %1231 = vmatpush.bf16.msra.mxu0 %v1133
          %1232 = vmatpush.bf16.msra.mxu0 %v1131
          %1233 = vmatmul.bf16.gmra.mxu0 %v999
          %v1234 = vpop.f32.mrf.mxu0
          %v1235 = vadd.f32 %v1196, %v1234
          %v1236 = vpop.f32.mrf.mxu0
          %1237 = vdwg.mxu0
          %1238 = vmatpush.bf16.msra.mxu0 %v1161
          %1239 = vmatpush.bf16.msra.mxu0 %v1159
          %1240 = vmatpush.bf16.msra.mxu0 %v1157
          %1241 = vmatpush.bf16.msra.mxu0 %v1155
          %1242 = vmatpush.bf16.msra.mxu0 %v1153
          %1243 = vmatpush.bf16.msra.mxu0 %v1151
          %1244 = vmatpush.bf16.msra.mxu0 %v1149
          %1245 = vmatpush.bf16.msra.mxu0 %v1147
          %1246 = vmatmul.bf16.gmra.mxu0 %v1000
          %v1247 = vpop.f32.mrf.mxu0
          %v1248 = vadd.f32 %v1235, %v1247
          %v1249 = vpop.f32.mrf.mxu0
          %1250 = vdwg.mxu0
          %v1251 = vmax.f32 %v1222, 0.0
          %v1252 = vmax.f32 %v1248, 0.0
          %v1253 = vpack.c.bf16 %v1251, %v1251
          %v1254 = vpack.c.bf16 %v1252, %v1252
          %v1255 = vld [vmem:[%s9] sm:$0xf]
          %v1256 = vld [vmem:[%s9 + $0x4] sm:$0xf]
          %v1257 = vld [vmem:[%s9 + $0x8] sm:$0xf]
          %v1258 = vld [vmem:[%s9 + $0xc] sm:$0xf]
          %v1259 = vld [vmem:[%s9 + $0x10] sm:$0xf]
          %v1260 = vld [vmem:[%s9 + $0x14] sm:$0xf]
          %v1261 = vld [vmem:[%s9 + $0x18] sm:$0xf]
          %v1262 = vld [vmem:[%s9 + $0x1c] sm:$0xf]
          %v1263 = vld [vmem:[%s9 + $0x20] sm:$0xf]
          %v1264 = vld [vmem:[%s9 + $0x24] sm:$0xf]
          %v1265 = vld [vmem:[%s9 + $0x28] sm:$0xf]
          %v1266 = vld [vmem:[%s9 + $0x2c] sm:$0xf]
          %v1267 = vld [vmem:[%s9 + $0x30] sm:$0xf]
          %v1268 = vld [vmem:[%s9 + $0x34] sm:$0xf]
          %v1269 = vld [vmem:[%s9 + $0x38] sm:$0xf]
          %v1270 = vld [vmem:[%s9 + $0x3c] sm:$0xf]
          %v1271 = vld [vmem:[%s9 + $0x40] sm:$0xf]
          %v1272 = vld [vmem:[%s9 + $0x44] sm:$0xf]
          %v1273 = vld [vmem:[%s9 + $0x48] sm:$0xf]
          %v1274 = vld [vmem:[%s9 + $0x4c] sm:$0xf]
          %v1275 = vld [vmem:[%s9 + $0x50] sm:$0xf]
          %v1276 = vld [vmem:[%s9 + $0x54] sm:$0xf]
          %v1277 = vld [vmem:[%s9 + $0x58] sm:$0xf]
          %v1278 = vld [vmem:[%s9 + $0x5c] sm:$0xf]
          %v1279 = vld [vmem:[%s9 + $0x60] sm:$0xf]
          %v1280 = vld [vmem:[%s9 + $0x64] sm:$0xf]
          %v1281 = vld [vmem:[%s9 + $0x68] sm:$0xf]
          %v1282 = vld [vmem:[%s9 + $0x6c] sm:$0xf]
          %v1283 = vld [vmem:[%s9 + $0x70] sm:$0xf]
          %v1284 = vld [vmem:[%s9 + $0x74] sm:$0xf]
          %v1285 = vld [vmem:[%s9 + $0x78] sm:$0xf]
          %v1286 = vld [vmem:[%s9 + $0x7c] sm:$0xf]
          %v1287 = vld [vmem:[#allocation11] sm:$0x1]
          %v1320 = vunpack.c.l.b16 %v1255
          %v1321 = vunpack.c.l.b16 %v1256
          %v1322 = vunpack.c.l.b16 %v1257
          %v1323 = vunpack.c.l.b16 %v1258
          %v1324 = vunpack.c.l.b16 %v1259
          %v1325 = vunpack.c.l.b16 %v1260
          %v1326 = vunpack.c.l.b16 %v1261
          %v1327 = vunpack.c.l.b16 %v1262
          %v1328 = vunpack.c.l.b16 %v1263
          %v1329 = vunpack.c.l.b16 %v1264
          %v1330 = vunpack.c.l.b16 %v1265
          %v1331 = vunpack.c.l.b16 %v1266
          %v1332 = vunpack.c.l.b16 %v1267
          %v1333 = vunpack.c.l.b16 %v1268
          %v1334 = vunpack.c.l.b16 %v1269
          %v1335 = vunpack.c.l.b16 %v1270
          %v1336 = vunpack.c.l.b16 %v1271
          %v1337 = vunpack.c.l.b16 %v1272
          %v1338 = vunpack.c.l.b16 %v1273
          %v1339 = vunpack.c.l.b16 %v1274
          %v1340 = vunpack.c.l.b16 %v1275
          %v1341 = vunpack.c.l.b16 %v1276
          %v1342 = vunpack.c.l.b16 %v1277
          %v1343 = vunpack.c.l.b16 %v1278
          %v1344 = vunpack.c.l.b16 %v1279
          %v1345 = vunpack.c.l.b16 %v1280
          %v1346 = vunpack.c.l.b16 %v1281
          %v1347 = vunpack.c.l.b16 %v1282
          %v1348 = vunpack.c.l.b16 %v1283
          %v1349 = vunpack.c.l.b16 %v1284
          %v1350 = vunpack.c.l.b16 %v1285
          %v1351 = vunpack.c.l.b16 %v1286
          %v1352 = vpack.c.b16 %v1321, %v1320
          %v1353 = vpack.c.b16 %v1323, %v1322
          %v1354 = vpack.c.b16 %v1325, %v1324
          %v1355 = vpack.c.b16 %v1327, %v1326
          %v1356 = vpack.c.b16 %v1329, %v1328
          %v1357 = vpack.c.b16 %v1331, %v1330
          %v1358 = vpack.c.b16 %v1333, %v1332
          %v1359 = vpack.c.b16 %v1335, %v1334
          %v1360 = vpack.c.b16 %v1337, %v1336
          %v1361 = vpack.c.b16 %v1339, %v1338
          %v1362 = vpack.c.b16 %v1341, %v1340
          %v1363 = vpack.c.b16 %v1343, %v1342
          %v1364 = vpack.c.b16 %v1345, %v1344
          %v1365 = vpack.c.b16 %v1347, %v1346
          %v1366 = vpack.c.b16 %v1349, %v1348
          %v1367 = vpack.c.b16 %v1351, %v1350
          %1384 = vmatpush.bf16.msra.mxu0 %v1359
          %1385 = vmatpush.bf16.msra.mxu0 %v1358
          %1386 = vmatpush.bf16.msra.mxu0 %v1357
          %1387 = vmatpush.bf16.msra.mxu0 %v1356
          %1388 = vmatpush.bf16.msra.mxu0 %v1355
          %1389 = vmatpush.bf16.msra.mxu0 %v1354
          %1390 = vmatpush.bf16.msra.mxu0 %v1353
          %1391 = vmatpush.bf16.msra.mxu0 %v1352
          %1392 = vmatmul.bf16.gmra.mxu0 %v1253
          %v1393 = vpop.f32.mrf.mxu0
          %v1394 = vadd.f32 %v1287, %v1393
          %v1395 = vpop.f32.mrf.mxu0
          %1396 = vdwg.mxu0
          %1397 = vmatpush.bf16.msra.mxu0 %v1367
          %1398 = vmatpush.bf16.msra.mxu0 %v1366
          %1399 = vmatpush.bf16.msra.mxu0 %v1365
          %1400 = vmatpush.bf16.msra.mxu0 %v1364
          %1401 = vmatpush.bf16.msra.mxu0 %v1363
          %1402 = vmatpush.bf16.msra.mxu0 %v1362
          %1403 = vmatpush.bf16.msra.mxu0 %v1361
          %1404 = vmatpush.bf16.msra.mxu0 %v1360
          %1405 = vmatmul.bf16.gmra.mxu0 %v1254
          %v1406 = vpop.f32.mrf.mxu0
          %v1407 = vadd.f32 %v1394, %v1406
          %v1408 = vpop.f32.mrf.mxu0
          %1409 = vdwg.mxu0
          %v1410 = vmax.f32 %v1407, 0.0
          %v1411 = vpack.c.bf16 %v1410, %v1410
          %v1412 = vld [vmem:[%s11] sm:$0xf]
          %v1413 = vld [vmem:[%s11 + $0x4] sm:$0xf]
          %v1414 = vld [vmem:[%s11 + $0x8] sm:$0xf]
          %v1415 = vld [vmem:[%s11 + $0xc] sm:$0xf]
          %v1416 = vld [vmem:[%s11 + $0x10] sm:$0xf]
          %v1417 = vld [vmem:[%s11 + $0x14] sm:$0xf]
          %v1418 = vld [vmem:[%s11 + $0x18] sm:$0xf]
          %v1419 = vld [vmem:[%s11 + $0x1c] sm:$0xf]
          %v1420 = vld [vmem:[%s11 + $0x20] sm:$0xf]
          %v1421 = vld [vmem:[%s11 + $0x24] sm:$0xf]
          %v1422 = vld [vmem:[%s11 + $0x28] sm:$0xf]
          %v1423 = vld [vmem:[%s11 + $0x2c] sm:$0xf]
          %v1424 = vld [vmem:[%s11 + $0x30] sm:$0xf]
          %v1425 = vld [vmem:[%s11 + $0x34] sm:$0xf]
          %v1426 = vld [vmem:[%s11 + $0x38] sm:$0xf]
          %v1427 = vld [vmem:[%s11 + $0x3c] sm:$0xf]
          %v1428 = vld [vmem:[#allocation13] sm:$0x1]
          %v1445 = vunpack.c.l.b16 %v1412
          %v1446 = vunpack.c.l.b16 %v1413
          %v1447 = vunpack.c.l.b16 %v1414
          %v1448 = vunpack.c.l.b16 %v1415
          %v1449 = vunpack.c.l.b16 %v1416
          %v1450 = vunpack.c.l.b16 %v1417
          %v1451 = vunpack.c.l.b16 %v1418
          %v1452 = vunpack.c.l.b16 %v1419
          %v1453 = vunpack.c.l.b16 %v1420
          %v1454 = vunpack.c.l.b16 %v1421
          %v1455 = vunpack.c.l.b16 %v1422
          %v1456 = vunpack.c.l.b16 %v1423
          %v1457 = vunpack.c.l.b16 %v1424
          %v1458 = vunpack.c.l.b16 %v1425
          %v1459 = vunpack.c.l.b16 %v1426
          %v1460 = vunpack.c.l.b16 %v1427
          %v1461 = vpack.c.b16 %v1446, %v1445
          %v1462 = vpack.c.b16 %v1448, %v1447
          %v1463 = vpack.c.b16 %v1450, %v1449
          %v1464 = vpack.c.b16 %v1452, %v1451
          %v1465 = vpack.c.b16 %v1454, %v1453
          %v1466 = vpack.c.b16 %v1456, %v1455
          %v1467 = vpack.c.b16 %v1458, %v1457
          %v1468 = vpack.c.b16 %v1460, %v1459
          %1477 = vmatpush.bf16.msra.mxu0 %v1468
          %1478 = vmatpush.bf16.msra.mxu0 %v1467
          %1479 = vmatpush.bf16.msra.mxu0 %v1466
          %1480 = vmatpush.bf16.msra.mxu0 %v1465
          %1481 = vmatpush.bf16.msra.mxu0 %v1464
          %1482 = vmatpush.bf16.msra.mxu0 %v1463
          %1483 = vmatpush.bf16.msra.mxu0 %v1462
          %1484 = vmatpush.bf16.msra.mxu0 %v1461
          %1485 = vmatmul.bf16.gmra.mxu0 %v1411
          %v1486 = vpop.f32.mrf.mxu0
          %v1487 = vadd.f32 %v1428, %v1486
          %v1488 = vpop.f32.mrf.mxu0
          %1489 = vdwg.mxu0
          %v1490 = vld [vmem:[%s13] sm:$0x1]
          %v1491 = vadd.f32 %v1487, %v1490
          %vm1492 = vcmask 65536
          %1493 = vst.msk [vmem:[%s593] sm:$0x1] %vm1492, %v1491
        $region112: #{classification_pointnet.4} parent=75 // pred_fallthru
          _
        %p1494 = scmp.lt.s32.totalorder %s33, 1
        %s1495 = scalar_select %p1494, %s33, 1
        %s1496 = scalar_lea.vmem %s14, %s1495
        // Predicated region
        $region113: #{classification_pointnet.4} parent=75 // pred_check
          %p1497 = pneg %p360
        $region114: #{classification_pointnet.4} parent=75 // pred_check_branch
          %1499 = sbr.rel (%p1497) target = $region116
        $region115: #{classification_pointnet.4} parent=75 // pred_region
          _
        $region116: #{classification_pointnet.4} parent=75 // pred_fallthru
          _
      $region76: #{classification_pointnet.4} parent=5 // pred_fallthru
        _
      %p1500 = scmp.le.s32.totalorder 2, %s24
      // Predicated region
      $region117: #{classification_pointnet.4} parent=5 // pred_check
        %p1501 = pneg %p1500
      $region118: #{classification_pointnet.4} parent=5 // pred_check_branch
        %1503 = sbr.rel (%p1501) target = $region120
      $region119: #{classification_pointnet.4} parent=5 // pred_region
        %s1504 = ssub.s32 %s24, 2
        // Predicated region
        $region121: #{classification_pointnet.4} parent=119 // pred_check
          %p1505 = pneg %p366
        $region122: #{classification_pointnet.4} parent=119 // pred_check_branch
          %1507 = sbr.rel (%p1505) target = $region124
        $region123: #{classification_pointnet.4} parent=119 // pred_region
          %p1508 = scmp.lt.s32.totalorder %s35, 1
          %s1509 = scalar_select %p1508, %s35, 1
          %s1510 = scalar_lea.vmem %s14, %s1509
        $region124: #{classification_pointnet.4} parent=119 // pred_fallthru
          _
      $region120: #{classification_pointnet.4} parent=5 // pred_fallthru
        _
    $region6: #{classification_pointnet.4} parent=1 // loop_footer
      %s28 = sadd.s32 1, %s24
    $region7: #{classification_pointnet.4} parent=1 // loop_footer_branch
      %23 = sbr.rel target = $region3
    $region8: #{classification_pointnet.4} parent=1 // loop_exit
      _
    %1511 = vsyncpa [#allocation4], 1
    %s1512 = scalar_lea.sflag [#allocation4], 1
    %1513 = vsyncpa %s1512, 1
    %1514 = vsyncpa [#allocation6], 1
    %1515 = vsyncpa [#allocation9], 1
    %1516 = vsyncpa [#allocation12], 1

// kernel: classification_pointnet.7
$region0: #{classification_pointnet.7}
  #allocation0 [shape = 'u32[]', space=smem, size = 0x4, offset = 0x4, fixed_abs, tag = 'smem constant byte address 0x4 - core index']
  #allocation1 [shape = 'u32[72,128]{1,0:T(1,128)}', space=vmem, size = 0x9000, scoped, tag = 'internal scratch']
  #allocation2 [shape = 'f32[8,256]{1,0:T(8,128)}', space=vmem, size = 0x2000, scoped, tag = 'scratch operand']
  #allocation3 [shape = 'bf16[64,64]{1,0:T(8,128)(2,1)}', space=vmem, size = 0x4000, scoped, tag = 'scratch operand']
  %s0 = inlined_call_operand.vmem [shape: bf16[2,64,64], index: 0, kind: input, shape index: {}]
  %s1 = inlined_call_operand.vmem [shape: f32[2,64,64], index: 1, kind: input, shape index: {}]
  %s2 = inlined_call_operand.vmem [shape: bf16[64,64], index: 2, kind: input, shape index: {}]
  %s3 = inlined_call_operand.vmem [shape: f32[1,64], index: 3, kind: input, shape index: {}]
  %s4 = inlined_call_operand.vmem [shape: bf16[64,128], index: 4, kind: input, shape index: {}]
  %s5 = inlined_call_operand.vmem [shape: f32[1,128], index: 5, kind: input, shape index: {}]
  %s6 = inlined_call_operand.vmem [shape: bf16[128,256], index: 6, kind: input, shape index: {}]
  %s7 = inlined_call_operand.vmem [shape: f32[1,256], index: 7, kind: input, shape index: {}]
  %s8 = inlined_call_operand.vmem [shape: bf16[256,128], index: 8, kind: input, shape index: {}]
  %s9 = inlined_call_operand.vmem [shape: f32[1,128], index: 9, kind: input, shape index: {}]
  %s10 = inlined_call_operand.vmem [shape: bf16[128,64], index: 10, kind: input, shape index: {}]
  %s11 = inlined_call_operand.vmem [shape: f32[1,64], index: 11, kind: input, shape index: {}]
  %s12 = inlined_call_operand.vmem [shape: bf16[64,8], index: 12, kind: input, shape index: {}]
  %s13 = inlined_call_operand.vmem [shape: f32[1,8], index: 13, kind: input, shape index: {}]
  %s14 = inlined_call_operand.hbm [shape: f32[2,1,8], index: 14, kind: output, shape index: {}]
  %s15 = sld [smem:[#allocation0]]
  $region97: #{classification_pointnet.7} parent=0
    _
  %s17 = ssub.s32 1, %s15
  %s18 = scalar_select 0, %s17, %s15
  $region1: #{classification_pointnet.7} parent=0
    #allocation4 [shape = 'u8[1024]{0}', space=vmem, size = 0x400, scoped, tag = 'output window, operand 0']
    #allocation5 [shape = 's32[2]{0}', space=sflag, size = 0x8, scoped, tag = 'scoped memory for classification_pointnet.7']
    %19 = vsyncpa [#allocation5], 0
    %s20 = scalar_lea.sflag [#allocation5], 1
    %21 = vsyncpa %s20, 0
    loop: start=0, step=1, limit=4
    $region2: #{classification_pointnet.7} parent=1 // loop_pre_header
      _
    $region3: #{classification_pointnet.7} parent=1 // loop_header
      %s23 = sphi 0, %s27
      %p24 = scmp.ge.s32.totalorder %s23, 4
      %s30 = sphi 0, %s42
      %s31 = sphi 0, %s38
      %s32 = sphi 0, %s30
      %s33 = sphi 0, %s31
      %s34 = sphi 0, %s32
      %s35 = sphi 0, %s33
      %s47 = sphi 0, %s49
      %s50 = sphi 0, %s47
      %s51 = sphi 0, %s50
      %s67 = sphi 0, %s51
      %s73 = sphi 0, %s75
      %s76 = sphi 0, %s73
      %s77 = sphi 0, %s76
      %s93 = sphi 0, %s77
      %s97 = sphi 0, %s97
      %s99 = sphi 0, %s97
      %s100 = sphi 0, %s99
      %s114 = sphi 0, %s100
      %s118 = sphi 0, %s118
      %s120 = sphi 0, %s118
      %s121 = sphi 0, %s120
      %s135 = sphi 0, %s121
      %s139 = sphi 0, %s139
      %s141 = sphi 0, %s139
      %s142 = sphi 0, %s141
      %s156 = sphi 0, %s142
      %s160 = sphi 0, %s160
      %s162 = sphi 0, %s160
      %s163 = sphi 0, %s162
      %s177 = sphi 0, %s163
      %s181 = sphi 0, %s181
      %s183 = sphi 0, %s181
      %s184 = sphi 0, %s183
      %s198 = sphi 0, %s184
      %s202 = sphi 0, %s202
      %s204 = sphi 0, %s202
      %s205 = sphi 0, %s204
      %s219 = sphi 0, %s205
      %s223 = sphi 0, %s223
      %s225 = sphi 0, %s223
      %s226 = sphi 0, %s225
      %s240 = sphi 0, %s226
      %s244 = sphi 0, %s244
      %s246 = sphi 0, %s244
      %s247 = sphi 0, %s246
      %s261 = sphi 0, %s247
      %s265 = sphi 0, %s265
      %s267 = sphi 0, %s265
      %s268 = sphi 0, %s267
      %s282 = sphi 0, %s268
      %s286 = sphi 0, %s286
      %s288 = sphi 0, %s286
      %s289 = sphi 0, %s288
      %s303 = sphi 0, %s289
      %s307 = sphi 0, %s307
      %s309 = sphi 0, %s307
      %s310 = sphi 0, %s309
      %s324 = sphi 0, %s310
      %s328 = sphi 0, %s328
      %s330 = sphi 0, %s328
      %s331 = sphi 0, %s330
      %s345 = sphi 0, %s331
      %s351 = sphi 0, %s353
      %s354 = sphi 0, %s351
      %s355 = sphi 0, %s354
      %s371 = sphi 0, %s355
    $region4: #{classification_pointnet.7} parent=1 // loop_header_branch
      %26 = sbr.rel (%p24) target = $region8
    $region5: #{classification_pointnet.7} parent=1 // loop_body
      %s28 = ssub.s32 %s23, 1
      %s29 = ssub.s32 %s23, 2
      %s36 = sadd.s32 1, %s31
      %p37 = scmp.ge.s32.totalorder %s36, 1
      %s38 = scalar_select %p37, 0, %s36
      %s39 = sadd.s32 1, %s30
      %s40 = scalar_select %p37, %s39, %s30
      %p41 = scmp.ge.s32.totalorder %s40, 2
      %s42 = scalar_select %p41, 0, %s40
      %s43 = ssub.s32 %s30, %s42
      %s44 = ssub.s32 %s31, %s38
      %s45 = sor.u32 %s43, %s44
      %p46 = scmp.eq.s32.totalorder %s45, 0
      %s48 = sadd.s32 %s47, 1
      %s49 = scalar_select %p46, %s47, %s48
      %p52 = pneg %p46
      %p53 = scmp.eq.s32.totalorder %s23, 1
      %p54 = por %p52, %p53
      %p55 = scmp.ne.s32.totalorder %s47, %s50
      %p56 = scmp.eq.s32.totalorder %s23, 0
      %p57 = por %p55, %p56
      %p58 = scmp.ne.s32.totalorder %s47, %s50
      %p59 = scmp.eq.s32.totalorder %s28, 1
      %p60 = por %p58, %p59
      %p61 = scmp.ne.s32.totalorder %s50, %s51
      %p62 = scmp.eq.s32.totalorder %s28, 0
      %p63 = por %p61, %p62
      %p64 = scmp.ne.s32.totalorder %s50, %s51
      %p65 = scmp.eq.s32.totalorder %s29, 1
      %p66 = por %p64, %p65
      %p68 = scmp.ne.s32.totalorder %s51, %s67
      %p69 = scmp.eq.s32.totalorder %s29, 0
      %p70 = por %p68, %p69
      %s71 = ssub.s32 %s30, %s42
      %p72 = scmp.eq.s32.totalorder %s71, 0
      %s74 = sadd.s32 %s73, 1
      %s75 = scalar_select %p72, %s73, %s74
      %p78 = pneg %p72
      %p79 = scmp.eq.s32.totalorder %s23, 1
      %p80 = por %p78, %p79
      %p81 = scmp.ne.s32.totalorder %s73, %s76
      %p82 = scmp.eq.s32.totalorder %s23, 0
      %p83 = por %p81, %p82
      %p84 = scmp.ne.s32.totalorder %s73, %s76
      %p85 = scmp.eq.s32.totalorder %s28, 1
      %p86 = por %p84, %p85
      %p87 = scmp.ne.s32.totalorder %s76, %s77
      %p88 = scmp.eq.s32.totalorder %s28, 0
      %p89 = por %p87, %p88
      %p90 = scmp.ne.s32.totalorder %s76, %s77
      %p91 = scmp.eq.s32.totalorder %s29, 1
      %p92 = por %p90, %p91
      %p94 = scmp.ne.s32.totalorder %s77, %s93
      %p95 = scmp.eq.s32.totalorder %s29, 0
      %p96 = por %p94, %p95
      %s98 = sadd.s32 %s97, 1
      %p101 = scmp.eq.s32.totalorder %s23, 1
      %p102 = scmp.ne.s32.totalorder %s97, %s99
      %p103 = scmp.eq.s32.totalorder %s23, 0
      %p104 = por %p102, %p103
      %p105 = scmp.ne.s32.totalorder %s97, %s99
      %p106 = scmp.eq.s32.totalorder %s28, 1
      %p107 = por %p105, %p106
      %p108 = scmp.ne.s32.totalorder %s99, %s100
      %p109 = scmp.eq.s32.totalorder %s28, 0
      %p110 = por %p108, %p109
      %p111 = scmp.ne.s32.totalorder %s99, %s100
      %p112 = scmp.eq.s32.totalorder %s29, 1
      %p113 = por %p111, %p112
      %p115 = scmp.ne.s32.totalorder %s100, %s114
      %p116 = scmp.eq.s32.totalorder %s29, 0
      %p117 = por %p115, %p116
      %s119 = sadd.s32 %s118, 1
      %p122 = scmp.eq.s32.totalorder %s23, 1
      %p123 = scmp.ne.s32.totalorder %s118, %s120
      %p124 = scmp.eq.s32.totalorder %s23, 0
      %p125 = por %p123, %p124
      %p126 = scmp.ne.s32.totalorder %s118, %s120
      %p127 = scmp.eq.s32.totalorder %s28, 1
      %p128 = por %p126, %p127
      %p129 = scmp.ne.s32.totalorder %s120, %s121
      %p130 = scmp.eq.s32.totalorder %s28, 0
      %p131 = por %p129, %p130
      %p132 = scmp.ne.s32.totalorder %s120, %s121
      %p133 = scmp.eq.s32.totalorder %s29, 1
      %p134 = por %p132, %p133
      %p136 = scmp.ne.s32.totalorder %s121, %s135
      %p137 = scmp.eq.s32.totalorder %s29, 0
      %p138 = por %p136, %p137
      %s140 = sadd.s32 %s139, 1
      %p143 = scmp.eq.s32.totalorder %s23, 1
      %p144 = scmp.ne.s32.totalorder %s139, %s141
      %p145 = scmp.eq.s32.totalorder %s23, 0
      %p146 = por %p144, %p145
      %p147 = scmp.ne.s32.totalorder %s139, %s141
      %p148 = scmp.eq.s32.totalorder %s28, 1
      %p149 = por %p147, %p148
      %p150 = scmp.ne.s32.totalorder %s141, %s142
      %p151 = scmp.eq.s32.totalorder %s28, 0
      %p152 = por %p150, %p151
      %p153 = scmp.ne.s32.totalorder %s141, %s142
      %p154 = scmp.eq.s32.totalorder %s29, 1
      %p155 = por %p153, %p154
      %p157 = scmp.ne.s32.totalorder %s142, %s156
      %p158 = scmp.eq.s32.totalorder %s29, 0
      %p159 = por %p157, %p158
      %s161 = sadd.s32 %s160, 1
      %p164 = scmp.eq.s32.totalorder %s23, 1
      %p165 = scmp.ne.s32.totalorder %s160, %s162
      %p166 = scmp.eq.s32.totalorder %s23, 0
      %p167 = por %p165, %p166
      %p168 = scmp.ne.s32.totalorder %s160, %s162
      %p169 = scmp.eq.s32.totalorder %s28, 1
      %p170 = por %p168, %p169
      %p171 = scmp.ne.s32.totalorder %s162, %s163
      %p172 = scmp.eq.s32.totalorder %s28, 0
      %p173 = por %p171, %p172
      %p174 = scmp.ne.s32.totalorder %s162, %s163
      %p175 = scmp.eq.s32.totalorder %s29, 1
      %p176 = por %p174, %p175
      %p178 = scmp.ne.s32.totalorder %s163, %s177
      %p179 = scmp.eq.s32.totalorder %s29, 0
      %p180 = por %p178, %p179
      %s182 = sadd.s32 %s181, 1
      %p185 = scmp.eq.s32.totalorder %s23, 1
      %p186 = scmp.ne.s32.totalorder %s181, %s183
      %p187 = scmp.eq.s32.totalorder %s23, 0
      %p188 = por %p186, %p187
      %p189 = scmp.ne.s32.totalorder %s181, %s183
      %p190 = scmp.eq.s32.totalorder %s28, 1
      %p191 = por %p189, %p190
      %p192 = scmp.ne.s32.totalorder %s183, %s184
      %p193 = scmp.eq.s32.totalorder %s28, 0
      %p194 = por %p192, %p193
      %p195 = scmp.ne.s32.totalorder %s183, %s184
      %p196 = scmp.eq.s32.totalorder %s29, 1
      %p197 = por %p195, %p196
      %p199 = scmp.ne.s32.totalorder %s184, %s198
      %p200 = scmp.eq.s32.totalorder %s29, 0
      %p201 = por %p199, %p200
      %s203 = sadd.s32 %s202, 1
      %p206 = scmp.eq.s32.totalorder %s23, 1
      %p207 = scmp.ne.s32.totalorder %s202, %s204
      %p208 = scmp.eq.s32.totalorder %s23, 0
      %p209 = por %p207, %p208
      %p210 = scmp.ne.s32.totalorder %s202, %s204
      %p211 = scmp.eq.s32.totalorder %s28, 1
      %p212 = por %p210, %p211
      %p213 = scmp.ne.s32.totalorder %s204, %s205
      %p214 = scmp.eq.s32.totalorder %s28, 0
      %p215 = por %p213, %p214
      %p216 = scmp.ne.s32.totalorder %s204, %s205
      %p217 = scmp.eq.s32.totalorder %s29, 1
      %p218 = por %p216, %p217
      %p220 = scmp.ne.s32.totalorder %s205, %s219
      %p221 = scmp.eq.s32.totalorder %s29, 0
      %p222 = por %p220, %p221
      %s224 = sadd.s32 %s223, 1
      %p227 = scmp.eq.s32.totalorder %s23, 1
      %p228 = scmp.ne.s32.totalorder %s223, %s225
      %p229 = scmp.eq.s32.totalorder %s23, 0
      %p230 = por %p228, %p229
      %p231 = scmp.ne.s32.totalorder %s223, %s225
      %p232 = scmp.eq.s32.totalorder %s28, 1
      %p233 = por %p231, %p232
      %p234 = scmp.ne.s32.totalorder %s225, %s226
      %p235 = scmp.eq.s32.totalorder %s28, 0
      %p236 = por %p234, %p235
      %p237 = scmp.ne.s32.totalorder %s225, %s226
      %p238 = scmp.eq.s32.totalorder %s29, 1
      %p239 = por %p237, %p238
      %p241 = scmp.ne.s32.totalorder %s226, %s240
      %p242 = scmp.eq.s32.totalorder %s29, 0
      %p243 = por %p241, %p242
      %s245 = sadd.s32 %s244, 1
      %p248 = scmp.eq.s32.totalorder %s23, 1
      %p249 = scmp.ne.s32.totalorder %s244, %s246
      %p250 = scmp.eq.s32.totalorder %s23, 0
      %p251 = por %p249, %p250
      %p252 = scmp.ne.s32.totalorder %s244, %s246
      %p253 = scmp.eq.s32.totalorder %s28, 1
      %p254 = por %p252, %p253
      %p255 = scmp.ne.s32.totalorder %s246, %s247
      %p256 = scmp.eq.s32.totalorder %s28, 0
      %p257 = por %p255, %p256
      %p258 = scmp.ne.s32.totalorder %s246, %s247
      %p259 = scmp.eq.s32.totalorder %s29, 1
      %p260 = por %p258, %p259
      %p262 = scmp.ne.s32.totalorder %s247, %s261
      %p263 = scmp.eq.s32.totalorder %s29, 0
      %p264 = por %p262, %p263
      %s266 = sadd.s32 %s265, 1
      %p269 = scmp.eq.s32.totalorder %s23, 1
      %p270 = scmp.ne.s32.totalorder %s265, %s267
      %p271 = scmp.eq.s32.totalorder %s23, 0
      %p272 = por %p270, %p271
      %p273 = scmp.ne.s32.totalorder %s265, %s267
      %p274 = scmp.eq.s32.totalorder %s28, 1
      %p275 = por %p273, %p274
      %p276 = scmp.ne.s32.totalorder %s267, %s268
      %p277 = scmp.eq.s32.totalorder %s28, 0
      %p278 = por %p276, %p277
      %p279 = scmp.ne.s32.totalorder %s267, %s268
      %p280 = scmp.eq.s32.totalorder %s29, 1
      %p281 = por %p279, %p280
      %p283 = scmp.ne.s32.totalorder %s268, %s282
      %p284 = scmp.eq.s32.totalorder %s29, 0
      %p285 = por %p283, %p284
      %s287 = sadd.s32 %s286, 1
      %p290 = scmp.eq.s32.totalorder %s23, 1
      %p291 = scmp.ne.s32.totalorder %s286, %s288
      %p292 = scmp.eq.s32.totalorder %s23, 0
      %p293 = por %p291, %p292
      %p294 = scmp.ne.s32.totalorder %s286, %s288
      %p295 = scmp.eq.s32.totalorder %s28, 1
      %p296 = por %p294, %p295
      %p297 = scmp.ne.s32.totalorder %s288, %s289
      %p298 = scmp.eq.s32.totalorder %s28, 0
      %p299 = por %p297, %p298
      %p300 = scmp.ne.s32.totalorder %s288, %s289
      %p301 = scmp.eq.s32.totalorder %s29, 1
      %p302 = por %p300, %p301
      %p304 = scmp.ne.s32.totalorder %s289, %s303
      %p305 = scmp.eq.s32.totalorder %s29, 0
      %p306 = por %p304, %p305
      %s308 = sadd.s32 %s307, 1
      %p311 = scmp.eq.s32.totalorder %s23, 1
      %p312 = scmp.ne.s32.totalorder %s307, %s309
      %p313 = scmp.eq.s32.totalorder %s23, 0
      %p314 = por %p312, %p313
      %p315 = scmp.ne.s32.totalorder %s307, %s309
      %p316 = scmp.eq.s32.totalorder %s28, 1
      %p317 = por %p315, %p316
      %p318 = scmp.ne.s32.totalorder %s309, %s310
      %p319 = scmp.eq.s32.totalorder %s28, 0
      %p320 = por %p318, %p319
      %p321 = scmp.ne.s32.totalorder %s309, %s310
      %p322 = scmp.eq.s32.totalorder %s29, 1
      %p323 = por %p321, %p322
      %p325 = scmp.ne.s32.totalorder %s310, %s324
      %p326 = scmp.eq.s32.totalorder %s29, 0
      %p327 = por %p325, %p326
      %s329 = sadd.s32 %s328, 1
      %p332 = scmp.eq.s32.totalorder %s23, 1
      %p333 = scmp.ne.s32.totalorder %s328, %s330
      %p334 = scmp.eq.s32.totalorder %s23, 0
      %p335 = por %p333, %p334
      %p336 = scmp.ne.s32.totalorder %s328, %s330
      %p337 = scmp.eq.s32.totalorder %s28, 1
      %p338 = por %p336, %p337
      %p339 = scmp.ne.s32.totalorder %s330, %s331
      %p340 = scmp.eq.s32.totalorder %s28, 0
      %p341 = por %p339, %p340
      %p342 = scmp.ne.s32.totalorder %s330, %s331
      %p343 = scmp.eq.s32.totalorder %s29, 1
      %p344 = por %p342, %p343
      %p346 = scmp.ne.s32.totalorder %s331, %s345
      %p347 = scmp.eq.s32.totalorder %s29, 0
      %p348 = por %p346, %p347
      %s349 = ssub.s32 %s30, %s42
      %p350 = scmp.eq.s32.totalorder %s349, 0
      %s352 = sadd.s32 %s351, 1
      %s353 = scalar_select %p350, %s351, %s352
      %p356 = pneg %p350
      %p357 = scmp.eq.s32.totalorder %s23, 1
      %p358 = por %p356, %p357
      %p359 = scmp.ne.s32.totalorder %s351, %s354
      %p360 = scmp.eq.s32.totalorder %s23, 0
      %p361 = por %p359, %p360
      %p362 = scmp.ne.s32.totalorder %s351, %s354
      %p363 = scmp.eq.s32.totalorder %s28, 1
      %p364 = por %p362, %p363
      %p365 = scmp.ne.s32.totalorder %s354, %s355
      %p366 = scmp.eq.s32.totalorder %s28, 0
      %p367 = por %p365, %p366
      %p368 = scmp.ne.s32.totalorder %s354, %s355
      %p369 = scmp.eq.s32.totalorder %s29, 1
      %p370 = por %p368, %p369
      %p372 = scmp.ne.s32.totalorder %s355, %s371
      %p373 = scmp.eq.s32.totalorder %s29, 0
      %p374 = por %p372, %p373
      %p375 = scmp.le.s32.totalorder 1, %s23
      %p376 = scmp.lt.s32.totalorder %s23, 3
      %p377 = pnand %p375, %p376
      %p378 = pneg %p377
      // Predicated region
      $region9: #{classification_pointnet.7} parent=5 // pred_check
        _
      $region10: #{classification_pointnet.7} parent=5 // pred_check_branch
        %380 = sbr.rel (%p377) target = $region12
      $region11: #{classification_pointnet.7} parent=5 // pred_region
        %s381 = ssub.s32 %s23, 1
        // Predicated region
        $region13: #{classification_pointnet.7} parent=11 // pred_check
          %p382 = pneg %p110
        $region14: #{classification_pointnet.7} parent=11 // pred_check_branch
          %384 = sbr.rel (%p382) target = $region16
        $region15: #{classification_pointnet.7} parent=11 // pred_region
          _
        $region16: #{classification_pointnet.7} parent=11 // pred_fallthru
          _
        // Predicated region
        $region17: #{classification_pointnet.7} parent=11 // pred_check
          %p385 = pneg %p131
        $region18: #{classification_pointnet.7} parent=11 // pred_check_branch
          %387 = sbr.rel (%p385) target = $region20
        $region19: #{classification_pointnet.7} parent=11 // pred_region
          _
        $region20: #{classification_pointnet.7} parent=11 // pred_fallthru
          _
        // Predicated region
        $region21: #{classification_pointnet.7} parent=11 // pred_check
          %p388 = pneg %p152
        $region22: #{classification_pointnet.7} parent=11 // pred_check_branch
          %390 = sbr.rel (%p388) target = $region24
        $region23: #{classification_pointnet.7} parent=11 // pred_region
          _
        $region24: #{classification_pointnet.7} parent=11 // pred_fallthru
          _
        // Predicated region
        $region25: #{classification_pointnet.7} parent=11 // pred_check
          %p391 = pneg %p173
        $region26: #{classification_pointnet.7} parent=11 // pred_check_branch
          %393 = sbr.rel (%p391) target = $region28
        $region27: #{classification_pointnet.7} parent=11 // pred_region
          _
        $region28: #{classification_pointnet.7} parent=11 // pred_fallthru
          _
        // Predicated region
        $region29: #{classification_pointnet.7} parent=11 // pred_check
          %p394 = pneg %p194
        $region30: #{classification_pointnet.7} parent=11 // pred_check_branch
          %396 = sbr.rel (%p394) target = $region32
        $region31: #{classification_pointnet.7} parent=11 // pred_region
          _
        $region32: #{classification_pointnet.7} parent=11 // pred_fallthru
          _
        // Predicated region
        $region33: #{classification_pointnet.7} parent=11 // pred_check
          %p397 = pneg %p215
        $region34: #{classification_pointnet.7} parent=11 // pred_check_branch
          %399 = sbr.rel (%p397) target = $region36
        $region35: #{classification_pointnet.7} parent=11 // pred_region
          _
        $region36: #{classification_pointnet.7} parent=11 // pred_fallthru
          _
        // Predicated region
        $region37: #{classification_pointnet.7} parent=11 // pred_check
          %p400 = pneg %p236
        $region38: #{classification_pointnet.7} parent=11 // pred_check_branch
          %402 = sbr.rel (%p400) target = $region40
        $region39: #{classification_pointnet.7} parent=11 // pred_region
          _
        $region40: #{classification_pointnet.7} parent=11 // pred_fallthru
          _
        // Predicated region
        $region41: #{classification_pointnet.7} parent=11 // pred_check
          %p403 = pneg %p257
        $region42: #{classification_pointnet.7} parent=11 // pred_check_branch
          %405 = sbr.rel (%p403) target = $region44
        $region43: #{classification_pointnet.7} parent=11 // pred_region
          _
        $region44: #{classification_pointnet.7} parent=11 // pred_fallthru
          _
        // Predicated region
        $region45: #{classification_pointnet.7} parent=11 // pred_check
          %p406 = pneg %p278
        $region46: #{classification_pointnet.7} parent=11 // pred_check_branch
          %408 = sbr.rel (%p406) target = $region48
        $region47: #{classification_pointnet.7} parent=11 // pred_region
          _
        $region48: #{classification_pointnet.7} parent=11 // pred_fallthru
          _
        // Predicated region
        $region49: #{classification_pointnet.7} parent=11 // pred_check
          %p409 = pneg %p299
        $region50: #{classification_pointnet.7} parent=11 // pred_check_branch
          %411 = sbr.rel (%p409) target = $region52
        $region51: #{classification_pointnet.7} parent=11 // pred_region
          _
        $region52: #{classification_pointnet.7} parent=11 // pred_fallthru
          _
        // Predicated region
        $region53: #{classification_pointnet.7} parent=11 // pred_check
          %p412 = pneg %p320
        $region54: #{classification_pointnet.7} parent=11 // pred_check_branch
          %414 = sbr.rel (%p412) target = $region56
        $region55: #{classification_pointnet.7} parent=11 // pred_region
          _
        $region56: #{classification_pointnet.7} parent=11 // pred_fallthru
          _
        // Predicated region
        $region57: #{classification_pointnet.7} parent=11 // pred_check
          %p415 = pneg %p341
        $region58: #{classification_pointnet.7} parent=11 // pred_check_branch
          %417 = sbr.rel (%p415) target = $region60
        $region59: #{classification_pointnet.7} parent=11 // pred_region
          _
        $region60: #{classification_pointnet.7} parent=11 // pred_fallthru
          _
      $region12: #{classification_pointnet.7} parent=5 // pred_fallthru
        _
      %p418 = scmp.lt.s32.totalorder %s23, 2
      // Predicated region
      $region61: #{classification_pointnet.7} parent=5 // pred_check
        %p419 = pneg %p418
      $region62: #{classification_pointnet.7} parent=5 // pred_check_branch
        %421 = sbr.rel (%p419) target = $region64
      $region63: #{classification_pointnet.7} parent=5 // pred_region
        // Predicated region
        $region65: #{classification_pointnet.7} parent=63 // pred_check
          %p422 = pneg %p57
        $region66: #{classification_pointnet.7} parent=63 // pred_check_branch
          %424 = sbr.rel (%p422) target = $region68
        $region67: #{classification_pointnet.7} parent=63 // pred_region
          %s425 = smul.u32 8, %s31
          %p426 = scmp.lt.s32.totalorder %s30, 1
          %s427 = scalar_select %p426, %s30, 1
          %p428 = scmp.lt.s32.totalorder %s425, 7
          %s429 = scalar_select %p428, %s425, 7
          %s430 = smul.addr %s427, 8
          %s431 = sadd.s32 %s429, %s430
          %s432 = smul.addr %s431, 4
          %s433 = scalar_lea.vmem %s0, %s432
          %s434 = smul.u32 8, %s31
        $region68: #{classification_pointnet.7} parent=63 // pred_fallthru
          _
        // Predicated region
        $region69: #{classification_pointnet.7} parent=63 // pred_check
          %p435 = pneg %p83
        $region70: #{classification_pointnet.7} parent=63 // pred_check_branch
          %437 = sbr.rel (%p435) target = $region72
        $region71: #{classification_pointnet.7} parent=63 // pred_region
          %p438 = scmp.lt.s32.totalorder %s30, 1
          %s439 = scalar_select %p438, %s30, 1
          %s440 = smul.addr %s439, 8
          %s441 = smul.addr %s440, 8
          %s442 = scalar_lea.vmem %s1, %s441
        $region72: #{classification_pointnet.7} parent=63 // pred_fallthru
          _
      $region64: #{classification_pointnet.7} parent=5 // pred_fallthru
        _
      %p443 = scmp.le.s32.totalorder 1, %s23
      %p444 = scmp.lt.s32.totalorder %s23, 3
      %p445 = pnand %p443, %p444
      %p446 = pneg %p445
      // Predicated region
      $region73: #{classification_pointnet.7} parent=5 // pred_check
        _
      $region74: #{classification_pointnet.7} parent=5 // pred_check_branch
        %448 = sbr.rel (%p445) target = $region76
      $region75: #{classification_pointnet.7} parent=5 // pred_region
        %s449 = ssub.s32 %s23, 1
        %s450 = smul.u32 8, %s33
        %p451 = scmp.lt.s32.totalorder %s32, 1
        %s452 = scalar_select %p451, %s32, 1
        %p453 = scmp.lt.s32.totalorder %s450, 7
        %s454 = scalar_select %p453, %s450, 7
        %s455 = smul.addr %s452, 8
        %s456 = sadd.s32 %s454, %s455
        %s457 = smul.addr %s456, 4
        %s458 = scalar_lea.vmem %s0, %s457
        %p459 = pneg %p63
        %p460 = pneg %p60
        %p461 = scmp.lt.s32.totalorder %s32, 1
        %s462 = scalar_select %p461, %s32, 1
        %s463 = smul.addr %s462, 8
        %s464 = smul.addr %s463, 8
        %s465 = scalar_lea.vmem %s1, %s464
        %p466 = pneg %p89
        %p467 = pneg %p86
        %p468 = pneg %p110
        %p469 = pneg %p107
        %p470 = pneg %p131
        %p471 = pneg %p128
        %p472 = pneg %p152
        %p473 = pneg %p149
        %p474 = pneg %p173
        %p475 = pneg %p170
        %p476 = pneg %p194
        %p477 = pneg %p191
        %p478 = pneg %p215
        %p479 = pneg %p212
        %p480 = pneg %p236
        %p481 = pneg %p233
        %p482 = pneg %p257
        %p483 = pneg %p254
        %p484 = pneg %p278
        %p485 = pneg %p275
        %p486 = pneg %p299
        %p487 = pneg %p296
        %p488 = pneg %p320
        %p489 = pneg %p317
        %p490 = pneg %p341
        %p491 = pneg %p338
        %p492 = pneg %p367
        %p493 = pneg %p364
        %s494 = sand.u32 %s354, 1
        %s495 = scalar_lea.sflag [#allocation5], %s494
        %s496 = sand.u32 %s354, 1
        %s497 = scalar_lea.vmem [#allocation4], %s496
        %s498 = smul.u32 8, %s33
        %p499 = scmp.lt.s32.totalorder %s32, 1
        %s500 = scalar_select %p499, %s32, 1
        %p501 = scmp.lt.s32.totalorder %s498, 7
        %s502 = scalar_select %p501, %s498, 7
        %s503 = smul.addr %s500, 8
        %s504 = sadd.s32 %s502, %s503
        %s505 = smul.addr %s504, 4
        %s506 = scalar_lea.vmem %s0, %s505
        %s507 = smul.u32 8, %s33
        %p508 = scmp.lt.s32.totalorder %s32, 1
        %s509 = scalar_select %p508, %s32, 1
        %s510 = smul.addr %s509, 8
        %s511 = smul.addr %s510, 8
        %s512 = scalar_lea.vmem %s1, %s511
        %p514 = scmp.eq.s32.totalorder %s33, 0
        // Predicated region
        $region77: #{classification_pointnet.7} parent=75 // pred_check
          %p515 = pneg %p514
        $region78: #{classification_pointnet.7} parent=75 // pred_check_branch
          %517 = sbr.rel (%p515) target = $region80
        $region79: #{classification_pointnet.7} parent=75 // pred_region
          %518 = vst [vmem:[#allocation2] sm:$0xff] 0.0
          %519 = vst [vmem:[#allocation2 + $0x8] sm:$0xff] 0.0
          %v520 = vld [vmem:[%s512] sm:$0xff]
          %v521 = vld [vmem:[%s512 + $0x8] sm:$0xff]
          %v522 = vld [vmem:[%s512 + $0x10] sm:$0xff]
          %v523 = vld [vmem:[%s512 + $0x18] sm:$0xff]
          %v524 = vld [vmem:[%s512 + $0x20] sm:$0xff]
          %v525 = vld [vmem:[%s512 + $0x28] sm:$0xff]
          %v526 = vld [vmem:[%s512 + $0x30] sm:$0xff]
          %v527 = vld [vmem:[%s512 + $0x38] sm:$0xff]
          %v528 = vld [vmem:[%s2] sm:$0xf]
          %v529 = vld [vmem:[%s2 + $0x4] sm:$0xf]
          %v530 = vld [vmem:[%s2 + $0x8] sm:$0xf]
          %v531 = vld [vmem:[%s2 + $0xc] sm:$0xf]
          %v532 = vld [vmem:[%s2 + $0x10] sm:$0xf]
          %v533 = vld [vmem:[%s2 + $0x14] sm:$0xf]
          %v534 = vld [vmem:[%s2 + $0x18] sm:$0xf]
          %v535 = vld [vmem:[%s2 + $0x1c] sm:$0xf]
          %v536 = vunpack.c.l.bf16 %v528
          %v537 = vunpack.c.l.bf16 %v529
          %v538 = vunpack.c.l.bf16 %v530
          %v539 = vunpack.c.l.bf16 %v531
          %v540 = vunpack.c.l.bf16 %v532
          %v541 = vunpack.c.l.bf16 %v533
          %v542 = vunpack.c.l.bf16 %v534
          %v543 = vunpack.c.l.bf16 %v535
          %vm544 = vcmask 523264
          %v546 = vsel %vm544, %v520, 0
          %v549 = vsel %vm544, %v521, 0
          %v552 = vsel %vm544, %v522, 0
          %v555 = vsel %vm544, %v523, 0
          %v558 = vsel %vm544, %v524, 0
          %v561 = vsel %vm544, %v525, 0
          %v564 = vsel %vm544, %v526, 0
          %v567 = vsel %vm544, %v527, 0
          %569 = vmatpush.msra.mxu0 0.0
          %570 = vmatpush.msra.mxu0 0.0
          %571 = vmatpush.msra.mxu0 0.0
          %572 = vmatpush.msra.mxu0 0.0
          %573 = vmatpush.msra.mxu0 0.0
          %574 = vmatpush.msra.mxu0 0.0
          %575 = vmatpush.msra.mxu0 0.0
          %576 = vmatpush.msra.mxu0 0.0
          %577 = vmatpush.msra.mxu0 %v543
          %578 = vmatpush.msra.mxu0 %v542
          %579 = vmatpush.msra.mxu0 %v541
          %580 = vmatpush.msra.mxu0 %v540
          %581 = vmatpush.msra.mxu0 %v539
          %582 = vmatpush.msra.mxu0 %v538
          %583 = vmatpush.msra.mxu0 %v537
          %584 = vmatpush.msra.mxu0 %v536
          %585 = vmatmul.f32.gmra.mxu0 %v546
          %v586 = vpop.f32.mrf.mxu0
          %v587 = vadd.f32 0.0, %v586
          %588 = vmatmul.f32.gmra.mxu0 %v549
          %v589 = vpop.f32.mrf.mxu0
          %v590 = vadd.f32 0.0, %v589
          %591 = vmatmul.f32.gmra.mxu0 %v552
          %v592 = vpop.f32.mrf.mxu0
          %v593 = vadd.f32 0.0, %v592
          %594 = vmatmul.f32.gmra.mxu0 %v555
          %v595 = vpop.f32.mrf.mxu0
          %v596 = vadd.f32 0.0, %v595
          %597 = vmatmul.f32.gmra.mxu0 %v558
          %v598 = vpop.f32.mrf.mxu0
          %v599 = vadd.f32 0.0, %v598
          %600 = vmatmul.f32.gmra.mxu0 %v561
          %v601 = vpop.f32.mrf.mxu0
          %v602 = vadd.f32 0.0, %v601
          %603 = vmatmul.f32.gmra.mxu0 %v564
          %v604 = vpop.f32.mrf.mxu0
          %v605 = vadd.f32 0.0, %v604
          %606 = vmatmul.f32.gmra.mxu0 %v567
          %v607 = vpop.f32.mrf.mxu0
          %v608 = vadd.f32 0.0, %v607
          %609 = vdwg.mxu0
          %v610 = vpack.c.bf16 %v587, %v587
          %v611 = vpack.c.bf16 %v590, %v590
          %v612 = vpack.c.bf16 %v593, %v593
          %v613 = vpack.c.bf16 %v596, %v596
          %v614 = vpack.c.bf16 %v599, %v599
          %v615 = vpack.c.bf16 %v602, %v602
          %v616 = vpack.c.bf16 %v605, %v605
          %v617 = vpack.c.bf16 %v608, %v608
          %vm618 = vcmask 519168
          %619 = vst.msk [vmem:[#allocation3] sm:$0xf] %vm618, %v610
          %620 = vst.msk [vmem:[#allocation3 + $0x4] sm:$0xf] %vm618, %v611
          %621 = vst.msk [vmem:[#allocation3 + $0x8] sm:$0xf] %vm618, %v612
          %622 = vst.msk [vmem:[#allocation3 + $0xc] sm:$0xf] %vm618, %v613
          %623 = vst.msk [vmem:[#allocation3 + $0x10] sm:$0xf] %vm618, %v614
          %624 = vst.msk [vmem:[#allocation3 + $0x14] sm:$0xf] %vm618, %v615
          %625 = vst.msk [vmem:[#allocation3 + $0x18] sm:$0xf] %vm618, %v616
          %626 = vst.msk [vmem:[#allocation3 + $0x1c] sm:$0xf] %vm618, %v617
        $region80: #{classification_pointnet.7} parent=75 // pred_fallthru
          _
        %v627 = vld [vmem:[%s506] sm:$0xf]
        %v628 = vld [vmem:[%s506 + $0x4] sm:$0xf]
        %v629 = vld [vmem:[%s506 + $0x8] sm:$0xf]
        %v630 = vld [vmem:[%s506 + $0xc] sm:$0xf]
        %v631 = vld [vmem:[%s506 + $0x10] sm:$0xf]
        %v632 = vld [vmem:[%s506 + $0x14] sm:$0xf]
        %v633 = vld [vmem:[%s506 + $0x18] sm:$0xf]
        %v634 = vld [vmem:[%s506 + $0x1c] sm:$0xf]
        %v635 = vld [vmem:[#allocation3] sm:$0xf]
        %v636 = vld [vmem:[#allocation3 + $0x4] sm:$0xf]
        %v637 = vld [vmem:[#allocation3 + $0x8] sm:$0xf]
        %v638 = vld [vmem:[#allocation3 + $0xc] sm:$0xf]
        %v639 = vld [vmem:[#allocation3 + $0x10] sm:$0xf]
        %v640 = vld [vmem:[#allocation3 + $0x14] sm:$0xf]
        %v641 = vld [vmem:[#allocation3 + $0x18] sm:$0xf]
        %v642 = vld [vmem:[#allocation3 + $0x1c] sm:$0xf]
        %v643 = vld [vmem:[%s3] sm:$0x1]
        %v645 = vperm.slane %v643, 0
        %v655 = vunpack.c.l.b16 %v627
        %v656 = vunpack.c.l.b16 %v628
        %v657 = vunpack.c.l.b16 %v629
        %v658 = vunpack.c.l.b16 %v630
        %v659 = vunpack.c.l.b16 %v631
        %v660 = vunpack.c.l.b16 %v632
        %v661 = vunpack.c.l.b16 %v633
        %v662 = vunpack.c.l.b16 %v634
        %v663 = vpack.c.b16 %v656, %v655
        %v664 = vpack.c.b16 %v658, %v657
        %v665 = vpack.c.b16 %v660, %v659
        %v666 = vpack.c.b16 %v662, %v661
        %v675 = vunpack.c.l.b16 %v635
        %v676 = vunpack.c.l.b16 %v636
        %v677 = vunpack.c.l.b16 %v637
        %v678 = vunpack.c.l.b16 %v638
        %v679 = vunpack.c.l.b16 %v639
        %v680 = vunpack.c.l.b16 %v640
        %v681 = vunpack.c.l.b16 %v641
        %v682 = vunpack.c.l.b16 %v642
        %v683 = vpack.c.b16 %v676, %v675
        %v684 = vpack.c.b16 %v678, %v677
        %v685 = vpack.c.b16 %v680, %v679
        %v686 = vpack.c.b16 %v682, %v681
        %vm691 = vcmask 523264
        %v693 = vsel %vm691, %v663, 0
        %v696 = vsel %vm691, %v664, 0
        %v699 = vsel %vm691, %v665, 0
        %v702 = vsel %vm691, %v666, 0
        %704 = vmatpush.bf16.msra.mxu0 0
        %705 = vmatpush.bf16.msra.mxu0 0
        %706 = vmatpush.bf16.msra.mxu0 0
        %707 = vmatpush.bf16.msra.mxu0 0
        %708 = vmatpush.bf16.msra.mxu0 %v686
        %709 = vmatpush.bf16.msra.mxu0 %v685
        %710 = vmatpush.bf16.msra.mxu0 %v684
        %711 = vmatpush.bf16.msra.mxu0 %v683
        %712 = vmatmul.bf16.gmra.mxu0 %v693
        %v713 = vpop.f32.mrf.mxu0
        %v714 = vadd.f32 %v645, %v713
        %v715 = vpop.f32.mrf.mxu0
        %v716 = vadd.f32 %v645, %v715
        %717 = vmatmul.bf16.gmra.mxu0 %v696
        %v718 = vpop.f32.mrf.mxu0
        %v719 = vadd.f32 %v645, %v718
        %v720 = vpop.f32.mrf.mxu0
        %v721 = vadd.f32 %v645, %v720
        %722 = vmatmul.bf16.gmra.mxu0 %v699
        %v723 = vpop.f32.mrf.mxu0
        %v724 = vadd.f32 %v645, %v723
        %v725 = vpop.f32.mrf.mxu0
        %v726 = vadd.f32 %v645, %v725
        %727 = vmatmul.bf16.gmra.mxu0 %v702
        %v728 = vpop.f32.mrf.mxu0
        %v729 = vadd.f32 %v645, %v728
        %v730 = vpop.f32.mrf.mxu0
        %v731 = vadd.f32 %v645, %v730
        %732 = vdwg.mxu0
        %v733 = vmax.f32 %v714, 0.0
        %v734 = vmax.f32 %v716, 0.0
        %v735 = vmax.f32 %v719, 0.0
        %v736 = vmax.f32 %v721, 0.0
        %v737 = vmax.f32 %v724, 0.0
        %v738 = vmax.f32 %v726, 0.0
        %v739 = vmax.f32 %v729, 0.0
        %v740 = vmax.f32 %v731, 0.0
        %v741 = vpack.c.bf16 %v734, %v733
        %v742 = vpack.c.bf16 %v736, %v735
        %v743 = vpack.c.bf16 %v738, %v737
        %v744 = vpack.c.bf16 %v740, %v739
        %v745 = vld [vmem:[%s4] sm:$0xf]
        %v746 = vld [vmem:[%s4 + $0x4] sm:$0xf]
        %v747 = vld [vmem:[%s4 + $0x8] sm:$0xf]
        %v748 = vld [vmem:[%s4 + $0xc] sm:$0xf]
        %v749 = vld [vmem:[%s4 + $0x10] sm:$0xf]
        %v750 = vld [vmem:[%s4 + $0x14] sm:$0xf]
        %v751 = vld [vmem:[%s4 + $0x18] sm:$0xf]
        %v752 = vld [vmem:[%s4 + $0x1c] sm:$0xf]
        %v753 = vld [vmem:[%s5] sm:$0x1]
        %v755 = vperm.slane %v753, 0
        %v765 = vunpack.c.l.b16 %v745
        %v766 = vunpack.c.l.b16 %v746
        %v767 = vunpack.c.l.b16 %v747
        %v768 = vunpack.c.l.b16 %v748
        %v769 = vunpack.c.l.b16 %v749
        %v770 = vunpack.c.l.b16 %v750
        %v771 = vunpack.c.l.b16 %v751
        %v772 = vunpack.c.l.b16 %v752
        %v773 = vpack.c.b16 %v766, %v765
        %v774 = vpack.c.b16 %v768, %v767
        %v775 = vpack.c.b16 %v770, %v769
        %v776 = vpack.c.b16 %v772, %v771
        %v782 = vsel %vm691, %v741, 0
        %v785 = vsel %vm691, %v742, 0
        %v788 = vsel %vm691, %v743, 0
        %v791 = vsel %vm691, %v744, 0
        %793 = vmatpush.bf16.msra.mxu0 0
        %794 = vmatpush.bf16.msra.mxu0 0
        %795 = vmatpush.bf16.msra.mxu0 0
        %796 = vmatpush.bf16.msra.mxu0 0
        %797 = vmatpush.bf16.msra.mxu0 %v776
        %798 = vmatpush.bf16.msra.mxu0 %v775
        %799 = vmatpush.bf16.msra.mxu0 %v774
        %800 = vmatpush.bf16.msra.mxu0 %v773
        %801 = vmatmul.bf16.gmra.mxu0 %v782
        %v802 = vpop.f32.mrf.mxu0
        %v803 = vadd.f32 %v755, %v802
        %v804 = vpop.f32.mrf.mxu0
        %v805 = vadd.f32 %v755, %v804
        %806 = vmatmul.bf16.gmra.mxu0 %v785
        %v807 = vpop.f32.mrf.mxu0
        %v808 = vadd.f32 %v755, %v807
        %v809 = vpop.f32.mrf.mxu0
        %v810 = vadd.f32 %v755, %v809
        %811 = vmatmul.bf16.gmra.mxu0 %v788
        %v812 = vpop.f32.mrf.mxu0
        %v813 = vadd.f32 %v755, %v812
        %v814 = vpop.f32.mrf.mxu0
        %v815 = vadd.f32 %v755, %v814
        %816 = vmatmul.bf16.gmra.mxu0 %v791
        %v817 = vpop.f32.mrf.mxu0
        %v818 = vadd.f32 %v755, %v817
        %v819 = vpop.f32.mrf.mxu0
        %v820 = vadd.f32 %v755, %v819
        %821 = vdwg.mxu0
        %v822 = vmax.f32 %v803, 0.0
        %v823 = vmax.f32 %v805, 0.0
        %v824 = vmax.f32 %v808, 0.0
        %v825 = vmax.f32 %v810, 0.0
        %v826 = vmax.f32 %v813, 0.0
        %v827 = vmax.f32 %v815, 0.0
        %v828 = vmax.f32 %v818, 0.0
        %v829 = vmax.f32 %v820, 0.0
        %v830 = vpack.c.bf16 %v823, %v822
        %v831 = vpack.c.bf16 %v825, %v824
        %v832 = vpack.c.bf16 %v827, %v826
        %v833 = vpack.c.bf16 %v829, %v828
        %v834 = vld [vmem:[%s6] sm:$0xff]
        %v835 = vld [vmem:[%s6 + $0x8] sm:$0xff]
        %v836 = vld [vmem:[%s6 + $0x10] sm:$0xff]
        %v837 = vld [vmem:[%s6 + $0x18] sm:$0xff]
        %v838 = vld [vmem:[%s6 + $0x20] sm:$0xff]
        %v839 = vld [vmem:[%s6 + $0x28] sm:$0xff]
        %v840 = vld [vmem:[%s6 + $0x30] sm:$0xff]
        %v841 = vld [vmem:[%s6 + $0x38] sm:$0xff]
        %v842 = vld [vmem:[%s6 + $0x40] sm:$0xff]
        %v843 = vld [vmem:[%s6 + $0x48] sm:$0xff]
        %v844 = vld [vmem:[%s6 + $0x50] sm:$0xff]
        %v845 = vld [vmem:[%s6 + $0x58] sm:$0xff]
        %v846 = vld [vmem:[%s6 + $0x60] sm:$0xff]
        %v847 = vld [vmem:[%s6 + $0x68] sm:$0xff]
        %v848 = vld [vmem:[%s6 + $0x70] sm:$0xff]
        %v849 = vld [vmem:[%s6 + $0x78] sm:$0xff]
        %v850 = vld [vmem:[%s7] sm:$0x3]
        %v852 = vperm.slane %v850, 0
        %v853 = vperm.slane %v850, 1
        %v872 = vunpack.c.l.b16 %v834
        %v873 = vunpack.c.h.b16 %v834
        %v874 = vunpack.c.l.b16 %v835
        %v875 = vunpack.c.h.b16 %v835
        %v876 = vunpack.c.l.b16 %v836
        %v877 = vunpack.c.h.b16 %v836
        %v878 = vunpack.c.l.b16 %v837
        %v879 = vunpack.c.h.b16 %v837
        %v880 = vunpack.c.l.b16 %v838
        %v881 = vunpack.c.h.b16 %v838
        %v882 = vunpack.c.l.b16 %v839
        %v883 = vunpack.c.h.b16 %v839
        %v884 = vunpack.c.l.b16 %v840
        %v885 = vunpack.c.h.b16 %v840
        %v886 = vunpack.c.l.b16 %v841
        %v887 = vunpack.c.h.b16 %v841
        %v888 = vunpack.c.l.b16 %v842
        %v889 = vunpack.c.h.b16 %v842
        %v890 = vunpack.c.l.b16 %v843
        %v891 = vunpack.c.h.b16 %v843
        %v892 = vunpack.c.l.b16 %v844
        %v893 = vunpack.c.h.b16 %v844
        %v894 = vunpack.c.l.b16 %v845
        %v895 = vunpack.c.h.b16 %v845
        %v896 = vunpack.c.l.b16 %v846
        %v897 = vunpack.c.h.b16 %v846
        %v898 = vunpack.c.l.b16 %v847
        %v899 = vunpack.c.h.b16 %v847
        %v900 = vunpack.c.l.b16 %v848
        %v901 = vunpack.c.h.b16 %v848
        %v902 = vunpack.c.l.b16 %v849
        %v903 = vunpack.c.h.b16 %v849
        %v904 = vpack.c.b16 %v874, %v872
        %v905 = vpack.c.b16 %v875, %v873
        %v906 = vpack.c.b16 %v878, %v876
        %v907 = vpack.c.b16 %v879, %v877
        %v908 = vpack.c.b16 %v882, %v880
        %v909 = vpack.c.b16 %v883, %v881
        %v910 = vpack.c.b16 %v886, %v884
        %v911 = vpack.c.b16 %v887, %v885
        %v912 = vpack.c.b16 %v890, %v888
        %v913 = vpack.c.b16 %v891, %v889
        %v914 = vpack.c.b16 %v894, %v892
        %v915 = vpack.c.b16 %v895, %v893
        %v916 = vpack.c.b16 %v898, %v896
        %v917 = vpack.c.b16 %v899, %v897
        %v918 = vpack.c.b16 %v902, %v900
        %v919 = vpack.c.b16 %v903, %v901
        %936 = vmatpush.bf16.msra.mxu0 %v918
        %937 = vmatpush.bf16.msra.mxu0 %v916
        %938 = vmatpush.bf16.msra.mxu0 %v914
        %939 = vmatpush.bf16.msra.mxu0 %v912
        %940 = vmatpush.bf16.msra.mxu0 %v910
        %941 = vmatpush.bf16.msra.mxu0 %v908
        %942 = vmatpush.bf16.msra.mxu0 %v906
        %943 = vmatpush.bf16.msra.mxu0 %v904
        %944 = vmatmul.bf16.gmra.mxu0 %v830
        %v945 = vpop.f32.mrf.mxu0
        %v946 = vadd.f32 %v852, %v945
        %v947 = vpop.f32.mrf.mxu0
        %v948 = vadd.f32 %v852, %v947
        %949 = vmatmul.bf16.gmra.mxu0 %v831
        %v950 = vpop.f32.mrf.mxu0
        %v951 = vadd.f32 %v852, %v950
        %v952 = vpop.f32.mrf.mxu0
        %v953 = vadd.f32 %v852, %v952
        %954 = vmatmul.bf16.gmra.mxu0 %v832
        %v955 = vpop.f32.mrf.mxu0
        %v956 = vadd.f32 %v852, %v955
        %v957 = vpop.f32.mrf.mxu0
        %v958 = vadd.f32 %v852, %v957
        %959 = vmatmul.bf16.gmra.mxu0 %v833
        %v960 = vpop.f32.mrf.mxu0
        %v961 = vadd.f32 %v852, %v960
        %v962 = vpop.f32.mrf.mxu0
        %v963 = vadd.f32 %v852, %v962
        %964 = vdwg.mxu0
        %965 = vmatpush.bf16.msra.mxu0 %v919
        %966 = vmatpush.bf16.msra.mxu0 %v917
        %967 = vmatpush.bf16.msra.mxu0 %v915
        %968 = vmatpush.bf16.msra.mxu0 %v913
        %969 = vmatpush.bf16.msra.mxu0 %v911
        %970 = vmatpush.bf16.msra.mxu0 %v909
        %971 = vmatpush.bf16.msra.mxu0 %v907
        %972 = vmatpush.bf16.msra.mxu0 %v905
        %973 = vmatmul.bf16.gmra.mxu0 %v830
        %v974 = vpop.f32.mrf.mxu0
        %v975 = vadd.f32 %v853, %v974
        %v976 = vpop.f32.mrf.mxu0
        %v977 = vadd.f32 %v853, %v976
        %978 = vmatmul.bf16.gmra.mxu0 %v831
        %v979 = vpop.f32.mrf.mxu0
        %v980 = vadd.f32 %v853, %v979
        %v981 = vpop.f32.mrf.mxu0
        %v982 = vadd.f32 %v853, %v981
        %983 = vmatmul.bf16.gmra.mxu0 %v832
        %v984 = vpop.f32.mrf.mxu0
        %v985 = vadd.f32 %v853, %v984
        %v986 = vpop.f32.mrf.mxu0
        %v987 = vadd.f32 %v853, %v986
        %988 = vmatmul.bf16.gmra.mxu0 %v833
        %v989 = vpop.f32.mrf.mxu0
        %v990 = vadd.f32 %v853, %v989
        %v991 = vpop.f32.mrf.mxu0
        %v992 = vadd.f32 %v853, %v991
        %993 = vdwg.mxu0
        %v994 = vmax.f32 %v946, 0.0
        %v995 = vmax.f32 %v975, 0.0
        %v996 = vmax.f32 %v948, 0.0
        %v997 = vmax.f32 %v977, 0.0
        %v998 = vmax.f32 %v951, 0.0
        %v999 = vmax.f32 %v980, 0.0
        %v1000 = vmax.f32 %v953, 0.0
        %v1001 = vmax.f32 %v982, 0.0
        %v1002 = vmax.f32 %v956, 0.0
        %v1003 = vmax.f32 %v985, 0.0
        %v1004 = vmax.f32 %v958, 0.0
        %v1005 = vmax.f32 %v987, 0.0
        %v1006 = vmax.f32 %v961, 0.0
        %v1007 = vmax.f32 %v990, 0.0
        %v1008 = vmax.f32 %v963, 0.0
        %v1009 = vmax.f32 %v992, 0.0
        %v1010 = vadd.f32 %v994, %v996
        %v1011 = vadd.f32 %v995, %v997
        %v1012 = vadd.f32 %v1010, %v998
        %v1013 = vadd.f32 %v1011, %v999
        %v1014 = vadd.f32 %v1012, %v1000
        %v1015 = vadd.f32 %v1013, %v1001
        %v1016 = vadd.f32 %v1014, %v1002
        %v1017 = vadd.f32 %v1015, %v1003
        %v1018 = vadd.f32 %v1016, %v1004
        %v1019 = vadd.f32 %v1017, %v1005
        %v1020 = vadd.f32 %v1018, %v1006
        %v1021 = vadd.f32 %v1019, %v1007
        %v1022 = vadd.f32 %v1020, %v1008
        %v1023 = vadd.f32 %v1021, %v1009
        %v1024 = vld [vmem:[#allocation2] sm:$0xff]
        %v1025 = vld [vmem:[#allocation2 + $0x8] sm:$0xff]
        %v1026 = vadd.f32 %v1024, %v1022
        %v1027 = vadd.f32 %v1025, %v1023
        %1028 = vst [vmem:[#allocation2] sm:$0xff] %v1026
        %1029 = vst [vmem:[#allocation2 + $0x8] sm:$0xff] %v1027
        // Predicated region
        $region81: #{classification_pointnet.7} parent=75 // pred_check
          %p1030 = pneg %p514
        $region82: #{classification_pointnet.7} parent=75 // pred_check_branch
          %1032 = sbr.rel (%p1030) target = $region84
        $region83: #{classification_pointnet.7} parent=75 // pred_region
          %v1033 = vld [vmem:[#allocation2] sm:$0xff]
          %v1034 = vld [vmem:[#allocation2 + $0x8] sm:$0xff]
          %v1035 = vrot.slane %v1033, 4
          %v1036 = vadd.f32 %v1033, %v1035
          %v1037 = vrot.slane %v1036, 2
          %v1038 = vadd.f32 %v1036, %v1037
          %v1039 = vrot.slane %v1038, 1
          %v1040 = vadd.f32 %v1038, %v1039
          %v1041 = vrot.slane %v1034, 4
          %v1042 = vadd.f32 %v1034, %v1041
          %v1043 = vrot.slane %v1042, 2
          %v1044 = vadd.f32 %v1042, %v1043
          %v1045 = vrot.slane %v1044, 1
          %v1046 = vadd.f32 %v1044, %v1045
          %v1047 = vpack.c.bf16 %v1040, %v1040
          %v1048 = vpack.c.bf16 %v1046, %v1046
          %v1049 = vld [vmem:[%s8] sm:$0xf]
          %v1050 = vld [vmem:[%s8 + $0x4] sm:$0xf]
          %v1051 = vld [vmem:[%s8 + $0x8] sm:$0xf]
          %v1052 = vld [vmem:[%s8 + $0xc] sm:$0xf]
          %v1053 = vld [vmem:[%s8 + $0x10] sm:$0xf]
          %v1054 = vld [vmem:[%s8 + $0x14] sm:$0xf]
          %v1055 = vld [vmem:[%s8 + $0x18] sm:$0xf]
          %v1056 = vld [vmem:[%s8 + $0x1c] sm:$0xf]
          %v1057 = vld [vmem:[%s8 + $0x20] sm:$0xf]
          %v1058 = vld [vmem:[%s8 + $0x24] sm:$0xf]
          %v1059 = vld [vmem:[%s8 + $0x28] sm:$0xf]
          %v1060 = vld [vmem:[%s8 + $0x2c] sm:$0xf]
          %v1061 = vld [vmem:[%s8 + $0x30] sm:$0xf]
          %v1062 = vld [vmem:[%s8 + $0x34] sm:$0xf]
          %v1063 = vld [vmem:[%s8 + $0x38] sm:$0xf]
          %v1064 = vld [vmem:[%s8 + $0x3c] sm:$0xf]
          %v1065 = vld [vmem:[%s8 + $0x40] sm:$0xf]
          %v1066 = vld [vmem:[%s8 + $0x44] sm:$0xf]
          %v1067 = vld [vmem:[%s8 + $0x48] sm:$0xf]
          %v1068 = vld [vmem:[%s8 + $0x4c] sm:$0xf]
          %v1069 = vld [vmem:[%s8 + $0x50] sm:$0xf]
          %v1070 = vld [vmem:[%s8 + $0x54] sm:$0xf]
          %v1071 = vld [vmem:[%s8 + $0x58] sm:$0xf]
          %v1072 = vld [vmem:[%s8 + $0x5c] sm:$0xf]
          %v1073 = vld [vmem:[%s8 + $0x60] sm:$0xf]
          %v1074 = vld [vmem:[%s8 + $0x64] sm:$0xf]
          %v1075 = vld [vmem:[%s8 + $0x68] sm:$0xf]
          %v1076 = vld [vmem:[%s8 + $0x6c] sm:$0xf]
          %v1077 = vld [vmem:[%s8 + $0x70] sm:$0xf]
          %v1078 = vld [vmem:[%s8 + $0x74] sm:$0xf]
          %v1079 = vld [vmem:[%s8 + $0x78] sm:$0xf]
          %v1080 = vld [vmem:[%s8 + $0x7c] sm:$0xf]
          %v1081 = vld [vmem:[%s9] sm:$0x1]
          %v1114 = vunpack.c.l.b16 %v1049
          %v1115 = vunpack.c.l.b16 %v1050
          %v1116 = vunpack.c.l.b16 %v1051
          %v1117 = vunpack.c.l.b16 %v1052
          %v1118 = vunpack.c.l.b16 %v1053
          %v1119 = vunpack.c.l.b16 %v1054
          %v1120 = vunpack.c.l.b16 %v1055
          %v1121 = vunpack.c.l.b16 %v1056
          %v1122 = vunpack.c.l.b16 %v1057
          %v1123 = vunpack.c.l.b16 %v1058
          %v1124 = vunpack.c.l.b16 %v1059
          %v1125 = vunpack.c.l.b16 %v1060
          %v1126 = vunpack.c.l.b16 %v1061
          %v1127 = vunpack.c.l.b16 %v1062
          %v1128 = vunpack.c.l.b16 %v1063
          %v1129 = vunpack.c.l.b16 %v1064
          %v1130 = vunpack.c.l.b16 %v1065
          %v1131 = vunpack.c.l.b16 %v1066
          %v1132 = vunpack.c.l.b16 %v1067
          %v1133 = vunpack.c.l.b16 %v1068
          %v1134 = vunpack.c.l.b16 %v1069
          %v1135 = vunpack.c.l.b16 %v1070
          %v1136 = vunpack.c.l.b16 %v1071
          %v1137 = vunpack.c.l.b16 %v1072
          %v1138 = vunpack.c.l.b16 %v1073
          %v1139 = vunpack.c.l.b16 %v1074
          %v1140 = vunpack.c.l.b16 %v1075
          %v1141 = vunpack.c.l.b16 %v1076
          %v1142 = vunpack.c.l.b16 %v1077
          %v1143 = vunpack.c.l.b16 %v1078
          %v1144 = vunpack.c.l.b16 %v1079
          %v1145 = vunpack.c.l.b16 %v1080
          %v1146 = vpack.c.b16 %v1115, %v1114
          %v1147 = vpack.c.b16 %v1117, %v1116
          %v1148 = vpack.c.b16 %v1119, %v1118
          %v1149 = vpack.c.b16 %v1121, %v1120
          %v1150 = vpack.c.b16 %v1123, %v1122
          %v1151 = vpack.c.b16 %v1125, %v1124
          %v1152 = vpack.c.b16 %v1127, %v1126
          %v1153 = vpack.c.b16 %v1129, %v1128
          %v1154 = vpack.c.b16 %v1131, %v1130
          %v1155 = vpack.c.b16 %v1133, %v1132
          %v1156 = vpack.c.b16 %v1135, %v1134
          %v1157 = vpack.c.b16 %v1137, %v1136
          %v1158 = vpack.c.b16 %v1139, %v1138
          %v1159 = vpack.c.b16 %v1141, %v1140
          %v1160 = vpack.c.b16 %v1143, %v1142
          %v1161 = vpack.c.b16 %v1145, %v1144
          %1178 = vmatpush.bf16.msra.mxu0 %v1153
          %1179 = vmatpush.bf16.msra.mxu0 %v1152
          %1180 = vmatpush.bf16.msra.mxu0 %v1151
          %1181 = vmatpush.bf16.msra.mxu0 %v1150
          %1182 = vmatpush.bf16.msra.mxu0 %v1149
          %1183 = vmatpush.bf16.msra.mxu0 %v1148
          %1184 = vmatpush.bf16.msra.mxu0 %v1147
          %1185 = vmatpush.bf16.msra.mxu0 %v1146
          %1186 = vmatmul.bf16.gmra.mxu0 %v1047
          %v1187 = vpop.f32.mrf.mxu0
          %v1188 = vadd.f32 %v1081, %v1187
          %v1189 = vpop.f32.mrf.mxu0
          %1190 = vdwg.mxu0
          %1191 = vmatpush.bf16.msra.mxu0 %v1161
          %1192 = vmatpush.bf16.msra.mxu0 %v1160
          %1193 = vmatpush.bf16.msra.mxu0 %v1159
          %1194 = vmatpush.bf16.msra.mxu0 %v1158
          %1195 = vmatpush.bf16.msra.mxu0 %v1157
          %1196 = vmatpush.bf16.msra.mxu0 %v1156
          %1197 = vmatpush.bf16.msra.mxu0 %v1155
          %1198 = vmatpush.bf16.msra.mxu0 %v1154
          %1199 = vmatmul.bf16.gmra.mxu0 %v1048
          %v1200 = vpop.f32.mrf.mxu0
          %v1201 = vadd.f32 %v1188, %v1200
          %v1202 = vpop.f32.mrf.mxu0
          %1203 = vdwg.mxu0
          %v1204 = vmax.f32 %v1201, 0.0
          %v1205 = vpack.c.bf16 %v1204, %v1204
          %v1206 = vld [vmem:[%s10] sm:$0xf]
          %v1207 = vld [vmem:[%s10 + $0x4] sm:$0xf]
          %v1208 = vld [vmem:[%s10 + $0x8] sm:$0xf]
          %v1209 = vld [vmem:[%s10 + $0xc] sm:$0xf]
          %v1210 = vld [vmem:[%s10 + $0x10] sm:$0xf]
          %v1211 = vld [vmem:[%s10 + $0x14] sm:$0xf]
          %v1212 = vld [vmem:[%s10 + $0x18] sm:$0xf]
          %v1213 = vld [vmem:[%s10 + $0x1c] sm:$0xf]
          %v1214 = vld [vmem:[%s10 + $0x20] sm:$0xf]
          %v1215 = vld [vmem:[%s10 + $0x24] sm:$0xf]
          %v1216 = vld [vmem:[%s10 + $0x28] sm:$0xf]
          %v1217 = vld [vmem:[%s10 + $0x2c] sm:$0xf]
          %v1218 = vld [vmem:[%s10 + $0x30] sm:$0xf]
          %v1219 = vld [vmem:[%s10 + $0x34] sm:$0xf]
          %v1220 = vld [vmem:[%s10 + $0x38] sm:$0xf]
          %v1221 = vld [vmem:[%s10 + $0x3c] sm:$0xf]
          %v1222 = vld [vmem:[%s11] sm:$0x1]
          %v1239 = vunpack.c.l.b16 %v1206
          %v1240 = vunpack.c.l.b16 %v1207
          %v1241 = vunpack.c.l.b16 %v1208
          %v1242 = vunpack.c.l.b16 %v1209
          %v1243 = vunpack.c.l.b16 %v1210
          %v1244 = vunpack.c.l.b16 %v1211
          %v1245 = vunpack.c.l.b16 %v1212
          %v1246 = vunpack.c.l.b16 %v1213
          %v1247 = vunpack.c.l.b16 %v1214
          %v1248 = vunpack.c.l.b16 %v1215
          %v1249 = vunpack.c.l.b16 %v1216
          %v1250 = vunpack.c.l.b16 %v1217
          %v1251 = vunpack.c.l.b16 %v1218
          %v1252 = vunpack.c.l.b16 %v1219
          %v1253 = vunpack.c.l.b16 %v1220
          %v1254 = vunpack.c.l.b16 %v1221
          %v1255 = vpack.c.b16 %v1240, %v1239
          %v1256 = vpack.c.b16 %v1242, %v1241
          %v1257 = vpack.c.b16 %v1244, %v1243
          %v1258 = vpack.c.b16 %v1246, %v1245
          %v1259 = vpack.c.b16 %v1248, %v1247
          %v1260 = vpack.c.b16 %v1250, %v1249
          %v1261 = vpack.c.b16 %v1252, %v1251
          %v1262 = vpack.c.b16 %v1254, %v1253
          %1271 = vmatpush.bf16.msra.mxu0 %v1262
          %1272 = vmatpush.bf16.msra.mxu0 %v1261
          %1273 = vmatpush.bf16.msra.mxu0 %v1260
          %1274 = vmatpush.bf16.msra.mxu0 %v1259
          %1275 = vmatpush.bf16.msra.mxu0 %v1258
          %1276 = vmatpush.bf16.msra.mxu0 %v1257
          %1277 = vmatpush.bf16.msra.mxu0 %v1256
          %1278 = vmatpush.bf16.msra.mxu0 %v1255
          %1279 = vmatmul.bf16.gmra.mxu0 %v1205
          %v1280 = vpop.f32.mrf.mxu0
          %v1281 = vadd.f32 %v1222, %v1280
          %v1282 = vpop.f32.mrf.mxu0
          %1283 = vdwg.mxu0
          %v1284 = vmax.f32 %v1281, 0.0
          %v1285 = vpack.c.bf16 %v1284, %v1284
          %v1286 = vld [vmem:[%s12] sm:$0xf]
          %v1287 = vld [vmem:[%s12 + $0x4] sm:$0xf]
          %v1288 = vld [vmem:[%s12 + $0x8] sm:$0xf]
          %v1289 = vld [vmem:[%s12 + $0xc] sm:$0xf]
          %v1290 = vld [vmem:[%s12 + $0x10] sm:$0xf]
          %v1291 = vld [vmem:[%s12 + $0x14] sm:$0xf]
          %v1292 = vld [vmem:[%s12 + $0x18] sm:$0xf]
          %v1293 = vld [vmem:[%s12 + $0x1c] sm:$0xf]
          %v1294 = vld [vmem:[%s13] sm:$0x1]
          %v1303 = vunpack.c.l.b16 %v1286
          %v1304 = vunpack.c.l.b16 %v1287
          %v1305 = vunpack.c.l.b16 %v1288
          %v1306 = vunpack.c.l.b16 %v1289
          %v1307 = vunpack.c.l.b16 %v1290
          %v1308 = vunpack.c.l.b16 %v1291
          %v1309 = vunpack.c.l.b16 %v1292
          %v1310 = vunpack.c.l.b16 %v1293
          %v1311 = vpack.c.b16 %v1304, %v1303
          %v1312 = vpack.c.b16 %v1306, %v1305
          %v1313 = vpack.c.b16 %v1308, %v1307
          %v1314 = vpack.c.b16 %v1310, %v1309
          %v1320 = vsel %vm691, %v1285, 0
          %1322 = vmatpush.bf16.msra.mxu0 0
          %1323 = vmatpush.bf16.msra.mxu0 0
          %1324 = vmatpush.bf16.msra.mxu0 0
          %1325 = vmatpush.bf16.msra.mxu0 0
          %1326 = vmatpush.bf16.msra.mxu0 %v1314
          %1327 = vmatpush.bf16.msra.mxu0 %v1313
          %1328 = vmatpush.bf16.msra.mxu0 %v1312
          %1329 = vmatpush.bf16.msra.mxu0 %v1311
          %1330 = vmatmul.bf16.gmra.mxu0 %v1320
          %v1331 = vpop.f32.mrf.mxu0
          %v1332 = vadd.f32 %v1294, %v1331
          %v1333 = vpop.f32.mrf.mxu0
          %1334 = vdwg.mxu0
          %vm1335 = vcmask 57344
          %v1336 = vsel %vm1335, %v1332, -inf
          %1337 = vmax.xlane.f32.xlu0 %v1336
          %v1338 = vpop.xlane.xlu0 %1337
          %v1339 = vsub.f32 %v1332, %v1338
          %v1340 = vmul.f32 %v1339, 1.442695
          %v1341 = vpow.pop %v1340
          %v1342 = vsel %vm1335, %v1341, 0.0
          %1343 = vadd.xlane.f32.xlu0 %v1342
          %v1344 = vpop.xlane.xlu0 %1343
          %v1345 = vlog2.pop %v1344
          %v1346 = vmul.f32 %v1345, 0.6931472
          %v1347 = vsub.f32 %v1339, %v1346
          %1348 = vst.msk [vmem:[%s497] sm:$0x1] %vm1335, %v1347
        $region84: #{classification_pointnet.7} parent=75 // pred_fallthru
          _
        %s1349 = sand.u32 %s354, 1
        %s1350 = scalar_lea.sflag [#allocation5], %s1349
        %s1351 = sand.u32 %s354, 1
        %s1352 = scalar_lea.vmem [#allocation4], %s1351
        // Predicated region
        $region85: #{classification_pointnet.7} parent=75 // pred_check
          %p1353 = pneg %p364
        $region86: #{classification_pointnet.7} parent=75 // pred_check_branch
          %1355 = sbr.rel (%p1353) target = $region88
        $region87: #{classification_pointnet.7} parent=75 // pred_region
          %1357 = vsyncadd %s1350, 0
          %s1358 = scalar_lea.hbm %s14, %s32
          %s1360 = sshll.u32 %s1352, 4
          %s1361 = int_to_ptr.vmem [resolvable:$true] %s1360
          %s1362 = sshll.u32 %s1358, 4
          %s1363 = int_to_ptr.hbm [resolvable:$true] %s1362
          %1365 = dma.vmem_to_hbm [thread:$0]  %s1361, 16, %s1363, %s1350
        $region88: #{classification_pointnet.7} parent=75 // pred_fallthru
          _
      $region76: #{classification_pointnet.7} parent=5 // pred_fallthru
        _
      %p1366 = scmp.le.s32.totalorder 2, %s23
      // Predicated region
      $region89: #{classification_pointnet.7} parent=5 // pred_check
        %p1367 = pneg %p1366
      $region90: #{classification_pointnet.7} parent=5 // pred_check_branch
        %1369 = sbr.rel (%p1367) target = $region92
      $region91: #{classification_pointnet.7} parent=5 // pred_region
        %s1370 = ssub.s32 %s23, 2
        // Predicated region
        $region93: #{classification_pointnet.7} parent=91 // pred_check
          %p1371 = pneg %p370
        $region94: #{classification_pointnet.7} parent=91 // pred_check_branch
          %1373 = sbr.rel (%p1371) target = $region96
        $region95: #{classification_pointnet.7} parent=91 // pred_region
          %s1374 = sand.u32 %s355, 1
          %s1375 = scalar_lea.sflag [#allocation5], %s1374
          %s1376 = sand.u32 %s355, 1
          %s1377 = scalar_lea.vmem [#allocation4], %s1376
          %1379 = dma.done %s1375, 16
        $region96: #{classification_pointnet.7} parent=91 // pred_fallthru
          _
      $region92: #{classification_pointnet.7} parent=5 // pred_fallthru
        _
    $region6: #{classification_pointnet.7} parent=1 // loop_footer
      %s27 = sadd.s32 1, %s23
    $region7: #{classification_pointnet.7} parent=1 // loop_footer_branch
      %22 = sbr.rel target = $region3
    $region8: #{classification_pointnet.7} parent=1 // loop_exit
      _
    %1380 = vsyncpa [#allocation5], 1
    %s1381 = scalar_lea.sflag [#allocation5], 1
    %1382 = vsyncpa %s1381, 1

// kernel: classification_pointnet.6
$region0: #{classification_pointnet.6}
  #allocation0 [shape = 'u32[]', space=smem, size = 0x4, offset = 0x4, fixed_abs, tag = 'smem constant byte address 0x4 - core index']
  #allocation1 [shape = 'u32[72,128]{1,0:T(1,128)}', space=vmem, size = 0x9000, scoped, tag = 'internal scratch']
  #allocation2 [shape = 'f32[8,256]{1,0:T(8,128)}', space=vmem, size = 0x2000, scoped, tag = 'scratch operand']
  %s0 = inlined_call_operand.vmem [shape: bf16[2,64,64], index: 0, kind: input, shape index: {}]
  %s1 = inlined_call_operand.vmem [shape: bf16[64,64], index: 1, kind: input, shape index: {}]
  %s2 = inlined_call_operand.vmem [shape: f32[1,64], index: 2, kind: input, shape index: {}]
  %s3 = inlined_call_operand.vmem [shape: bf16[64,128], index: 3, kind: input, shape index: {}]
  %s4 = inlined_call_operand.vmem [shape: f32[1,128], index: 4, kind: input, shape index: {}]
  %s5 = inlined_call_operand.vmem [shape: bf16[128,256], index: 5, kind: input, shape index: {}]
  %s6 = inlined_call_operand.vmem [shape: f32[1,256], index: 6, kind: input, shape index: {}]
  %s7 = inlined_call_operand.vmem [shape: bf16[256,256], index: 7, kind: input, shape index: {}]
  %s8 = inlined_call_operand.vmem [shape: f32[1,256], index: 8, kind: input, shape index: {}]
  %s9 = inlined_call_operand.vmem [shape: bf16[256,128], index: 9, kind: input, shape index: {}]
  %s10 = inlined_call_operand.vmem [shape: f32[1,128], index: 10, kind: input, shape index: {}]
  %s11 = inlined_call_operand.vmem [shape: bf16[128,4096], index: 11, kind: input, shape index: {}]
  %s12 = inlined_call_operand.vmem [shape: f32[1,4096], index: 12, kind: input, shape index: {}]
  %s13 = inlined_call_operand.vmem [shape: f32[1,4096], index: 13, kind: input, shape index: {}]
  %s14 = inlined_call_operand.vmem [shape: f32[2,1,4096], index: 14, kind: output, shape index: {}]
  %s15 = sld [smem:[#allocation0]]
  $region97: #{classification_pointnet.6} parent=0
    _
  %s17 = ssub.s32 1, %s15
  %s18 = scalar_select 0, %s17, %s15
  loop: start=0, step=1, limit=4
  $region2: #{classification_pointnet.6} parent=0 // loop_pre_header
    _
  $region3: #{classification_pointnet.6} parent=0 // loop_header
    %s20 = sphi 0, %s24
    %p21 = scmp.ge.s32.totalorder %s20, 4
    %s27 = sphi 0, %s39
    %s28 = sphi 0, %s35
    %s29 = sphi 0, %s27
    %s30 = sphi 0, %s28
    %s31 = sphi 0, %s29
    %s32 = sphi 0, %s30
    %s44 = sphi 0, %s46
    %s47 = sphi 0, %s44
    %s48 = sphi 0, %s47
    %s64 = sphi 0, %s48
    %s68 = sphi 0, %s68
    %s70 = sphi 0, %s68
    %s71 = sphi 0, %s70
    %s85 = sphi 0, %s71
    %s89 = sphi 0, %s89
    %s91 = sphi 0, %s89
    %s92 = sphi 0, %s91
    %s106 = sphi 0, %s92
    %s110 = sphi 0, %s110
    %s112 = sphi 0, %s110
    %s113 = sphi 0, %s112
    %s127 = sphi 0, %s113
    %s131 = sphi 0, %s131
    %s133 = sphi 0, %s131
    %s134 = sphi 0, %s133
    %s148 = sphi 0, %s134
    %s152 = sphi 0, %s152
    %s154 = sphi 0, %s152
    %s155 = sphi 0, %s154
    %s169 = sphi 0, %s155
    %s173 = sphi 0, %s173
    %s175 = sphi 0, %s173
    %s176 = sphi 0, %s175
    %s190 = sphi 0, %s176
    %s194 = sphi 0, %s194
    %s196 = sphi 0, %s194
    %s197 = sphi 0, %s196
    %s211 = sphi 0, %s197
    %s215 = sphi 0, %s215
    %s217 = sphi 0, %s215
    %s218 = sphi 0, %s217
    %s232 = sphi 0, %s218
    %s236 = sphi 0, %s236
    %s238 = sphi 0, %s236
    %s239 = sphi 0, %s238
    %s253 = sphi 0, %s239
    %s257 = sphi 0, %s257
    %s259 = sphi 0, %s257
    %s260 = sphi 0, %s259
    %s274 = sphi 0, %s260
    %s278 = sphi 0, %s278
    %s280 = sphi 0, %s278
    %s281 = sphi 0, %s280
    %s295 = sphi 0, %s281
    %s299 = sphi 0, %s299
    %s301 = sphi 0, %s299
    %s302 = sphi 0, %s301
    %s316 = sphi 0, %s302
    %s320 = sphi 0, %s320
    %s322 = sphi 0, %s320
    %s323 = sphi 0, %s322
    %s337 = sphi 0, %s323
    %s343 = sphi 0, %s345
    %s346 = sphi 0, %s343
    %s347 = sphi 0, %s346
    %s363 = sphi 0, %s347
  $region4: #{classification_pointnet.6} parent=0 // loop_header_branch
    %23 = sbr.rel (%p21) target = $region8
  $region5: #{classification_pointnet.6} parent=0 // loop_body
    %s25 = ssub.s32 %s20, 1
    %s26 = ssub.s32 %s20, 2
    %s33 = sadd.s32 1, %s28
    %p34 = scmp.ge.s32.totalorder %s33, 1
    %s35 = scalar_select %p34, 0, %s33
    %s36 = sadd.s32 1, %s27
    %s37 = scalar_select %p34, %s36, %s27
    %p38 = scmp.ge.s32.totalorder %s37, 2
    %s39 = scalar_select %p38, 0, %s37
    %s40 = ssub.s32 %s27, %s39
    %s41 = ssub.s32 %s28, %s35
    %s42 = sor.u32 %s40, %s41
    %p43 = scmp.eq.s32.totalorder %s42, 0
    %s45 = sadd.s32 %s44, 1
    %s46 = scalar_select %p43, %s44, %s45
    %p49 = pneg %p43
    %p50 = scmp.eq.s32.totalorder %s20, 1
    %p51 = por %p49, %p50
    %p52 = scmp.ne.s32.totalorder %s44, %s47
    %p53 = scmp.eq.s32.totalorder %s20, 0
    %p54 = por %p52, %p53
    %p55 = scmp.ne.s32.totalorder %s44, %s47
    %p56 = scmp.eq.s32.totalorder %s25, 1
    %p57 = por %p55, %p56
    %p58 = scmp.ne.s32.totalorder %s47, %s48
    %p59 = scmp.eq.s32.totalorder %s25, 0
    %p60 = por %p58, %p59
    %p61 = scmp.ne.s32.totalorder %s47, %s48
    %p62 = scmp.eq.s32.totalorder %s26, 1
    %p63 = por %p61, %p62
    %p65 = scmp.ne.s32.totalorder %s48, %s64
    %p66 = scmp.eq.s32.totalorder %s26, 0
    %p67 = por %p65, %p66
    %s69 = sadd.s32 %s68, 1
    %p72 = scmp.eq.s32.totalorder %s20, 1
    %p73 = scmp.ne.s32.totalorder %s68, %s70
    %p74 = scmp.eq.s32.totalorder %s20, 0
    %p75 = por %p73, %p74
    %p76 = scmp.ne.s32.totalorder %s68, %s70
    %p77 = scmp.eq.s32.totalorder %s25, 1
    %p78 = por %p76, %p77
    %p79 = scmp.ne.s32.totalorder %s70, %s71
    %p80 = scmp.eq.s32.totalorder %s25, 0
    %p81 = por %p79, %p80
    %p82 = scmp.ne.s32.totalorder %s70, %s71
    %p83 = scmp.eq.s32.totalorder %s26, 1
    %p84 = por %p82, %p83
    %p86 = scmp.ne.s32.totalorder %s71, %s85
    %p87 = scmp.eq.s32.totalorder %s26, 0
    %p88 = por %p86, %p87
    %s90 = sadd.s32 %s89, 1
    %p93 = scmp.eq.s32.totalorder %s20, 1
    %p94 = scmp.ne.s32.totalorder %s89, %s91
    %p95 = scmp.eq.s32.totalorder %s20, 0
    %p96 = por %p94, %p95
    %p97 = scmp.ne.s32.totalorder %s89, %s91
    %p98 = scmp.eq.s32.totalorder %s25, 1
    %p99 = por %p97, %p98
    %p100 = scmp.ne.s32.totalorder %s91, %s92
    %p101 = scmp.eq.s32.totalorder %s25, 0
    %p102 = por %p100, %p101
    %p103 = scmp.ne.s32.totalorder %s91, %s92
    %p104 = scmp.eq.s32.totalorder %s26, 1
    %p105 = por %p103, %p104
    %p107 = scmp.ne.s32.totalorder %s92, %s106
    %p108 = scmp.eq.s32.totalorder %s26, 0
    %p109 = por %p107, %p108
    %s111 = sadd.s32 %s110, 1
    %p114 = scmp.eq.s32.totalorder %s20, 1
    %p115 = scmp.ne.s32.totalorder %s110, %s112
    %p116 = scmp.eq.s32.totalorder %s20, 0
    %p117 = por %p115, %p116
    %p118 = scmp.ne.s32.totalorder %s110, %s112
    %p119 = scmp.eq.s32.totalorder %s25, 1
    %p120 = por %p118, %p119
    %p121 = scmp.ne.s32.totalorder %s112, %s113
    %p122 = scmp.eq.s32.totalorder %s25, 0
    %p123 = por %p121, %p122
    %p124 = scmp.ne.s32.totalorder %s112, %s113
    %p125 = scmp.eq.s32.totalorder %s26, 1
    %p126 = por %p124, %p125
    %p128 = scmp.ne.s32.totalorder %s113, %s127
    %p129 = scmp.eq.s32.totalorder %s26, 0
    %p130 = por %p128, %p129
    %s132 = sadd.s32 %s131, 1
    %p135 = scmp.eq.s32.totalorder %s20, 1
    %p136 = scmp.ne.s32.totalorder %s131, %s133
    %p137 = scmp.eq.s32.totalorder %s20, 0
    %p138 = por %p136, %p137
    %p139 = scmp.ne.s32.totalorder %s131, %s133
    %p140 = scmp.eq.s32.totalorder %s25, 1
    %p141 = por %p139, %p140
    %p142 = scmp.ne.s32.totalorder %s133, %s134
    %p143 = scmp.eq.s32.totalorder %s25, 0
    %p144 = por %p142, %p143
    %p145 = scmp.ne.s32.totalorder %s133, %s134
    %p146 = scmp.eq.s32.totalorder %s26, 1
    %p147 = por %p145, %p146
    %p149 = scmp.ne.s32.totalorder %s134, %s148
    %p150 = scmp.eq.s32.totalorder %s26, 0
    %p151 = por %p149, %p150
    %s153 = sadd.s32 %s152, 1
    %p156 = scmp.eq.s32.totalorder %s20, 1
    %p157 = scmp.ne.s32.totalorder %s152, %s154
    %p158 = scmp.eq.s32.totalorder %s20, 0
    %p159 = por %p157, %p158
    %p160 = scmp.ne.s32.totalorder %s152, %s154
    %p161 = scmp.eq.s32.totalorder %s25, 1
    %p162 = por %p160, %p161
    %p163 = scmp.ne.s32.totalorder %s154, %s155
    %p164 = scmp.eq.s32.totalorder %s25, 0
    %p165 = por %p163, %p164
    %p166 = scmp.ne.s32.totalorder %s154, %s155
    %p167 = scmp.eq.s32.totalorder %s26, 1
    %p168 = por %p166, %p167
    %p170 = scmp.ne.s32.totalorder %s155, %s169
    %p171 = scmp.eq.s32.totalorder %s26, 0
    %p172 = por %p170, %p171
    %s174 = sadd.s32 %s173, 1
    %p177 = scmp.eq.s32.totalorder %s20, 1
    %p178 = scmp.ne.s32.totalorder %s173, %s175
    %p179 = scmp.eq.s32.totalorder %s20, 0
    %p180 = por %p178, %p179
    %p181 = scmp.ne.s32.totalorder %s173, %s175
    %p182 = scmp.eq.s32.totalorder %s25, 1
    %p183 = por %p181, %p182
    %p184 = scmp.ne.s32.totalorder %s175, %s176
    %p185 = scmp.eq.s32.totalorder %s25, 0
    %p186 = por %p184, %p185
    %p187 = scmp.ne.s32.totalorder %s175, %s176
    %p188 = scmp.eq.s32.totalorder %s26, 1
    %p189 = por %p187, %p188
    %p191 = scmp.ne.s32.totalorder %s176, %s190
    %p192 = scmp.eq.s32.totalorder %s26, 0
    %p193 = por %p191, %p192
    %s195 = sadd.s32 %s194, 1
    %p198 = scmp.eq.s32.totalorder %s20, 1
    %p199 = scmp.ne.s32.totalorder %s194, %s196
    %p200 = scmp.eq.s32.totalorder %s20, 0
    %p201 = por %p199, %p200
    %p202 = scmp.ne.s32.totalorder %s194, %s196
    %p203 = scmp.eq.s32.totalorder %s25, 1
    %p204 = por %p202, %p203
    %p205 = scmp.ne.s32.totalorder %s196, %s197
    %p206 = scmp.eq.s32.totalorder %s25, 0
    %p207 = por %p205, %p206
    %p208 = scmp.ne.s32.totalorder %s196, %s197
    %p209 = scmp.eq.s32.totalorder %s26, 1
    %p210 = por %p208, %p209
    %p212 = scmp.ne.s32.totalorder %s197, %s211
    %p213 = scmp.eq.s32.totalorder %s26, 0
    %p214 = por %p212, %p213
    %s216 = sadd.s32 %s215, 1
    %p219 = scmp.eq.s32.totalorder %s20, 1
    %p220 = scmp.ne.s32.totalorder %s215, %s217
    %p221 = scmp.eq.s32.totalorder %s20, 0
    %p222 = por %p220, %p221
    %p223 = scmp.ne.s32.totalorder %s215, %s217
    %p224 = scmp.eq.s32.totalorder %s25, 1
    %p225 = por %p223, %p224
    %p226 = scmp.ne.s32.totalorder %s217, %s218
    %p227 = scmp.eq.s32.totalorder %s25, 0
    %p228 = por %p226, %p227
    %p229 = scmp.ne.s32.totalorder %s217, %s218
    %p230 = scmp.eq.s32.totalorder %s26, 1
    %p231 = por %p229, %p230
    %p233 = scmp.ne.s32.totalorder %s218, %s232
    %p234 = scmp.eq.s32.totalorder %s26, 0
    %p235 = por %p233, %p234
    %s237 = sadd.s32 %s236, 1
    %p240 = scmp.eq.s32.totalorder %s20, 1
    %p241 = scmp.ne.s32.totalorder %s236, %s238
    %p242 = scmp.eq.s32.totalorder %s20, 0
    %p243 = por %p241, %p242
    %p244 = scmp.ne.s32.totalorder %s236, %s238
    %p245 = scmp.eq.s32.totalorder %s25, 1
    %p246 = por %p244, %p245
    %p247 = scmp.ne.s32.totalorder %s238, %s239
    %p248 = scmp.eq.s32.totalorder %s25, 0
    %p249 = por %p247, %p248
    %p250 = scmp.ne.s32.totalorder %s238, %s239
    %p251 = scmp.eq.s32.totalorder %s26, 1
    %p252 = por %p250, %p251
    %p254 = scmp.ne.s32.totalorder %s239, %s253
    %p255 = scmp.eq.s32.totalorder %s26, 0
    %p256 = por %p254, %p255
    %s258 = sadd.s32 %s257, 1
    %p261 = scmp.eq.s32.totalorder %s20, 1
    %p262 = scmp.ne.s32.totalorder %s257, %s259
    %p263 = scmp.eq.s32.totalorder %s20, 0
    %p264 = por %p262, %p263
    %p265 = scmp.ne.s32.totalorder %s257, %s259
    %p266 = scmp.eq.s32.totalorder %s25, 1
    %p267 = por %p265, %p266
    %p268 = scmp.ne.s32.totalorder %s259, %s260
    %p269 = scmp.eq.s32.totalorder %s25, 0
    %p270 = por %p268, %p269
    %p271 = scmp.ne.s32.totalorder %s259, %s260
    %p272 = scmp.eq.s32.totalorder %s26, 1
    %p273 = por %p271, %p272
    %p275 = scmp.ne.s32.totalorder %s260, %s274
    %p276 = scmp.eq.s32.totalorder %s26, 0
    %p277 = por %p275, %p276
    %s279 = sadd.s32 %s278, 1
    %p282 = scmp.eq.s32.totalorder %s20, 1
    %p283 = scmp.ne.s32.totalorder %s278, %s280
    %p284 = scmp.eq.s32.totalorder %s20, 0
    %p285 = por %p283, %p284
    %p286 = scmp.ne.s32.totalorder %s278, %s280
    %p287 = scmp.eq.s32.totalorder %s25, 1
    %p288 = por %p286, %p287
    %p289 = scmp.ne.s32.totalorder %s280, %s281
    %p290 = scmp.eq.s32.totalorder %s25, 0
    %p291 = por %p289, %p290
    %p292 = scmp.ne.s32.totalorder %s280, %s281
    %p293 = scmp.eq.s32.totalorder %s26, 1
    %p294 = por %p292, %p293
    %p296 = scmp.ne.s32.totalorder %s281, %s295
    %p297 = scmp.eq.s32.totalorder %s26, 0
    %p298 = por %p296, %p297
    %s300 = sadd.s32 %s299, 1
    %p303 = scmp.eq.s32.totalorder %s20, 1
    %p304 = scmp.ne.s32.totalorder %s299, %s301
    %p305 = scmp.eq.s32.totalorder %s20, 0
    %p306 = por %p304, %p305
    %p307 = scmp.ne.s32.totalorder %s299, %s301
    %p308 = scmp.eq.s32.totalorder %s25, 1
    %p309 = por %p307, %p308
    %p310 = scmp.ne.s32.totalorder %s301, %s302
    %p311 = scmp.eq.s32.totalorder %s25, 0
    %p312 = por %p310, %p311
    %p313 = scmp.ne.s32.totalorder %s301, %s302
    %p314 = scmp.eq.s32.totalorder %s26, 1
    %p315 = por %p313, %p314
    %p317 = scmp.ne.s32.totalorder %s302, %s316
    %p318 = scmp.eq.s32.totalorder %s26, 0
    %p319 = por %p317, %p318
    %s321 = sadd.s32 %s320, 1
    %p324 = scmp.eq.s32.totalorder %s20, 1
    %p325 = scmp.ne.s32.totalorder %s320, %s322
    %p326 = scmp.eq.s32.totalorder %s20, 0
    %p327 = por %p325, %p326
    %p328 = scmp.ne.s32.totalorder %s320, %s322
    %p329 = scmp.eq.s32.totalorder %s25, 1
    %p330 = por %p328, %p329
    %p331 = scmp.ne.s32.totalorder %s322, %s323
    %p332 = scmp.eq.s32.totalorder %s25, 0
    %p333 = por %p331, %p332
    %p334 = scmp.ne.s32.totalorder %s322, %s323
    %p335 = scmp.eq.s32.totalorder %s26, 1
    %p336 = por %p334, %p335
    %p338 = scmp.ne.s32.totalorder %s323, %s337
    %p339 = scmp.eq.s32.totalorder %s26, 0
    %p340 = por %p338, %p339
    %s341 = ssub.s32 %s27, %s39
    %p342 = scmp.eq.s32.totalorder %s341, 0
    %s344 = sadd.s32 %s343, 1
    %s345 = scalar_select %p342, %s343, %s344
    %p348 = pneg %p342
    %p349 = scmp.eq.s32.totalorder %s20, 1
    %p350 = por %p348, %p349
    %p351 = scmp.ne.s32.totalorder %s343, %s346
    %p352 = scmp.eq.s32.totalorder %s20, 0
    %p353 = por %p351, %p352
    %p354 = scmp.ne.s32.totalorder %s343, %s346
    %p355 = scmp.eq.s32.totalorder %s25, 1
    %p356 = por %p354, %p355
    %p357 = scmp.ne.s32.totalorder %s346, %s347
    %p358 = scmp.eq.s32.totalorder %s25, 0
    %p359 = por %p357, %p358
    %p360 = scmp.ne.s32.totalorder %s346, %s347
    %p361 = scmp.eq.s32.totalorder %s26, 1
    %p362 = por %p360, %p361
    %p364 = scmp.ne.s32.totalorder %s347, %s363
    %p365 = scmp.eq.s32.totalorder %s26, 0
    %p366 = por %p364, %p365
    %p367 = scmp.le.s32.totalorder 1, %s20
    %p368 = scmp.lt.s32.totalorder %s20, 3
    %p369 = pnand %p367, %p368
    %p370 = pneg %p369
    // Predicated region
    $region9: #{classification_pointnet.6} parent=5 // pred_check
      _
    $region10: #{classification_pointnet.6} parent=5 // pred_check_branch
      %372 = sbr.rel (%p369) target = $region12
    $region11: #{classification_pointnet.6} parent=5 // pred_region
      %s373 = ssub.s32 %s20, 1
      // Predicated region
      $region13: #{classification_pointnet.6} parent=11 // pred_check
        %p374 = pneg %p81
      $region14: #{classification_pointnet.6} parent=11 // pred_check_branch
        %376 = sbr.rel (%p374) target = $region16
      $region15: #{classification_pointnet.6} parent=11 // pred_region
        _
      $region16: #{classification_pointnet.6} parent=11 // pred_fallthru
        _
      // Predicated region
      $region17: #{classification_pointnet.6} parent=11 // pred_check
        %p377 = pneg %p102
      $region18: #{classification_pointnet.6} parent=11 // pred_check_branch
        %379 = sbr.rel (%p377) target = $region20
      $region19: #{classification_pointnet.6} parent=11 // pred_region
        _
      $region20: #{classification_pointnet.6} parent=11 // pred_fallthru
        _
      // Predicated region
      $region21: #{classification_pointnet.6} parent=11 // pred_check
        %p380 = pneg %p123
      $region22: #{classification_pointnet.6} parent=11 // pred_check_branch
        %382 = sbr.rel (%p380) target = $region24
      $region23: #{classification_pointnet.6} parent=11 // pred_region
        _
      $region24: #{classification_pointnet.6} parent=11 // pred_fallthru
        _
      // Predicated region
      $region25: #{classification_pointnet.6} parent=11 // pred_check
        %p383 = pneg %p144
      $region26: #{classification_pointnet.6} parent=11 // pred_check_branch
        %385 = sbr.rel (%p383) target = $region28
      $region27: #{classification_pointnet.6} parent=11 // pred_region
        _
      $region28: #{classification_pointnet.6} parent=11 // pred_fallthru
        _
      // Predicated region
      $region29: #{classification_pointnet.6} parent=11 // pred_check
        %p386 = pneg %p165
      $region30: #{classification_pointnet.6} parent=11 // pred_check_branch
        %388 = sbr.rel (%p386) target = $region32
      $region31: #{classification_pointnet.6} parent=11 // pred_region
        _
      $region32: #{classification_pointnet.6} parent=11 // pred_fallthru
        _
      // Predicated region
      $region33: #{classification_pointnet.6} parent=11 // pred_check
        %p389 = pneg %p186
      $region34: #{classification_pointnet.6} parent=11 // pred_check_branch
        %391 = sbr.rel (%p389) target = $region36
      $region35: #{classification_pointnet.6} parent=11 // pred_region
        _
      $region36: #{classification_pointnet.6} parent=11 // pred_fallthru
        _
      // Predicated region
      $region37: #{classification_pointnet.6} parent=11 // pred_check
        %p392 = pneg %p207
      $region38: #{classification_pointnet.6} parent=11 // pred_check_branch
        %394 = sbr.rel (%p392) target = $region40
      $region39: #{classification_pointnet.6} parent=11 // pred_region
        _
      $region40: #{classification_pointnet.6} parent=11 // pred_fallthru
        _
      // Predicated region
      $region41: #{classification_pointnet.6} parent=11 // pred_check
        %p395 = pneg %p228
      $region42: #{classification_pointnet.6} parent=11 // pred_check_branch
        %397 = sbr.rel (%p395) target = $region44
      $region43: #{classification_pointnet.6} parent=11 // pred_region
        _
      $region44: #{classification_pointnet.6} parent=11 // pred_fallthru
        _
      // Predicated region
      $region45: #{classification_pointnet.6} parent=11 // pred_check
        %p398 = pneg %p249
      $region46: #{classification_pointnet.6} parent=11 // pred_check_branch
        %400 = sbr.rel (%p398) target = $region48
      $region47: #{classification_pointnet.6} parent=11 // pred_region
        _
      $region48: #{classification_pointnet.6} parent=11 // pred_fallthru
        _
      // Predicated region
      $region49: #{classification_pointnet.6} parent=11 // pred_check
        %p401 = pneg %p270
      $region50: #{classification_pointnet.6} parent=11 // pred_check_branch
        %403 = sbr.rel (%p401) target = $region52
      $region51: #{classification_pointnet.6} parent=11 // pred_region
        _
      $region52: #{classification_pointnet.6} parent=11 // pred_fallthru
        _
      // Predicated region
      $region53: #{classification_pointnet.6} parent=11 // pred_check
        %p404 = pneg %p291
      $region54: #{classification_pointnet.6} parent=11 // pred_check_branch
        %406 = sbr.rel (%p404) target = $region56
      $region55: #{classification_pointnet.6} parent=11 // pred_region
        _
      $region56: #{classification_pointnet.6} parent=11 // pred_fallthru
        _
      // Predicated region
      $region57: #{classification_pointnet.6} parent=11 // pred_check
        %p407 = pneg %p312
      $region58: #{classification_pointnet.6} parent=11 // pred_check_branch
        %409 = sbr.rel (%p407) target = $region60
      $region59: #{classification_pointnet.6} parent=11 // pred_region
        _
      $region60: #{classification_pointnet.6} parent=11 // pred_fallthru
        _
      // Predicated region
      $region61: #{classification_pointnet.6} parent=11 // pred_check
        %p410 = pneg %p333
      $region62: #{classification_pointnet.6} parent=11 // pred_check_branch
        %412 = sbr.rel (%p410) target = $region64
      $region63: #{classification_pointnet.6} parent=11 // pred_region
        _
      $region64: #{classification_pointnet.6} parent=11 // pred_fallthru
        _
    $region12: #{classification_pointnet.6} parent=5 // pred_fallthru
      _
    %p413 = scmp.lt.s32.totalorder %s20, 2
    // Predicated region
    $region65: #{classification_pointnet.6} parent=5 // pred_check
      %p414 = pneg %p413
    $region66: #{classification_pointnet.6} parent=5 // pred_check_branch
      %416 = sbr.rel (%p414) target = $region68
    $region67: #{classification_pointnet.6} parent=5 // pred_region
      // Predicated region
      $region69: #{classification_pointnet.6} parent=67 // pred_check
        %p417 = pneg %p54
      $region70: #{classification_pointnet.6} parent=67 // pred_check_branch
        %419 = sbr.rel (%p417) target = $region72
      $region71: #{classification_pointnet.6} parent=67 // pred_region
        %s420 = smul.u32 8, %s28
        %p421 = scmp.lt.s32.totalorder %s27, 1
        %s422 = scalar_select %p421, %s27, 1
        %p423 = scmp.lt.s32.totalorder %s420, 7
        %s424 = scalar_select %p423, %s420, 7
        %s425 = smul.addr %s422, 8
        %s426 = sadd.s32 %s424, %s425
        %s427 = smul.addr %s426, 4
        %s428 = scalar_lea.vmem %s0, %s427
        %s429 = smul.u32 8, %s28
      $region72: #{classification_pointnet.6} parent=67 // pred_fallthru
        _
    $region68: #{classification_pointnet.6} parent=5 // pred_fallthru
      _
    %p430 = scmp.le.s32.totalorder 1, %s20
    %p431 = scmp.lt.s32.totalorder %s20, 3
    %p432 = pnand %p430, %p431
    %p433 = pneg %p432
    // Predicated region
    $region73: #{classification_pointnet.6} parent=5 // pred_check
      _
    $region74: #{classification_pointnet.6} parent=5 // pred_check_branch
      %435 = sbr.rel (%p432) target = $region76
    $region75: #{classification_pointnet.6} parent=5 // pred_region
      %s436 = ssub.s32 %s20, 1
      %s437 = smul.u32 8, %s30
      %p438 = scmp.lt.s32.totalorder %s29, 1
      %s439 = scalar_select %p438, %s29, 1
      %p440 = scmp.lt.s32.totalorder %s437, 7
      %s441 = scalar_select %p440, %s437, 7
      %s442 = smul.addr %s439, 8
      %s443 = sadd.s32 %s441, %s442
      %s444 = smul.addr %s443, 4
      %s445 = scalar_lea.vmem %s0, %s444
      %p446 = pneg %p60
      %p447 = pneg %p57
      %p448 = pneg %p81
      %p449 = pneg %p78
      %p450 = pneg %p102
      %p451 = pneg %p99
      %p452 = pneg %p123
      %p453 = pneg %p120
      %p454 = pneg %p144
      %p455 = pneg %p141
      %p456 = pneg %p165
      %p457 = pneg %p162
      %p458 = pneg %p186
      %p459 = pneg %p183
      %p460 = pneg %p207
      %p461 = pneg %p204
      %p462 = pneg %p228
      %p463 = pneg %p225
      %p464 = pneg %p249
      %p465 = pneg %p246
      %p466 = pneg %p270
      %p467 = pneg %p267
      %p468 = pneg %p291
      %p469 = pneg %p288
      %p470 = pneg %p312
      %p471 = pneg %p309
      %p472 = pneg %p333
      %p473 = pneg %p330
      %p474 = pneg %p359
      %p475 = pneg %p356
      %p476 = scmp.lt.s32.totalorder %s29, 1
      %s477 = scalar_select %p476, %s29, 1
      %s478 = smul.addr %s477, 32
      %s479 = scalar_lea.vmem %s14, %s478
      %s480 = smul.u32 8, %s30
      %p481 = scmp.lt.s32.totalorder %s29, 1
      %s482 = scalar_select %p481, %s29, 1
      %p483 = scmp.lt.s32.totalorder %s480, 7
      %s484 = scalar_select %p483, %s480, 7
      %s485 = smul.addr %s482, 8
      %s486 = sadd.s32 %s484, %s485
      %s487 = smul.addr %s486, 4
      %s488 = scalar_lea.vmem %s0, %s487
      %s489 = smul.u32 8, %s30
      %p490 = scmp.lt.s32.totalorder %s29, 1
      %s491 = scalar_select %p490, %s29, 1
      %s492 = smul.addr %s491, 32
      %s493 = scalar_lea.vmem %s14, %s492
      %p495 = scmp.eq.s32.totalorder %s30, 0
      // Predicated region
      $region77: #{classification_pointnet.6} parent=75 // pred_check
        %p496 = pneg %p495
      $region78: #{classification_pointnet.6} parent=75 // pred_check_branch
        %498 = sbr.rel (%p496) target = $region80
      $region79: #{classification_pointnet.6} parent=75 // pred_region
        %499 = vst [vmem:[#allocation2] sm:$0xff] -inf
        %500 = vst [vmem:[#allocation2 + $0x8] sm:$0xff] -inf
      $region80: #{classification_pointnet.6} parent=75 // pred_fallthru
        _
      %v501 = vld [vmem:[%s488] sm:$0xf]
      %v502 = vld [vmem:[%s488 + $0x4] sm:$0xf]
      %v503 = vld [vmem:[%s488 + $0x8] sm:$0xf]
      %v504 = vld [vmem:[%s488 + $0xc] sm:$0xf]
      %v505 = vld [vmem:[%s488 + $0x10] sm:$0xf]
      %v506 = vld [vmem:[%s488 + $0x14] sm:$0xf]
      %v507 = vld [vmem:[%s488 + $0x18] sm:$0xf]
      %v508 = vld [vmem:[%s488 + $0x1c] sm:$0xf]
      %v509 = vld [vmem:[%s1] sm:$0xf]
      %v510 = vld [vmem:[%s1 + $0x4] sm:$0xf]
      %v511 = vld [vmem:[%s1 + $0x8] sm:$0xf]
      %v512 = vld [vmem:[%s1 + $0xc] sm:$0xf]
      %v513 = vld [vmem:[%s1 + $0x10] sm:$0xf]
      %v514 = vld [vmem:[%s1 + $0x14] sm:$0xf]
      %v515 = vld [vmem:[%s1 + $0x18] sm:$0xf]
      %v516 = vld [vmem:[%s1 + $0x1c] sm:$0xf]
      %v517 = vld [vmem:[%s2] sm:$0x1]
      %v519 = vperm.slane %v517, 0
      %v529 = vunpack.c.l.b16 %v501
      %v530 = vunpack.c.l.b16 %v502
      %v531 = vunpack.c.l.b16 %v503
      %v532 = vunpack.c.l.b16 %v504
      %v533 = vunpack.c.l.b16 %v505
      %v534 = vunpack.c.l.b16 %v506
      %v535 = vunpack.c.l.b16 %v507
      %v536 = vunpack.c.l.b16 %v508
      %v537 = vpack.c.b16 %v530, %v529
      %v538 = vpack.c.b16 %v532, %v531
      %v539 = vpack.c.b16 %v534, %v533
      %v540 = vpack.c.b16 %v536, %v535
      %v549 = vunpack.c.l.b16 %v509
      %v550 = vunpack.c.l.b16 %v510
      %v551 = vunpack.c.l.b16 %v511
      %v552 = vunpack.c.l.b16 %v512
      %v553 = vunpack.c.l.b16 %v513
      %v554 = vunpack.c.l.b16 %v514
      %v555 = vunpack.c.l.b16 %v515
      %v556 = vunpack.c.l.b16 %v516
      %v557 = vpack.c.b16 %v550, %v549
      %v558 = vpack.c.b16 %v552, %v551
      %v559 = vpack.c.b16 %v554, %v553
      %v560 = vpack.c.b16 %v556, %v555
      %vm565 = vcmask 523264
      %v567 = vsel %vm565, %v537, 0
      %v570 = vsel %vm565, %v538, 0
      %v573 = vsel %vm565, %v539, 0
      %v576 = vsel %vm565, %v540, 0
      %578 = vmatpush.bf16.msra.mxu0 0
      %579 = vmatpush.bf16.msra.mxu0 0
      %580 = vmatpush.bf16.msra.mxu0 0
      %581 = vmatpush.bf16.msra.mxu0 0
      %582 = vmatpush.bf16.msra.mxu0 %v560
      %583 = vmatpush.bf16.msra.mxu0 %v559
      %584 = vmatpush.bf16.msra.mxu0 %v558
      %585 = vmatpush.bf16.msra.mxu0 %v557
      %586 = vmatmul.bf16.gmra.mxu0 %v567
      %v587 = vpop.f32.mrf.mxu0
      %v588 = vadd.f32 %v519, %v587
      %v589 = vpop.f32.mrf.mxu0
      %v590 = vadd.f32 %v519, %v589
      %591 = vmatmul.bf16.gmra.mxu0 %v570
      %v592 = vpop.f32.mrf.mxu0
      %v593 = vadd.f32 %v519, %v592
      %v594 = vpop.f32.mrf.mxu0
      %v595 = vadd.f32 %v519, %v594
      %596 = vmatmul.bf16.gmra.mxu0 %v573
      %v597 = vpop.f32.mrf.mxu0
      %v598 = vadd.f32 %v519, %v597
      %v599 = vpop.f32.mrf.mxu0
      %v600 = vadd.f32 %v519, %v599
      %601 = vmatmul.bf16.gmra.mxu0 %v576
      %v602 = vpop.f32.mrf.mxu0
      %v603 = vadd.f32 %v519, %v602
      %v604 = vpop.f32.mrf.mxu0
      %v605 = vadd.f32 %v519, %v604
      %606 = vdwg.mxu0
      %v607 = vmax.f32 %v588, 0.0
      %v608 = vmax.f32 %v590, 0.0
      %v609 = vmax.f32 %v593, 0.0
      %v610 = vmax.f32 %v595, 0.0
      %v611 = vmax.f32 %v598, 0.0
      %v612 = vmax.f32 %v600, 0.0
      %v613 = vmax.f32 %v603, 0.0
      %v614 = vmax.f32 %v605, 0.0
      %v615 = vpack.c.bf16 %v608, %v607
      %v616 = vpack.c.bf16 %v610, %v609
      %v617 = vpack.c.bf16 %v612, %v611
      %v618 = vpack.c.bf16 %v614, %v613
      %v619 = vld [vmem:[%s3] sm:$0xf]
      %v620 = vld [vmem:[%s3 + $0x4] sm:$0xf]
      %v621 = vld [vmem:[%s3 + $0x8] sm:$0xf]
      %v622 = vld [vmem:[%s3 + $0xc] sm:$0xf]
      %v623 = vld [vmem:[%s3 + $0x10] sm:$0xf]
      %v624 = vld [vmem:[%s3 + $0x14] sm:$0xf]
      %v625 = vld [vmem:[%s3 + $0x18] sm:$0xf]
      %v626 = vld [vmem:[%s3 + $0x1c] sm:$0xf]
      %v627 = vld [vmem:[%s4] sm:$0x1]
      %v629 = vperm.slane %v627, 0
      %v639 = vunpack.c.l.b16 %v619
      %v640 = vunpack.c.l.b16 %v620
      %v641 = vunpack.c.l.b16 %v621
      %v642 = vunpack.c.l.b16 %v622
      %v643 = vunpack.c.l.b16 %v623
      %v644 = vunpack.c.l.b16 %v624
      %v645 = vunpack.c.l.b16 %v625
      %v646 = vunpack.c.l.b16 %v626
      %v647 = vpack.c.b16 %v640, %v639
      %v648 = vpack.c.b16 %v642, %v641
      %v649 = vpack.c.b16 %v644, %v643
      %v650 = vpack.c.b16 %v646, %v645
      %v656 = vsel %vm565, %v615, 0
      %v659 = vsel %vm565, %v616, 0
      %v662 = vsel %vm565, %v617, 0
      %v665 = vsel %vm565, %v618, 0
      %667 = vmatpush.bf16.msra.mxu0 0
      %668 = vmatpush.bf16.msra.mxu0 0
      %669 = vmatpush.bf16.msra.mxu0 0
      %670 = vmatpush.bf16.msra.mxu0 0
      %671 = vmatpush.bf16.msra.mxu0 %v650
      %672 = vmatpush.bf16.msra.mxu0 %v649
      %673 = vmatpush.bf16.msra.mxu0 %v648
      %674 = vmatpush.bf16.msra.mxu0 %v647
      %675 = vmatmul.bf16.gmra.mxu0 %v656
      %v676 = vpop.f32.mrf.mxu0
      %v677 = vadd.f32 %v629, %v676
      %v678 = vpop.f32.mrf.mxu0
      %v679 = vadd.f32 %v629, %v678
      %680 = vmatmul.bf16.gmra.mxu0 %v659
      %v681 = vpop.f32.mrf.mxu0
      %v682 = vadd.f32 %v629, %v681
      %v683 = vpop.f32.mrf.mxu0
      %v684 = vadd.f32 %v629, %v683
      %685 = vmatmul.bf16.gmra.mxu0 %v662
      %v686 = vpop.f32.mrf.mxu0
      %v687 = vadd.f32 %v629, %v686
      %v688 = vpop.f32.mrf.mxu0
      %v689 = vadd.f32 %v629, %v688
      %690 = vmatmul.bf16.gmra.mxu0 %v665
      %v691 = vpop.f32.mrf.mxu0
      %v692 = vadd.f32 %v629, %v691
      %v693 = vpop.f32.mrf.mxu0
      %v694 = vadd.f32 %v629, %v693
      %695 = vdwg.mxu0
      %v696 = vmax.f32 %v677, 0.0
      %v697 = vmax.f32 %v679, 0.0
      %v698 = vmax.f32 %v682, 0.0
      %v699 = vmax.f32 %v684, 0.0
      %v700 = vmax.f32 %v687, 0.0
      %v701 = vmax.f32 %v689, 0.0
      %v702 = vmax.f32 %v692, 0.0
      %v703 = vmax.f32 %v694, 0.0
      %v704 = vpack.c.bf16 %v697, %v696
      %v705 = vpack.c.bf16 %v699, %v698
      %v706 = vpack.c.bf16 %v701, %v700
      %v707 = vpack.c.bf16 %v703, %v702
      %v708 = vld [vmem:[%s5] sm:$0xff]
      %v709 = vld [vmem:[%s5 + $0x8] sm:$0xff]
      %v710 = vld [vmem:[%s5 + $0x10] sm:$0xff]
      %v711 = vld [vmem:[%s5 + $0x18] sm:$0xff]
      %v712 = vld [vmem:[%s5 + $0x20] sm:$0xff]
      %v713 = vld [vmem:[%s5 + $0x28] sm:$0xff]
      %v714 = vld [vmem:[%s5 + $0x30] sm:$0xff]
      %v715 = vld [vmem:[%s5 + $0x38] sm:$0xff]
      %v716 = vld [vmem:[%s5 + $0x40] sm:$0xff]
      %v717 = vld [vmem:[%s5 + $0x48] sm:$0xff]
      %v718 = vld [vmem:[%s5 + $0x50] sm:$0xff]
      %v719 = vld [vmem:[%s5 + $0x58] sm:$0xff]
      %v720 = vld [vmem:[%s5 + $0x60] sm:$0xff]
      %v721 = vld [vmem:[%s5 + $0x68] sm:$0xff]
      %v722 = vld [vmem:[%s5 + $0x70] sm:$0xff]
      %v723 = vld [vmem:[%s5 + $0x78] sm:$0xff]
      %v724 = vld [vmem:[%s6] sm:$0x3]
      %v726 = vperm.slane %v724, 0
      %v727 = vperm.slane %v724, 1
      %v746 = vunpack.c.l.b16 %v708
      %v747 = vunpack.c.h.b16 %v708
      %v748 = vunpack.c.l.b16 %v709
      %v749 = vunpack.c.h.b16 %v709
      %v750 = vunpack.c.l.b16 %v710
      %v751 = vunpack.c.h.b16 %v710
      %v752 = vunpack.c.l.b16 %v711
      %v753 = vunpack.c.h.b16 %v711
      %v754 = vunpack.c.l.b16 %v712
      %v755 = vunpack.c.h.b16 %v712
      %v756 = vunpack.c.l.b16 %v713
      %v757 = vunpack.c.h.b16 %v713
      %v758 = vunpack.c.l.b16 %v714
      %v759 = vunpack.c.h.b16 %v714
      %v760 = vunpack.c.l.b16 %v715
      %v761 = vunpack.c.h.b16 %v715
      %v762 = vunpack.c.l.b16 %v716
      %v763 = vunpack.c.h.b16 %v716
      %v764 = vunpack.c.l.b16 %v717
      %v765 = vunpack.c.h.b16 %v717
      %v766 = vunpack.c.l.b16 %v718
      %v767 = vunpack.c.h.b16 %v718
      %v768 = vunpack.c.l.b16 %v719
      %v769 = vunpack.c.h.b16 %v719
      %v770 = vunpack.c.l.b16 %v720
      %v771 = vunpack.c.h.b16 %v720
      %v772 = vunpack.c.l.b16 %v721
      %v773 = vunpack.c.h.b16 %v721
      %v774 = vunpack.c.l.b16 %v722
      %v775 = vunpack.c.h.b16 %v722
      %v776 = vunpack.c.l.b16 %v723
      %v777 = vunpack.c.h.b16 %v723
      %v778 = vpack.c.b16 %v748, %v746
      %v779 = vpack.c.b16 %v749, %v747
      %v780 = vpack.c.b16 %v752, %v750
      %v781 = vpack.c.b16 %v753, %v751
      %v782 = vpack.c.b16 %v756, %v754
      %v783 = vpack.c.b16 %v757, %v755
      %v784 = vpack.c.b16 %v760, %v758
      %v785 = vpack.c.b16 %v761, %v759
      %v786 = vpack.c.b16 %v764, %v762
      %v787 = vpack.c.b16 %v765, %v763
      %v788 = vpack.c.b16 %v768, %v766
      %v789 = vpack.c.b16 %v769, %v767
      %v790 = vpack.c.b16 %v772, %v770
      %v791 = vpack.c.b16 %v773, %v771
      %v792 = vpack.c.b16 %v776, %v774
      %v793 = vpack.c.b16 %v777, %v775
      %810 = vmatpush.bf16.msra.mxu0 %v792
      %811 = vmatpush.bf16.msra.mxu0 %v790
      %812 = vmatpush.bf16.msra.mxu0 %v788
      %813 = vmatpush.bf16.msra.mxu0 %v786
      %814 = vmatpush.bf16.msra.mxu0 %v784
      %815 = vmatpush.bf16.msra.mxu0 %v782
      %816 = vmatpush.bf16.msra.mxu0 %v780
      %817 = vmatpush.bf16.msra.mxu0 %v778
      %818 = vmatmul.bf16.gmra.mxu0 %v704
      %v819 = vpop.f32.mrf.mxu0
      %v820 = vadd.f32 %v726, %v819
      %v821 = vpop.f32.mrf.mxu0
      %v822 = vadd.f32 %v726, %v821
      %823 = vmatmul.bf16.gmra.mxu0 %v705
      %v824 = vpop.f32.mrf.mxu0
      %v825 = vadd.f32 %v726, %v824
      %v826 = vpop.f32.mrf.mxu0
      %v827 = vadd.f32 %v726, %v826
      %828 = vmatmul.bf16.gmra.mxu0 %v706
      %v829 = vpop.f32.mrf.mxu0
      %v830 = vadd.f32 %v726, %v829
      %v831 = vpop.f32.mrf.mxu0
      %v832 = vadd.f32 %v726, %v831
      %833 = vmatmul.bf16.gmra.mxu0 %v707
      %v834 = vpop.f32.mrf.mxu0
      %v835 = vadd.f32 %v726, %v834
      %v836 = vpop.f32.mrf.mxu0
      %v837 = vadd.f32 %v726, %v836
      %838 = vdwg.mxu0
      %839 = vmatpush.bf16.msra.mxu0 %v793
      %840 = vmatpush.bf16.msra.mxu0 %v791
      %841 = vmatpush.bf16.msra.mxu0 %v789
      %842 = vmatpush.bf16.msra.mxu0 %v787
      %843 = vmatpush.bf16.msra.mxu0 %v785
      %844 = vmatpush.bf16.msra.mxu0 %v783
      %845 = vmatpush.bf16.msra.mxu0 %v781
      %846 = vmatpush.bf16.msra.mxu0 %v779
      %847 = vmatmul.bf16.gmra.mxu0 %v704
      %v848 = vpop.f32.mrf.mxu0
      %v849 = vadd.f32 %v727, %v848
      %v850 = vpop.f32.mrf.mxu0
      %v851 = vadd.f32 %v727, %v850
      %852 = vmatmul.bf16.gmra.mxu0 %v705
      %v853 = vpop.f32.mrf.mxu0
      %v854 = vadd.f32 %v727, %v853
      %v855 = vpop.f32.mrf.mxu0
      %v856 = vadd.f32 %v727, %v855
      %857 = vmatmul.bf16.gmra.mxu0 %v706
      %v858 = vpop.f32.mrf.mxu0
      %v859 = vadd.f32 %v727, %v858
      %v860 = vpop.f32.mrf.mxu0
      %v861 = vadd.f32 %v727, %v860
      %862 = vmatmul.bf16.gmra.mxu0 %v707
      %v863 = vpop.f32.mrf.mxu0
      %v864 = vadd.f32 %v727, %v863
      %v865 = vpop.f32.mrf.mxu0
      %v866 = vadd.f32 %v727, %v865
      %867 = vdwg.mxu0
      %v868 = vmax.f32 %v820, 0.0
      %v869 = vmax.f32 %v849, 0.0
      %v870 = vmax.f32 %v822, 0.0
      %v871 = vmax.f32 %v851, 0.0
      %v872 = vmax.f32 %v825, 0.0
      %v873 = vmax.f32 %v854, 0.0
      %v874 = vmax.f32 %v827, 0.0
      %v875 = vmax.f32 %v856, 0.0
      %v876 = vmax.f32 %v830, 0.0
      %v877 = vmax.f32 %v859, 0.0
      %v878 = vmax.f32 %v832, 0.0
      %v879 = vmax.f32 %v861, 0.0
      %v880 = vmax.f32 %v835, 0.0
      %v881 = vmax.f32 %v864, 0.0
      %v882 = vmax.f32 %v837, 0.0
      %v883 = vmax.f32 %v866, 0.0
      %v884 = vmax.f32 %v868, %v870
      %v885 = vmax.f32 %v869, %v871
      %v886 = vmax.f32 %v884, %v872
      %v887 = vmax.f32 %v885, %v873
      %v888 = vmax.f32 %v886, %v874
      %v889 = vmax.f32 %v887, %v875
      %v890 = vmax.f32 %v888, %v876
      %v891 = vmax.f32 %v889, %v877
      %v892 = vmax.f32 %v890, %v878
      %v893 = vmax.f32 %v891, %v879
      %v894 = vmax.f32 %v892, %v880
      %v895 = vmax.f32 %v893, %v881
      %v896 = vmax.f32 %v894, %v882
      %v897 = vmax.f32 %v895, %v883
      %v898 = vld [vmem:[#allocation2] sm:$0xff]
      %v899 = vld [vmem:[#allocation2 + $0x8] sm:$0xff]
      %v900 = vmax.f32 %v898, %v896
      %v901 = vmax.f32 %v899, %v897
      %902 = vst [vmem:[#allocation2] sm:$0xff] %v900
      %903 = vst [vmem:[#allocation2 + $0x8] sm:$0xff] %v901
      // Predicated region
      $region81: #{classification_pointnet.6} parent=75 // pred_check
        %p904 = pneg %p495
      $region82: #{classification_pointnet.6} parent=75 // pred_check_branch
        %906 = sbr.rel (%p904) target = $region84
      $region83: #{classification_pointnet.6} parent=75 // pred_region
        %v907 = vld [vmem:[#allocation2] sm:$0xff]
        %v908 = vld [vmem:[#allocation2 + $0x8] sm:$0xff]
        %v909 = vrot.slane %v907, 4
        %v910 = vmax.f32 %v907, %v909
        %v911 = vrot.slane %v910, 2
        %v912 = vmax.f32 %v910, %v911
        %v913 = vrot.slane %v912, 1
        %v914 = vmax.f32 %v912, %v913
        %v915 = vrot.slane %v908, 4
        %v916 = vmax.f32 %v908, %v915
        %v917 = vrot.slane %v916, 2
        %v918 = vmax.f32 %v916, %v917
        %v919 = vrot.slane %v918, 1
        %v920 = vmax.f32 %v918, %v919
        %v921 = vpack.c.bf16 %v914, %v914
        %v922 = vpack.c.bf16 %v920, %v920
        %v923 = vld [vmem:[%s7] sm:$0xff]
        %v924 = vld [vmem:[%s7 + $0x8] sm:$0xff]
        %v925 = vld [vmem:[%s7 + $0x10] sm:$0xff]
        %v926 = vld [vmem:[%s7 + $0x18] sm:$0xff]
        %v927 = vld [vmem:[%s7 + $0x20] sm:$0xff]
        %v928 = vld [vmem:[%s7 + $0x28] sm:$0xff]
        %v929 = vld [vmem:[%s7 + $0x30] sm:$0xff]
        %v930 = vld [vmem:[%s7 + $0x38] sm:$0xff]
        %v931 = vld [vmem:[%s7 + $0x40] sm:$0xff]
        %v932 = vld [vmem:[%s7 + $0x48] sm:$0xff]
        %v933 = vld [vmem:[%s7 + $0x50] sm:$0xff]
        %v934 = vld [vmem:[%s7 + $0x58] sm:$0xff]
        %v935 = vld [vmem:[%s7 + $0x60] sm:$0xff]
        %v936 = vld [vmem:[%s7 + $0x68] sm:$0xff]
        %v937 = vld [vmem:[%s7 + $0x70] sm:$0xff]
        %v938 = vld [vmem:[%s7 + $0x78] sm:$0xff]
        %v939 = vld [vmem:[%s7 + $0x80] sm:$0xff]
        %v940 = vld [vmem:[%s7 + $0x88] sm:$0xff]
        %v941 = vld [vmem:[%s7 + $0x90] sm:$0xff]
        %v942 = vld [vmem:[%s7 + $0x98] sm:$0xff]
        %v943 = vld [vmem:[%s7 + $0xa0] sm:$0xff]
        %v944 = vld [vmem:[%s7 + $0xa8] sm:$0xff]
        %v945 = vld [vmem:[%s7 + $0xb0] sm:$0xff]
        %v946 = vld [vmem:[%s7 + $0xb8] sm:$0xff]
        %v947 = vld [vmem:[%s7 + $0xc0] sm:$0xff]
        %v948 = vld [vmem:[%s7 + $0xc8] sm:$0xff]
        %v949 = vld [vmem:[%s7 + $0xd0] sm:$0xff]
        %v950 = vld [vmem:[%s7 + $0xd8] sm:$0xff]
        %v951 = vld [vmem:[%s7 + $0xe0] sm:$0xff]
        %v952 = vld [vmem:[%s7 + $0xe8] sm:$0xff]
        %v953 = vld [vmem:[%s7 + $0xf0] sm:$0xff]
        %v954 = vld [vmem:[%s7 + $0xf8] sm:$0xff]
        %v955 = vld [vmem:[%s8] sm:$0x3]
        %v988 = vunpack.c.l.b16 %v923
        %v989 = vunpack.c.h.b16 %v923
        %v990 = vunpack.c.l.b16 %v924
        %v991 = vunpack.c.h.b16 %v924
        %v992 = vunpack.c.l.b16 %v925
        %v993 = vunpack.c.h.b16 %v925
        %v994 = vunpack.c.l.b16 %v926
        %v995 = vunpack.c.h.b16 %v926
        %v996 = vunpack.c.l.b16 %v927
        %v997 = vunpack.c.h.b16 %v927
        %v998 = vunpack.c.l.b16 %v928
        %v999 = vunpack.c.h.b16 %v928
        %v1000 = vunpack.c.l.b16 %v929
        %v1001 = vunpack.c.h.b16 %v929
        %v1002 = vunpack.c.l.b16 %v930
        %v1003 = vunpack.c.h.b16 %v930
        %v1004 = vunpack.c.l.b16 %v931
        %v1005 = vunpack.c.h.b16 %v931
        %v1006 = vunpack.c.l.b16 %v932
        %v1007 = vunpack.c.h.b16 %v932
        %v1008 = vunpack.c.l.b16 %v933
        %v1009 = vunpack.c.h.b16 %v933
        %v1010 = vunpack.c.l.b16 %v934
        %v1011 = vunpack.c.h.b16 %v934
        %v1012 = vunpack.c.l.b16 %v935
        %v1013 = vunpack.c.h.b16 %v935
        %v1014 = vunpack.c.l.b16 %v936
        %v1015 = vunpack.c.h.b16 %v936
        %v1016 = vunpack.c.l.b16 %v937
        %v1017 = vunpack.c.h.b16 %v937
        %v1018 = vunpack.c.l.b16 %v938
        %v1019 = vunpack.c.h.b16 %v938
        %v1020 = vunpack.c.l.b16 %v939
        %v1021 = vunpack.c.h.b16 %v939
        %v1022 = vunpack.c.l.b16 %v940
        %v1023 = vunpack.c.h.b16 %v940
        %v1024 = vunpack.c.l.b16 %v941
        %v1025 = vunpack.c.h.b16 %v941
        %v1026 = vunpack.c.l.b16 %v942
        %v1027 = vunpack.c.h.b16 %v942
        %v1028 = vunpack.c.l.b16 %v943
        %v1029 = vunpack.c.h.b16 %v943
        %v1030 = vunpack.c.l.b16 %v944
        %v1031 = vunpack.c.h.b16 %v944
        %v1032 = vunpack.c.l.b16 %v945
        %v1033 = vunpack.c.h.b16 %v945
        %v1034 = vunpack.c.l.b16 %v946
        %v1035 = vunpack.c.h.b16 %v946
        %v1036 = vunpack.c.l.b16 %v947
        %v1037 = vunpack.c.h.b16 %v947
        %v1038 = vunpack.c.l.b16 %v948
        %v1039 = vunpack.c.h.b16 %v948
        %v1040 = vunpack.c.l.b16 %v949
        %v1041 = vunpack.c.h.b16 %v949
        %v1042 = vunpack.c.l.b16 %v950
        %v1043 = vunpack.c.h.b16 %v950
        %v1044 = vunpack.c.l.b16 %v951
        %v1045 = vunpack.c.h.b16 %v951
        %v1046 = vunpack.c.l.b16 %v952
        %v1047 = vunpack.c.h.b16 %v952
        %v1048 = vunpack.c.l.b16 %v953
        %v1049 = vunpack.c.h.b16 %v953
        %v1050 = vunpack.c.l.b16 %v954
        %v1051 = vunpack.c.h.b16 %v954
        %v1052 = vpack.c.b16 %v990, %v988
        %v1053 = vpack.c.b16 %v991, %v989
        %v1054 = vpack.c.b16 %v994, %v992
        %v1055 = vpack.c.b16 %v995, %v993
        %v1056 = vpack.c.b16 %v998, %v996
        %v1057 = vpack.c.b16 %v999, %v997
        %v1058 = vpack.c.b16 %v1002, %v1000
        %v1059 = vpack.c.b16 %v1003, %v1001
        %v1060 = vpack.c.b16 %v1006, %v1004
        %v1061 = vpack.c.b16 %v1007, %v1005
        %v1062 = vpack.c.b16 %v1010, %v1008
        %v1063 = vpack.c.b16 %v1011, %v1009
        %v1064 = vpack.c.b16 %v1014, %v1012
        %v1065 = vpack.c.b16 %v1015, %v1013
        %v1066 = vpack.c.b16 %v1018, %v1016
        %v1067 = vpack.c.b16 %v1019, %v1017
        %v1068 = vpack.c.b16 %v1022, %v1020
        %v1069 = vpack.c.b16 %v1023, %v1021
        %v1070 = vpack.c.b16 %v1026, %v1024
        %v1071 = vpack.c.b16 %v1027, %v1025
        %v1072 = vpack.c.b16 %v1030, %v1028
        %v1073 = vpack.c.b16 %v1031, %v1029
        %v1074 = vpack.c.b16 %v1034, %v1032
        %v1075 = vpack.c.b16 %v1035, %v1033
        %v1076 = vpack.c.b16 %v1038, %v1036
        %v1077 = vpack.c.b16 %v1039, %v1037
        %v1078 = vpack.c.b16 %v1042, %v1040
        %v1079 = vpack.c.b16 %v1043, %v1041
        %v1080 = vpack.c.b16 %v1046, %v1044
        %v1081 = vpack.c.b16 %v1047, %v1045
        %v1082 = vpack.c.b16 %v1050, %v1048
        %v1083 = vpack.c.b16 %v1051, %v1049
        %v1117 = vperm.slane %v955, 0
        %v1118 = vperm.slane %v955, 1
        %1121 = vmatpush.bf16.msra.mxu0 %v1066
        %1122 = vmatpush.bf16.msra.mxu0 %v1064
        %1123 = vmatpush.bf16.msra.mxu0 %v1062
        %1124 = vmatpush.bf16.msra.mxu0 %v1060
        %1125 = vmatpush.bf16.msra.mxu0 %v1058
        %1126 = vmatpush.bf16.msra.mxu0 %v1056
        %1127 = vmatpush.bf16.msra.mxu0 %v1054
        %1128 = vmatpush.bf16.msra.mxu0 %v1052
        %1129 = vmatmul.bf16.gmra.mxu0 %v921
        %v1130 = vpop.f32.mrf.mxu0
        %v1131 = vadd.f32 %v1117, %v1130
        %v1132 = vpop.f32.mrf.mxu0
        %1133 = vdwg.mxu0
        %1134 = vmatpush.bf16.msra.mxu0 %v1082
        %1135 = vmatpush.bf16.msra.mxu0 %v1080
        %1136 = vmatpush.bf16.msra.mxu0 %v1078
        %1137 = vmatpush.bf16.msra.mxu0 %v1076
        %1138 = vmatpush.bf16.msra.mxu0 %v1074
        %1139 = vmatpush.bf16.msra.mxu0 %v1072
        %1140 = vmatpush.bf16.msra.mxu0 %v1070
        %1141 = vmatpush.bf16.msra.mxu0 %v1068
        %1142 = vmatmul.bf16.gmra.mxu0 %v922
        %v1143 = vpop.f32.mrf.mxu0
        %v1144 = vadd.f32 %v1131, %v1143
        %v1145 = vpop.f32.mrf.mxu0
        %1146 = vdwg.mxu0
        %1147 = vmatpush.bf16.msra.mxu0 %v1067
        %1148 = vmatpush.bf16.msra.mxu0 %v1065
        %1149 = vmatpush.bf16.msra.mxu0 %v1063
        %1150 = vmatpush.bf16.msra.mxu0 %v1061
        %1151 = vmatpush.bf16.msra.mxu0 %v1059
        %1152 = vmatpush.bf16.msra.mxu0 %v1057
        %1153 = vmatpush.bf16.msra.mxu0 %v1055
        %1154 = vmatpush.bf16.msra.mxu0 %v1053
        %1155 = vmatmul.bf16.gmra.mxu0 %v921
        %v1156 = vpop.f32.mrf.mxu0
        %v1157 = vadd.f32 %v1118, %v1156
        %v1158 = vpop.f32.mrf.mxu0
        %1159 = vdwg.mxu0
        %1160 = vmatpush.bf16.msra.mxu0 %v1083
        %1161 = vmatpush.bf16.msra.mxu0 %v1081
        %1162 = vmatpush.bf16.msra.mxu0 %v1079
        %1163 = vmatpush.bf16.msra.mxu0 %v1077
        %1164 = vmatpush.bf16.msra.mxu0 %v1075
        %1165 = vmatpush.bf16.msra.mxu0 %v1073
        %1166 = vmatpush.bf16.msra.mxu0 %v1071
        %1167 = vmatpush.bf16.msra.mxu0 %v1069
        %1168 = vmatmul.bf16.gmra.mxu0 %v922
        %v1169 = vpop.f32.mrf.mxu0
        %v1170 = vadd.f32 %v1157, %v1169
        %v1171 = vpop.f32.mrf.mxu0
        %1172 = vdwg.mxu0
        %v1173 = vmax.f32 %v1144, 0.0
        %v1174 = vmax.f32 %v1170, 0.0
        %v1175 = vpack.c.bf16 %v1173, %v1173
        %v1176 = vpack.c.bf16 %v1174, %v1174
        %v1177 = vld [vmem:[%s9] sm:$0xf]
        %v1178 = vld [vmem:[%s9 + $0x4] sm:$0xf]
        %v1179 = vld [vmem:[%s9 + $0x8] sm:$0xf]
        %v1180 = vld [vmem:[%s9 + $0xc] sm:$0xf]
        %v1181 = vld [vmem:[%s9 + $0x10] sm:$0xf]
        %v1182 = vld [vmem:[%s9 + $0x14] sm:$0xf]
        %v1183 = vld [vmem:[%s9 + $0x18] sm:$0xf]
        %v1184 = vld [vmem:[%s9 + $0x1c] sm:$0xf]
        %v1185 = vld [vmem:[%s9 + $0x20] sm:$0xf]
        %v1186 = vld [vmem:[%s9 + $0x24] sm:$0xf]
        %v1187 = vld [vmem:[%s9 + $0x28] sm:$0xf]
        %v1188 = vld [vmem:[%s9 + $0x2c] sm:$0xf]
        %v1189 = vld [vmem:[%s9 + $0x30] sm:$0xf]
        %v1190 = vld [vmem:[%s9 + $0x34] sm:$0xf]
        %v1191 = vld [vmem:[%s9 + $0x38] sm:$0xf]
        %v1192 = vld [vmem:[%s9 + $0x3c] sm:$0xf]
        %v1193 = vld [vmem:[%s9 + $0x40] sm:$0xf]
        %v1194 = vld [vmem:[%s9 + $0x44] sm:$0xf]
        %v1195 = vld [vmem:[%s9 + $0x48] sm:$0xf]
        %v1196 = vld [vmem:[%s9 + $0x4c] sm:$0xf]
        %v1197 = vld [vmem:[%s9 + $0x50] sm:$0xf]
        %v1198 = vld [vmem:[%s9 + $0x54] sm:$0xf]
        %v1199 = vld [vmem:[%s9 + $0x58] sm:$0xf]
        %v1200 = vld [vmem:[%s9 + $0x5c] sm:$0xf]
        %v1201 = vld [vmem:[%s9 + $0x60] sm:$0xf]
        %v1202 = vld [vmem:[%s9 + $0x64] sm:$0xf]
        %v1203 = vld [vmem:[%s9 + $0x68] sm:$0xf]
        %v1204 = vld [vmem:[%s9 + $0x6c] sm:$0xf]
        %v1205 = vld [vmem:[%s9 + $0x70] sm:$0xf]
        %v1206 = vld [vmem:[%s9 + $0x74] sm:$0xf]
        %v1207 = vld [vmem:[%s9 + $0x78] sm:$0xf]
        %v1208 = vld [vmem:[%s9 + $0x7c] sm:$0xf]
        %v1209 = vld [vmem:[%s10] sm:$0x1]
        %v1242 = vunpack.c.l.b16 %v1177
        %v1243 = vunpack.c.l.b16 %v1178
        %v1244 = vunpack.c.l.b16 %v1179
        %v1245 = vunpack.c.l.b16 %v1180
        %v1246 = vunpack.c.l.b16 %v1181
        %v1247 = vunpack.c.l.b16 %v1182
        %v1248 = vunpack.c.l.b16 %v1183
        %v1249 = vunpack.c.l.b16 %v1184
        %v1250 = vunpack.c.l.b16 %v1185
        %v1251 = vunpack.c.l.b16 %v1186
        %v1252 = vunpack.c.l.b16 %v1187
        %v1253 = vunpack.c.l.b16 %v1188
        %v1254 = vunpack.c.l.b16 %v1189
        %v1255 = vunpack.c.l.b16 %v1190
        %v1256 = vunpack.c.l.b16 %v1191
        %v1257 = vunpack.c.l.b16 %v1192
        %v1258 = vunpack.c.l.b16 %v1193
        %v1259 = vunpack.c.l.b16 %v1194
        %v1260 = vunpack.c.l.b16 %v1195
        %v1261 = vunpack.c.l.b16 %v1196
        %v1262 = vunpack.c.l.b16 %v1197
        %v1263 = vunpack.c.l.b16 %v1198
        %v1264 = vunpack.c.l.b16 %v1199
        %v1265 = vunpack.c.l.b16 %v1200
        %v1266 = vunpack.c.l.b16 %v1201
        %v1267 = vunpack.c.l.b16 %v1202
        %v1268 = vunpack.c.l.b16 %v1203
        %v1269 = vunpack.c.l.b16 %v1204
        %v1270 = vunpack.c.l.b16 %v1205
        %v1271 = vunpack.c.l.b16 %v1206
        %v1272 = vunpack.c.l.b16 %v1207
        %v1273 = vunpack.c.l.b16 %v1208
        %v1274 = vpack.c.b16 %v1243, %v1242
        %v1275 = vpack.c.b16 %v1245, %v1244
        %v1276 = vpack.c.b16 %v1247, %v1246
        %v1277 = vpack.c.b16 %v1249, %v1248
        %v1278 = vpack.c.b16 %v1251, %v1250
        %v1279 = vpack.c.b16 %v1253, %v1252
        %v1280 = vpack.c.b16 %v1255, %v1254
        %v1281 = vpack.c.b16 %v1257, %v1256
        %v1282 = vpack.c.b16 %v1259, %v1258
        %v1283 = vpack.c.b16 %v1261, %v1260
        %v1284 = vpack.c.b16 %v1263, %v1262
        %v1285 = vpack.c.b16 %v1265, %v1264
        %v1286 = vpack.c.b16 %v1267, %v1266
        %v1287 = vpack.c.b16 %v1269, %v1268
        %v1288 = vpack.c.b16 %v1271, %v1270
        %v1289 = vpack.c.b16 %v1273, %v1272
        %1306 = vmatpush.bf16.msra.mxu0 %v1281
        %1307 = vmatpush.bf16.msra.mxu0 %v1280
        %1308 = vmatpush.bf16.msra.mxu0 %v1279
        %1309 = vmatpush.bf16.msra.mxu0 %v1278
        %1310 = vmatpush.bf16.msra.mxu0 %v1277
        %1311 = vmatpush.bf16.msra.mxu0 %v1276
        %1312 = vmatpush.bf16.msra.mxu0 %v1275
        %1313 = vmatpush.bf16.msra.mxu0 %v1274
        %1314 = vmatmul.bf16.gmra.mxu0 %v1175
        %v1315 = vpop.f32.mrf.mxu0
        %v1316 = vadd.f32 %v1209, %v1315
        %v1317 = vpop.f32.mrf.mxu0
        %1318 = vdwg.mxu0
        %1319 = vmatpush.bf16.msra.mxu0 %v1289
        %1320 = vmatpush.bf16.msra.mxu0 %v1288
        %1321 = vmatpush.bf16.msra.mxu0 %v1287
        %1322 = vmatpush.bf16.msra.mxu0 %v1286
        %1323 = vmatpush.bf16.msra.mxu0 %v1285
        %1324 = vmatpush.bf16.msra.mxu0 %v1284
        %1325 = vmatpush.bf16.msra.mxu0 %v1283
        %1326 = vmatpush.bf16.msra.mxu0 %v1282
        %1327 = vmatmul.bf16.gmra.mxu0 %v1176
        %v1328 = vpop.f32.mrf.mxu0
        %v1329 = vadd.f32 %v1316, %v1328
        %v1330 = vpop.f32.mrf.mxu0
        %1331 = vdwg.mxu0
        %v1332 = vmax.f32 %v1329, 0.0
        %v1333 = vpack.c.bf16 %v1332, %v1332
        %v1334 = vld [vmem:[%s11] sm:$0xff]
        %v1335 = vld [vmem:[%s11 + $0x8] sm:$0xff]
        %v1336 = vld [vmem:[%s11 + $0x10] sm:$0xff]
        %v1337 = vld [vmem:[%s11 + $0x18] sm:$0xff]
        %v1338 = vld [vmem:[%s11 + $0x20] sm:$0xff]
        %v1339 = vld [vmem:[%s11 + $0x28] sm:$0xff]
        %v1340 = vld [vmem:[%s11 + $0x30] sm:$0xff]
        %v1341 = vld [vmem:[%s11 + $0x38] sm:$0xff]
        %v1342 = vld [vmem:[%s11 + $0x40] sm:$0xff]
        %v1343 = vld [vmem:[%s11 + $0x48] sm:$0xff]
        %v1344 = vld [vmem:[%s11 + $0x50] sm:$0xff]
        %v1345 = vld [vmem:[%s11 + $0x58] sm:$0xff]
        %v1346 = vld [vmem:[%s11 + $0x60] sm:$0xff]
        %v1347 = vld [vmem:[%s11 + $0x68] sm:$0xff]
        %v1348 = vld [vmem:[%s11 + $0x70] sm:$0xff]
        %v1349 = vld [vmem:[%s11 + $0x78] sm:$0xff]
        %v1350 = vld [vmem:[%s11 + $0x80] sm:$0xff]
        %v1351 = vld [vmem:[%s11 + $0x88] sm:$0xff]
        %v1352 = vld [vmem:[%s11 + $0x90] sm:$0xff]
        %v1353 = vld [vmem:[%s11 + $0x98] sm:$0xff]
        %v1354 = vld [vmem:[%s11 + $0xa0] sm:$0xff]
        %v1355 = vld [vmem:[%s11 + $0xa8] sm:$0xff]
        %v1356 = vld [vmem:[%s11 + $0xb0] sm:$0xff]
        %v1357 = vld [vmem:[%s11 + $0xb8] sm:$0xff]
        %v1358 = vld [vmem:[%s11 + $0xc0] sm:$0xff]
        %v1359 = vld [vmem:[%s11 + $0xc8] sm:$0xff]
        %v1360 = vld [vmem:[%s11 + $0xd0] sm:$0xff]
        %v1361 = vld [vmem:[%s11 + $0xd8] sm:$0xff]
        %v1362 = vld [vmem:[%s11 + $0xe0] sm:$0xff]
        %v1363 = vld [vmem:[%s11 + $0xe8] sm:$0xff]
        %v1364 = vld [vmem:[%s11 + $0xf0] sm:$0xff]
        %v1365 = vld [vmem:[%s11 + $0xf8] sm:$0xff]
        %v1366 = vld [vmem:[%s11 + $0x100] sm:$0xff]
        %v1367 = vld [vmem:[%s11 + $0x108] sm:$0xff]
        %v1368 = vld [vmem:[%s11 + $0x110] sm:$0xff]
        %v1369 = vld [vmem:[%s11 + $0x118] sm:$0xff]
        %v1370 = vld [vmem:[%s11 + $0x120] sm:$0xff]
        %v1371 = vld [vmem:[%s11 + $0x128] sm:$0xff]
        %v1372 = vld [vmem:[%s11 + $0x130] sm:$0xff]
        %v1373 = vld [vmem:[%s11 + $0x138] sm:$0xff]
        %v1374 = vld [vmem:[%s11 + $0x140] sm:$0xff]
        %v1375 = vld [vmem:[%s11 + $0x148] sm:$0xff]
        %v1376 = vld [vmem:[%s11 + $0x150] sm:$0xff]
        %v1377 = vld [vmem:[%s11 + $0x158] sm:$0xff]
        %v1378 = vld [vmem:[%s11 + $0x160] sm:$0xff]
        %v1379 = vld [vmem:[%s11 + $0x168] sm:$0xff]
        %v1380 = vld [vmem:[%s11 + $0x170] sm:$0xff]
        %v1381 = vld [vmem:[%s11 + $0x178] sm:$0xff]
        %v1382 = vld [vmem:[%s11 + $0x180] sm:$0xff]
        %v1383 = vld [vmem:[%s11 + $0x188] sm:$0xff]
        %v1384 = vld [vmem:[%s11 + $0x190] sm:$0xff]
        %v1385 = vld [vmem:[%s11 + $0x198] sm:$0xff]
        %v1386 = vld [vmem:[%s11 + $0x1a0] sm:$0xff]
        %v1387 = vld [vmem:[%s11 + $0x1a8] sm:$0xff]
        %v1388 = vld [vmem:[%s11 + $0x1b0] sm:$0xff]
        %v1389 = vld [vmem:[%s11 + $0x1b8] sm:$0xff]
        %v1390 = vld [vmem:[%s11 + $0x1c0] sm:$0xff]
        %v1391 = vld [vmem:[%s11 + $0x1c8] sm:$0xff]
        %v1392 = vld [vmem:[%s11 + $0x1d0] sm:$0xff]
        %v1393 = vld [vmem:[%s11 + $0x1d8] sm:$0xff]
        %v1394 = vld [vmem:[%s11 + $0x1e0] sm:$0xff]
        %v1395 = vld [vmem:[%s11 + $0x1e8] sm:$0xff]
        %v1396 = vld [vmem:[%s11 + $0x1f0] sm:$0xff]
        %v1397 = vld [vmem:[%s11 + $0x1f8] sm:$0xff]
        %v1398 = vld [vmem:[%s11 + $0x200] sm:$0xff]
        %v1399 = vld [vmem:[%s11 + $0x208] sm:$0xff]
        %v1400 = vld [vmem:[%s11 + $0x210] sm:$0xff]
        %v1401 = vld [vmem:[%s11 + $0x218] sm:$0xff]
        %v1402 = vld [vmem:[%s11 + $0x220] sm:$0xff]
        %v1403 = vld [vmem:[%s11 + $0x228] sm:$0xff]
        %v1404 = vld [vmem:[%s11 + $0x230] sm:$0xff]
        %v1405 = vld [vmem:[%s11 + $0x238] sm:$0xff]
        %v1406 = vld [vmem:[%s11 + $0x240] sm:$0xff]
        %v1407 = vld [vmem:[%s11 + $0x248] sm:$0xff]
        %v1408 = vld [vmem:[%s11 + $0x250] sm:$0xff]
        %v1409 = vld [vmem:[%s11 + $0x258] sm:$0xff]
        %v1410 = vld [vmem:[%s11 + $0x260] sm:$0xff]
        %v1411 = vld [vmem:[%s11 + $0x268] sm:$0xff]
        %v1412 = vld [vmem:[%s11 + $0x270] sm:$0xff]
        %v1413 = vld [vmem:[%s11 + $0x278] sm:$0xff]
        %v1414 = vld [vmem:[%s11 + $0x280] sm:$0xff]
        %v1415 = vld [vmem:[%s11 + $0x288] sm:$0xff]
        %v1416 = vld [vmem:[%s11 + $0x290] sm:$0xff]
        %v1417 = vld [vmem:[%s11 + $0x298] sm:$0xff]
        %v1418 = vld [vmem:[%s11 + $0x2a0] sm:$0xff]
        %v1419 = vld [vmem:[%s11 + $0x2a8] sm:$0xff]
        %v1420 = vld [vmem:[%s11 + $0x2b0] sm:$0xff]
        %v1421 = vld [vmem:[%s11 + $0x2b8] sm:$0xff]
        %v1422 = vld [vmem:[%s11 + $0x2c0] sm:$0xff]
        %v1423 = vld [vmem:[%s11 + $0x2c8] sm:$0xff]
        %v1424 = vld [vmem:[%s11 + $0x2d0] sm:$0xff]
        %v1425 = vld [vmem:[%s11 + $0x2d8] sm:$0xff]
        %v1426 = vld [vmem:[%s11 + $0x2e0] sm:$0xff]
        %v1427 = vld [vmem:[%s11 + $0x2e8] sm:$0xff]
        %v1428 = vld [vmem:[%s11 + $0x2f0] sm:$0xff]
        %v1429 = vld [vmem:[%s11 + $0x2f8] sm:$0xff]
        %v1430 = vld [vmem:[%s11 + $0x300] sm:$0xff]
        %v1431 = vld [vmem:[%s11 + $0x308] sm:$0xff]
        %v1432 = vld [vmem:[%s11 + $0x310] sm:$0xff]
        %v1433 = vld [vmem:[%s11 + $0x318] sm:$0xff]
        %v1434 = vld [vmem:[%s11 + $0x320] sm:$0xff]
        %v1435 = vld [vmem:[%s11 + $0x328] sm:$0xff]
        %v1436 = vld [vmem:[%s11 + $0x330] sm:$0xff]
        %v1437 = vld [vmem:[%s11 + $0x338] sm:$0xff]
        %v1438 = vld [vmem:[%s11 + $0x340] sm:$0xff]
        %v1439 = vld [vmem:[%s11 + $0x348] sm:$0xff]
        %v1440 = vld [vmem:[%s11 + $0x350] sm:$0xff]
        %v1441 = vld [vmem:[%s11 + $0x358] sm:$0xff]
        %v1442 = vld [vmem:[%s11 + $0x360] sm:$0xff]
        %v1443 = vld [vmem:[%s11 + $0x368] sm:$0xff]
        %v1444 = vld [vmem:[%s11 + $0x370] sm:$0xff]
        %v1445 = vld [vmem:[%s11 + $0x378] sm:$0xff]
        %v1446 = vld [vmem:[%s11 + $0x380] sm:$0xff]
        %v1447 = vld [vmem:[%s11 + $0x388] sm:$0xff]
        %v1448 = vld [vmem:[%s11 + $0x390] sm:$0xff]
        %v1449 = vld [vmem:[%s11 + $0x398] sm:$0xff]
        %v1450 = vld [vmem:[%s11 + $0x3a0] sm:$0xff]
        %v1451 = vld [vmem:[%s11 + $0x3a8] sm:$0xff]
        %v1452 = vld [vmem:[%s11 + $0x3b0] sm:$0xff]
        %v1453 = vld [vmem:[%s11 + $0x3b8] sm:$0xff]
        %v1454 = vld [vmem:[%s11 + $0x3c0] sm:$0xff]
        %v1455 = vld [vmem:[%s11 + $0x3c8] sm:$0xff]
        %v1456 = vld [vmem:[%s11 + $0x3d0] sm:$0xff]
        %v1457 = vld [vmem:[%s11 + $0x3d8] sm:$0xff]
        %v1458 = vld [vmem:[%s11 + $0x3e0] sm:$0xff]
        %v1459 = vld [vmem:[%s11 + $0x3e8] sm:$0xff]
        %v1460 = vld [vmem:[%s11 + $0x3f0] sm:$0xff]
        %v1461 = vld [vmem:[%s11 + $0x3f8] sm:$0xff]
        %v1462 = vld [vmem:[%s11 + $0x400] sm:$0xff]
        %v1463 = vld [vmem:[%s11 + $0x408] sm:$0xff]
        %v1464 = vld [vmem:[%s11 + $0x410] sm:$0xff]
        %v1465 = vld [vmem:[%s11 + $0x418] sm:$0xff]
        %v1466 = vld [vmem:[%s11 + $0x420] sm:$0xff]
        %v1467 = vld [vmem:[%s11 + $0x428] sm:$0xff]
        %v1468 = vld [vmem:[%s11 + $0x430] sm:$0xff]
        %v1469 = vld [vmem:[%s11 + $0x438] sm:$0xff]
        %v1470 = vld [vmem:[%s11 + $0x440] sm:$0xff]
        %v1471 = vld [vmem:[%s11 + $0x448] sm:$0xff]
        %v1472 = vld [vmem:[%s11 + $0x450] sm:$0xff]
        %v1473 = vld [vmem:[%s11 + $0x458] sm:$0xff]
        %v1474 = vld [vmem:[%s11 + $0x460] sm:$0xff]
        %v1475 = vld [vmem:[%s11 + $0x468] sm:$0xff]
        %v1476 = vld [vmem:[%s11 + $0x470] sm:$0xff]
        %v1477 = vld [vmem:[%s11 + $0x478] sm:$0xff]
        %v1478 = vld [vmem:[%s11 + $0x480] sm:$0xff]
        %v1479 = vld [vmem:[%s11 + $0x488] sm:$0xff]
        %v1480 = vld [vmem:[%s11 + $0x490] sm:$0xff]
        %v1481 = vld [vmem:[%s11 + $0x498] sm:$0xff]
        %v1482 = vld [vmem:[%s11 + $0x4a0] sm:$0xff]
        %v1483 = vld [vmem:[%s11 + $0x4a8] sm:$0xff]
        %v1484 = vld [vmem:[%s11 + $0x4b0] sm:$0xff]
        %v1485 = vld [vmem:[%s11 + $0x4b8] sm:$0xff]
        %v1486 = vld [vmem:[%s11 + $0x4c0] sm:$0xff]
        %v1487 = vld [vmem:[%s11 + $0x4c8] sm:$0xff]
        %v1488 = vld [vmem:[%s11 + $0x4d0] sm:$0xff]
        %v1489 = vld [vmem:[%s11 + $0x4d8] sm:$0xff]
        %v1490 = vld [vmem:[%s11 + $0x4e0] sm:$0xff]
        %v1491 = vld [vmem:[%s11 + $0x4e8] sm:$0xff]
        %v1492 = vld [vmem:[%s11 + $0x4f0] sm:$0xff]
        %v1493 = vld [vmem:[%s11 + $0x4f8] sm:$0xff]
        %v1494 = vld [vmem:[%s11 + $0x500] sm:$0xff]
        %v1495 = vld [vmem:[%s11 + $0x508] sm:$0xff]
        %v1496 = vld [vmem:[%s11 + $0x510] sm:$0xff]
        %v1497 = vld [vmem:[%s11 + $0x518] sm:$0xff]
        %v1498 = vld [vmem:[%s11 + $0x520] sm:$0xff]
        %v1499 = vld [vmem:[%s11 + $0x528] sm:$0xff]
        %v1500 = vld [vmem:[%s11 + $0x530] sm:$0xff]
        %v1501 = vld [vmem:[%s11 + $0x538] sm:$0xff]
        %v1502 = vld [vmem:[%s11 + $0x540] sm:$0xff]
        %v1503 = vld [vmem:[%s11 + $0x548] sm:$0xff]
        %v1504 = vld [vmem:[%s11 + $0x550] sm:$0xff]
        %v1505 = vld [vmem:[%s11 + $0x558] sm:$0xff]
        %v1506 = vld [vmem:[%s11 + $0x560] sm:$0xff]
        %v1507 = vld [vmem:[%s11 + $0x568] sm:$0xff]
        %v1508 = vld [vmem:[%s11 + $0x570] sm:$0xff]
        %v1509 = vld [vmem:[%s11 + $0x578] sm:$0xff]
        %v1510 = vld [vmem:[%s11 + $0x580] sm:$0xff]
        %v1511 = vld [vmem:[%s11 + $0x588] sm:$0xff]
        %v1512 = vld [vmem:[%s11 + $0x590] sm:$0xff]
        %v1513 = vld [vmem:[%s11 + $0x598] sm:$0xff]
        %v1514 = vld [vmem:[%s11 + $0x5a0] sm:$0xff]
        %v1515 = vld [vmem:[%s11 + $0x5a8] sm:$0xff]
        %v1516 = vld [vmem:[%s11 + $0x5b0] sm:$0xff]
        %v1517 = vld [vmem:[%s11 + $0x5b8] sm:$0xff]
        %v1518 = vld [vmem:[%s11 + $0x5c0] sm:$0xff]
        %v1519 = vld [vmem:[%s11 + $0x5c8] sm:$0xff]
        %v1520 = vld [vmem:[%s11 + $0x5d0] sm:$0xff]
        %v1521 = vld [vmem:[%s11 + $0x5d8] sm:$0xff]
        %v1522 = vld [vmem:[%s11 + $0x5e0] sm:$0xff]
        %v1523 = vld [vmem:[%s11 + $0x5e8] sm:$0xff]
        %v1524 = vld [vmem:[%s11 + $0x5f0] sm:$0xff]
        %v1525 = vld [vmem:[%s11 + $0x5f8] sm:$0xff]
        %v1526 = vld [vmem:[%s11 + $0x600] sm:$0xff]
        %v1527 = vld [vmem:[%s11 + $0x608] sm:$0xff]
        %v1528 = vld [vmem:[%s11 + $0x610] sm:$0xff]
        %v1529 = vld [vmem:[%s11 + $0x618] sm:$0xff]
        %v1530 = vld [vmem:[%s11 + $0x620] sm:$0xff]
        %v1531 = vld [vmem:[%s11 + $0x628] sm:$0xff]
        %v1532 = vld [vmem:[%s11 + $0x630] sm:$0xff]
        %v1533 = vld [vmem:[%s11 + $0x638] sm:$0xff]
        %v1534 = vld [vmem:[%s11 + $0x640] sm:$0xff]
        %v1535 = vld [vmem:[%s11 + $0x648] sm:$0xff]
        %v1536 = vld [vmem:[%s11 + $0x650] sm:$0xff]
        %v1537 = vld [vmem:[%s11 + $0x658] sm:$0xff]
        %v1538 = vld [vmem:[%s11 + $0x660] sm:$0xff]
        %v1539 = vld [vmem:[%s11 + $0x668] sm:$0xff]
        %v1540 = vld [vmem:[%s11 + $0x670] sm:$0xff]
        %v1541 = vld [vmem:[%s11 + $0x678] sm:$0xff]
        %v1542 = vld [vmem:[%s11 + $0x680] sm:$0xff]
        %v1543 = vld [vmem:[%s11 + $0x688] sm:$0xff]
        %v1544 = vld [vmem:[%s11 + $0x690] sm:$0xff]
        %v1545 = vld [vmem:[%s11 + $0x698] sm:$0xff]
        %v1546 = vld [vmem:[%s11 + $0x6a0] sm:$0xff]
        %v1547 = vld [vmem:[%s11 + $0x6a8] sm:$0xff]
        %v1548 = vld [vmem:[%s11 + $0x6b0] sm:$0xff]
        %v1549 = vld [vmem:[%s11 + $0x6b8] sm:$0xff]
        %v1550 = vld [vmem:[%s11 + $0x6c0] sm:$0xff]
        %v1551 = vld [vmem:[%s11 + $0x6c8] sm:$0xff]
        %v1552 = vld [vmem:[%s11 + $0x6d0] sm:$0xff]
        %v1553 = vld [vmem:[%s11 + $0x6d8] sm:$0xff]
        %v1554 = vld [vmem:[%s11 + $0x6e0] sm:$0xff]
        %v1555 = vld [vmem:[%s11 + $0x6e8] sm:$0xff]
        %v1556 = vld [vmem:[%s11 + $0x6f0] sm:$0xff]
        %v1557 = vld [vmem:[%s11 + $0x6f8] sm:$0xff]
        %v1558 = vld [vmem:[%s11 + $0x700] sm:$0xff]
        %v1559 = vld [vmem:[%s11 + $0x708] sm:$0xff]
        %v1560 = vld [vmem:[%s11 + $0x710] sm:$0xff]
        %v1561 = vld [vmem:[%s11 + $0x718] sm:$0xff]
        %v1562 = vld [vmem:[%s11 + $0x720] sm:$0xff]
        %v1563 = vld [vmem:[%s11 + $0x728] sm:$0xff]
        %v1564 = vld [vmem:[%s11 + $0x730] sm:$0xff]
        %v1565 = vld [vmem:[%s11 + $0x738] sm:$0xff]
        %v1566 = vld [vmem:[%s11 + $0x740] sm:$0xff]
        %v1567 = vld [vmem:[%s11 + $0x748] sm:$0xff]
        %v1568 = vld [vmem:[%s11 + $0x750] sm:$0xff]
        %v1569 = vld [vmem:[%s11 + $0x758] sm:$0xff]
        %v1570 = vld [vmem:[%s11 + $0x760] sm:$0xff]
        %v1571 = vld [vmem:[%s11 + $0x768] sm:$0xff]
        %v1572 = vld [vmem:[%s11 + $0x770] sm:$0xff]
        %v1573 = vld [vmem:[%s11 + $0x778] sm:$0xff]
        %v1574 = vld [vmem:[%s11 + $0x780] sm:$0xff]
        %v1575 = vld [vmem:[%s11 + $0x788] sm:$0xff]
        %v1576 = vld [vmem:[%s11 + $0x790] sm:$0xff]
        %v1577 = vld [vmem:[%s11 + $0x798] sm:$0xff]
        %v1578 = vld [vmem:[%s11 + $0x7a0] sm:$0xff]
        %v1579 = vld [vmem:[%s11 + $0x7a8] sm:$0xff]
        %v1580 = vld [vmem:[%s11 + $0x7b0] sm:$0xff]
        %v1581 = vld [vmem:[%s11 + $0x7b8] sm:$0xff]
        %v1582 = vld [vmem:[%s11 + $0x7c0] sm:$0xff]
        %v1583 = vld [vmem:[%s11 + $0x7c8] sm:$0xff]
        %v1584 = vld [vmem:[%s11 + $0x7d0] sm:$0xff]
        %v1585 = vld [vmem:[%s11 + $0x7d8] sm:$0xff]
        %v1586 = vld [vmem:[%s11 + $0x7e0] sm:$0xff]
        %v1587 = vld [vmem:[%s11 + $0x7e8] sm:$0xff]
        %v1588 = vld [vmem:[%s11 + $0x7f0] sm:$0xff]
        %v1589 = vld [vmem:[%s11 + $0x7f8] sm:$0xff]
        %v1590 = vld [vmem:[%s12] sm:$0xff]
        %v1591 = vld [vmem:[%s12 + $0x8] sm:$0xff]
        %v1592 = vld [vmem:[%s12 + $0x10] sm:$0xff]
        %v1593 = vld [vmem:[%s12 + $0x18] sm:$0xff]
        %v1850 = vunpack.c.l.b16 %v1334
        %v1851 = vunpack.c.h.b16 %v1334
        %v1852 = vunpack.c.l.b16 %v1335
        %v1853 = vunpack.c.h.b16 %v1335
        %v1854 = vunpack.c.l.b16 %v1336
        %v1855 = vunpack.c.h.b16 %v1336
        %v1856 = vunpack.c.l.b16 %v1337
        %v1857 = vunpack.c.h.b16 %v1337
        %v1858 = vunpack.c.l.b16 %v1338
        %v1859 = vunpack.c.h.b16 %v1338
        %v1860 = vunpack.c.l.b16 %v1339
        %v1861 = vunpack.c.h.b16 %v1339
        %v1862 = vunpack.c.l.b16 %v1340
        %v1863 = vunpack.c.h.b16 %v1340
        %v1864 = vunpack.c.l.b16 %v1341
        %v1865 = vunpack.c.h.b16 %v1341
        %v1866 = vunpack.c.l.b16 %v1342
        %v1867 = vunpack.c.h.b16 %v1342
        %v1868 = vunpack.c.l.b16 %v1343
        %v1869 = vunpack.c.h.b16 %v1343
        %v1870 = vunpack.c.l.b16 %v1344
        %v1871 = vunpack.c.h.b16 %v1344
        %v1872 = vunpack.c.l.b16 %v1345
        %v1873 = vunpack.c.h.b16 %v1345
        %v1874 = vunpack.c.l.b16 %v1346
        %v1875 = vunpack.c.h.b16 %v1346
        %v1876 = vunpack.c.l.b16 %v1347
        %v1877 = vunpack.c.h.b16 %v1347
        %v1878 = vunpack.c.l.b16 %v1348
        %v1879 = vunpack.c.h.b16 %v1348
        %v1880 = vunpack.c.l.b16 %v1349
        %v1881 = vunpack.c.h.b16 %v1349
        %v1882 = vunpack.c.l.b16 %v1350
        %v1883 = vunpack.c.h.b16 %v1350
        %v1884 = vunpack.c.l.b16 %v1351
        %v1885 = vunpack.c.h.b16 %v1351
        %v1886 = vunpack.c.l.b16 %v1352
        %v1887 = vunpack.c.h.b16 %v1352
        %v1888 = vunpack.c.l.b16 %v1353
        %v1889 = vunpack.c.h.b16 %v1353
        %v1890 = vunpack.c.l.b16 %v1354
        %v1891 = vunpack.c.h.b16 %v1354
        %v1892 = vunpack.c.l.b16 %v1355
        %v1893 = vunpack.c.h.b16 %v1355
        %v1894 = vunpack.c.l.b16 %v1356
        %v1895 = vunpack.c.h.b16 %v1356
        %v1896 = vunpack.c.l.b16 %v1357
        %v1897 = vunpack.c.h.b16 %v1357
        %v1898 = vunpack.c.l.b16 %v1358
        %v1899 = vunpack.c.h.b16 %v1358
        %v1900 = vunpack.c.l.b16 %v1359
        %v1901 = vunpack.c.h.b16 %v1359
        %v1902 = vunpack.c.l.b16 %v1360
        %v1903 = vunpack.c.h.b16 %v1360
        %v1904 = vunpack.c.l.b16 %v1361
        %v1905 = vunpack.c.h.b16 %v1361
        %v1906 = vunpack.c.l.b16 %v1362
        %v1907 = vunpack.c.h.b16 %v1362
        %v1908 = vunpack.c.l.b16 %v1363
        %v1909 = vunpack.c.h.b16 %v1363
        %v1910 = vunpack.c.l.b16 %v1364
        %v1911 = vunpack.c.h.b16 %v1364
        %v1912 = vunpack.c.l.b16 %v1365
        %v1913 = vunpack.c.h.b16 %v1365
        %v1914 = vunpack.c.l.b16 %v1366
        %v1915 = vunpack.c.h.b16 %v1366
        %v1916 = vunpack.c.l.b16 %v1367
        %v1917 = vunpack.c.h.b16 %v1367
        %v1918 = vunpack.c.l.b16 %v1368
        %v1919 = vunpack.c.h.b16 %v1368
        %v1920 = vunpack.c.l.b16 %v1369
        %v1921 = vunpack.c.h.b16 %v1369
        %v1922 = vunpack.c.l.b16 %v1370
        %v1923 = vunpack.c.h.b16 %v1370
        %v1924 = vunpack.c.l.b16 %v1371
        %v1925 = vunpack.c.h.b16 %v1371
        %v1926 = vunpack.c.l.b16 %v1372
        %v1927 = vunpack.c.h.b16 %v1372
        %v1928 = vunpack.c.l.b16 %v1373
        %v1929 = vunpack.c.h.b16 %v1373
        %v1930 = vunpack.c.l.b16 %v1374
        %v1931 = vunpack.c.h.b16 %v1374
        %v1932 = vunpack.c.l.b16 %v1375
        %v1933 = vunpack.c.h.b16 %v1375
        %v1934 = vunpack.c.l.b16 %v1376
        %v1935 = vunpack.c.h.b16 %v1376
        %v1936 = vunpack.c.l.b16 %v1377
        %v1937 = vunpack.c.h.b16 %v1377
        %v1938 = vunpack.c.l.b16 %v1378
        %v1939 = vunpack.c.h.b16 %v1378
        %v1940 = vunpack.c.l.b16 %v1379
        %v1941 = vunpack.c.h.b16 %v1379
        %v1942 = vunpack.c.l.b16 %v1380
        %v1943 = vunpack.c.h.b16 %v1380
        %v1944 = vunpack.c.l.b16 %v1381
        %v1945 = vunpack.c.h.b16 %v1381
        %v1946 = vunpack.c.l.b16 %v1382
        %v1947 = vunpack.c.h.b16 %v1382
        %v1948 = vunpack.c.l.b16 %v1383
        %v1949 = vunpack.c.h.b16 %v1383
        %v1950 = vunpack.c.l.b16 %v1384
        %v1951 = vunpack.c.h.b16 %v1384
        %v1952 = vunpack.c.l.b16 %v1385
        %v1953 = vunpack.c.h.b16 %v1385
        %v1954 = vunpack.c.l.b16 %v1386
        %v1955 = vunpack.c.h.b16 %v1386
        %v1956 = vunpack.c.l.b16 %v1387
        %v1957 = vunpack.c.h.b16 %v1387
        %v1958 = vunpack.c.l.b16 %v1388
        %v1959 = vunpack.c.h.b16 %v1388
        %v1960 = vunpack.c.l.b16 %v1389
        %v1961 = vunpack.c.h.b16 %v1389
        %v1962 = vunpack.c.l.b16 %v1390
        %v1963 = vunpack.c.h.b16 %v1390
        %v1964 = vunpack.c.l.b16 %v1391
        %v1965 = vunpack.c.h.b16 %v1391
        %v1966 = vunpack.c.l.b16 %v1392
        %v1967 = vunpack.c.h.b16 %v1392
        %v1968 = vunpack.c.l.b16 %v1393
        %v1969 = vunpack.c.h.b16 %v1393
        %v1970 = vunpack.c.l.b16 %v1394
        %v1971 = vunpack.c.h.b16 %v1394
        %v1972 = vunpack.c.l.b16 %v1395
        %v1973 = vunpack.c.h.b16 %v1395
        %v1974 = vunpack.c.l.b16 %v1396
        %v1975 = vunpack.c.h.b16 %v1396
        %v1976 = vunpack.c.l.b16 %v1397
        %v1977 = vunpack.c.h.b16 %v1397
        %v1978 = vunpack.c.l.b16 %v1398
        %v1979 = vunpack.c.h.b16 %v1398
        %v1980 = vunpack.c.l.b16 %v1399
        %v1981 = vunpack.c.h.b16 %v1399
        %v1982 = vunpack.c.l.b16 %v1400
        %v1983 = vunpack.c.h.b16 %v1400
        %v1984 = vunpack.c.l.b16 %v1401
        %v1985 = vunpack.c.h.b16 %v1401
        %v1986 = vunpack.c.l.b16 %v1402
        %v1987 = vunpack.c.h.b16 %v1402
        %v1988 = vunpack.c.l.b16 %v1403
        %v1989 = vunpack.c.h.b16 %v1403
        %v1990 = vunpack.c.l.b16 %v1404
        %v1991 = vunpack.c.h.b16 %v1404
        %v1992 = vunpack.c.l.b16 %v1405
        %v1993 = vunpack.c.h.b16 %v1405
        %v1994 = vunpack.c.l.b16 %v1406
        %v1995 = vunpack.c.h.b16 %v1406
        %v1996 = vunpack.c.l.b16 %v1407
        %v1997 = vunpack.c.h.b16 %v1407
        %v1998 = vunpack.c.l.b16 %v1408
        %v1999 = vunpack.c.h.b16 %v1408
        %v2000 = vunpack.c.l.b16 %v1409
        %v2001 = vunpack.c.h.b16 %v1409
        %v2002 = vunpack.c.l.b16 %v1410
        %v2003 = vunpack.c.h.b16 %v1410
        %v2004 = vunpack.c.l.b16 %v1411
        %v2005 = vunpack.c.h.b16 %v1411
        %v2006 = vunpack.c.l.b16 %v1412
        %v2007 = vunpack.c.h.b16 %v1412
        %v2008 = vunpack.c.l.b16 %v1413
        %v2009 = vunpack.c.h.b16 %v1413
        %v2010 = vunpack.c.l.b16 %v1414
        %v2011 = vunpack.c.h.b16 %v1414
        %v2012 = vunpack.c.l.b16 %v1415
        %v2013 = vunpack.c.h.b16 %v1415
        %v2014 = vunpack.c.l.b16 %v1416
        %v2015 = vunpack.c.h.b16 %v1416
        %v2016 = vunpack.c.l.b16 %v1417
        %v2017 = vunpack.c.h.b16 %v1417
        %v2018 = vunpack.c.l.b16 %v1418
        %v2019 = vunpack.c.h.b16 %v1418
        %v2020 = vunpack.c.l.b16 %v1419
        %v2021 = vunpack.c.h.b16 %v1419
        %v2022 = vunpack.c.l.b16 %v1420
        %v2023 = vunpack.c.h.b16 %v1420
        %v2024 = vunpack.c.l.b16 %v1421
        %v2025 = vunpack.c.h.b16 %v1421
        %v2026 = vunpack.c.l.b16 %v1422
        %v2027 = vunpack.c.h.b16 %v1422
        %v2028 = vunpack.c.l.b16 %v1423
        %v2029 = vunpack.c.h.b16 %v1423
        %v2030 = vunpack.c.l.b16 %v1424
        %v2031 = vunpack.c.h.b16 %v1424
        %v2032 = vunpack.c.l.b16 %v1425
        %v2033 = vunpack.c.h.b16 %v1425
        %v2034 = vunpack.c.l.b16 %v1426
        %v2035 = vunpack.c.h.b16 %v1426
        %v2036 = vunpack.c.l.b16 %v1427
        %v2037 = vunpack.c.h.b16 %v1427
        %v2038 = vunpack.c.l.b16 %v1428
        %v2039 = vunpack.c.h.b16 %v1428
        %v2040 = vunpack.c.l.b16 %v1429
        %v2041 = vunpack.c.h.b16 %v1429
        %v2042 = vunpack.c.l.b16 %v1430
        %v2043 = vunpack.c.h.b16 %v1430
        %v2044 = vunpack.c.l.b16 %v1431
        %v2045 = vunpack.c.h.b16 %v1431
        %v2046 = vunpack.c.l.b16 %v1432
        %v2047 = vunpack.c.h.b16 %v1432
        %v2048 = vunpack.c.l.b16 %v1433
        %v2049 = vunpack.c.h.b16 %v1433
        %v2050 = vunpack.c.l.b16 %v1434
        %v2051 = vunpack.c.h.b16 %v1434
        %v2052 = vunpack.c.l.b16 %v1435
        %v2053 = vunpack.c.h.b16 %v1435
        %v2054 = vunpack.c.l.b16 %v1436
        %v2055 = vunpack.c.h.b16 %v1436
        %v2056 = vunpack.c.l.b16 %v1437
        %v2057 = vunpack.c.h.b16 %v1437
        %v2058 = vunpack.c.l.b16 %v1438
        %v2059 = vunpack.c.h.b16 %v1438
        %v2060 = vunpack.c.l.b16 %v1439
        %v2061 = vunpack.c.h.b16 %v1439
        %v2062 = vunpack.c.l.b16 %v1440
        %v2063 = vunpack.c.h.b16 %v1440
        %v2064 = vunpack.c.l.b16 %v1441
        %v2065 = vunpack.c.h.b16 %v1441
        %v2066 = vunpack.c.l.b16 %v1442
        %v2067 = vunpack.c.h.b16 %v1442
        %v2068 = vunpack.c.l.b16 %v1443
        %v2069 = vunpack.c.h.b16 %v1443
        %v2070 = vunpack.c.l.b16 %v1444
        %v2071 = vunpack.c.h.b16 %v1444
        %v2072 = vunpack.c.l.b16 %v1445
        %v2073 = vunpack.c.h.b16 %v1445
        %v2074 = vunpack.c.l.b16 %v1446
        %v2075 = vunpack.c.h.b16 %v1446
        %v2076 = vunpack.c.l.b16 %v1447
        %v2077 = vunpack.c.h.b16 %v1447
        %v2078 = vunpack.c.l.b16 %v1448
        %v2079 = vunpack.c.h.b16 %v1448
        %v2080 = vunpack.c.l.b16 %v1449
        %v2081 = vunpack.c.h.b16 %v1449
        %v2082 = vunpack.c.l.b16 %v1450
        %v2083 = vunpack.c.h.b16 %v1450
        %v2084 = vunpack.c.l.b16 %v1451
        %v2085 = vunpack.c.h.b16 %v1451
        %v2086 = vunpack.c.l.b16 %v1452
        %v2087 = vunpack.c.h.b16 %v1452
        %v2088 = vunpack.c.l.b16 %v1453
        %v2089 = vunpack.c.h.b16 %v1453
        %v2090 = vunpack.c.l.b16 %v1454
        %v2091 = vunpack.c.h.b16 %v1454
        %v2092 = vunpack.c.l.b16 %v1455
        %v2093 = vunpack.c.h.b16 %v1455
        %v2094 = vunpack.c.l.b16 %v1456
        %v2095 = vunpack.c.h.b16 %v1456
        %v2096 = vunpack.c.l.b16 %v1457
        %v2097 = vunpack.c.h.b16 %v1457
        %v2098 = vunpack.c.l.b16 %v1458
        %v2099 = vunpack.c.h.b16 %v1458
        %v2100 = vunpack.c.l.b16 %v1459
        %v2101 = vunpack.c.h.b16 %v1459
        %v2102 = vunpack.c.l.b16 %v1460
        %v2103 = vunpack.c.h.b16 %v1460
        %v2104 = vunpack.c.l.b16 %v1461
        %v2105 = vunpack.c.h.b16 %v1461
        %v2106 = vunpack.c.l.b16 %v1462
        %v2107 = vunpack.c.h.b16 %v1462
        %v2108 = vunpack.c.l.b16 %v1463
        %v2109 = vunpack.c.h.b16 %v1463
        %v2110 = vunpack.c.l.b16 %v1464
        %v2111 = vunpack.c.h.b16 %v1464
        %v2112 = vunpack.c.l.b16 %v1465
        %v2113 = vunpack.c.h.b16 %v1465
        %v2114 = vunpack.c.l.b16 %v1466
        %v2115 = vunpack.c.h.b16 %v1466
        %v2116 = vunpack.c.l.b16 %v1467
        %v2117 = vunpack.c.h.b16 %v1467
        %v2118 = vunpack.c.l.b16 %v1468
        %v2119 = vunpack.c.h.b16 %v1468
        %v2120 = vunpack.c.l.b16 %v1469
        %v2121 = vunpack.c.h.b16 %v1469
        %v2122 = vunpack.c.l.b16 %v1470
        %v2123 = vunpack.c.h.b16 %v1470
        %v2124 = vunpack.c.l.b16 %v1471
        %v2125 = vunpack.c.h.b16 %v1471
        %v2126 = vunpack.c.l.b16 %v1472
        %v2127 = vunpack.c.h.b16 %v1472
        %v2128 = vunpack.c.l.b16 %v1473
        %v2129 = vunpack.c.h.b16 %v1473
        %v2130 = vunpack.c.l.b16 %v1474
        %v2131 = vunpack.c.h.b16 %v1474
        %v2132 = vunpack.c.l.b16 %v1475
        %v2133 = vunpack.c.h.b16 %v1475
        %v2134 = vunpack.c.l.b16 %v1476
        %v2135 = vunpack.c.h.b16 %v1476
        %v2136 = vunpack.c.l.b16 %v1477
        %v2137 = vunpack.c.h.b16 %v1477
        %v2138 = vunpack.c.l.b16 %v1478
        %v2139 = vunpack.c.h.b16 %v1478
        %v2140 = vunpack.c.l.b16 %v1479
        %v2141 = vunpack.c.h.b16 %v1479
        %v2142 = vunpack.c.l.b16 %v1480
        %v2143 = vunpack.c.h.b16 %v1480
        %v2144 = vunpack.c.l.b16 %v1481
        %v2145 = vunpack.c.h.b16 %v1481
        %v2146 = vunpack.c.l.b16 %v1482
        %v2147 = vunpack.c.h.b16 %v1482
        %v2148 = vunpack.c.l.b16 %v1483
        %v2149 = vunpack.c.h.b16 %v1483
        %v2150 = vunpack.c.l.b16 %v1484
        %v2151 = vunpack.c.h.b16 %v1484
        %v2152 = vunpack.c.l.b16 %v1485
        %v2153 = vunpack.c.h.b16 %v1485
        %v2154 = vunpack.c.l.b16 %v1486
        %v2155 = vunpack.c.h.b16 %v1486
        %v2156 = vunpack.c.l.b16 %v1487
        %v2157 = vunpack.c.h.b16 %v1487
        %v2158 = vunpack.c.l.b16 %v1488
        %v2159 = vunpack.c.h.b16 %v1488
        %v2160 = vunpack.c.l.b16 %v1489
        %v2161 = vunpack.c.h.b16 %v1489
        %v2162 = vunpack.c.l.b16 %v1490
        %v2163 = vunpack.c.h.b16 %v1490
        %v2164 = vunpack.c.l.b16 %v1491
        %v2165 = vunpack.c.h.b16 %v1491
        %v2166 = vunpack.c.l.b16 %v1492
        %v2167 = vunpack.c.h.b16 %v1492
        %v2168 = vunpack.c.l.b16 %v1493
        %v2169 = vunpack.c.h.b16 %v1493
        %v2170 = vunpack.c.l.b16 %v1494
        %v2171 = vunpack.c.h.b16 %v1494
        %v2172 = vunpack.c.l.b16 %v1495
        %v2173 = vunpack.c.h.b16 %v1495
        %v2174 = vunpack.c.l.b16 %v1496
        %v2175 = vunpack.c.h.b16 %v1496
        %v2176 = vunpack.c.l.b16 %v1497
        %v2177 = vunpack.c.h.b16 %v1497
        %v2178 = vunpack.c.l.b16 %v1498
        %v2179 = vunpack.c.h.b16 %v1498
        %v2180 = vunpack.c.l.b16 %v1499
        %v2181 = vunpack.c.h.b16 %v1499
        %v2182 = vunpack.c.l.b16 %v1500
        %v2183 = vunpack.c.h.b16 %v1500
        %v2184 = vunpack.c.l.b16 %v1501
        %v2185 = vunpack.c.h.b16 %v1501
        %v2186 = vunpack.c.l.b16 %v1502
        %v2187 = vunpack.c.h.b16 %v1502
        %v2188 = vunpack.c.l.b16 %v1503
        %v2189 = vunpack.c.h.b16 %v1503
        %v2190 = vunpack.c.l.b16 %v1504
        %v2191 = vunpack.c.h.b16 %v1504
        %v2192 = vunpack.c.l.b16 %v1505
        %v2193 = vunpack.c.h.b16 %v1505
        %v2194 = vunpack.c.l.b16 %v1506
        %v2195 = vunpack.c.h.b16 %v1506
        %v2196 = vunpack.c.l.b16 %v1507
        %v2197 = vunpack.c.h.b16 %v1507
        %v2198 = vunpack.c.l.b16 %v1508
        %v2199 = vunpack.c.h.b16 %v1508
        %v2200 = vunpack.c.l.b16 %v1509
        %v2201 = vunpack.c.h.b16 %v1509
        %v2202 = vunpack.c.l.b16 %v1510
        %v2203 = vunpack.c.h.b16 %v1510
        %v2204 = vunpack.c.l.b16 %v1511
        %v2205 = vunpack.c.h.b16 %v1511
        %v2206 = vunpack.c.l.b16 %v1512
        %v2207 = vunpack.c.h.b16 %v1512
        %v2208 = vunpack.c.l.b16 %v1513
        %v2209 = vunpack.c.h.b16 %v1513
        %v2210 = vunpack.c.l.b16 %v1514
        %v2211 = vunpack.c.h.b16 %v1514
        %v2212 = vunpack.c.l.b16 %v1515
        %v2213 = vunpack.c.h.b16 %v1515
        %v2214 = vunpack.c.l.b16 %v1516
        %v2215 = vunpack.c.h.b16 %v1516
        %v2216 = vunpack.c.l.b16 %v1517
        %v2217 = vunpack.c.h.b16 %v1517
        %v2218 = vunpack.c.l.b16 %v1518
        %v2219 = vunpack.c.h.b16 %v1518
        %v2220 = vunpack.c.l.b16 %v1519
        %v2221 = vunpack.c.h.b16 %v1519
        %v2222 = vunpack.c.l.b16 %v1520
        %v2223 = vunpack.c.h.b16 %v1520
        %v2224 = vunpack.c.l.b16 %v1521
        %v2225 = vunpack.c.h.b16 %v1521
        %v2226 = vunpack.c.l.b16 %v1522
        %v2227 = vunpack.c.h.b16 %v1522
        %v2228 = vunpack.c.l.b16 %v1523
        %v2229 = vunpack.c.h.b16 %v1523
        %v2230 = vunpack.c.l.b16 %v1524
        %v2231 = vunpack.c.h.b16 %v1524
        %v2232 = vunpack.c.l.b16 %v1525
        %v2233 = vunpack.c.h.b16 %v1525
        %v2234 = vunpack.c.l.b16 %v1526
        %v2235 = vunpack.c.h.b16 %v1526
        %v2236 = vunpack.c.l.b16 %v1527
        %v2237 = vunpack.c.h.b16 %v1527
        %v2238 = vunpack.c.l.b16 %v1528
        %v2239 = vunpack.c.h.b16 %v1528
        %v2240 = vunpack.c.l.b16 %v1529
        %v2241 = vunpack.c.h.b16 %v1529
        %v2242 = vunpack.c.l.b16 %v1530
        %v2243 = vunpack.c.h.b16 %v1530
        %v2244 = vunpack.c.l.b16 %v1531
        %v2245 = vunpack.c.h.b16 %v1531
        %v2246 = vunpack.c.l.b16 %v1532
        %v2247 = vunpack.c.h.b16 %v1532
        %v2248 = vunpack.c.l.b16 %v1533
        %v2249 = vunpack.c.h.b16 %v1533
        %v2250 = vunpack.c.l.b16 %v1534
        %v2251 = vunpack.c.h.b16 %v1534
        %v2252 = vunpack.c.l.b16 %v1535
        %v2253 = vunpack.c.h.b16 %v1535
        %v2254 = vunpack.c.l.b16 %v1536
        %v2255 = vunpack.c.h.b16 %v1536
        %v2256 = vunpack.c.l.b16 %v1537
        %v2257 = vunpack.c.h.b16 %v1537
        %v2258 = vunpack.c.l.b16 %v1538
        %v2259 = vunpack.c.h.b16 %v1538
        %v2260 = vunpack.c.l.b16 %v1539
        %v2261 = vunpack.c.h.b16 %v1539
        %v2262 = vunpack.c.l.b16 %v1540
        %v2263 = vunpack.c.h.b16 %v1540
        %v2264 = vunpack.c.l.b16 %v1541
        %v2265 = vunpack.c.h.b16 %v1541
        %v2266 = vunpack.c.l.b16 %v1542
        %v2267 = vunpack.c.h.b16 %v1542
        %v2268 = vunpack.c.l.b16 %v1543
        %v2269 = vunpack.c.h.b16 %v1543
        %v2270 = vunpack.c.l.b16 %v1544
        %v2271 = vunpack.c.h.b16 %v1544
        %v2272 = vunpack.c.l.b16 %v1545
        %v2273 = vunpack.c.h.b16 %v1545
        %v2274 = vunpack.c.l.b16 %v1546
        %v2275 = vunpack.c.h.b16 %v1546
        %v2276 = vunpack.c.l.b16 %v1547
        %v2277 = vunpack.c.h.b16 %v1547
        %v2278 = vunpack.c.l.b16 %v1548
        %v2279 = vunpack.c.h.b16 %v1548
        %v2280 = vunpack.c.l.b16 %v1549
        %v2281 = vunpack.c.h.b16 %v1549
        %v2282 = vunpack.c.l.b16 %v1550
        %v2283 = vunpack.c.h.b16 %v1550
        %v2284 = vunpack.c.l.b16 %v1551
        %v2285 = vunpack.c.h.b16 %v1551
        %v2286 = vunpack.c.l.b16 %v1552
        %v2287 = vunpack.c.h.b16 %v1552
        %v2288 = vunpack.c.l.b16 %v1553
        %v2289 = vunpack.c.h.b16 %v1553
        %v2290 = vunpack.c.l.b16 %v1554
        %v2291 = vunpack.c.h.b16 %v1554
        %v2292 = vunpack.c.l.b16 %v1555
        %v2293 = vunpack.c.h.b16 %v1555
        %v2294 = vunpack.c.l.b16 %v1556
        %v2295 = vunpack.c.h.b16 %v1556
        %v2296 = vunpack.c.l.b16 %v1557
        %v2297 = vunpack.c.h.b16 %v1557
        %v2298 = vunpack.c.l.b16 %v1558
        %v2299 = vunpack.c.h.b16 %v1558
        %v2300 = vunpack.c.l.b16 %v1559
        %v2301 = vunpack.c.h.b16 %v1559
        %v2302 = vunpack.c.l.b16 %v1560
        %v2303 = vunpack.c.h.b16 %v1560
        %v2304 = vunpack.c.l.b16 %v1561
        %v2305 = vunpack.c.h.b16 %v1561
        %v2306 = vunpack.c.l.b16 %v1562
        %v2307 = vunpack.c.h.b16 %v1562
        %v2308 = vunpack.c.l.b16 %v1563
        %v2309 = vunpack.c.h.b16 %v1563
        %v2310 = vunpack.c.l.b16 %v1564
        %v2311 = vunpack.c.h.b16 %v1564
        %v2312 = vunpack.c.l.b16 %v1565
        %v2313 = vunpack.c.h.b16 %v1565
        %v2314 = vunpack.c.l.b16 %v1566
        %v2315 = vunpack.c.h.b16 %v1566
        %v2316 = vunpack.c.l.b16 %v1567
        %v2317 = vunpack.c.h.b16 %v1567
        %v2318 = vunpack.c.l.b16 %v1568
        %v2319 = vunpack.c.h.b16 %v1568
        %v2320 = vunpack.c.l.b16 %v1569
        %v2321 = vunpack.c.h.b16 %v1569
        %v2322 = vunpack.c.l.b16 %v1570
        %v2323 = vunpack.c.h.b16 %v1570
        %v2324 = vunpack.c.l.b16 %v1571
        %v2325 = vunpack.c.h.b16 %v1571
        %v2326 = vunpack.c.l.b16 %v1572
        %v2327 = vunpack.c.h.b16 %v1572
        %v2328 = vunpack.c.l.b16 %v1573
        %v2329 = vunpack.c.h.b16 %v1573
        %v2330 = vunpack.c.l.b16 %v1574
        %v2331 = vunpack.c.h.b16 %v1574
        %v2332 = vunpack.c.l.b16 %v1575
        %v2333 = vunpack.c.h.b16 %v1575
        %v2334 = vunpack.c.l.b16 %v1576
        %v2335 = vunpack.c.h.b16 %v1576
        %v2336 = vunpack.c.l.b16 %v1577
        %v2337 = vunpack.c.h.b16 %v1577
        %v2338 = vunpack.c.l.b16 %v1578
        %v2339 = vunpack.c.h.b16 %v1578
        %v2340 = vunpack.c.l.b16 %v1579
        %v2341 = vunpack.c.h.b16 %v1579
        %v2342 = vunpack.c.l.b16 %v1580
        %v2343 = vunpack.c.h.b16 %v1580
        %v2344 = vunpack.c.l.b16 %v1581
        %v2345 = vunpack.c.h.b16 %v1581
        %v2346 = vunpack.c.l.b16 %v1582
        %v2347 = vunpack.c.h.b16 %v1582
        %v2348 = vunpack.c.l.b16 %v1583
        %v2349 = vunpack.c.h.b16 %v1583
        %v2350 = vunpack.c.l.b16 %v1584
        %v2351 = vunpack.c.h.b16 %v1584
        %v2352 = vunpack.c.l.b16 %v1585
        %v2353 = vunpack.c.h.b16 %v1585
        %v2354 = vunpack.c.l.b16 %v1586
        %v2355 = vunpack.c.h.b16 %v1586
        %v2356 = vunpack.c.l.b16 %v1587
        %v2357 = vunpack.c.h.b16 %v1587
        %v2358 = vunpack.c.l.b16 %v1588
        %v2359 = vunpack.c.h.b16 %v1588
        %v2360 = vunpack.c.l.b16 %v1589
        %v2361 = vunpack.c.h.b16 %v1589
        %v2362 = vpack.c.b16 %v1882, %v1850
        %v2363 = vpack.c.b16 %v1883, %v1851
        %v2364 = vpack.c.b16 %v1884, %v1852
        %v2365 = vpack.c.b16 %v1885, %v1853
        %v2366 = vpack.c.b16 %v1886, %v1854
        %v2367 = vpack.c.b16 %v1887, %v1855
        %v2368 = vpack.c.b16 %v1888, %v1856
        %v2369 = vpack.c.b16 %v1889, %v1857
        %v2370 = vpack.c.b16 %v1890, %v1858
        %v2371 = vpack.c.b16 %v1891, %v1859
        %v2372 = vpack.c.b16 %v1892, %v1860
        %v2373 = vpack.c.b16 %v1893, %v1861
        %v2374 = vpack.c.b16 %v1894, %v1862
        %v2375 = vpack.c.b16 %v1895, %v1863
        %v2376 = vpack.c.b16 %v1896, %v1864
        %v2377 = vpack.c.b16 %v1897, %v1865
        %v2378 = vpack.c.b16 %v1898, %v1866
        %v2379 = vpack.c.b16 %v1899, %v1867
        %v2380 = vpack.c.b16 %v1900, %v1868
        %v2381 = vpack.c.b16 %v1901, %v1869
        %v2382 = vpack.c.b16 %v1902, %v1870
        %v2383 = vpack.c.b16 %v1903, %v1871
        %v2384 = vpack.c.b16 %v1904, %v1872
        %v2385 = vpack.c.b16 %v1905, %v1873
        %v2386 = vpack.c.b16 %v1906, %v1874
        %v2387 = vpack.c.b16 %v1907, %v1875
        %v2388 = vpack.c.b16 %v1908, %v1876
        %v2389 = vpack.c.b16 %v1909, %v1877
        %v2390 = vpack.c.b16 %v1910, %v1878
        %v2391 = vpack.c.b16 %v1911, %v1879
        %v2392 = vpack.c.b16 %v1912, %v1880
        %v2393 = vpack.c.b16 %v1913, %v1881
        %v2394 = vpack.c.b16 %v1946, %v1914
        %v2395 = vpack.c.b16 %v1947, %v1915
        %v2396 = vpack.c.b16 %v1948, %v1916
        %v2397 = vpack.c.b16 %v1949, %v1917
        %v2398 = vpack.c.b16 %v1950, %v1918
        %v2399 = vpack.c.b16 %v1951, %v1919
        %v2400 = vpack.c.b16 %v1952, %v1920
        %v2401 = vpack.c.b16 %v1953, %v1921
        %v2402 = vpack.c.b16 %v1954, %v1922
        %v2403 = vpack.c.b16 %v1955, %v1923
        %v2404 = vpack.c.b16 %v1956, %v1924
        %v2405 = vpack.c.b16 %v1957, %v1925
        %v2406 = vpack.c.b16 %v1958, %v1926
        %v2407 = vpack.c.b16 %v1959, %v1927
        %v2408 = vpack.c.b16 %v1960, %v1928
        %v2409 = vpack.c.b16 %v1961, %v1929
        %v2410 = vpack.c.b16 %v1962, %v1930
        %v2411 = vpack.c.b16 %v1963, %v1931
        %v2412 = vpack.c.b16 %v1964, %v1932
        %v2413 = vpack.c.b16 %v1965, %v1933
        %v2414 = vpack.c.b16 %v1966, %v1934
        %v2415 = vpack.c.b16 %v1967, %v1935
        %v2416 = vpack.c.b16 %v1968, %v1936
        %v2417 = vpack.c.b16 %v1969, %v1937
        %v2418 = vpack.c.b16 %v1970, %v1938
        %v2419 = vpack.c.b16 %v1971, %v1939
        %v2420 = vpack.c.b16 %v1972, %v1940
        %v2421 = vpack.c.b16 %v1973, %v1941
        %v2422 = vpack.c.b16 %v1974, %v1942
        %v2423 = vpack.c.b16 %v1975, %v1943
        %v2424 = vpack.c.b16 %v1976, %v1944
        %v2425 = vpack.c.b16 %v1977, %v1945
        %v2426 = vpack.c.b16 %v2010, %v1978
        %v2427 = vpack.c.b16 %v2011, %v1979
        %v2428 = vpack.c.b16 %v2012, %v1980
        %v2429 = vpack.c.b16 %v2013, %v1981
        %v2430 = vpack.c.b16 %v2014, %v1982
        %v2431 = vpack.c.b16 %v2015, %v1983
        %v2432 = vpack.c.b16 %v2016, %v1984
        %v2433 = vpack.c.b16 %v2017, %v1985
        %v2434 = vpack.c.b16 %v2018, %v1986
        %v2435 = vpack.c.b16 %v2019, %v1987
        %v2436 = vpack.c.b16 %v2020, %v1988
        %v2437 = vpack.c.b16 %v2021, %v1989
        %v2438 = vpack.c.b16 %v2022, %v1990
        %v2439 = vpack.c.b16 %v2023, %v1991
        %v2440 = vpack.c.b16 %v2024, %v1992
        %v2441 = vpack.c.b16 %v2025, %v1993
        %v2442 = vpack.c.b16 %v2026, %v1994
        %v2443 = vpack.c.b16 %v2027, %v1995
        %v2444 = vpack.c.b16 %v2028, %v1996
        %v2445 = vpack.c.b16 %v2029, %v1997
        %v2446 = vpack.c.b16 %v2030, %v1998
        %v2447 = vpack.c.b16 %v2031, %v1999
        %v2448 = vpack.c.b16 %v2032, %v2000
        %v2449 = vpack.c.b16 %v2033, %v2001
        %v2450 = vpack.c.b16 %v2034, %v2002
        %v2451 = vpack.c.b16 %v2035, %v2003
        %v2452 = vpack.c.b16 %v2036, %v2004
        %v2453 = vpack.c.b16 %v2037, %v2005
        %v2454 = vpack.c.b16 %v2038, %v2006
        %v2455 = vpack.c.b16 %v2039, %v2007
        %v2456 = vpack.c.b16 %v2040, %v2008
        %v2457 = vpack.c.b16 %v2041, %v2009
        %v2458 = vpack.c.b16 %v2074, %v2042
        %v2459 = vpack.c.b16 %v2075, %v2043
        %v2460 = vpack.c.b16 %v2076, %v2044
        %v2461 = vpack.c.b16 %v2077, %v2045
        %v2462 = vpack.c.b16 %v2078, %v2046
        %v2463 = vpack.c.b16 %v2079, %v2047
        %v2464 = vpack.c.b16 %v2080, %v2048
        %v2465 = vpack.c.b16 %v2081, %v2049
        %v2466 = vpack.c.b16 %v2082, %v2050
        %v2467 = vpack.c.b16 %v2083, %v2051
        %v2468 = vpack.c.b16 %v2084, %v2052
        %v2469 = vpack.c.b16 %v2085, %v2053
        %v2470 = vpack.c.b16 %v2086, %v2054
        %v2471 = vpack.c.b16 %v2087, %v2055
        %v2472 = vpack.c.b16 %v2088, %v2056
        %v2473 = vpack.c.b16 %v2089, %v2057
        %v2474 = vpack.c.b16 %v2090, %v2058
        %v2475 = vpack.c.b16 %v2091, %v2059
        %v2476 = vpack.c.b16 %v2092, %v2060
        %v2477 = vpack.c.b16 %v2093, %v2061
        %v2478 = vpack.c.b16 %v2094, %v2062
        %v2479 = vpack.c.b16 %v2095, %v2063
        %v2480 = vpack.c.b16 %v2096, %v2064
        %v2481 = vpack.c.b16 %v2097, %v2065
        %v2482 = vpack.c.b16 %v2098, %v2066
        %v2483 = vpack.c.b16 %v2099, %v2067
        %v2484 = vpack.c.b16 %v2100, %v2068
        %v2485 = vpack.c.b16 %v2101, %v2069
        %v2486 = vpack.c.b16 %v2102, %v2070
        %v2487 = vpack.c.b16 %v2103, %v2071
        %v2488 = vpack.c.b16 %v2104, %v2072
        %v2489 = vpack.c.b16 %v2105, %v2073
        %v2490 = vpack.c.b16 %v2138, %v2106
        %v2491 = vpack.c.b16 %v2139, %v2107
        %v2492 = vpack.c.b16 %v2140, %v2108
        %v2493 = vpack.c.b16 %v2141, %v2109
        %v2494 = vpack.c.b16 %v2142, %v2110
        %v2495 = vpack.c.b16 %v2143, %v2111
        %v2496 = vpack.c.b16 %v2144, %v2112
        %v2497 = vpack.c.b16 %v2145, %v2113
        %v2498 = vpack.c.b16 %v2146, %v2114
        %v2499 = vpack.c.b16 %v2147, %v2115
        %v2500 = vpack.c.b16 %v2148, %v2116
        %v2501 = vpack.c.b16 %v2149, %v2117
        %v2502 = vpack.c.b16 %v2150, %v2118
        %v2503 = vpack.c.b16 %v2151, %v2119
        %v2504 = vpack.c.b16 %v2152, %v2120
        %v2505 = vpack.c.b16 %v2153, %v2121
        %v2506 = vpack.c.b16 %v2154, %v2122
        %v2507 = vpack.c.b16 %v2155, %v2123
        %v2508 = vpack.c.b16 %v2156, %v2124
        %v2509 = vpack.c.b16 %v2157, %v2125
        %v2510 = vpack.c.b16 %v2158, %v2126
        %v2511 = vpack.c.b16 %v2159, %v2127
        %v2512 = vpack.c.b16 %v2160, %v2128
        %v2513 = vpack.c.b16 %v2161, %v2129
        %v2514 = vpack.c.b16 %v2162, %v2130
        %v2515 = vpack.c.b16 %v2163, %v2131
        %v2516 = vpack.c.b16 %v2164, %v2132
        %v2517 = vpack.c.b16 %v2165, %v2133
        %v2518 = vpack.c.b16 %v2166, %v2134
        %v2519 = vpack.c.b16 %v2167, %v2135
        %v2520 = vpack.c.b16 %v2168, %v2136
        %v2521 = vpack.c.b16 %v2169, %v2137
        %v2522 = vpack.c.b16 %v2202, %v2170
        %v2523 = vpack.c.b16 %v2203, %v2171
        %v2524 = vpack.c.b16 %v2204, %v2172
        %v2525 = vpack.c.b16 %v2205, %v2173
        %v2526 = vpack.c.b16 %v2206, %v2174
        %v2527 = vpack.c.b16 %v2207, %v2175
        %v2528 = vpack.c.b16 %v2208, %v2176
        %v2529 = vpack.c.b16 %v2209, %v2177
        %v2530 = vpack.c.b16 %v2210, %v2178
        %v2531 = vpack.c.b16 %v2211, %v2179
        %v2532 = vpack.c.b16 %v2212, %v2180
        %v2533 = vpack.c.b16 %v2213, %v2181
        %v2534 = vpack.c.b16 %v2214, %v2182
        %v2535 = vpack.c.b16 %v2215, %v2183
        %v2536 = vpack.c.b16 %v2216, %v2184
        %v2537 = vpack.c.b16 %v2217, %v2185
        %v2538 = vpack.c.b16 %v2218, %v2186
        %v2539 = vpack.c.b16 %v2219, %v2187
        %v2540 = vpack.c.b16 %v2220, %v2188
        %v2541 = vpack.c.b16 %v2221, %v2189
        %v2542 = vpack.c.b16 %v2222, %v2190
        %v2543 = vpack.c.b16 %v2223, %v2191
        %v2544 = vpack.c.b16 %v2224, %v2192
        %v2545 = vpack.c.b16 %v2225, %v2193
        %v2546 = vpack.c.b16 %v2226, %v2194
        %v2547 = vpack.c.b16 %v2227, %v2195
        %v2548 = vpack.c.b16 %v2228, %v2196
        %v2549 = vpack.c.b16 %v2229, %v2197
        %v2550 = vpack.c.b16 %v2230, %v2198
        %v2551 = vpack.c.b16 %v2231, %v2199
        %v2552 = vpack.c.b16 %v2232, %v2200
        %v2553 = vpack.c.b16 %v2233, %v2201
        %v2554 = vpack.c.b16 %v2266, %v2234
        %v2555 = vpack.c.b16 %v2267, %v2235
        %v2556 = vpack.c.b16 %v2268, %v2236
        %v2557 = vpack.c.b16 %v2269, %v2237
        %v2558 = vpack.c.b16 %v2270, %v2238
        %v2559 = vpack.c.b16 %v2271, %v2239
        %v2560 = vpack.c.b16 %v2272, %v2240
        %v2561 = vpack.c.b16 %v2273, %v2241
        %v2562 = vpack.c.b16 %v2274, %v2242
        %v2563 = vpack.c.b16 %v2275, %v2243
        %v2564 = vpack.c.b16 %v2276, %v2244
        %v2565 = vpack.c.b16 %v2277, %v2245
        %v2566 = vpack.c.b16 %v2278, %v2246
        %v2567 = vpack.c.b16 %v2279, %v2247
        %v2568 = vpack.c.b16 %v2280, %v2248
        %v2569 = vpack.c.b16 %v2281, %v2249
        %v2570 = vpack.c.b16 %v2282, %v2250
        %v2571 = vpack.c.b16 %v2283, %v2251
        %v2572 = vpack.c.b16 %v2284, %v2252
        %v2573 = vpack.c.b16 %v2285, %v2253
        %v2574 = vpack.c.b16 %v2286, %v2254
        %v2575 = vpack.c.b16 %v2287, %v2255
        %v2576 = vpack.c.b16 %v2288, %v2256
        %v2577 = vpack.c.b16 %v2289, %v2257
        %v2578 = vpack.c.b16 %v2290, %v2258
        %v2579 = vpack.c.b16 %v2291, %v2259
        %v2580 = vpack.c.b16 %v2292, %v2260
        %v2581 = vpack.c.b16 %v2293, %v2261
        %v2582 = vpack.c.b16 %v2294, %v2262
        %v2583 = vpack.c.b16 %v2295, %v2263
        %v2584 = vpack.c.b16 %v2296, %v2264
        %v2585 = vpack.c.b16 %v2297, %v2265
        %v2586 = vpack.c.b16 %v2330, %v2298
        %v2587 = vpack.c.b16 %v2331, %v2299
        %v2588 = vpack.c.b16 %v2332, %v2300
        %v2589 = vpack.c.b16 %v2333, %v2301
        %v2590 = vpack.c.b16 %v2334, %v2302
        %v2591 = vpack.c.b16 %v2335, %v2303
        %v2592 = vpack.c.b16 %v2336, %v2304
        %v2593 = vpack.c.b16 %v2337, %v2305
        %v2594 = vpack.c.b16 %v2338, %v2306
        %v2595 = vpack.c.b16 %v2339, %v2307
        %v2596 = vpack.c.b16 %v2340, %v2308
        %v2597 = vpack.c.b16 %v2341, %v2309
        %v2598 = vpack.c.b16 %v2342, %v2310
        %v2599 = vpack.c.b16 %v2343, %v2311
        %v2600 = vpack.c.b16 %v2344, %v2312
        %v2601 = vpack.c.b16 %v2345, %v2313
        %v2602 = vpack.c.b16 %v2346, %v2314
        %v2603 = vpack.c.b16 %v2347, %v2315
        %v2604 = vpack.c.b16 %v2348, %v2316
        %v2605 = vpack.c.b16 %v2349, %v2317
        %v2606 = vpack.c.b16 %v2350, %v2318
        %v2607 = vpack.c.b16 %v2351, %v2319
        %v2608 = vpack.c.b16 %v2352, %v2320
        %v2609 = vpack.c.b16 %v2353, %v2321
        %v2610 = vpack.c.b16 %v2354, %v2322
        %v2611 = vpack.c.b16 %v2355, %v2323
        %v2612 = vpack.c.b16 %v2356, %v2324
        %v2613 = vpack.c.b16 %v2357, %v2325
        %v2614 = vpack.c.b16 %v2358, %v2326
        %v2615 = vpack.c.b16 %v2359, %v2327
        %v2616 = vpack.c.b16 %v2360, %v2328
        %v2617 = vpack.c.b16 %v2361, %v2329
        %v2878 = vperm.slane %v1590, 0
        %v2879 = vperm.slane %v1590, 1
        %v2880 = vperm.slane %v1590, 2
        %v2881 = vperm.slane %v1590, 3
        %v2882 = vperm.slane %v1590, 4
        %v2883 = vperm.slane %v1590, 5
        %v2884 = vperm.slane %v1590, 6
        %v2885 = vperm.slane %v1590, 7
        %v2886 = vperm.slane %v1591, 0
        %v2887 = vperm.slane %v1591, 1
        %v2888 = vperm.slane %v1591, 2
        %v2889 = vperm.slane %v1591, 3
        %v2890 = vperm.slane %v1591, 4
        %v2891 = vperm.slane %v1591, 5
        %v2892 = vperm.slane %v1591, 6
        %v2893 = vperm.slane %v1591, 7
        %v2894 = vperm.slane %v1592, 0
        %v2895 = vperm.slane %v1592, 1
        %v2896 = vperm.slane %v1592, 2
        %v2897 = vperm.slane %v1592, 3
        %v2898 = vperm.slane %v1592, 4
        %v2899 = vperm.slane %v1592, 5
        %v2900 = vperm.slane %v1592, 6
        %v2901 = vperm.slane %v1592, 7
        %v2902 = vperm.slane %v1593, 0
        %v2903 = vperm.slane %v1593, 1
        %v2904 = vperm.slane %v1593, 2
        %v2905 = vperm.slane %v1593, 3
        %v2906 = vperm.slane %v1593, 4
        %v2907 = vperm.slane %v1593, 5
        %v2908 = vperm.slane %v1593, 6
        %v2909 = vperm.slane %v1593, 7
        %2942 = vmatpush.bf16.msra.mxu0 %v2586
        %2943 = vmatpush.bf16.msra.mxu0 %v2554
        %2944 = vmatpush.bf16.msra.mxu0 %v2522
        %2945 = vmatpush.bf16.msra.mxu0 %v2490
        %2946 = vmatpush.bf16.msra.mxu0 %v2458
        %2947 = vmatpush.bf16.msra.mxu0 %v2426
        %2948 = vmatpush.bf16.msra.mxu0 %v2394
        %2949 = vmatpush.bf16.msra.mxu0 %v2362
        %2950 = vmatmul.bf16.gmra.mxu0 %v1333
        %v2951 = vpop.f32.mrf.mxu0
        %v2952 = vadd.f32 %v2878, %v2951
        %v2953 = vpop.f32.mrf.mxu0
        %2954 = vdwg.mxu0
        %2955 = vmatpush.bf16.msra.mxu0 %v2587
        %2956 = vmatpush.bf16.msra.mxu0 %v2555
        %2957 = vmatpush.bf16.msra.mxu0 %v2523
        %2958 = vmatpush.bf16.msra.mxu0 %v2491
        %2959 = vmatpush.bf16.msra.mxu0 %v2459
        %2960 = vmatpush.bf16.msra.mxu0 %v2427
        %2961 = vmatpush.bf16.msra.mxu0 %v2395
        %2962 = vmatpush.bf16.msra.mxu0 %v2363
        %2963 = vmatmul.bf16.gmra.mxu0 %v1333
        %v2964 = vpop.f32.mrf.mxu0
        %v2965 = vadd.f32 %v2879, %v2964
        %v2966 = vpop.f32.mrf.mxu0
        %2967 = vdwg.mxu0
        %2968 = vmatpush.bf16.msra.mxu0 %v2588
        %2969 = vmatpush.bf16.msra.mxu0 %v2556
        %2970 = vmatpush.bf16.msra.mxu0 %v2524
        %2971 = vmatpush.bf16.msra.mxu0 %v2492
        %2972 = vmatpush.bf16.msra.mxu0 %v2460
        %2973 = vmatpush.bf16.msra.mxu0 %v2428
        %2974 = vmatpush.bf16.msra.mxu0 %v2396
        %2975 = vmatpush.bf16.msra.mxu0 %v2364
        %2976 = vmatmul.bf16.gmra.mxu0 %v1333
        %v2977 = vpop.f32.mrf.mxu0
        %v2978 = vadd.f32 %v2880, %v2977
        %v2979 = vpop.f32.mrf.mxu0
        %2980 = vdwg.mxu0
        %2981 = vmatpush.bf16.msra.mxu0 %v2589
        %2982 = vmatpush.bf16.msra.mxu0 %v2557
        %2983 = vmatpush.bf16.msra.mxu0 %v2525
        %2984 = vmatpush.bf16.msra.mxu0 %v2493
        %2985 = vmatpush.bf16.msra.mxu0 %v2461
        %2986 = vmatpush.bf16.msra.mxu0 %v2429
        %2987 = vmatpush.bf16.msra.mxu0 %v2397
        %2988 = vmatpush.bf16.msra.mxu0 %v2365
        %2989 = vmatmul.bf16.gmra.mxu0 %v1333
        %v2990 = vpop.f32.mrf.mxu0
        %v2991 = vadd.f32 %v2881, %v2990
        %v2992 = vpop.f32.mrf.mxu0
        %2993 = vdwg.mxu0
        %2994 = vmatpush.bf16.msra.mxu0 %v2590
        %2995 = vmatpush.bf16.msra.mxu0 %v2558
        %2996 = vmatpush.bf16.msra.mxu0 %v2526
        %2997 = vmatpush.bf16.msra.mxu0 %v2494
        %2998 = vmatpush.bf16.msra.mxu0 %v2462
        %2999 = vmatpush.bf16.msra.mxu0 %v2430
        %3000 = vmatpush.bf16.msra.mxu0 %v2398
        %3001 = vmatpush.bf16.msra.mxu0 %v2366
        %3002 = vmatmul.bf16.gmra.mxu0 %v1333
        %v3003 = vpop.f32.mrf.mxu0
        %v3004 = vadd.f32 %v2882, %v3003
        %v3005 = vpop.f32.mrf.mxu0
        %3006 = vdwg.mxu0
        %3007 = vmatpush.bf16.msra.mxu0 %v2591
        %3008 = vmatpush.bf16.msra.mxu0 %v2559
        %3009 = vmatpush.bf16.msra.mxu0 %v2527
        %3010 = vmatpush.bf16.msra.mxu0 %v2495
        %3011 = vmatpush.bf16.msra.mxu0 %v2463
        %3012 = vmatpush.bf16.msra.mxu0 %v2431
        %3013 = vmatpush.bf16.msra.mxu0 %v2399
        %3014 = vmatpush.bf16.msra.mxu0 %v2367
        %3015 = vmatmul.bf16.gmra.mxu0 %v1333
        %v3016 = vpop.f32.mrf.mxu0
        %v3017 = vadd.f32 %v2883, %v3016
        %v3018 = vpop.f32.mrf.mxu0
        %3019 = vdwg.mxu0
        %3020 = vmatpush.bf16.msra.mxu0 %v2592
        %3021 = vmatpush.bf16.msra.mxu0 %v2560
        %3022 = vmatpush.bf16.msra.mxu0 %v2528
        %3023 = vmatpush.bf16.msra.mxu0 %v2496
        %3024 = vmatpush.bf16.msra.mxu0 %v2464
        %3025 = vmatpush.bf16.msra.mxu0 %v2432
        %3026 = vmatpush.bf16.msra.mxu0 %v2400
        %3027 = vmatpush.bf16.msra.mxu0 %v2368
        %3028 = vmatmul.bf16.gmra.mxu0 %v1333
        %v3029 = vpop.f32.mrf.mxu0
        %v3030 = vadd.f32 %v2884, %v3029
        %v3031 = vpop.f32.mrf.mxu0
        %3032 = vdwg.mxu0
        %3033 = vmatpush.bf16.msra.mxu0 %v2593
        %3034 = vmatpush.bf16.msra.mxu0 %v2561
        %3035 = vmatpush.bf16.msra.mxu0 %v2529
        %3036 = vmatpush.bf16.msra.mxu0 %v2497
        %3037 = vmatpush.bf16.msra.mxu0 %v2465
        %3038 = vmatpush.bf16.msra.mxu0 %v2433
        %3039 = vmatpush.bf16.msra.mxu0 %v2401
        %3040 = vmatpush.bf16.msra.mxu0 %v2369
        %3041 = vmatmul.bf16.gmra.mxu0 %v1333
        %v3042 = vpop.f32.mrf.mxu0
        %v3043 = vadd.f32 %v2885, %v3042
        %v3044 = vpop.f32.mrf.mxu0
        %3045 = vdwg.mxu0
        %3046 = vmatpush.bf16.msra.mxu0 %v2594
        %3047 = vmatpush.bf16.msra.mxu0 %v2562
        %3048 = vmatpush.bf16.msra.mxu0 %v2530
        %3049 = vmatpush.bf16.msra.mxu0 %v2498
        %3050 = vmatpush.bf16.msra.mxu0 %v2466
        %3051 = vmatpush.bf16.msra.mxu0 %v2434
        %3052 = vmatpush.bf16.msra.mxu0 %v2402
        %3053 = vmatpush.bf16.msra.mxu0 %v2370
        %3054 = vmatmul.bf16.gmra.mxu0 %v1333
        %v3055 = vpop.f32.mrf.mxu0
        %v3056 = vadd.f32 %v2886, %v3055
        %v3057 = vpop.f32.mrf.mxu0
        %3058 = vdwg.mxu0
        %3059 = vmatpush.bf16.msra.mxu0 %v2595
        %3060 = vmatpush.bf16.msra.mxu0 %v2563
        %3061 = vmatpush.bf16.msra.mxu0 %v2531
        %3062 = vmatpush.bf16.msra.mxu0 %v2499
        %3063 = vmatpush.bf16.msra.mxu0 %v2467
        %3064 = vmatpush.bf16.msra.mxu0 %v2435
        %3065 = vmatpush.bf16.msra.mxu0 %v2403
        %3066 = vmatpush.bf16.msra.mxu0 %v2371
        %3067 = vmatmul.bf16.gmra.mxu0 %v1333
        %v3068 = vpop.f32.mrf.mxu0
        %v3069 = vadd.f32 %v2887, %v3068
        %v3070 = vpop.f32.mrf.mxu0
        %3071 = vdwg.mxu0
        %3072 = vmatpush.bf16.msra.mxu0 %v2596
        %3073 = vmatpush.bf16.msra.mxu0 %v2564
        %3074 = vmatpush.bf16.msra.mxu0 %v2532
        %3075 = vmatpush.bf16.msra.mxu0 %v2500
        %3076 = vmatpush.bf16.msra.mxu0 %v2468
        %3077 = vmatpush.bf16.msra.mxu0 %v2436
        %3078 = vmatpush.bf16.msra.mxu0 %v2404
        %3079 = vmatpush.bf16.msra.mxu0 %v2372
        %3080 = vmatmul.bf16.gmra.mxu0 %v1333
        %v3081 = vpop.f32.mrf.mxu0
        %v3082 = vadd.f32 %v2888, %v3081
        %v3083 = vpop.f32.mrf.mxu0
        %3084 = vdwg.mxu0
        %3085 = vmatpush.bf16.msra.mxu0 %v2597
        %3086 = vmatpush.bf16.msra.mxu0 %v2565
        %3087 = vmatpush.bf16.msra.mxu0 %v2533
        %3088 = vmatpush.bf16.msra.mxu0 %v2501
        %3089 = vmatpush.bf16.msra.mxu0 %v2469
        %3090 = vmatpush.bf16.msra.mxu0 %v2437
        %3091 = vmatpush.bf16.msra.mxu0 %v2405
        %3092 = vmatpush.bf16.msra.mxu0 %v2373
        %3093 = vmatmul.bf16.gmra.mxu0 %v1333
        %v3094 = vpop.f32.mrf.mxu0
        %v3095 = vadd.f32 %v2889, %v3094
        %v3096 = vpop.f32.mrf.mxu0
        %3097 = vdwg.mxu0
        %3098 = vmatpush.bf16.msra.mxu0 %v2598
        %3099 = vmatpush.bf16.msra.mxu0 %v2566
        %3100 = vmatpush.bf16.msra.mxu0 %v2534
        %3101 = vmatpush.bf16.msra.mxu0 %v2502
        %3102 = vmatpush.bf16.msra.mxu0 %v2470
        %3103 = vmatpush.bf16.msra.mxu0 %v2438
        %3104 = vmatpush.bf16.msra.mxu0 %v2406
        %3105 = vmatpush.bf16.msra.mxu0 %v2374
        %3106 = vmatmul.bf16.gmra.mxu0 %v1333
        %v3107 = vpop.f32.mrf.mxu0
        %v3108 = vadd.f32 %v2890, %v3107
        %v3109 = vpop.f32.mrf.mxu0
        %3110 = vdwg.mxu0
        %3111 = vmatpush.bf16.msra.mxu0 %v2599
        %3112 = vmatpush.bf16.msra.mxu0 %v2567
        %3113 = vmatpush.bf16.msra.mxu0 %v2535
        %3114 = vmatpush.bf16.msra.mxu0 %v2503
        %3115 = vmatpush.bf16.msra.mxu0 %v2471
        %3116 = vmatpush.bf16.msra.mxu0 %v2439
        %3117 = vmatpush.bf16.msra.mxu0 %v2407
        %3118 = vmatpush.bf16.msra.mxu0 %v2375
        %3119 = vmatmul.bf16.gmra.mxu0 %v1333
        %v3120 = vpop.f32.mrf.mxu0
        %v3121 = vadd.f32 %v2891, %v3120
        %v3122 = vpop.f32.mrf.mxu0
        %3123 = vdwg.mxu0
        %3124 = vmatpush.bf16.msra.mxu0 %v2600
        %3125 = vmatpush.bf16.msra.mxu0 %v2568
        %3126 = vmatpush.bf16.msra.mxu0 %v2536
        %3127 = vmatpush.bf16.msra.mxu0 %v2504
        %3128 = vmatpush.bf16.msra.mxu0 %v2472
        %3129 = vmatpush.bf16.msra.mxu0 %v2440
        %3130 = vmatpush.bf16.msra.mxu0 %v2408
        %3131 = vmatpush.bf16.msra.mxu0 %v2376
        %3132 = vmatmul.bf16.gmra.mxu0 %v1333
        %v3133 = vpop.f32.mrf.mxu0
        %v3134 = vadd.f32 %v2892, %v3133
        %v3135 = vpop.f32.mrf.mxu0
        %3136 = vdwg.mxu0
        %3137 = vmatpush.bf16.msra.mxu0 %v2601
        %3138 = vmatpush.bf16.msra.mxu0 %v2569
        %3139 = vmatpush.bf16.msra.mxu0 %v2537
        %3140 = vmatpush.bf16.msra.mxu0 %v2505
        %3141 = vmatpush.bf16.msra.mxu0 %v2473
        %3142 = vmatpush.bf16.msra.mxu0 %v2441
        %3143 = vmatpush.bf16.msra.mxu0 %v2409
        %3144 = vmatpush.bf16.msra.mxu0 %v2377
        %3145 = vmatmul.bf16.gmra.mxu0 %v1333
        %v3146 = vpop.f32.mrf.mxu0
        %v3147 = vadd.f32 %v2893, %v3146
        %v3148 = vpop.f32.mrf.mxu0
        %3149 = vdwg.mxu0
        %3150 = vmatpush.bf16.msra.mxu0 %v2602
        %3151 = vmatpush.bf16.msra.mxu0 %v2570
        %3152 = vmatpush.bf16.msra.mxu0 %v2538
        %3153 = vmatpush.bf16.msra.mxu0 %v2506
        %3154 = vmatpush.bf16.msra.mxu0 %v2474
        %3155 = vmatpush.bf16.msra.mxu0 %v2442
        %3156 = vmatpush.bf16.msra.mxu0 %v2410
        %3157 = vmatpush.bf16.msra.mxu0 %v2378
        %3158 = vmatmul.bf16.gmra.mxu0 %v1333
        %v3159 = vpop.f32.mrf.mxu0
        %v3160 = vadd.f32 %v2894, %v3159
        %v3161 = vpop.f32.mrf.mxu0
        %3162 = vdwg.mxu0
        %3163 = vmatpush.bf16.msra.mxu0 %v2603
        %3164 = vmatpush.bf16.msra.mxu0 %v2571
        %3165 = vmatpush.bf16.msra.mxu0 %v2539
        %3166 = vmatpush.bf16.msra.mxu0 %v2507
        %3167 = vmatpush.bf16.msra.mxu0 %v2475
        %3168 = vmatpush.bf16.msra.mxu0 %v2443
        %3169 = vmatpush.bf16.msra.mxu0 %v2411
        %3170 = vmatpush.bf16.msra.mxu0 %v2379
        %3171 = vmatmul.bf16.gmra.mxu0 %v1333
        %v3172 = vpop.f32.mrf.mxu0
        %v3173 = vadd.f32 %v2895, %v3172
        %v3174 = vpop.f32.mrf.mxu0
        %3175 = vdwg.mxu0
        %3176 = vmatpush.bf16.msra.mxu0 %v2604
        %3177 = vmatpush.bf16.msra.mxu0 %v2572
        %3178 = vmatpush.bf16.msra.mxu0 %v2540
        %3179 = vmatpush.bf16.msra.mxu0 %v2508
        %3180 = vmatpush.bf16.msra.mxu0 %v2476
        %3181 = vmatpush.bf16.msra.mxu0 %v2444
        %3182 = vmatpush.bf16.msra.mxu0 %v2412
        %3183 = vmatpush.bf16.msra.mxu0 %v2380
        %3184 = vmatmul.bf16.gmra.mxu0 %v1333
        %v3185 = vpop.f32.mrf.mxu0
        %v3186 = vadd.f32 %v2896, %v3185
        %v3187 = vpop.f32.mrf.mxu0
        %3188 = vdwg.mxu0
        %3189 = vmatpush.bf16.msra.mxu0 %v2605
        %3190 = vmatpush.bf16.msra.mxu0 %v2573
        %3191 = vmatpush.bf16.msra.mxu0 %v2541
        %3192 = vmatpush.bf16.msra.mxu0 %v2509
        %3193 = vmatpush.bf16.msra.mxu0 %v2477
        %3194 = vmatpush.bf16.msra.mxu0 %v2445
        %3195 = vmatpush.bf16.msra.mxu0 %v2413
        %3196 = vmatpush.bf16.msra.mxu0 %v2381
        %3197 = vmatmul.bf16.gmra.mxu0 %v1333
        %v3198 = vpop.f32.mrf.mxu0
        %v3199 = vadd.f32 %v2897, %v3198
        %v3200 = vpop.f32.mrf.mxu0
        %3201 = vdwg.mxu0
        %3202 = vmatpush.bf16.msra.mxu0 %v2606
        %3203 = vmatpush.bf16.msra.mxu0 %v2574
        %3204 = vmatpush.bf16.msra.mxu0 %v2542
        %3205 = vmatpush.bf16.msra.mxu0 %v2510
        %3206 = vmatpush.bf16.msra.mxu0 %v2478
        %3207 = vmatpush.bf16.msra.mxu0 %v2446
        %3208 = vmatpush.bf16.msra.mxu0 %v2414
        %3209 = vmatpush.bf16.msra.mxu0 %v2382
        %3210 = vmatmul.bf16.gmra.mxu0 %v1333
        %v3211 = vpop.f32.mrf.mxu0
        %v3212 = vadd.f32 %v2898, %v3211
        %v3213 = vpop.f32.mrf.mxu0
        %3214 = vdwg.mxu0
        %3215 = vmatpush.bf16.msra.mxu0 %v2607
        %3216 = vmatpush.bf16.msra.mxu0 %v2575
        %3217 = vmatpush.bf16.msra.mxu0 %v2543
        %3218 = vmatpush.bf16.msra.mxu0 %v2511
        %3219 = vmatpush.bf16.msra.mxu0 %v2479
        %3220 = vmatpush.bf16.msra.mxu0 %v2447
        %3221 = vmatpush.bf16.msra.mxu0 %v2415
        %3222 = vmatpush.bf16.msra.mxu0 %v2383
        %3223 = vmatmul.bf16.gmra.mxu0 %v1333
        %v3224 = vpop.f32.mrf.mxu0
        %v3225 = vadd.f32 %v2899, %v3224
        %v3226 = vpop.f32.mrf.mxu0
        %3227 = vdwg.mxu0
        %3228 = vmatpush.bf16.msra.mxu0 %v2608
        %3229 = vmatpush.bf16.msra.mxu0 %v2576
        %3230 = vmatpush.bf16.msra.mxu0 %v2544
        %3231 = vmatpush.bf16.msra.mxu0 %v2512
        %3232 = vmatpush.bf16.msra.mxu0 %v2480
        %3233 = vmatpush.bf16.msra.mxu0 %v2448
        %3234 = vmatpush.bf16.msra.mxu0 %v2416
        %3235 = vmatpush.bf16.msra.mxu0 %v2384
        %3236 = vmatmul.bf16.gmra.mxu0 %v1333
        %v3237 = vpop.f32.mrf.mxu0
        %v3238 = vadd.f32 %v2900, %v3237
        %v3239 = vpop.f32.mrf.mxu0
        %3240 = vdwg.mxu0
        %3241 = vmatpush.bf16.msra.mxu0 %v2609
        %3242 = vmatpush.bf16.msra.mxu0 %v2577
        %3243 = vmatpush.bf16.msra.mxu0 %v2545
        %3244 = vmatpush.bf16.msra.mxu0 %v2513
        %3245 = vmatpush.bf16.msra.mxu0 %v2481
        %3246 = vmatpush.bf16.msra.mxu0 %v2449
        %3247 = vmatpush.bf16.msra.mxu0 %v2417
        %3248 = vmatpush.bf16.msra.mxu0 %v2385
        %3249 = vmatmul.bf16.gmra.mxu0 %v1333
        %v3250 = vpop.f32.mrf.mxu0
        %v3251 = vadd.f32 %v2901, %v3250
        %v3252 = vpop.f32.mrf.mxu0
        %3253 = vdwg.mxu0
        %3254 = vmatpush.bf16.msra.mxu0 %v2610
        %3255 = vmatpush.bf16.msra.mxu0 %v2578
        %3256 = vmatpush.bf16.msra.mxu0 %v2546
        %3257 = vmatpush.bf16.msra.mxu0 %v2514
        %3258 = vmatpush.bf16.msra.mxu0 %v2482
        %3259 = vmatpush.bf16.msra.mxu0 %v2450
        %3260 = vmatpush.bf16.msra.mxu0 %v2418
        %3261 = vmatpush.bf16.msra.mxu0 %v2386
        %3262 = vmatmul.bf16.gmra.mxu0 %v1333
        %v3263 = vpop.f32.mrf.mxu0
        %v3264 = vadd.f32 %v2902, %v3263
        %v3265 = vpop.f32.mrf.mxu0
        %3266 = vdwg.mxu0
        %3267 = vmatpush.bf16.msra.mxu0 %v2611
        %3268 = vmatpush.bf16.msra.mxu0 %v2579
        %3269 = vmatpush.bf16.msra.mxu0 %v2547
        %3270 = vmatpush.bf16.msra.mxu0 %v2515
        %3271 = vmatpush.bf16.msra.mxu0 %v2483
        %3272 = vmatpush.bf16.msra.mxu0 %v2451
        %3273 = vmatpush.bf16.msra.mxu0 %v2419
        %3274 = vmatpush.bf16.msra.mxu0 %v2387
        %3275 = vmatmul.bf16.gmra.mxu0 %v1333
        %v3276 = vpop.f32.mrf.mxu0
        %v3277 = vadd.f32 %v2903, %v3276
        %v3278 = vpop.f32.mrf.mxu0
        %3279 = vdwg.mxu0
        %3280 = vmatpush.bf16.msra.mxu0 %v2612
        %3281 = vmatpush.bf16.msra.mxu0 %v2580
        %3282 = vmatpush.bf16.msra.mxu0 %v2548
        %3283 = vmatpush.bf16.msra.mxu0 %v2516
        %3284 = vmatpush.bf16.msra.mxu0 %v2484
        %3285 = vmatpush.bf16.msra.mxu0 %v2452
        %3286 = vmatpush.bf16.msra.mxu0 %v2420
        %3287 = vmatpush.bf16.msra.mxu0 %v2388
        %3288 = vmatmul.bf16.gmra.mxu0 %v1333
        %v3289 = vpop.f32.mrf.mxu0
        %v3290 = vadd.f32 %v2904, %v3289
        %v3291 = vpop.f32.mrf.mxu0
        %3292 = vdwg.mxu0
        %3293 = vmatpush.bf16.msra.mxu0 %v2613
        %3294 = vmatpush.bf16.msra.mxu0 %v2581
        %3295 = vmatpush.bf16.msra.mxu0 %v2549
        %3296 = vmatpush.bf16.msra.mxu0 %v2517
        %3297 = vmatpush.bf16.msra.mxu0 %v2485
        %3298 = vmatpush.bf16.msra.mxu0 %v2453
        %3299 = vmatpush.bf16.msra.mxu0 %v2421
        %3300 = vmatpush.bf16.msra.mxu0 %v2389
        %3301 = vmatmul.bf16.gmra.mxu0 %v1333
        %v3302 = vpop.f32.mrf.mxu0
        %v3303 = vadd.f32 %v2905, %v3302
        %v3304 = vpop.f32.mrf.mxu0
        %3305 = vdwg.mxu0
        %3306 = vmatpush.bf16.msra.mxu0 %v2614
        %3307 = vmatpush.bf16.msra.mxu0 %v2582
        %3308 = vmatpush.bf16.msra.mxu0 %v2550
        %3309 = vmatpush.bf16.msra.mxu0 %v2518
        %3310 = vmatpush.bf16.msra.mxu0 %v2486
        %3311 = vmatpush.bf16.msra.mxu0 %v2454
        %3312 = vmatpush.bf16.msra.mxu0 %v2422
        %3313 = vmatpush.bf16.msra.mxu0 %v2390
        %3314 = vmatmul.bf16.gmra.mxu0 %v1333
        %v3315 = vpop.f32.mrf.mxu0
        %v3316 = vadd.f32 %v2906, %v3315
        %v3317 = vpop.f32.mrf.mxu0
        %3318 = vdwg.mxu0
        %3319 = vmatpush.bf16.msra.mxu0 %v2615
        %3320 = vmatpush.bf16.msra.mxu0 %v2583
        %3321 = vmatpush.bf16.msra.mxu0 %v2551
        %3322 = vmatpush.bf16.msra.mxu0 %v2519
        %3323 = vmatpush.bf16.msra.mxu0 %v2487
        %3324 = vmatpush.bf16.msra.mxu0 %v2455
        %3325 = vmatpush.bf16.msra.mxu0 %v2423
        %3326 = vmatpush.bf16.msra.mxu0 %v2391
        %3327 = vmatmul.bf16.gmra.mxu0 %v1333
        %v3328 = vpop.f32.mrf.mxu0
        %v3329 = vadd.f32 %v2907, %v3328
        %v3330 = vpop.f32.mrf.mxu0
        %3331 = vdwg.mxu0
        %3332 = vmatpush.bf16.msra.mxu0 %v2616
        %3333 = vmatpush.bf16.msra.mxu0 %v2584
        %3334 = vmatpush.bf16.msra.mxu0 %v2552
        %3335 = vmatpush.bf16.msra.mxu0 %v2520
        %3336 = vmatpush.bf16.msra.mxu0 %v2488
        %3337 = vmatpush.bf16.msra.mxu0 %v2456
        %3338 = vmatpush.bf16.msra.mxu0 %v2424
        %3339 = vmatpush.bf16.msra.mxu0 %v2392
        %3340 = vmatmul.bf16.gmra.mxu0 %v1333
        %v3341 = vpop.f32.mrf.mxu0
        %v3342 = vadd.f32 %v2908, %v3341
        %v3343 = vpop.f32.mrf.mxu0
        %3344 = vdwg.mxu0
        %3345 = vmatpush.bf16.msra.mxu0 %v2617
        %3346 = vmatpush.bf16.msra.mxu0 %v2585
        %3347 = vmatpush.bf16.msra.mxu0 %v2553
        %3348 = vmatpush.bf16.msra.mxu0 %v2521
        %3349 = vmatpush.bf16.msra.mxu0 %v2489
        %3350 = vmatpush.bf16.msra.mxu0 %v2457
        %3351 = vmatpush.bf16.msra.mxu0 %v2425
        %3352 = vmatpush.bf16.msra.mxu0 %v2393
        %3353 = vmatmul.bf16.gmra.mxu0 %v1333
        %v3354 = vpop.f32.mrf.mxu0
        %v3355 = vadd.f32 %v2909, %v3354
        %v3356 = vpop.f32.mrf.mxu0
        %3357 = vdwg.mxu0
        %v3358 = vld [vmem:[%s13] sm:$0xff]
        %v3359 = vld [vmem:[%s13 + $0x8] sm:$0xff]
        %v3360 = vld [vmem:[%s13 + $0x10] sm:$0xff]
        %v3361 = vld [vmem:[%s13 + $0x18] sm:$0xff]
        %v3366 = vperm.slane %v3358, 0
        %v3367 = vperm.slane %v3358, 1
        %v3368 = vperm.slane %v3358, 2
        %v3369 = vperm.slane %v3358, 3
        %v3370 = vperm.slane %v3358, 4
        %v3371 = vperm.slane %v3358, 5
        %v3372 = vperm.slane %v3358, 6
        %v3373 = vperm.slane %v3358, 7
        %v3374 = vperm.slane %v3359, 0
        %v3375 = vperm.slane %v3359, 1
        %v3376 = vperm.slane %v3359, 2
        %v3377 = vperm.slane %v3359, 3
        %v3378 = vperm.slane %v3359, 4
        %v3379 = vperm.slane %v3359, 5
        %v3380 = vperm.slane %v3359, 6
        %v3381 = vperm.slane %v3359, 7
        %v3382 = vperm.slane %v3360, 0
        %v3383 = vperm.slane %v3360, 1
        %v3384 = vperm.slane %v3360, 2
        %v3385 = vperm.slane %v3360, 3
        %v3386 = vperm.slane %v3360, 4
        %v3387 = vperm.slane %v3360, 5
        %v3388 = vperm.slane %v3360, 6
        %v3389 = vperm.slane %v3360, 7
        %v3390 = vperm.slane %v3361, 0
        %v3391 = vperm.slane %v3361, 1
        %v3392 = vperm.slane %v3361, 2
        %v3393 = vperm.slane %v3361, 3
        %v3394 = vperm.slane %v3361, 4
        %v3395 = vperm.slane %v3361, 5
        %v3396 = vperm.slane %v3361, 6
        %v3397 = vperm.slane %v3361, 7
        %v3430 = vadd.f32 %v2952, %v3366
        %v3431 = vadd.f32 %v2965, %v3367
        %v3432 = vadd.f32 %v2978, %v3368
        %v3433 = vadd.f32 %v2991, %v3369
        %v3434 = vadd.f32 %v3004, %v3370
        %v3435 = vadd.f32 %v3017, %v3371
        %v3436 = vadd.f32 %v3030, %v3372
        %v3437 = vadd.f32 %v3043, %v3373
        %v3438 = vadd.f32 %v3056, %v3374
        %v3439 = vadd.f32 %v3069, %v3375
        %v3440 = vadd.f32 %v3082, %v3376
        %v3441 = vadd.f32 %v3095, %v3377
        %v3442 = vadd.f32 %v3108, %v3378
        %v3443 = vadd.f32 %v3121, %v3379
        %v3444 = vadd.f32 %v3134, %v3380
        %v3445 = vadd.f32 %v3147, %v3381
        %v3446 = vadd.f32 %v3160, %v3382
        %v3447 = vadd.f32 %v3173, %v3383
        %v3448 = vadd.f32 %v3186, %v3384
        %v3449 = vadd.f32 %v3199, %v3385
        %v3450 = vadd.f32 %v3212, %v3386
        %v3451 = vadd.f32 %v3225, %v3387
        %v3452 = vadd.f32 %v3238, %v3388
        %v3453 = vadd.f32 %v3251, %v3389
        %v3454 = vadd.f32 %v3264, %v3390
        %v3455 = vadd.f32 %v3277, %v3391
        %v3456 = vadd.f32 %v3290, %v3392
        %v3457 = vadd.f32 %v3303, %v3393
        %v3458 = vadd.f32 %v3316, %v3394
        %v3459 = vadd.f32 %v3329, %v3395
        %v3460 = vadd.f32 %v3342, %v3396
        %v3461 = vadd.f32 %v3355, %v3397
        %v3494 = vrot.slane %v3431, 7
        %v3495 = vrot.slane %v3432, 6
        %v3496 = vrot.slane %v3433, 5
        %v3497 = vrot.slane %v3434, 4
        %v3498 = vrot.slane %v3435, 3
        %v3499 = vrot.slane %v3436, 2
        %v3500 = vrot.slane %v3437, 1
        %v3501 = vrot.slane %v3439, 7
        %v3502 = vrot.slane %v3440, 6
        %v3503 = vrot.slane %v3441, 5
        %v3504 = vrot.slane %v3442, 4
        %v3505 = vrot.slane %v3443, 3
        %v3506 = vrot.slane %v3444, 2
        %v3507 = vrot.slane %v3445, 1
        %v3508 = vrot.slane %v3447, 7
        %v3509 = vrot.slane %v3448, 6
        %v3510 = vrot.slane %v3449, 5
        %v3511 = vrot.slane %v3450, 4
        %v3512 = vrot.slane %v3451, 3
        %v3513 = vrot.slane %v3452, 2
        %v3514 = vrot.slane %v3453, 1
        %v3515 = vrot.slane %v3455, 7
        %v3516 = vrot.slane %v3456, 6
        %v3517 = vrot.slane %v3457, 5
        %v3518 = vrot.slane %v3458, 4
        %v3519 = vrot.slane %v3459, 3
        %v3520 = vrot.slane %v3460, 2
        %v3521 = vrot.slane %v3461, 1
        %vm3522 = vcmask 1040384
        %v3523 = vsel %vm3522, %v3430, %v3494
        %vm3524 = vcmask 1042434
        %v3525 = vsel %vm3524, %v3495, %v3496
        %vm3526 = vcmask 1041408
        %v3527 = vsel %vm3526, %v3523, %v3525
        %vm3528 = vcmask 1044484
        %v3529 = vsel %vm3528, %v3497, %v3498
        %vm3530 = vcmask 1046534
        %v3531 = vsel %vm3530, %v3499, %v3500
        %vm3532 = vcmask 1045508
        %v3533 = vsel %vm3532, %v3529, %v3531
        %vm3534 = vcmask 1043456
        %v3535 = vsel %vm3534, %v3527, %v3533
        %v3536 = vsel %vm3522, %v3438, %v3501
        %v3537 = vsel %vm3524, %v3502, %v3503
        %v3538 = vsel %vm3526, %v3536, %v3537
        %v3539 = vsel %vm3528, %v3504, %v3505
        %v3540 = vsel %vm3530, %v3506, %v3507
        %v3541 = vsel %vm3532, %v3539, %v3540
        %v3542 = vsel %vm3534, %v3538, %v3541
        %v3543 = vsel %vm3522, %v3446, %v3508
        %v3544 = vsel %vm3524, %v3509, %v3510
        %v3545 = vsel %vm3526, %v3543, %v3544
        %v3546 = vsel %vm3528, %v3511, %v3512
        %v3547 = vsel %vm3530, %v3513, %v3514
        %v3548 = vsel %vm3532, %v3546, %v3547
        %v3549 = vsel %vm3534, %v3545, %v3548
        %v3550 = vsel %vm3522, %v3454, %v3515
        %v3551 = vsel %vm3524, %v3516, %v3517
        %v3552 = vsel %vm3526, %v3550, %v3551
        %v3553 = vsel %vm3528, %v3518, %v3519
        %v3554 = vsel %vm3530, %v3520, %v3521
        %v3555 = vsel %vm3532, %v3553, %v3554
        %v3556 = vsel %vm3534, %v3552, %v3555
        %3561 = vst [vmem:[%s493] sm:$0xff] %v3535
        %3562 = vst [vmem:[%s493 + $0x8] sm:$0xff] %v3542
        %3563 = vst [vmem:[%s493 + $0x10] sm:$0xff] %v3549
        %3564 = vst [vmem:[%s493 + $0x18] sm:$0xff] %v3556
      $region84: #{classification_pointnet.6} parent=75 // pred_fallthru
        _
      %p3565 = scmp.lt.s32.totalorder %s29, 1
      %s3566 = scalar_select %p3565, %s29, 1
      %s3567 = smul.addr %s3566, 32
      %s3568 = scalar_lea.vmem %s14, %s3567
      // Predicated region
      $region85: #{classification_pointnet.6} parent=75 // pred_check
        %p3569 = pneg %p356
      $region86: #{classification_pointnet.6} parent=75 // pred_check_branch
        %3571 = sbr.rel (%p3569) target = $region88
      $region87: #{classification_pointnet.6} parent=75 // pred_region
        _
      $region88: #{classification_pointnet.6} parent=75 // pred_fallthru
        _
    $region76: #{classification_pointnet.6} parent=5 // pred_fallthru
      _
    %p3572 = scmp.le.s32.totalorder 2, %s20
    // Predicated region
    $region89: #{classification_pointnet.6} parent=5 // pred_check
      %p3573 = pneg %p3572
    $region90: #{classification_pointnet.6} parent=5 // pred_check_branch
      %3575 = sbr.rel (%p3573) target = $region92
    $region91: #{classification_pointnet.6} parent=5 // pred_region
      %s3576 = ssub.s32 %s20, 2
      // Predicated region
      $region93: #{classification_pointnet.6} parent=91 // pred_check
        %p3577 = pneg %p362
      $region94: #{classification_pointnet.6} parent=91 // pred_check_branch
        %3579 = sbr.rel (%p3577) target = $region96
      $region95: #{classification_pointnet.6} parent=91 // pred_region
        %p3580 = scmp.lt.s32.totalorder %s31, 1
        %s3581 = scalar_select %p3580, %s31, 1
        %s3582 = smul.addr %s3581, 32
        %s3583 = scalar_lea.vmem %s14, %s3582
      $region96: #{classification_pointnet.6} parent=91 // pred_fallthru
        _
    $region92: #{classification_pointnet.6} parent=5 // pred_fallthru
      _
  $region6: #{classification_pointnet.6} parent=0 // loop_footer
    %s24 = sadd.s32 1, %s20
  $region7: #{classification_pointnet.6} parent=0 // loop_footer_branch
    %19 = sbr.rel target = $region3
  $region8: #{classification_pointnet.6} parent=0 // loop_exit
    _

</llo_original>
